<compile_context>
chip_gen: v7x
topology: tpu7x:2x2x1
jax: 0.10.0
libtpu: 0.0.40
codegen_flags: <defaults>
</compile_context>

<pallas_src>
import math
import jax
import jax.numpy as jnp
from jax.experimental import pallas as pl
from jax.experimental.pallas import tpu as pltpu


def _layernorm_f32(x, gamma, beta, eps=1e-5):
    # x: (TL, D) f32; gamma/beta: (1, D) f32
    mu = jnp.mean(x, axis=-1, keepdims=True)
    xc = x - mu
    var = jnp.mean(xc * xc, axis=-1, keepdims=True)
    inv = jax.lax.rsqrt(var + eps)
    return xc * inv * gamma + beta


def _make_kernel(n_heads, d_model, d_ff, seq_len, tile_l):
    H, D, F, L, TL = n_heads, d_model, d_ff, seq_len, tile_l
    dk = D // H
    scale = 1.0 / math.sqrt(dk)

    def kernel(x_ref,                      # (L, D)  f32  full sequence of this batch
               wqkv_ref, bqkv_ref,         # (D, 3D) bf16 ; (1, 3D) f32
               wo_ref, bo_ref,             # (D, D)  bf16 ; (1, D)  f32
               g1_ref, be1_ref,            # (1, D)  f32
               w1_ref, b1_ref,             # (D, F)  bf16 ; (1, F)  f32
               w2_ref, b2_ref,             # (F, D)  bf16 ; (1, D)  f32
               g2_ref, be2_ref,            # (1, D)  f32
               out_ref,                    # (TL, D)
               q_s, k_s, v_s):             # scratch: (H, L, dk) bf16 each
        qi = pl.program_id(1)

        # ---- once per batch element: fused QKV projection over the full sequence
        @pl.when(qi == 0)
        def _():
            xf = x_ref[...].astype(jnp.bfloat16)                       # (L, D)
            qkv = jnp.dot(xf, wqkv_ref[...],
                          preferred_element_type=jnp.float32) + bqkv_ref[...]
            for h in range(H):                                         # head-major cache
                q_s[h, :, :] = qkv[:, h * dk:(h + 1) * dk].astype(jnp.bfloat16)
                k_s[h, :, :] = qkv[:, D + h * dk: D + (h + 1) * dk].astype(jnp.bfloat16)
                v_s[h, :, :] = qkv[:, 2 * D + h * dk: 2 * D + (h + 1) * dk].astype(jnp.bfloat16)

        q_start = pl.multiple_of(qi * TL, TL)

        # ---- self-attention for this query tile (heads batched, no explicit K^T)
        qh = q_s[:, pl.ds(q_start, TL), :]                             # (H, TL, dk) bf16
        kh = k_s[...]                                                  # (H, L,  dk) bf16
        vh = v_s[...]                                                  # (H, L,  dk) bf16

        s = jnp.einsum('hqd,hkd->hqk', qh, kh,
                       preferred_element_type=jnp.float32) * scale     # (H, TL, L) f32
        s = s - jnp.max(s, axis=-1, keepdims=True)
        p = jnp.exp(s)
        p = p * pl.reciprocal(jnp.sum(p, axis=-1, keepdims=True), approx=True)
        o = jnp.einsum('hqk,hkd->hqd', p.astype(jnp.bfloat16), vh,
                       preferred_element_type=jnp.float32)             # (H, TL, dk) f32

        # output projection: accumulate per-head partial matmuls (avoids concat /
        # 3-D transpose); equivalent to concat(heads) @ Wo.
        proj = jnp.zeros((TL, D), jnp.float32)
        for h in range(H):
            proj = proj + jnp.dot(o[h].astype(jnp.bfloat16),
                                  wo_ref[pl.ds(h * dk, dk), :],
                                  preferred_element_type=jnp.float32)
        new_x = proj + bo_ref[...]

        # ---- residual + norm1 (f32 elementwise)
        x_tile = x_ref[pl.ds(q_start, TL), :]                          # (TL, D) f32
        x1n = _layernorm_f32(x_tile + new_x, g1_ref[...], be1_ref[...])

        # ---- FFN (Conv1d k=1 == pointwise Linear): bf16 matmuls, f32 accumulation
        y = jnp.dot(x1n.astype(jnp.bfloat16), w1_ref[...],
                    preferred_element_type=jnp.float32) + b1_ref[...]
        y = jnp.maximum(y, 0.0)                                        # relu (f32)
        y = jnp.dot(y.astype(jnp.bfloat16), w2_ref[...],
                    preferred_element_type=jnp.float32) + b2_ref[...]

        # ---- residual + norm2
        out = _layernorm_f32(x1n + y, g2_ref[...], be2_ref[...])
        out_ref[...] = out.astype(out_ref.dtype)

    return kernel


def encoder_layer(x, params, n_heads, *, tile_l=128):
    """x: (B, L, D) float32. params: dict of weights (see init_params)."""
    B, L, D = x.shape
    F = params["w1"].shape[1]
    H = n_heads
    assert D % H == 0, "d_model must be divisible by n_heads"
    dk = D // H

    TL = tile_l if (L % tile_l == 0) else L
    n_q = L // TL

    # bf16 weights: halves weight DMA/VMEM residency and feeds the MXU bf16 path.
    bf16 = jnp.bfloat16
    wqkv = params["wqkv"].astype(bf16)
    wo = params["wo"].astype(bf16)
    w1 = params["w1"].astype(bf16)
    w2 = params["w2"].astype(bf16)

    const2d = lambda shape: pl.BlockSpec(shape, lambda b, qi: (0, 0))
    in_specs = [
        pl.BlockSpec((None, L, D), lambda b, qi: (b, 0, 0)),   # x (full seq per batch)
        const2d((D, 3 * D)), const2d((1, 3 * D)),              # Wqkv, bqkv
        const2d((D, D)), const2d((1, D)),                      # Wo, bo
        const2d((1, D)), const2d((1, D)),                      # norm1 gamma, beta
        const2d((D, F)), const2d((1, F)),                      # conv1 (as matmul), bias
        const2d((F, D)), const2d((1, D)),                      # conv2 (as matmul), bias
        const2d((1, D)), const2d((1, D)),                      # norm2 gamma, beta
    ]
    out_spec = pl.BlockSpec((None, TL, D), lambda b, qi: (b, qi, 0))

    scratch_shapes = [
        pltpu.VMEM((H, L, dk), bf16),   # Q (head-major)
        pltpu.VMEM((H, L, dk), bf16),   # K
        pltpu.VMEM((H, L, dk), bf16),   # V
    ]

    # Rough VMEM budget: double-buffered inputs + scratch + big f32 temporaries.
    weight_bytes = 2 * (3 * D * D + D * D + 2 * D * F) * 2            # bf16, dbl-buffered
    io_bytes = 2 * (L * D * 4) + 2 * (TL * D * 4)
    scratch_bytes = 3 * H * L * max(dk, 128) * 2
    temp_bytes = H * TL * L * 4 + TL * max(F, 128) * 4 + 4 * TL * max(D, 128) * 4
    vmem_est = int(1.5 * (weight_bytes + io_bytes + scratch_bytes + temp_bytes))
    vmem_limit = min(max(vmem_est, 32 * 1024 * 1024), 64 * 1024 * 1024)

    flops = 2 * B * L * D * (3 * D + D + 2 * F) + 4 * B * L * L * D
    cost = pl.CostEstimate(
        flops=flops,
        transcendentals=B * H * L * L,
        bytes_accessed=2 * B * L * D * 4 + (4 * D * D + 2 * D * F) * 2,
    )

    kernel = _make_kernel(H, D, F, L, TL)
    fn = pl.pallas_call(
        kernel,
        out_shape=jax.ShapeDtypeStruct((B, L, D), x.dtype),
        grid_spec=pltpu.PrefetchScalarGridSpec(
            num_scalar_prefetch=0,
            grid=(B, n_q),
            in_specs=in_specs,
            out_specs=out_spec,
            scratch_shapes=scratch_shapes,
        ),
        compiler_params=pltpu.CompilerParams(
            dimension_semantics=("parallel", "arbitrary"),
            vmem_limit_bytes=vmem_limit,
        ),
        cost_estimate=cost,
    )
    return fn(
        x,
        wqkv, params["bqkv"], wo, params["bo"],
        params["g1"], params["be1"],
        w1, params["b1"], w2, params["b2"],
        params["g2"], params["be2"],
    )


def init_params(key, d_model, n_heads, d_ff):
    ks = jax.random.split(key, 8)

    def lin(k, din, dout):
        # weight stored already transposed as (din, dout) so the kernel does x @ W
        return jax.random.normal(k, (din, dout), jnp.float32) * (1.0 / math.sqrt(din))

    return {
        "wqkv": lin(ks[0], d_model, 3 * d_model),
        "bqkv": jax.random.normal(ks[1], (1, 3 * d_model), jnp.float32) * 0.02,
        "wo": lin(ks[2], d_model, d_model),
        "bo": jax.random.normal(ks[3], (1, d_model), jnp.float32) * 0.02,
        "w1": lin(ks[4], d_model, d_ff),
        "b1": jax.random.normal(ks[5], (1, d_ff), jnp.float32) * 0.02,
        "w2": lin(ks[6], d_ff, d_model),
        "b2": jax.random.normal(ks[7], (1, d_model), jnp.float32) * 0.02,
        "g1": jnp.ones((1, d_model), jnp.float32), "be1": jnp.zeros((1, d_model), jnp.float32),
        "g2": jnp.ones((1, d_model), jnp.float32), "be2": jnp.zeros((1, d_model), jnp.float32),
    }


def encoder_layer_ref(x, p, n_heads):
    """Pure-JAX f32 reference reproducing the PyTorch forward (dropout = identity)."""
    B, L, D = x.shape
    dk = D // n_heads
    qkv = x @ p["wqkv"] + p["bqkv"]
    q = qkv[..., 0:D].reshape(B, L, n_heads, dk)
    k = qkv[..., D:2 * D].reshape(B, L, n_heads, dk)
    v = qkv[..., 2 * D:3 * D].reshape(B, L, n_heads, dk)
    scores = jnp.einsum("blhd,bshd->bhls", q, k) / math.sqrt(dk)
    a = jax.nn.softmax(scores, axis=-1)
    o = jnp.einsum("bhls,bshd->blhd", a, v).reshape(B, L, D)
    new_x = o @ p["wo"] + p["bo"]

    def ln(t, g, b, eps=1e-5):
        mu = t.mean(-1, keepdims=True)
        var = ((t - mu) ** 2).mean(-1, keepdims=True)
        return (t - mu) / jnp.sqrt(var + eps) * g + b

    x1 = ln(x + new_x, p["g1"], p["be1"])
    y = jax.nn.relu(x1 @ p["w1"] + p["b1"])
    y = y @ p["w2"] + p["b2"]
    return ln(x1 + y, p["g2"], p["be2"])


if __name__ == "__main__":
    # Lane-dense small test shapes: D and F multiples of 128, L tiled into 2 query tiles.
    B, L, d_model, n_heads = 2, 256, 128, 4
    d_ff = 4 * d_model

    key = jax.random.PRNGKey(0)
    kx, kp = jax.random.split(key)
    x = jax.random.normal(kx, (B, L, d_model), jnp.float32)
    params = init_params(kp, d_model, n_heads, d_ff)

    out = encoder_layer(x, params, n_heads, tile_l=128)
    out = jax.block_until_ready(out)

    ref = encoder_layer_ref(x, params, n_heads)
    # Kernel uses bf16 matmul operands (f32 accumulation) + approximate reciprocal
    # in the softmax, so compare against the f32 reference with bf16-level tolerance.
    assert out.shape == ref.shape
    assert bool(jnp.all(jnp.isfinite(out)))
    assert jnp.allclose(out, ref, atol=1e-1, rtol=1e-1), "mismatch vs JAX reference"
    print("KERNEL_OK")
</pallas_src>

<mosaic_0001>
module attributes {stable_mosaic.version = 11 : i64} {
  func.func @kernel(%arg0: i32, %arg1: i32, %arg2: memref<1x256x128xf32, #tpu.memory_space<vmem>>, %arg3: memref<128x384xbf16, #tpu.memory_space<vmem>>, %arg4: memref<1x384xf32, #tpu.memory_space<vmem>>, %arg5: memref<128x128xbf16, #tpu.memory_space<vmem>>, %arg6: memref<1x128xf32, #tpu.memory_space<vmem>>, %arg7: memref<1x128xf32, #tpu.memory_space<vmem>>, %arg8: memref<1x128xf32, #tpu.memory_space<vmem>>, %arg9: memref<128x512xbf16, #tpu.memory_space<vmem>>, %arg10: memref<1x512xf32, #tpu.memory_space<vmem>>, %arg11: memref<512x128xbf16, #tpu.memory_space<vmem>>, %arg12: memref<1x128xf32, #tpu.memory_space<vmem>>, %arg13: memref<1x128xf32, #tpu.memory_space<vmem>>, %arg14: memref<1x128xf32, #tpu.memory_space<vmem>>, %arg15: memref<1x128x128xf32, #tpu.memory_space<vmem>>, %arg16: memref<4x256x32xbf16, #tpu.memory_space<vmem>>, %arg17: memref<4x256x32xbf16, #tpu.memory_space<vmem>>, %arg18: memref<4x256x32xbf16, #tpu.memory_space<vmem>>) attributes {dimension_semantics = [#tpu.dimension_semantics<parallel>, #tpu.dimension_semantics<arbitrary>], iteration_bounds = array<i64: 2, 2>, scalar_prefetch = 0 : i64, scratch_operands = 3 : i64, tpu.core_type = #tpu.core_type<tc>, window_params = [{transform_indices = @transform_0, window_bounds = array<i64: 1, 256, 128>}, {pipeline_mode = #tpu.pipeline_mode<synchronous>, transform_indices = @transform_1, window_bounds = array<i64: 128, 384>}, {pipeline_mode = #tpu.pipeline_mode<synchronous>, transform_indices = @transform_2, window_bounds = array<i64: 1, 384>}, {pipeline_mode = #tpu.pipeline_mode<synchronous>, transform_indices = @transform_3, window_bounds = array<i64: 128, 128>}, {pipeline_mode = #tpu.pipeline_mode<synchronous>, transform_indices = @transform_4, window_bounds = array<i64: 1, 128>}, {pipeline_mode = #tpu.pipeline_mode<synchronous>, transform_indices = @transform_5, window_bounds = array<i64: 1, 128>}, {pipeline_mode = #tpu.pipeline_mode<synchronous>, transform_indices = @transform_6, window_bounds = array<i64: 1, 128>}, {pipeline_mode = #tpu.pipeline_mode<synchronous>, transform_indices = @transform_7, window_bounds = array<i64: 128, 512>}, {pipeline_mode = #tpu.pipeline_mode<synchronous>, transform_indices = @transform_8, window_bounds = array<i64: 1, 512>}, {pipeline_mode = #tpu.pipeline_mode<synchronous>, transform_indices = @transform_9, window_bounds = array<i64: 512, 128>}, {pipeline_mode = #tpu.pipeline_mode<synchronous>, transform_indices = @transform_10, window_bounds = array<i64: 1, 128>}, {pipeline_mode = #tpu.pipeline_mode<synchronous>, transform_indices = @transform_11, window_bounds = array<i64: 1, 128>}, {pipeline_mode = #tpu.pipeline_mode<synchronous>, transform_indices = @transform_12, window_bounds = array<i64: 1, 128>}, {transform_indices = @transform_13, window_bounds = array<i64: 1, 128, 128>}]} {
    %c0_i32 = arith.constant 0 : i32
    %0 = arith.cmpi eq, %arg1, %c0_i32 : i32
    %1 = arith.extui %0 : i1 to i32
    %c0_i32_0 = arith.constant 0 : i32
    %2 = arith.cmpi ne, %1, %c0_i32_0 : i32
    scf.if %2 {
      %c0_58 = arith.constant 0 : index
      %c0_59 = arith.constant 0 : index
      %c0_60 = arith.constant 0 : index
      %118 = vector.load %arg2[%c0_58, %c0_59, %c0_60] : memref<1x256x128xf32, #tpu.memory_space<vmem>>, vector<1x256x128xf32>
      %119 = vector.shape_cast %118 : vector<1x256x128xf32> to vector<256x128xf32>
      %120 = arith.truncf %119 : vector<256x128xf32> to vector<256x128xbf16>
      %c0_61 = arith.constant 0 : index
      %c0_62 = arith.constant 0 : index
      %121 = vector.load %arg3[%c0_61, %c0_62] : memref<128x384xbf16, #tpu.memory_space<vmem>>, vector<128x384xbf16>
      %cst_63 = arith.constant dense<0.000000e+00> : vector<256x384xf32>
      %122 = tpu.matmul %120, %121, %cst_63 {dimension_numbers = #tpu.dot_dimension_numbers<[1], [0], [0], [1], [0, 0, 1, 1], [], []>} : vector<256x128xbf16>, vector<128x384xbf16>, vector<256x384xf32> -> vector<256x384xf32>
      %c0_64 = arith.constant 0 : index
      %c0_65 = arith.constant 0 : index
      %123 = vector.load %arg4[%c0_64, %c0_65] : memref<1x384xf32, #tpu.memory_space<vmem>>, vector<1x384xf32>
      %124 = vector.broadcast %123 : vector<1x384xf32> to vector<256x384xf32>
      %125 = arith.addf %122, %124 : vector<256x384xf32>
      %126 = vector.extract_strided_slice %125 {offsets = [0, 0], sizes = [256, 32], strides = [1, 1]} : vector<256x384xf32> to vector<256x32xf32>
      %127 = arith.truncf %126 : vector<256x32xf32> to vector<256x32xbf16>
      %c0_66 = arith.constant 0 : index
      %c0_67 = arith.constant 0 : index
      %c0_68 = arith.constant 0 : index
      %128 = vector.load %arg16[%c0_66, %c0_67, %c0_68] : memref<4x256x32xbf16, #tpu.memory_space<vmem>>, vector<1x256x32xbf16>
      %129 = vector.shape_cast %128 : vector<1x256x32xbf16> to vector<256x32xbf16>
      %130 = vector.shape_cast %127 : vector<256x32xbf16> to vector<1x256x32xbf16>
      tpu.vector_store %arg16[%c0_66, %c0_67, %c0_68], %130 {strides = array<i32>} : memref<4x256x32xbf16, #tpu.memory_space<vmem>>, vector<1x256x32xbf16>,
      %131 = vector.extract_strided_slice %125 {offsets = [0, 128], sizes = [256, 32], strides = [1, 1]} : vector<256x384xf32> to vector<256x32xf32>
      %132 = arith.truncf %131 : vector<256x32xf32> to vector<256x32xbf16>
      %c0_69 = arith.constant 0 : index
      %c0_70 = arith.constant 0 : index
      %c0_71 = arith.constant 0 : index
      %133 = vector.load %arg17[%c0_69, %c0_70, %c0_71] : memref<4x256x32xbf16, #tpu.memory_space<vmem>>, vector<1x256x32xbf16>
      %134 = vector.shape_cast %133 : vector<1x256x32xbf16> to vector<256x32xbf16>
      %135 = vector.shape_cast %132 : vector<256x32xbf16> to vector<1x256x32xbf16>
      tpu.vector_store %arg17[%c0_69, %c0_70, %c0_71], %135 {strides = array<i32>} : memref<4x256x32xbf16, #tpu.memory_space<vmem>>, vector<1x256x32xbf16>,
      %136 = vector.extract_strided_slice %125 {offsets = [0, 256], sizes = [256, 32], strides = [1, 1]} : vector<256x384xf32> to vector<256x32xf32>
      %137 = arith.truncf %136 : vector<256x32xf32> to vector<256x32xbf16>
      %c0_72 = arith.constant 0 : index
      %c0_73 = arith.constant 0 : index
      %c0_74 = arith.constant 0 : index
      %138 = vector.load %arg18[%c0_72, %c0_73, %c0_74] : memref<4x256x32xbf16, #tpu.memory_space<vmem>>, vector<1x256x32xbf16>
      %139 = vector.shape_cast %138 : vector<1x256x32xbf16> to vector<256x32xbf16>
      %140 = vector.shape_cast %137 : vector<256x32xbf16> to vector<1x256x32xbf16>
      tpu.vector_store %arg18[%c0_72, %c0_73, %c0_74], %140 {strides = array<i32>} : memref<4x256x32xbf16, #tpu.memory_space<vmem>>, vector<1x256x32xbf16>,
      %141 = vector.extract_strided_slice %125 {offsets = [0, 32], sizes = [256, 32], strides = [1, 1]} : vector<256x384xf32> to vector<256x32xf32>
      %142 = arith.truncf %141 : vector<256x32xf32> to vector<256x32xbf16>
      %c1 = arith.constant 1 : index
      %c0_75 = arith.constant 0 : index
      %c0_76 = arith.constant 0 : index
      %143 = vector.load %arg16[%c1, %c0_75, %c0_76] : memref<4x256x32xbf16, #tpu.memory_space<vmem>>, vector<1x256x32xbf16>
      %144 = vector.shape_cast %143 : vector<1x256x32xbf16> to vector<256x32xbf16>
      %145 = vector.shape_cast %142 : vector<256x32xbf16> to vector<1x256x32xbf16>
      tpu.vector_store %arg16[%c1, %c0_75, %c0_76], %145 {strides = array<i32>} : memref<4x256x32xbf16, #tpu.memory_space<vmem>>, vector<1x256x32xbf16>,
      %146 = vector.extract_strided_slice %125 {offsets = [0, 160], sizes = [256, 32], strides = [1, 1]} : vector<256x384xf32> to vector<256x32xf32>
      %147 = arith.truncf %146 : vector<256x32xf32> to vector<256x32xbf16>
      %c1_77 = arith.constant 1 : index
      %c0_78 = arith.constant 0 : index
      %c0_79 = arith.constant 0 : index
      %148 = vector.load %arg17[%c1_77, %c0_78, %c0_79] : memref<4x256x32xbf16, #tpu.memory_space<vmem>>, vector<1x256x32xbf16>
      %149 = vector.shape_cast %148 : vector<1x256x32xbf16> to vector<256x32xbf16>
      %150 = vector.shape_cast %147 : vector<256x32xbf16> to vector<1x256x32xbf16>
      tpu.vector_store %arg17[%c1_77, %c0_78, %c0_79], %150 {strides = array<i32>} : memref<4x256x32xbf16, #tpu.memory_space<vmem>>, vector<1x256x32xbf16>,
      %151 = vector.extract_strided_slice %125 {offsets = [0, 288], sizes = [256, 32], strides = [1, 1]} : vector<256x384xf32> to vector<256x32xf32>
      %152 = arith.truncf %151 : vector<256x32xf32> to vector<256x32xbf16>
      %c1_80 = arith.constant 1 : index
      %c0_81 = arith.constant 0 : index
      %c0_82 = arith.constant 0 : index
      %153 = vector.load %arg18[%c1_80, %c0_81, %c0_82] : memref<4x256x32xbf16, #tpu.memory_space<vmem>>, vector<1x256x32xbf16>
      %154 = vector.shape_cast %153 : vector<1x256x32xbf16> to vector<256x32xbf16>
      %155 = vector.shape_cast %152 : vector<256x32xbf16> to vector<1x256x32xbf16>
      tpu.vector_store %arg18[%c1_80, %c0_81, %c0_82], %155 {strides = array<i32>} : memref<4x256x32xbf16, #tpu.memory_space<vmem>>, vector<1x256x32xbf16>,
      %156 = vector.extract_strided_slice %125 {offsets = [0, 64], sizes = [256, 32], strides = [1, 1]} : vector<256x384xf32> to vector<256x32xf32>
      %157 = arith.truncf %156 : vector<256x32xf32> to vector<256x32xbf16>
      %c2 = arith.constant 2 : index
      %c0_83 = arith.constant 0 : index
      %c0_84 = arith.constant 0 : index
      %158 = vector.load %arg16[%c2, %c0_83, %c0_84] : memref<4x256x32xbf16, #tpu.memory_space<vmem>>, vector<1x256x32xbf16>
      %159 = vector.shape_cast %158 : vector<1x256x32xbf16> to vector<256x32xbf16>
      %160 = vector.shape_cast %157 : vector<256x32xbf16> to vector<1x256x32xbf16>
      tpu.vector_store %arg16[%c2, %c0_83, %c0_84], %160 {strides = array<i32>} : memref<4x256x32xbf16, #tpu.memory_space<vmem>>, vector<1x256x32xbf16>,
      %161 = vector.extract_strided_slice %125 {offsets = [0, 192], sizes = [256, 32], strides = [1, 1]} : vector<256x384xf32> to vector<256x32xf32>
      %162 = arith.truncf %161 : vector<256x32xf32> to vector<256x32xbf16>
      %c2_85 = arith.constant 2 : index
      %c0_86 = arith.constant 0 : index
      %c0_87 = arith.constant 0 : index
      %163 = vector.load %arg17[%c2_85, %c0_86, %c0_87] : memref<4x256x32xbf16, #tpu.memory_space<vmem>>, vector<1x256x32xbf16>
      %164 = vector.shape_cast %163 : vector<1x256x32xbf16> to vector<256x32xbf16>
      %165 = vector.shape_cast %162 : vector<256x32xbf16> to vector<1x256x32xbf16>
      tpu.vector_store %arg17[%c2_85, %c0_86, %c0_87], %165 {strides = array<i32>} : memref<4x256x32xbf16, #tpu.memory_space<vmem>>, vector<1x256x32xbf16>,
      %166 = vector.extract_strided_slice %125 {offsets = [0, 320], sizes = [256, 32], strides = [1, 1]} : vector<256x384xf32> to vector<256x32xf32>
      %167 = arith.truncf %166 : vector<256x32xf32> to vector<256x32xbf16>
      %c2_88 = arith.constant 2 : index
      %c0_89 = arith.constant 0 : index
      %c0_90 = arith.constant 0 : index
      %168 = vector.load %arg18[%c2_88, %c0_89, %c0_90] : memref<4x256x32xbf16, #tpu.memory_space<vmem>>, vector<1x256x32xbf16>
      %169 = vector.shape_cast %168 : vector<1x256x32xbf16> to vector<256x32xbf16>
      %170 = vector.shape_cast %167 : vector<256x32xbf16> to vector<1x256x32xbf16>
      tpu.vector_store %arg18[%c2_88, %c0_89, %c0_90], %170 {strides = array<i32>} : memref<4x256x32xbf16, #tpu.memory_space<vmem>>, vector<1x256x32xbf16>,
      %171 = vector.extract_strided_slice %125 {offsets = [0, 96], sizes = [256, 32], strides = [1, 1]} : vector<256x384xf32> to vector<256x32xf32>
      %172 = arith.truncf %171 : vector<256x32xf32> to vector<256x32xbf16>
      %c3 = arith.constant 3 : index
      %c0_91 = arith.constant 0 : index
      %c0_92 = arith.constant 0 : index
      %173 = vector.load %arg16[%c3, %c0_91, %c0_92] : memref<4x256x32xbf16, #tpu.memory_space<vmem>>, vector<1x256x32xbf16>
      %174 = vector.shape_cast %173 : vector<1x256x32xbf16> to vector<256x32xbf16>
      %175 = vector.shape_cast %172 : vector<256x32xbf16> to vector<1x256x32xbf16>
      tpu.vector_store %arg16[%c3, %c0_91, %c0_92], %175 {strides = array<i32>} : memref<4x256x32xbf16, #tpu.memory_space<vmem>>, vector<1x256x32xbf16>,
      %176 = vector.extract_strided_slice %125 {offsets = [0, 224], sizes = [256, 32], strides = [1, 1]} : vector<256x384xf32> to vector<256x32xf32>
      %177 = arith.truncf %176 : vector<256x32xf32> to vector<256x32xbf16>
      %c3_93 = arith.constant 3 : index
      %c0_94 = arith.constant 0 : index
      %c0_95 = arith.constant 0 : index
      %178 = vector.load %arg17[%c3_93, %c0_94, %c0_95] : memref<4x256x32xbf16, #tpu.memory_space<vmem>>, vector<1x256x32xbf16>
      %179 = vector.shape_cast %178 : vector<1x256x32xbf16> to vector<256x32xbf16>
      %180 = vector.shape_cast %177 : vector<256x32xbf16> to vector<1x256x32xbf16>
      tpu.vector_store %arg17[%c3_93, %c0_94, %c0_95], %180 {strides = array<i32>} : memref<4x256x32xbf16, #tpu.memory_space<vmem>>, vector<1x256x32xbf16>,
      %181 = vector.extract_strided_slice %125 {offsets = [0, 352], sizes = [256, 32], strides = [1, 1]} : vector<256x384xf32> to vector<256x32xf32>
      %182 = arith.truncf %181 : vector<256x32xf32> to vector<256x32xbf16>
      %c3_96 = arith.constant 3 : index
      %c0_97 = arith.constant 0 : index
      %c0_98 = arith.constant 0 : index
      %183 = vector.load %arg18[%c3_96, %c0_97, %c0_98] : memref<4x256x32xbf16, #tpu.memory_space<vmem>>, vector<1x256x32xbf16>
      %184 = vector.shape_cast %183 : vector<1x256x32xbf16> to vector<256x32xbf16>
      %185 = vector.shape_cast %182 : vector<256x32xbf16> to vector<1x256x32xbf16>
      tpu.vector_store %arg18[%c3_96, %c0_97, %c0_98], %185 {strides = array<i32>} : memref<4x256x32xbf16, #tpu.memory_space<vmem>>, vector<1x256x32xbf16>,
    } else {
    }
    %c128_i32 = arith.constant 128 : i32
    %3 = arith.muli %arg1, %c128_i32 : i32
    %4 = tpu.assume_multiple %3, 128 : i32
    %c0 = arith.constant 0 : index
    %5 = arith.index_cast %4 : i32 to index
    %c0_1 = arith.constant 0 : index
    %6 = vector.load %arg16[%c0, %5, %c0_1] : memref<4x256x32xbf16, #tpu.memory_space<vmem>>, vector<4x128x32xbf16>
    %c0_2 = arith.constant 0 : index
    %c0_3 = arith.constant 0 : index
    %c0_4 = arith.constant 0 : index
    %7 = vector.load %arg17[%c0_2, %c0_3, %c0_4] : memref<4x256x32xbf16, #tpu.memory_space<vmem>>, vector<4x256x32xbf16>
    %c0_5 = arith.constant 0 : index
    %c0_6 = arith.constant 0 : index
    %c0_7 = arith.constant 0 : index
    %8 = vector.load %arg18[%c0_5, %c0_6, %c0_7] : memref<4x256x32xbf16, #tpu.memory_space<vmem>>, vector<4x256x32xbf16>
    "tpu.trace_start"() <{level = 10 : i32, message = "hqd,hkd->hqk"}> : () -> ()
    %cst = arith.constant dense<0.000000e+00> : vector<4x128x256xf32>
    %9 = tpu.matmul %6, %7, %cst {dimension_numbers = #tpu.dot_dimension_numbers<[2], [2], [1], [1], [0, 0, 0, 1, 1, 1], [0], [0]>} : vector<4x128x32xbf16>, vector<4x256x32xbf16>, vector<4x128x256xf32> -> vector<4x128x256xf32>
    "tpu.trace_stop"() : () -> ()
    %cst_8 = arith.constant 0.176776692 : f32
    %10 = vector.broadcast %cst_8 : f32 to vector<4x128x256xf32>
    %11 = arith.mulf %9, %10 : vector<4x128x256xf32>
    %cst_9 = arith.constant dense<0xFF800000> : vector<4x128xf32>
    %12 = vector.multi_reduction <maximumf>, %11, %cst_9 [2] : vector<4x128x256xf32> to vector<4x128xf32>
    %13 = vector.shape_cast %12 : vector<4x128xf32> to vector<4x128x1xf32>
    %14 = vector.broadcast %13 : vector<4x128x1xf32> to vector<4x128x256xf32>
    %15 = arith.subf %11, %14 : vector<4x128x256xf32>
    %16 = math.exp %15 : vector<4x128x256xf32>
    %cst_10 = arith.constant dense<0.000000e+00> : vector<4x128xf32>
    %17 = vector.multi_reduction <add>, %16, %cst_10 [2] : vector<4x128x256xf32> to vector<4x128xf32>
    %18 = vector.shape_cast %17 : vector<4x128xf32> to vector<4x128x1xf32>
    %19 = tpu.reciprocal %18 {approx = true} : vector<4x128x1xf32> -> vector<4x128x1xf32>
    %20 = vector.broadcast %19 : vector<4x128x1xf32> to vector<4x128x256xf32>
    %21 = arith.mulf %16, %20 : vector<4x128x256xf32>
    %22 = arith.truncf %21 : vector<4x128x256xf32> to vector<4x128x256xbf16>
    "tpu.trace_start"() <{level = 10 : i32, message = "hqk,hkd->hqd"}> : () -> ()
    %cst_11 = arith.constant dense<0.000000e+00> : vector<4x128x32xf32>
    %23 = tpu.matmul %22, %8, %cst_11 {dimension_numbers = #tpu.dot_dimension_numbers<[2], [1], [1], [2], [0, 0, 0, 1, 1, 2], [0], [0]>} : vector<4x128x256xbf16>, vector<4x256x32xbf16>, vector<4x128x32xf32> -> vector<4x128x32xf32>
    %cst_12 = arith.constant 0.000000e+00 : f32
    "tpu.trace_stop"() : () -> ()
    %24 = vector.broadcast %cst_12 : f32 to vector<128x128xf32>
    %25 = vector.extract_strided_slice %23 {offsets = [0, 0, 0], sizes = [1, 128, 32], strides = [1, 1, 1]} : vector<4x128x32xf32> to vector<1x128x32xf32>
    %26 = vector.shape_cast %25 : vector<1x128x32xf32> to vector<128x32xf32>
    %27 = arith.truncf %26 : vector<128x32xf32> to vector<128x32xbf16>
    %c0_13 = arith.constant 0 : index
    %c0_14 = arith.constant 0 : index
    %28 = vector.load %arg5[%c0_13, %c0_14] : memref<128x128xbf16, #tpu.memory_space<vmem>>, vector<32x128xbf16>
    %cst_15 = arith.constant dense<0.000000e+00> : vector<128x128xf32>
    %29 = tpu.matmul %27, %28, %cst_15 {dimension_numbers = #tpu.dot_dimension_numbers<[1], [0], [0], [1], [0, 0, 1, 1], [], []>} : vector<128x32xbf16>, vector<32x128xbf16>, vector<128x128xf32> -> vector<128x128xf32>
    %30 = arith.addf %24, %29 : vector<128x128xf32>
    %31 = vector.extract_strided_slice %23 {offsets = [1, 0, 0], sizes = [1, 128, 32], strides = [1, 1, 1]} : vector<4x128x32xf32> to vector<1x128x32xf32>
    %32 = vector.shape_cast %31 : vector<1x128x32xf32> to vector<128x32xf32>
    %33 = arith.truncf %32 : vector<128x32xf32> to vector<128x32xbf16>
    %c32 = arith.constant 32 : index
    %c0_16 = arith.constant 0 : index
    %34 = vector.load %arg5[%c32, %c0_16] : memref<128x128xbf16, #tpu.memory_space<vmem>>, vector<32x128xbf16>
    %cst_17 = arith.constant dense<0.000000e+00> : vector<128x128xf32>
    %35 = tpu.matmul %33, %34, %cst_17 {dimension_numbers = #tpu.dot_dimension_numbers<[1], [0], [0], [1], [0, 0, 1, 1], [], []>} : vector<128x32xbf16>, vector<32x128xbf16>, vector<128x128xf32> -> vector<128x128xf32>
    %36 = arith.addf %30, %35 : vector<128x128xf32>
    %37 = vector.extract_strided_slice %23 {offsets = [2, 0, 0], sizes = [1, 128, 32], strides = [1, 1, 1]} : vector<4x128x32xf32> to vector<1x128x32xf32>
    %38 = vector.shape_cast %37 : vector<1x128x32xf32> to vector<128x32xf32>
    %39 = arith.truncf %38 : vector<128x32xf32> to vector<128x32xbf16>
    %c64 = arith.constant 64 : index
    %c0_18 = arith.constant 0 : index
    %40 = vector.load %arg5[%c64, %c0_18] : memref<128x128xbf16, #tpu.memory_space<vmem>>, vector<32x128xbf16>
    %cst_19 = arith.constant dense<0.000000e+00> : vector<128x128xf32>
    %41 = tpu.matmul %39, %40, %cst_19 {dimension_numbers = #tpu.dot_dimension_numbers<[1], [0], [0], [1], [0, 0, 1, 1], [], []>} : vector<128x32xbf16>, vector<32x128xbf16>, vector<128x128xf32> -> vector<128x128xf32>
    %42 = arith.addf %36, %41 : vector<128x128xf32>
    %43 = vector.extract_strided_slice %23 {offsets = [3, 0, 0], sizes = [1, 128, 32], strides = [1, 1, 1]} : vector<4x128x32xf32> to vector<1x128x32xf32>
    %44 = vector.shape_cast %43 : vector<1x128x32xf32> to vector<128x32xf32>
    %45 = arith.truncf %44 : vector<128x32xf32> to vector<128x32xbf16>
    %c96 = arith.constant 96 : index
    %c0_20 = arith.constant 0 : index
    %46 = vector.load %arg5[%c96, %c0_20] : memref<128x128xbf16, #tpu.memory_space<vmem>>, vector<32x128xbf16>
    %cst_21 = arith.constant dense<0.000000e+00> : vector<128x128xf32>
    %47 = tpu.matmul %45, %46, %cst_21 {dimension_numbers = #tpu.dot_dimension_numbers<[1], [0], [0], [1], [0, 0, 1, 1], [], []>} : vector<128x32xbf16>, vector<32x128xbf16>, vector<128x128xf32> -> vector<128x128xf32>
    %48 = arith.addf %42, %47 : vector<128x128xf32>
    %c0_22 = arith.constant 0 : index
    %c0_23 = arith.constant 0 : index
    %49 = vector.load %arg6[%c0_22, %c0_23] : memref<1x128xf32, #tpu.memory_space<vmem>>, vector<1x128xf32>
    %50 = vector.broadcast %49 : vector<1x128xf32> to vector<128x128xf32>
    %51 = arith.addf %48, %50 : vector<128x128xf32>
    %c0_24 = arith.constant 0 : index
    %52 = arith.index_cast %4 : i32 to index
    %c0_25 = arith.constant 0 : index
    %53 = vector.load %arg2[%c0_24, %52, %c0_25] : memref<1x256x128xf32, #tpu.memory_space<vmem>>, vector<1x128x128xf32>
    %54 = vector.shape_cast %53 : vector<1x128x128xf32> to vector<128x128xf32>
    %55 = arith.addf %54, %51 : vector<128x128xf32>
    %c0_26 = arith.constant 0 : index
    %c0_27 = arith.constant 0 : index
    %56 = vector.load %arg7[%c0_26, %c0_27] : memref<1x128xf32, #tpu.memory_space<vmem>>, vector<1x128xf32>
    %c0_28 = arith.constant 0 : index
    %c0_29 = arith.constant 0 : index
    %57 = vector.load %arg8[%c0_28, %c0_29] : memref<1x128xf32, #tpu.memory_space<vmem>>, vector<1x128xf32>
    %cst_30 = arith.constant dense<0.000000e+00> : vector<128xf32>
    %58 = vector.multi_reduction <add>, %55, %cst_30 [1] : vector<128x128xf32> to vector<128xf32>
    %59 = vector.shape_cast %58 : vector<128xf32> to vector<128x1xf32>
    %cst_31 = arith.constant 1.280000e+02 : f32
    %60 = vector.broadcast %cst_31 : f32 to vector<128x1xf32>
    %61 = arith.divf %59, %60 : vector<128x1xf32>
    %62 = vector.broadcast %61 : vector<128x1xf32> to vector<128x128xf32>
    %63 = arith.subf %55, %62 : vector<128x128xf32>
    %64 = arith.mulf %63, %63 : vector<128x128xf32>
    %cst_32 = arith.constant dense<0.000000e+00> : vector<128xf32>
    %65 = vector.multi_reduction <add>, %64, %cst_32 [1] : vector<128x128xf32> to vector<128xf32>
    %66 = vector.shape_cast %65 : vector<128xf32> to vector<128x1xf32>
    %cst_33 = arith.constant 1.280000e+02 : f32
    %67 = vector.broadcast %cst_33 : f32 to vector<128x1xf32>
    %68 = arith.divf %66, %67 : vector<128x1xf32>
    %cst_34 = arith.constant 9.99999974E-6 : f32
    %69 = vector.broadcast %cst_34 : f32 to vector<128x1xf32>
    %70 = arith.addf %68, %69 : vector<128x1xf32>
    %71 = math.rsqrt %70 : vector<128x1xf32>
    %72 = vector.broadcast %71 : vector<128x1xf32> to vector<128x128xf32>
    %73 = arith.mulf %63, %72 : vector<128x128xf32>
    %74 = vector.broadcast %56 : vector<1x128xf32> to vector<128x128xf32>
    %75 = arith.mulf %73, %74 : vector<128x128xf32>
    %76 = vector.broadcast %57 : vector<1x128xf32> to vector<128x128xf32>
    %77 = arith.addf %75, %76 : vector<128x128xf32>
    %78 = arith.truncf %77 : vector<128x128xf32> to vector<128x128xbf16>
    %c0_35 = arith.constant 0 : index
    %c0_36 = arith.constant 0 : index
    %79 = vector.load %arg9[%c0_35, %c0_36] : memref<128x512xbf16, #tpu.memory_space<vmem>>, vector<128x512xbf16>
    %cst_37 = arith.constant dense<0.000000e+00> : vector<128x512xf32>
    %80 = tpu.matmul %78, %79, %cst_37 {dimension_numbers = #tpu.dot_dimension_numbers<[1], [0], [0], [1], [0, 0, 1, 1], [], []>} : vector<128x128xbf16>, vector<128x512xbf16>, vector<128x512xf32> -> vector<128x512xf32>
    %c0_38 = arith.constant 0 : index
    %c0_39 = arith.constant 0 : index
    %81 = vector.load %arg10[%c0_38, %c0_39] : memref<1x512xf32, #tpu.memory_space<vmem>>, vector<1x512xf32>
    %82 = vector.broadcast %81 : vector<1x512xf32> to vector<128x512xf32>
    %83 = arith.addf %80, %82 : vector<128x512xf32>
    %cst_40 = arith.constant 0.000000e+00 : f32
    %84 = vector.broadcast %cst_40 : f32 to vector<128x512xf32>
    %85 = arith.maximumf %83, %84 : vector<128x512xf32>
    %86 = arith.truncf %85 : vector<128x512xf32> to vector<128x512xbf16>
    %c0_41 = arith.constant 0 : index
    %c0_42 = arith.constant 0 : index
    %87 = vector.load %arg11[%c0_41, %c0_42] : memref<512x128xbf16, #tpu.memory_space<vmem>>, vector<512x128xbf16>
    %cst_43 = arith.constant dense<0.000000e+00> : vector<128x128xf32>
    %88 = tpu.matmul %86, %87, %cst_43 {dimension_numbers = #tpu.dot_dimension_numbers<[1], [0], [0], [1], [0, 0, 1, 1], [], []>} : vector<128x512xbf16>, vector<512x128xbf16>, vector<128x128xf32> -> vector<128x128xf32>
    %c0_44 = arith.constant 0 : index
    %c0_45 = arith.constant 0 : index
    %89 = vector.load %arg12[%c0_44, %c0_45] : memref<1x128xf32, #tpu.memory_space<vmem>>, vector<1x128xf32>
    %90 = vector.broadcast %89 : vector<1x128xf32> to vector<128x128xf32>
    %91 = arith.addf %88, %90 : vector<128x128xf32>
    %92 = arith.addf %77, %91 : vector<128x128xf32>
    %c0_46 = arith.constant 0 : index
    %c0_47 = arith.constant 0 : index
    %93 = vector.load %arg13[%c0_46, %c0_47] : memref<1x128xf32, #tpu.memory_space<vmem>>, vector<1x128xf32>
    %c0_48 = arith.constant 0 : index
    %c0_49 = arith.constant 0 : index
    %94 = vector.load %arg14[%c0_48, %c0_49] : memref<1x128xf32, #tpu.memory_space<vmem>>, vector<1x128xf32>
    %cst_50 = arith.constant dense<0.000000e+00> : vector<128xf32>
    %95 = vector.multi_reduction <add>, %92, %cst_50 [1] : vector<128x128xf32> to vector<128xf32>
    %96 = vector.shape_cast %95 : vector<128xf32> to vector<128x1xf32>
    %cst_51 = arith.constant 1.280000e+02 : f32
    %97 = vector.broadcast %cst_51 : f32 to vector<128x1xf32>
    %98 = arith.divf %96, %97 : vector<128x1xf32>
    %99 = vector.broadcast %98 : vector<128x1xf32> to vector<128x128xf32>
    %100 = arith.subf %92, %99 : vector<128x128xf32>
    %101 = arith.mulf %100, %100 : vector<128x128xf32>
    %cst_52 = arith.constant dense<0.000000e+00> : vector<128xf32>
    %102 = vector.multi_reduction <add>, %101, %cst_52 [1] : vector<128x128xf32> to vector<128xf32>
    %103 = vector.shape_cast %102 : vector<128xf32> to vector<128x1xf32>
    %cst_53 = arith.constant 1.280000e+02 : f32
    %104 = vector.broadcast %cst_53 : f32 to vector<128x1xf32>
    %105 = arith.divf %103, %104 : vector<128x1xf32>
    %cst_54 = arith.constant 9.99999974E-6 : f32
    %106 = vector.broadcast %cst_54 : f32 to vector<128x1xf32>
    %107 = arith.addf %105, %106 : vector<128x1xf32>
    %108 = math.rsqrt %107 : vector<128x1xf32>
    %109 = vector.broadcast %108 : vector<128x1xf32> to vector<128x128xf32>
    %110 = arith.mulf %100, %109 : vector<128x128xf32>
    %111 = vector.broadcast %93 : vector<1x128xf32> to vector<128x128xf32>
    %112 = arith.mulf %110, %111 : vector<128x128xf32>
    %113 = vector.broadcast %94 : vector<1x128xf32> to vector<128x128xf32>
    %114 = arith.addf %112, %113 : vector<128x128xf32>
    %c0_55 = arith.constant 0 : index
    %c0_56 = arith.constant 0 : index
    %c0_57 = arith.constant 0 : index
    %115 = vector.load %arg15[%c0_55, %c0_56, %c0_57] : memref<1x128x128xf32, #tpu.memory_space<vmem>>, vector<1x128x128xf32>
    %116 = vector.shape_cast %115 : vector<1x128x128xf32> to vector<128x128xf32>
    %117 = vector.shape_cast %114 : vector<128x128xf32> to vector<1x128x128xf32>
    tpu.vector_store %arg15[%c0_55, %c0_56, %c0_57], %117 {strides = array<i32>} : memref<1x128x128xf32, #tpu.memory_space<vmem>>, vector<1x128x128xf32>,
    return
  }
  func.func @transform_0(%arg0: i32, %arg1: i32) -> (i32, i32, i32) {
    %c0_i32 = arith.constant 0 : i32
    %c0_i32_0 = arith.constant 0 : i32
    %c0_i32_1 = arith.constant 0 : i32
    return %arg0, %c0_i32, %c0_i32_0 : i32, i32, i32
  }
  func.func @transform_1(%arg0: i32, %arg1: i32) -> (i32, i32) {
    %c0_i32 = arith.constant 0 : i32
    %c0_i32_0 = arith.constant 0 : i32
    %c0_i32_1 = arith.constant 0 : i32
    return %c0_i32, %c0_i32_0 : i32, i32
  }
  func.func @transform_2(%arg0: i32, %arg1: i32) -> (i32, i32) {
    %c0_i32 = arith.constant 0 : i32
    %c0_i32_0 = arith.constant 0 : i32
    %c0_i32_1 = arith.constant 0 : i32
    return %c0_i32, %c0_i32_0 : i32, i32
  }
  func.func @transform_3(%arg0: i32, %arg1: i32) -> (i32, i32) {
    %c0_i32 = arith.constant 0 : i32
    %c0_i32_0 = arith.constant 0 : i32
    %c0_i32_1 = arith.constant 0 : i32
    return %c0_i32, %c0_i32_0 : i32, i32
  }
  func.func @transform_4(%arg0: i32, %arg1: i32) -> (i32, i32) {
    %c0_i32 = arith.constant 0 : i32
    %c0_i32_0 = arith.constant 0 : i32
    %c0_i32_1 = arith.constant 0 : i32
    return %c0_i32, %c0_i32_0 : i32, i32
  }
  func.func @transform_5(%arg0: i32, %arg1: i32) -> (i32, i32) {
    %c0_i32 = arith.constant 0 : i32
    %c0_i32_0 = arith.constant 0 : i32
    %c0_i32_1 = arith.constant 0 : i32
    return %c0_i32, %c0_i32_0 : i32, i32
  }
  func.func @transform_6(%arg0: i32, %arg1: i32) -> (i32, i32) {
    %c0_i32 = arith.constant 0 : i32
    %c0_i32_0 = arith.constant 0 : i32
    %c0_i32_1 = arith.constant 0 : i32
    return %c0_i32, %c0_i32_0 : i32, i32
  }
  func.func @transform_7(%arg0: i32, %arg1: i32) -> (i32, i32) {
    %c0_i32 = arith.constant 0 : i32
    %c0_i32_0 = arith.constant 0 : i32
    %c0_i32_1 = arith.constant 0 : i32
    return %c0_i32, %c0_i32_0 : i32, i32
  }
  func.func @transform_8(%arg0: i32, %arg1: i32) -> (i32, i32) {
    %c0_i32 = arith.constant 0 : i32
    %c0_i32_0 = arith.constant 0 : i32
    %c0_i32_1 = arith.constant 0 : i32
    return %c0_i32, %c0_i32_0 : i32, i32
  }
  func.func @transform_9(%arg0: i32, %arg1: i32) -> (i32, i32) {
    %c0_i32 = arith.constant 0 : i32
    %c0_i32_0 = arith.constant 0 : i32
    %c0_i32_1 = arith.constant 0 : i32
    return %c0_i32, %c0_i32_0 : i32, i32
  }
  func.func @transform_10(%arg0: i32, %arg1: i32) -> (i32, i32) {
    %c0_i32 = arith.constant 0 : i32
    %c0_i32_0 = arith.constant 0 : i32
    %c0_i32_1 = arith.constant 0 : i32
    return %c0_i32, %c0_i32_0 : i32, i32
  }
  func.func @transform_11(%arg0: i32, %arg1: i32) -> (i32, i32) {
    %c0_i32 = arith.constant 0 : i32
    %c0_i32_0 = arith.constant 0 : i32
    %c0_i32_1 = arith.constant 0 : i32
    return %c0_i32, %c0_i32_0 : i32, i32
  }
  func.func @transform_12(%arg0: i32, %arg1: i32) -> (i32, i32) {
    %c0_i32 = arith.constant 0 : i32
    %c0_i32_0 = arith.constant 0 : i32
    %c0_i32_1 = arith.constant 0 : i32
    return %c0_i32, %c0_i32_0 : i32, i32
  }
  func.func @transform_13(%arg0: i32, %arg1: i32) -> (i32, i32, i32) {
    %c0_i32 = arith.constant 0 : i32
    %c0_i32_0 = arith.constant 0 : i32
    return %arg0, %arg1, %c0_i32 : i32, i32, i32
  }
}

</mosaic_0001>

<llo_original>
// kernel: tpu_custom_call.1
$region0: #{tpu_custom_call.1}
  #allocation0 [shape = 'u32[]', space=smem, size = 0x4, offset = 0x4, fixed_abs, tag = 'smem constant byte address 0x4 - core index']
  #allocation1 [shape = 'u32[144,128]{1,0:T(1,128)}', space=vmem, size = 0x12000, scoped, tag = 'internal scratch']
  #allocation2 [shape = 'bf16[4,256,32]{2,1,0:T(16,128)(2,1)}', space=vmem, size = 0x40000, scoped, tag = 'scratch operand']
  #allocation3 [shape = 'bf16[4,256,32]{2,1,0:T(16,128)(2,1)}', space=vmem, size = 0x40000, scoped, tag = 'scratch operand']
  #allocation4 [shape = 'bf16[4,256,32]{2,1,0:T(16,128)(2,1)}', space=vmem, size = 0x40000, scoped, tag = 'scratch operand']
  %s0 = inlined_call_operand.hbm [shape: f32[2,256,128], index: 0, kind: input, shape index: {}]
  %s1 = inlined_call_operand.hbm [shape: bf16[128,384], index: 1, kind: input, shape index: {}]
  %s2 = inlined_call_operand.vmem [shape: f32[1,384], index: 2, kind: input, shape index: {}]
  %s3 = inlined_call_operand.hbm [shape: bf16[128,128], index: 3, kind: input, shape index: {}]
  %s4 = inlined_call_operand.vmem [shape: f32[1,128], index: 4, kind: input, shape index: {}]
  %s5 = inlined_call_operand.vmem [shape: f32[1,128], index: 5, kind: input, shape index: {}]
  %s6 = inlined_call_operand.vmem [shape: f32[1,128], index: 6, kind: input, shape index: {}]
  %s7 = inlined_call_operand.hbm [shape: bf16[128,512], index: 7, kind: input, shape index: {}]
  %s8 = inlined_call_operand.vmem [shape: f32[1,512], index: 8, kind: input, shape index: {}]
  %s9 = inlined_call_operand.hbm [shape: bf16[512,128], index: 9, kind: input, shape index: {}]
  %s10 = inlined_call_operand.vmem [shape: f32[1,128], index: 10, kind: input, shape index: {}]
  %s11 = inlined_call_operand.vmem [shape: f32[1,128], index: 11, kind: input, shape index: {}]
  %s12 = inlined_call_operand.vmem [shape: f32[1,128], index: 12, kind: input, shape index: {}]
  %s13 = inlined_call_operand.hbm [shape: f32[2,256,128], index: 13, kind: output, shape index: {}]
  %s14 = sld [smem:[#allocation0]]
  $region109: #{tpu_custom_call.1} parent=0
    _
  %s16 = ssub.s32 1, %s14
  %s17 = scalar_select 0, %s16, %s14
  $region1: #{tpu_custom_call.1} parent=0
    #allocation5 [shape = 'u8[262144]{0}', space=vmem, size = 0x40000, scoped, tag = 'input window, operand 0']
    #allocation6 [shape = 's32[2]{0}', space=sflag, size = 0x8, scoped, tag = 'scoped memory for tpu_custom_call.1']
    #allocation7 [shape = 's32[2]{0}', space=sflag, size = 0x8, scoped, tag = 'scoped memory for tpu_custom_call.1']
    #allocation8 [shape = 'u8[98304]{0}', space=vmem, size = 0x18000, scoped, tag = 'input window, operand 1, single buffered']
    #allocation9 [shape = 's32[1]{0}', space=sflag, size = 0x4, scoped, tag = 'scoped memory for tpu_custom_call.1']
    #allocation10 [shape = 'u8[32768]{0}', space=vmem, size = 0x8000, scoped, tag = 'input window, operand 3, single buffered']
    #allocation11 [shape = 'u8[131072]{0}', space=vmem, size = 0x20000, scoped, tag = 'input window, operand 7, single buffered']
    #allocation12 [shape = 's32[1]{0}', space=sflag, size = 0x4, scoped, tag = 'scoped memory for tpu_custom_call.1']
    #allocation13 [shape = 'u8[131072]{0}', space=vmem, size = 0x20000, scoped, tag = 'input window, operand 9, single buffered']
    #allocation14 [shape = 'u8[131072]{0}', space=vmem, size = 0x20000, scoped, tag = 'output window, operand 0']
    %18 = vsyncpa [#allocation6], 0
    %s19 = scalar_lea.sflag [#allocation6], 1
    %20 = vsyncpa %s19, 0
    %21 = vsyncpa [#allocation9], 0
    %22 = vsyncpa [#allocation12], 0
    %23 = vsyncpa [#allocation7], 0
    %s24 = scalar_lea.sflag [#allocation7], 1
    %25 = vsyncpa %s24, 0
    loop: start=0, step=1, limit=6
    $region2: #{tpu_custom_call.1} parent=1 // loop_pre_header
      _
    $region3: #{tpu_custom_call.1} parent=1 // loop_header
      %s27 = sphi 0, %s31
      %p28 = scmp.ge.s32.totalorder %s27, 6
      %s34 = sphi 0, %s46
      %s35 = sphi 0, %s42
      %s36 = sphi 0, %s34
      %s37 = sphi 0, %s35
      %s38 = sphi 0, %s36
      %s39 = sphi 0, %s37
      %s49 = sphi 0, %s51
      %s52 = sphi 0, %s49
      %s53 = sphi 0, %s52
      %s69 = sphi 0, %s53
      %s73 = sphi 0, %s73
      %s75 = sphi 0, %s73
      %s76 = sphi 0, %s75
      %s90 = sphi 0, %s76
      %s94 = sphi 0, %s94
      %s96 = sphi 0, %s94
      %s97 = sphi 0, %s96
      %s111 = sphi 0, %s97
      %s115 = sphi 0, %s115
      %s117 = sphi 0, %s115
      %s118 = sphi 0, %s117
      %s132 = sphi 0, %s118
      %s136 = sphi 0, %s136
      %s138 = sphi 0, %s136
      %s139 = sphi 0, %s138
      %s153 = sphi 0, %s139
      %s157 = sphi 0, %s157
      %s159 = sphi 0, %s157
      %s160 = sphi 0, %s159
      %s174 = sphi 0, %s160
      %s178 = sphi 0, %s178
      %s180 = sphi 0, %s178
      %s181 = sphi 0, %s180
      %s195 = sphi 0, %s181
      %s199 = sphi 0, %s199
      %s201 = sphi 0, %s199
      %s202 = sphi 0, %s201
      %s216 = sphi 0, %s202
      %s220 = sphi 0, %s220
      %s222 = sphi 0, %s220
      %s223 = sphi 0, %s222
      %s237 = sphi 0, %s223
      %s241 = sphi 0, %s241
      %s243 = sphi 0, %s241
      %s244 = sphi 0, %s243
      %s258 = sphi 0, %s244
      %s262 = sphi 0, %s262
      %s264 = sphi 0, %s262
      %s265 = sphi 0, %s264
      %s279 = sphi 0, %s265
      %s283 = sphi 0, %s283
      %s285 = sphi 0, %s283
      %s286 = sphi 0, %s285
      %s300 = sphi 0, %s286
      %s304 = sphi 0, %s304
      %s306 = sphi 0, %s304
      %s307 = sphi 0, %s306
      %s321 = sphi 0, %s307
      %s329 = sphi 0, %s331
      %s332 = sphi 0, %s329
      %s333 = sphi 0, %s332
      %s349 = sphi 0, %s333
    $region4: #{tpu_custom_call.1} parent=1 // loop_header_branch
      %30 = sbr.rel (%p28) target = $region8
    $region5: #{tpu_custom_call.1} parent=1 // loop_body
      %s32 = ssub.s32 %s27, 1
      %s33 = ssub.s32 %s27, 2
      %s40 = sadd.s32 1, %s35
      %p41 = scmp.ge.s32.totalorder %s40, 2
      %s42 = scalar_select %p41, 0, %s40
      %s43 = sadd.s32 1, %s34
      %s44 = scalar_select %p41, %s43, %s34
      %p45 = scmp.ge.s32.totalorder %s44, 2
      %s46 = scalar_select %p45, 0, %s44
      %s47 = ssub.s32 %s34, %s46
      %p48 = scmp.eq.s32.totalorder %s47, 0
      %s50 = sadd.s32 %s49, 1
      %s51 = scalar_select %p48, %s49, %s50
      %p54 = pneg %p48
      %p55 = scmp.eq.s32.totalorder %s27, 3
      %p56 = por %p54, %p55
      %p57 = scmp.ne.s32.totalorder %s49, %s52
      %p58 = scmp.eq.s32.totalorder %s27, 0
      %p59 = por %p57, %p58
      %p60 = scmp.ne.s32.totalorder %s49, %s52
      %p61 = scmp.eq.s32.totalorder %s32, 3
      %p62 = por %p60, %p61
      %p63 = scmp.ne.s32.totalorder %s52, %s53
      %p64 = scmp.eq.s32.totalorder %s32, 0
      %p65 = por %p63, %p64
      %p66 = scmp.ne.s32.totalorder %s52, %s53
      %p67 = scmp.eq.s32.totalorder %s33, 3
      %p68 = por %p66, %p67
      %p70 = scmp.ne.s32.totalorder %s53, %s69
      %p71 = scmp.eq.s32.totalorder %s33, 0
      %p72 = por %p70, %p71
      %s74 = sadd.s32 %s73, 1
      %p77 = scmp.eq.s32.totalorder %s27, 3
      %p78 = scmp.ne.s32.totalorder %s73, %s75
      %p79 = scmp.eq.s32.totalorder %s27, 0
      %p80 = por %p78, %p79
      %p81 = scmp.ne.s32.totalorder %s73, %s75
      %p82 = scmp.eq.s32.totalorder %s32, 3
      %p83 = por %p81, %p82
      %p84 = scmp.ne.s32.totalorder %s75, %s76
      %p85 = scmp.eq.s32.totalorder %s32, 0
      %p86 = por %p84, %p85
      %p87 = scmp.ne.s32.totalorder %s75, %s76
      %p88 = scmp.eq.s32.totalorder %s33, 3
      %p89 = por %p87, %p88
      %p91 = scmp.ne.s32.totalorder %s76, %s90
      %p92 = scmp.eq.s32.totalorder %s33, 0
      %p93 = por %p91, %p92
      %s95 = sadd.s32 %s94, 1
      %p98 = scmp.eq.s32.totalorder %s27, 3
      %p99 = scmp.ne.s32.totalorder %s94, %s96
      %p100 = scmp.eq.s32.totalorder %s27, 0
      %p101 = por %p99, %p100
      %p102 = scmp.ne.s32.totalorder %s94, %s96
      %p103 = scmp.eq.s32.totalorder %s32, 3
      %p104 = por %p102, %p103
      %p105 = scmp.ne.s32.totalorder %s96, %s97
      %p106 = scmp.eq.s32.totalorder %s32, 0
      %p107 = por %p105, %p106
      %p108 = scmp.ne.s32.totalorder %s96, %s97
      %p109 = scmp.eq.s32.totalorder %s33, 3
      %p110 = por %p108, %p109
      %p112 = scmp.ne.s32.totalorder %s97, %s111
      %p113 = scmp.eq.s32.totalorder %s33, 0
      %p114 = por %p112, %p113
      %s116 = sadd.s32 %s115, 1
      %p119 = scmp.eq.s32.totalorder %s27, 3
      %p120 = scmp.ne.s32.totalorder %s115, %s117
      %p121 = scmp.eq.s32.totalorder %s27, 0
      %p122 = por %p120, %p121
      %p123 = scmp.ne.s32.totalorder %s115, %s117
      %p124 = scmp.eq.s32.totalorder %s32, 3
      %p125 = por %p123, %p124
      %p126 = scmp.ne.s32.totalorder %s117, %s118
      %p127 = scmp.eq.s32.totalorder %s32, 0
      %p128 = por %p126, %p127
      %p129 = scmp.ne.s32.totalorder %s117, %s118
      %p130 = scmp.eq.s32.totalorder %s33, 3
      %p131 = por %p129, %p130
      %p133 = scmp.ne.s32.totalorder %s118, %s132
      %p134 = scmp.eq.s32.totalorder %s33, 0
      %p135 = por %p133, %p134
      %s137 = sadd.s32 %s136, 1
      %p140 = scmp.eq.s32.totalorder %s27, 3
      %p141 = scmp.ne.s32.totalorder %s136, %s138
      %p142 = scmp.eq.s32.totalorder %s27, 0
      %p143 = por %p141, %p142
      %p144 = scmp.ne.s32.totalorder %s136, %s138
      %p145 = scmp.eq.s32.totalorder %s32, 3
      %p146 = por %p144, %p145
      %p147 = scmp.ne.s32.totalorder %s138, %s139
      %p148 = scmp.eq.s32.totalorder %s32, 0
      %p149 = por %p147, %p148
      %p150 = scmp.ne.s32.totalorder %s138, %s139
      %p151 = scmp.eq.s32.totalorder %s33, 3
      %p152 = por %p150, %p151
      %p154 = scmp.ne.s32.totalorder %s139, %s153
      %p155 = scmp.eq.s32.totalorder %s33, 0
      %p156 = por %p154, %p155
      %s158 = sadd.s32 %s157, 1
      %p161 = scmp.eq.s32.totalorder %s27, 3
      %p162 = scmp.ne.s32.totalorder %s157, %s159
      %p163 = scmp.eq.s32.totalorder %s27, 0
      %p164 = por %p162, %p163
      %p165 = scmp.ne.s32.totalorder %s157, %s159
      %p166 = scmp.eq.s32.totalorder %s32, 3
      %p167 = por %p165, %p166
      %p168 = scmp.ne.s32.totalorder %s159, %s160
      %p169 = scmp.eq.s32.totalorder %s32, 0
      %p170 = por %p168, %p169
      %p171 = scmp.ne.s32.totalorder %s159, %s160
      %p172 = scmp.eq.s32.totalorder %s33, 3
      %p173 = por %p171, %p172
      %p175 = scmp.ne.s32.totalorder %s160, %s174
      %p176 = scmp.eq.s32.totalorder %s33, 0
      %p177 = por %p175, %p176
      %s179 = sadd.s32 %s178, 1
      %p182 = scmp.eq.s32.totalorder %s27, 3
      %p183 = scmp.ne.s32.totalorder %s178, %s180
      %p184 = scmp.eq.s32.totalorder %s27, 0
      %p185 = por %p183, %p184
      %p186 = scmp.ne.s32.totalorder %s178, %s180
      %p187 = scmp.eq.s32.totalorder %s32, 3
      %p188 = por %p186, %p187
      %p189 = scmp.ne.s32.totalorder %s180, %s181
      %p190 = scmp.eq.s32.totalorder %s32, 0
      %p191 = por %p189, %p190
      %p192 = scmp.ne.s32.totalorder %s180, %s181
      %p193 = scmp.eq.s32.totalorder %s33, 3
      %p194 = por %p192, %p193
      %p196 = scmp.ne.s32.totalorder %s181, %s195
      %p197 = scmp.eq.s32.totalorder %s33, 0
      %p198 = por %p196, %p197
      %s200 = sadd.s32 %s199, 1
      %p203 = scmp.eq.s32.totalorder %s27, 3
      %p204 = scmp.ne.s32.totalorder %s199, %s201
      %p205 = scmp.eq.s32.totalorder %s27, 0
      %p206 = por %p204, %p205
      %p207 = scmp.ne.s32.totalorder %s199, %s201
      %p208 = scmp.eq.s32.totalorder %s32, 3
      %p209 = por %p207, %p208
      %p210 = scmp.ne.s32.totalorder %s201, %s202
      %p211 = scmp.eq.s32.totalorder %s32, 0
      %p212 = por %p210, %p211
      %p213 = scmp.ne.s32.totalorder %s201, %s202
      %p214 = scmp.eq.s32.totalorder %s33, 3
      %p215 = por %p213, %p214
      %p217 = scmp.ne.s32.totalorder %s202, %s216
      %p218 = scmp.eq.s32.totalorder %s33, 0
      %p219 = por %p217, %p218
      %s221 = sadd.s32 %s220, 1
      %p224 = scmp.eq.s32.totalorder %s27, 3
      %p225 = scmp.ne.s32.totalorder %s220, %s222
      %p226 = scmp.eq.s32.totalorder %s27, 0
      %p227 = por %p225, %p226
      %p228 = scmp.ne.s32.totalorder %s220, %s222
      %p229 = scmp.eq.s32.totalorder %s32, 3
      %p230 = por %p228, %p229
      %p231 = scmp.ne.s32.totalorder %s222, %s223
      %p232 = scmp.eq.s32.totalorder %s32, 0
      %p233 = por %p231, %p232
      %p234 = scmp.ne.s32.totalorder %s222, %s223
      %p235 = scmp.eq.s32.totalorder %s33, 3
      %p236 = por %p234, %p235
      %p238 = scmp.ne.s32.totalorder %s223, %s237
      %p239 = scmp.eq.s32.totalorder %s33, 0
      %p240 = por %p238, %p239
      %s242 = sadd.s32 %s241, 1
      %p245 = scmp.eq.s32.totalorder %s27, 3
      %p246 = scmp.ne.s32.totalorder %s241, %s243
      %p247 = scmp.eq.s32.totalorder %s27, 0
      %p248 = por %p246, %p247
      %p249 = scmp.ne.s32.totalorder %s241, %s243
      %p250 = scmp.eq.s32.totalorder %s32, 3
      %p251 = por %p249, %p250
      %p252 = scmp.ne.s32.totalorder %s243, %s244
      %p253 = scmp.eq.s32.totalorder %s32, 0
      %p254 = por %p252, %p253
      %p255 = scmp.ne.s32.totalorder %s243, %s244
      %p256 = scmp.eq.s32.totalorder %s33, 3
      %p257 = por %p255, %p256
      %p259 = scmp.ne.s32.totalorder %s244, %s258
      %p260 = scmp.eq.s32.totalorder %s33, 0
      %p261 = por %p259, %p260
      %s263 = sadd.s32 %s262, 1
      %p266 = scmp.eq.s32.totalorder %s27, 3
      %p267 = scmp.ne.s32.totalorder %s262, %s264
      %p268 = scmp.eq.s32.totalorder %s27, 0
      %p269 = por %p267, %p268
      %p270 = scmp.ne.s32.totalorder %s262, %s264
      %p271 = scmp.eq.s32.totalorder %s32, 3
      %p272 = por %p270, %p271
      %p273 = scmp.ne.s32.totalorder %s264, %s265
      %p274 = scmp.eq.s32.totalorder %s32, 0
      %p275 = por %p273, %p274
      %p276 = scmp.ne.s32.totalorder %s264, %s265
      %p277 = scmp.eq.s32.totalorder %s33, 3
      %p278 = por %p276, %p277
      %p280 = scmp.ne.s32.totalorder %s265, %s279
      %p281 = scmp.eq.s32.totalorder %s33, 0
      %p282 = por %p280, %p281
      %s284 = sadd.s32 %s283, 1
      %p287 = scmp.eq.s32.totalorder %s27, 3
      %p288 = scmp.ne.s32.totalorder %s283, %s285
      %p289 = scmp.eq.s32.totalorder %s27, 0
      %p290 = por %p288, %p289
      %p291 = scmp.ne.s32.totalorder %s283, %s285
      %p292 = scmp.eq.s32.totalorder %s32, 3
      %p293 = por %p291, %p292
      %p294 = scmp.ne.s32.totalorder %s285, %s286
      %p295 = scmp.eq.s32.totalorder %s32, 0
      %p296 = por %p294, %p295
      %p297 = scmp.ne.s32.totalorder %s285, %s286
      %p298 = scmp.eq.s32.totalorder %s33, 3
      %p299 = por %p297, %p298
      %p301 = scmp.ne.s32.totalorder %s286, %s300
      %p302 = scmp.eq.s32.totalorder %s33, 0
      %p303 = por %p301, %p302
      %s305 = sadd.s32 %s304, 1
      %p308 = scmp.eq.s32.totalorder %s27, 3
      %p309 = scmp.ne.s32.totalorder %s304, %s306
      %p310 = scmp.eq.s32.totalorder %s27, 0
      %p311 = por %p309, %p310
      %p312 = scmp.ne.s32.totalorder %s304, %s306
      %p313 = scmp.eq.s32.totalorder %s32, 3
      %p314 = por %p312, %p313
      %p315 = scmp.ne.s32.totalorder %s306, %s307
      %p316 = scmp.eq.s32.totalorder %s32, 0
      %p317 = por %p315, %p316
      %p318 = scmp.ne.s32.totalorder %s306, %s307
      %p319 = scmp.eq.s32.totalorder %s33, 3
      %p320 = por %p318, %p319
      %p322 = scmp.ne.s32.totalorder %s307, %s321
      %p323 = scmp.eq.s32.totalorder %s33, 0
      %p324 = por %p322, %p323
      %s325 = ssub.s32 %s34, %s46
      %s326 = ssub.s32 %s35, %s42
      %s327 = sor.u32 %s325, %s326
      %p328 = scmp.eq.s32.totalorder %s327, 0
      %s330 = sadd.s32 %s329, 1
      %s331 = scalar_select %p328, %s329, %s330
      %p334 = pneg %p328
      %p335 = scmp.eq.s32.totalorder %s27, 3
      %p336 = por %p334, %p335
      %p337 = scmp.ne.s32.totalorder %s329, %s332
      %p338 = scmp.eq.s32.totalorder %s27, 0
      %p339 = por %p337, %p338
      %p340 = scmp.ne.s32.totalorder %s329, %s332
      %p341 = scmp.eq.s32.totalorder %s32, 3
      %p342 = por %p340, %p341
      %p343 = scmp.ne.s32.totalorder %s332, %s333
      %p344 = scmp.eq.s32.totalorder %s32, 0
      %p345 = por %p343, %p344
      %p346 = scmp.ne.s32.totalorder %s332, %s333
      %p347 = scmp.eq.s32.totalorder %s33, 3
      %p348 = por %p346, %p347
      %p350 = scmp.ne.s32.totalorder %s333, %s349
      %p351 = scmp.eq.s32.totalorder %s33, 0
      %p352 = por %p350, %p351
      %p353 = scmp.le.s32.totalorder 1, %s27
      %p354 = scmp.lt.s32.totalorder %s27, 5
      %p355 = pnand %p353, %p354
      %p356 = pneg %p355
      // Predicated region
      $region9: #{tpu_custom_call.1} parent=5 // pred_check
        _
      $region10: #{tpu_custom_call.1} parent=5 // pred_check_branch
        %358 = sbr.rel (%p355) target = $region12
      $region11: #{tpu_custom_call.1} parent=5 // pred_region
        %s359 = ssub.s32 %s27, 1
        // Predicated region
        $region13: #{tpu_custom_call.1} parent=11 // pred_check
          %p360 = pneg %p86
        $region14: #{tpu_custom_call.1} parent=11 // pred_check_branch
          %362 = sbr.rel (%p360) target = $region16
        $region15: #{tpu_custom_call.1} parent=11 // pred_region
          %s364 = ssub.s32 3072, 3072
          %365 = vsyncadd [#allocation9], %s364
          %s366 = sshll.u32 [#allocation8], 4
          %s367 = int_to_ptr.vmem [resolvable:$true] %s366
          %372 = dma.hbm_to_vmem [thread:$0]  %s1, 3072, %s367, [#allocation9], 192, 192, 12
        $region16: #{tpu_custom_call.1} parent=11 // pred_fallthru
          _
        // Predicated region
        $region17: #{tpu_custom_call.1} parent=11 // pred_check
          %p373 = pneg %p107
        $region18: #{tpu_custom_call.1} parent=11 // pred_check_branch
          %375 = sbr.rel (%p373) target = $region20
        $region19: #{tpu_custom_call.1} parent=11 // pred_region
          _
        $region20: #{tpu_custom_call.1} parent=11 // pred_fallthru
          _
        // Predicated region
        $region21: #{tpu_custom_call.1} parent=11 // pred_check
          %p376 = pneg %p128
        $region22: #{tpu_custom_call.1} parent=11 // pred_check_branch
          %378 = sbr.rel (%p376) target = $region24
        $region23: #{tpu_custom_call.1} parent=11 // pred_region
          %s380 = ssub.s32 1024, 1024
          %381 = vsyncadd [#allocation9], %s380
          %s382 = sshll.u32 [#allocation10], 4
          %s383 = int_to_ptr.vmem [resolvable:$true] %s382
          %388 = dma.hbm_to_vmem [thread:$0]  %s3, 1024, %s383, [#allocation9], 64, 64, 4
        $region24: #{tpu_custom_call.1} parent=11 // pred_fallthru
          _
        // Predicated region
        $region25: #{tpu_custom_call.1} parent=11 // pred_check
          %p389 = pneg %p149
        $region26: #{tpu_custom_call.1} parent=11 // pred_check_branch
          %391 = sbr.rel (%p389) target = $region28
        $region27: #{tpu_custom_call.1} parent=11 // pred_region
          _
        $region28: #{tpu_custom_call.1} parent=11 // pred_fallthru
          _
        // Predicated region
        $region29: #{tpu_custom_call.1} parent=11 // pred_check
          %p392 = pneg %p170
        $region30: #{tpu_custom_call.1} parent=11 // pred_check_branch
          %394 = sbr.rel (%p392) target = $region32
        $region31: #{tpu_custom_call.1} parent=11 // pred_region
          _
        $region32: #{tpu_custom_call.1} parent=11 // pred_fallthru
          _
        // Predicated region
        $region33: #{tpu_custom_call.1} parent=11 // pred_check
          %p395 = pneg %p191
        $region34: #{tpu_custom_call.1} parent=11 // pred_check_branch
          %397 = sbr.rel (%p395) target = $region36
        $region35: #{tpu_custom_call.1} parent=11 // pred_region
          _
        $region36: #{tpu_custom_call.1} parent=11 // pred_fallthru
          _
        // Predicated region
        $region37: #{tpu_custom_call.1} parent=11 // pred_check
          %p398 = pneg %p212
        $region38: #{tpu_custom_call.1} parent=11 // pred_check_branch
          %400 = sbr.rel (%p398) target = $region40
        $region39: #{tpu_custom_call.1} parent=11 // pred_region
          %s402 = ssub.s32 4096, 4096
          %403 = vsyncadd [#allocation12], %s402
          %s404 = sshll.u32 [#allocation11], 4
          %s405 = int_to_ptr.vmem [resolvable:$true] %s404
          %410 = dma.hbm_to_vmem [thread:$0]  %s7, 4096, %s405, [#allocation12], 256, 256, 16
        $region40: #{tpu_custom_call.1} parent=11 // pred_fallthru
          _
        // Predicated region
        $region41: #{tpu_custom_call.1} parent=11 // pred_check
          %p411 = pneg %p233
        $region42: #{tpu_custom_call.1} parent=11 // pred_check_branch
          %413 = sbr.rel (%p411) target = $region44
        $region43: #{tpu_custom_call.1} parent=11 // pred_region
          _
        $region44: #{tpu_custom_call.1} parent=11 // pred_fallthru
          _
        // Predicated region
        $region45: #{tpu_custom_call.1} parent=11 // pred_check
          %p414 = pneg %p254
        $region46: #{tpu_custom_call.1} parent=11 // pred_check_branch
          %416 = sbr.rel (%p414) target = $region48
        $region47: #{tpu_custom_call.1} parent=11 // pred_region
          %s418 = ssub.s32 4096, 4096
          %419 = vsyncadd [#allocation12], %s418
          %s420 = sshll.u32 [#allocation13], 4
          %s421 = int_to_ptr.vmem [resolvable:$true] %s420
          %426 = dma.hbm_to_vmem [thread:$0]  %s9, 4096, %s421, [#allocation12], 64, 64, 4
        $region48: #{tpu_custom_call.1} parent=11 // pred_fallthru
          _
        // Predicated region
        $region49: #{tpu_custom_call.1} parent=11 // pred_check
          %p427 = pneg %p275
        $region50: #{tpu_custom_call.1} parent=11 // pred_check_branch
          %429 = sbr.rel (%p427) target = $region52
        $region51: #{tpu_custom_call.1} parent=11 // pred_region
          _
        $region52: #{tpu_custom_call.1} parent=11 // pred_fallthru
          _
        // Predicated region
        $region53: #{tpu_custom_call.1} parent=11 // pred_check
          %p430 = pneg %p296
        $region54: #{tpu_custom_call.1} parent=11 // pred_check_branch
          %432 = sbr.rel (%p430) target = $region56
        $region55: #{tpu_custom_call.1} parent=11 // pred_region
          _
        $region56: #{tpu_custom_call.1} parent=11 // pred_fallthru
          _
        // Predicated region
        $region57: #{tpu_custom_call.1} parent=11 // pred_check
          %p433 = pneg %p317
        $region58: #{tpu_custom_call.1} parent=11 // pred_check_branch
          %435 = sbr.rel (%p433) target = $region60
        $region59: #{tpu_custom_call.1} parent=11 // pred_region
          _
        $region60: #{tpu_custom_call.1} parent=11 // pred_fallthru
          _
      $region12: #{tpu_custom_call.1} parent=5 // pred_fallthru
        _
      %p436 = scmp.lt.s32.totalorder %s27, 4
      // Predicated region
      $region61: #{tpu_custom_call.1} parent=5 // pred_check
        %p437 = pneg %p436
      $region62: #{tpu_custom_call.1} parent=5 // pred_check_branch
        %439 = sbr.rel (%p437) target = $region64
      $region63: #{tpu_custom_call.1} parent=5 // pred_region
        // Predicated region
        $region65: #{tpu_custom_call.1} parent=63 // pred_check
          %p440 = pneg %p59
        $region66: #{tpu_custom_call.1} parent=63 // pred_check_branch
          %442 = sbr.rel (%p440) target = $region68
        $region67: #{tpu_custom_call.1} parent=63 // pred_region
          %s443 = sand.u32 %s49, 1
          %s444 = scalar_lea.sflag [#allocation6], %s443
          %s445 = sand.u32 %s49, 1
          %s446 = smul.addr %s445, 256
          %s447 = scalar_lea.vmem [#allocation5], %s446
          %s449 = ssub.s32 4096, 4096
          %450 = vsyncadd %s444, %s449
          %s451 = smul.addr %s34, 32
          %s452 = smul.addr %s451, 128
          %s453 = scalar_lea.hbm %s0, %s452
          %s454 = sshll.u32 %s447, 4
          %s455 = int_to_ptr.vmem [resolvable:$true] %s454
          %460 = dma.hbm_to_vmem [thread:$0]  %s453, 4096, %s455, %s444, 128, 128, 8
        $region68: #{tpu_custom_call.1} parent=63 // pred_fallthru
          _
      $region64: #{tpu_custom_call.1} parent=5 // pred_fallthru
        _
      %p461 = scmp.le.s32.totalorder 1, %s27
      %p462 = scmp.lt.s32.totalorder %s27, 5
      %p463 = pnand %p461, %p462
      %p464 = pneg %p463
      // Predicated region
      $region69: #{tpu_custom_call.1} parent=5 // pred_check
        _
      $region70: #{tpu_custom_call.1} parent=5 // pred_check_branch
        %466 = sbr.rel (%p463) target = $region72
      $region71: #{tpu_custom_call.1} parent=5 // pred_region
        %s467 = ssub.s32 %s27, 1
        %s468 = sand.u32 %s52, 1
        %s469 = scalar_lea.sflag [#allocation6], %s468
        %s470 = sand.u32 %s52, 1
        %s471 = smul.addr %s470, 256
        %s472 = scalar_lea.vmem [#allocation5], %s471
        // Predicated region
        $region73: #{tpu_custom_call.1} parent=71 // pred_check
          %p473 = pneg %p65
        $region74: #{tpu_custom_call.1} parent=71 // pred_check_branch
          %475 = sbr.rel (%p473) target = $region76
        $region75: #{tpu_custom_call.1} parent=71 // pred_region
          %476 = dma.done %s469, 4096
        $region76: #{tpu_custom_call.1} parent=71 // pred_fallthru
          _
        // Predicated region
        $region77: #{tpu_custom_call.1} parent=71 // pred_check
          %p477 = pneg %p86
        $region78: #{tpu_custom_call.1} parent=71 // pred_check_branch
          %479 = sbr.rel (%p477) target = $region80
        $region79: #{tpu_custom_call.1} parent=71 // pred_region
          %480 = dma.done [#allocation9], 3072
        $region80: #{tpu_custom_call.1} parent=71 // pred_fallthru
          _
        // Predicated region
        $region81: #{tpu_custom_call.1} parent=71 // pred_check
          %p481 = pneg %p128
        $region82: #{tpu_custom_call.1} parent=71 // pred_check_branch
          %483 = sbr.rel (%p481) target = $region84
        $region83: #{tpu_custom_call.1} parent=71 // pred_region
          %484 = dma.done [#allocation9], 1024
        $region84: #{tpu_custom_call.1} parent=71 // pred_fallthru
          _
        // Predicated region
        $region85: #{tpu_custom_call.1} parent=71 // pred_check
          %p485 = pneg %p212
        $region86: #{tpu_custom_call.1} parent=71 // pred_check_branch
          %487 = sbr.rel (%p485) target = $region88
        $region87: #{tpu_custom_call.1} parent=71 // pred_region
          %488 = dma.done [#allocation12], 4096
        $region88: #{tpu_custom_call.1} parent=71 // pred_fallthru
          _
        // Predicated region
        $region89: #{tpu_custom_call.1} parent=71 // pred_check
          %p489 = pneg %p254
        $region90: #{tpu_custom_call.1} parent=71 // pred_check_branch
          %491 = sbr.rel (%p489) target = $region92
        $region91: #{tpu_custom_call.1} parent=71 // pred_region
          %492 = dma.done [#allocation12], 4096
        $region92: #{tpu_custom_call.1} parent=71 // pred_fallthru
          _
        %s493 = sand.u32 %s52, 1
        %s494 = scalar_lea.sflag [#allocation6], %s493
        %s495 = sand.u32 %s52, 1
        %s496 = smul.addr %s495, 256
        %s497 = scalar_lea.vmem [#allocation5], %s496
        %p498 = pneg %p65
        %p499 = pneg %p62
        %p500 = pneg %p86
        %p501 = pneg %p83
        %p502 = pneg %p107
        %p503 = pneg %p104
        %p504 = pneg %p128
        %p505 = pneg %p125
        %p506 = pneg %p149
        %p507 = pneg %p146
        %p508 = pneg %p170
        %p509 = pneg %p167
        %p510 = pneg %p191
        %p511 = pneg %p188
        %p512 = pneg %p212
        %p513 = pneg %p209
        %p514 = pneg %p233
        %p515 = pneg %p230
        %p516 = pneg %p254
        %p517 = pneg %p251
        %p518 = pneg %p275
        %p519 = pneg %p272
        %p520 = pneg %p296
        %p521 = pneg %p293
        %p522 = pneg %p317
        %p523 = pneg %p314
        %p524 = pneg %p345
        %p525 = pneg %p342
        %s526 = sand.u32 %s332, 1
        %s527 = scalar_lea.sflag [#allocation7], %s526
        %s528 = sand.u32 %s332, 1
        %s529 = smul.addr %s528, 128
        %s530 = scalar_lea.vmem [#allocation14], %s529
        %s531 = smul.u32 16, %s37
        %p533 = scmp.eq.s32.totalorder %s37, 0
        // Predicated region
        $region93: #{tpu_custom_call.1} parent=71 // pred_check
          %p534 = pneg %p533
        $region94: #{tpu_custom_call.1} parent=71 // pred_check_branch
          %536 = sbr.rel (%p534) target = $region96
        $region95: #{tpu_custom_call.1} parent=71 // pred_region
          %v537 = vld [vmem:[%s472] sm:$0xff]
          %v538 = vld [vmem:[%s472 + $0x8] sm:$0xff]
          %v539 = vld [vmem:[%s472 + $0x10] sm:$0xff]
          %v540 = vld [vmem:[%s472 + $0x18] sm:$0xff]
          %v541 = vld [vmem:[%s472 + $0x20] sm:$0xff]
          %v542 = vld [vmem:[%s472 + $0x28] sm:$0xff]
          %v543 = vld [vmem:[%s472 + $0x30] sm:$0xff]
          %v544 = vld [vmem:[%s472 + $0x38] sm:$0xff]
          %v545 = vld [vmem:[%s472 + $0x40] sm:$0xff]
          %v546 = vld [vmem:[%s472 + $0x48] sm:$0xff]
          %v547 = vld [vmem:[%s472 + $0x50] sm:$0xff]
          %v548 = vld [vmem:[%s472 + $0x58] sm:$0xff]
          %v549 = vld [vmem:[%s472 + $0x60] sm:$0xff]
          %v550 = vld [vmem:[%s472 + $0x68] sm:$0xff]
          %v551 = vld [vmem:[%s472 + $0x70] sm:$0xff]
          %v552 = vld [vmem:[%s472 + $0x78] sm:$0xff]
          %v553 = vld [vmem:[%s472 + $0x80] sm:$0xff]
          %v554 = vld [vmem:[%s472 + $0x88] sm:$0xff]
          %v555 = vld [vmem:[%s472 + $0x90] sm:$0xff]
          %v556 = vld [vmem:[%s472 + $0x98] sm:$0xff]
          %v557 = vld [vmem:[%s472 + $0xa0] sm:$0xff]
          %v558 = vld [vmem:[%s472 + $0xa8] sm:$0xff]
          %v559 = vld [vmem:[%s472 + $0xb0] sm:$0xff]
          %v560 = vld [vmem:[%s472 + $0xb8] sm:$0xff]
          %v561 = vld [vmem:[%s472 + $0xc0] sm:$0xff]
          %v562 = vld [vmem:[%s472 + $0xc8] sm:$0xff]
          %v563 = vld [vmem:[%s472 + $0xd0] sm:$0xff]
          %v564 = vld [vmem:[%s472 + $0xd8] sm:$0xff]
          %v565 = vld [vmem:[%s472 + $0xe0] sm:$0xff]
          %v566 = vld [vmem:[%s472 + $0xe8] sm:$0xff]
          %v567 = vld [vmem:[%s472 + $0xf0] sm:$0xff]
          %v568 = vld [vmem:[%s472 + $0xf8] sm:$0xff]
          %v569 = vpack.c.bf16 %v538, %v537
          %v570 = vpack.c.bf16 %v540, %v539
          %v571 = vpack.c.bf16 %v542, %v541
          %v572 = vpack.c.bf16 %v544, %v543
          %v573 = vpack.c.bf16 %v546, %v545
          %v574 = vpack.c.bf16 %v548, %v547
          %v575 = vpack.c.bf16 %v550, %v549
          %v576 = vpack.c.bf16 %v552, %v551
          %v577 = vpack.c.bf16 %v554, %v553
          %v578 = vpack.c.bf16 %v556, %v555
          %v579 = vpack.c.bf16 %v558, %v557
          %v580 = vpack.c.bf16 %v560, %v559
          %v581 = vpack.c.bf16 %v562, %v561
          %v582 = vpack.c.bf16 %v564, %v563
          %v583 = vpack.c.bf16 %v566, %v565
          %v584 = vpack.c.bf16 %v568, %v567
          %v585 = vld [vmem:[#allocation8] sm:$0xff]
          %v586 = vld [vmem:[#allocation8 + $0x8] sm:$0xf]
          %v587 = vld [vmem:[#allocation8 + $0xc] sm:$0xff]
          %v588 = vld [vmem:[#allocation8 + $0x14] sm:$0xf]
          %v589 = vld [vmem:[#allocation8 + $0x18] sm:$0xff]
          %v590 = vld [vmem:[#allocation8 + $0x20] sm:$0xf]
          %v591 = vld [vmem:[#allocation8 + $0x24] sm:$0xff]
          %v592 = vld [vmem:[#allocation8 + $0x2c] sm:$0xf]
          %v593 = vld [vmem:[#allocation8 + $0x30] sm:$0xff]
          %v594 = vld [vmem:[#allocation8 + $0x38] sm:$0xf]
          %v595 = vld [vmem:[#allocation8 + $0x3c] sm:$0xff]
          %v596 = vld [vmem:[#allocation8 + $0x44] sm:$0xf]
          %v597 = vld [vmem:[#allocation8 + $0x48] sm:$0xff]
          %v598 = vld [vmem:[#allocation8 + $0x50] sm:$0xf]
          %v599 = vld [vmem:[#allocation8 + $0x54] sm:$0xff]
          %v600 = vld [vmem:[#allocation8 + $0x5c] sm:$0xf]
          %v601 = vld [vmem:[#allocation8 + $0x60] sm:$0xff]
          %v602 = vld [vmem:[#allocation8 + $0x68] sm:$0xf]
          %v603 = vld [vmem:[#allocation8 + $0x6c] sm:$0xff]
          %v604 = vld [vmem:[#allocation8 + $0x74] sm:$0xf]
          %v605 = vld [vmem:[#allocation8 + $0x78] sm:$0xff]
          %v606 = vld [vmem:[#allocation8 + $0x80] sm:$0xf]
          %v607 = vld [vmem:[#allocation8 + $0x84] sm:$0xff]
          %v608 = vld [vmem:[#allocation8 + $0x8c] sm:$0xf]
          %v609 = vld [vmem:[#allocation8 + $0x90] sm:$0xff]
          %v610 = vld [vmem:[#allocation8 + $0x98] sm:$0xf]
          %v611 = vld [vmem:[#allocation8 + $0x9c] sm:$0xff]
          %v612 = vld [vmem:[#allocation8 + $0xa4] sm:$0xf]
          %v613 = vld [vmem:[#allocation8 + $0xa8] sm:$0xff]
          %v614 = vld [vmem:[#allocation8 + $0xb0] sm:$0xf]
          %v615 = vld [vmem:[#allocation8 + $0xb4] sm:$0xff]
          %v616 = vld [vmem:[#allocation8 + $0xbc] sm:$0xf]
          %v617 = vld [vmem:[%s2] sm:$0x7]
          %v619 = vlaneseq
          %v620 = vshrl.u32 %v619, 7
          %v621 = vsub.s32 0, %v620
          %v622 = vrot.slane %v617, %v621
          %v623 = vlaneseq
          %v624 = vshrl.u32 %v623, 7
          %v625 = vsub.s32 1, %v624
          %v626 = vrot.slane %v617, %v625
          %v627 = vlaneseq
          %v628 = vshrl.u32 %v627, 7
          %v629 = vsub.s32 2, %v628
          %v630 = vrot.slane %v617, %v629
          %v666 = vunpack.c.l.b16 %v585
          %v667 = vunpack.c.h.b16 %v585
          %v668 = vunpack.c.l.b16 %v586
          %v669 = vunpack.c.l.b16 %v587
          %v670 = vunpack.c.h.b16 %v587
          %v671 = vunpack.c.l.b16 %v588
          %v672 = vunpack.c.l.b16 %v589
          %v673 = vunpack.c.h.b16 %v589
          %v674 = vunpack.c.l.b16 %v590
          %v675 = vunpack.c.l.b16 %v591
          %v676 = vunpack.c.h.b16 %v591
          %v677 = vunpack.c.l.b16 %v592
          %v678 = vunpack.c.l.b16 %v593
          %v679 = vunpack.c.h.b16 %v593
          %v680 = vunpack.c.l.b16 %v594
          %v681 = vunpack.c.l.b16 %v595
          %v682 = vunpack.c.h.b16 %v595
          %v683 = vunpack.c.l.b16 %v596
          %v684 = vunpack.c.l.b16 %v597
          %v685 = vunpack.c.h.b16 %v597
          %v686 = vunpack.c.l.b16 %v598
          %v687 = vunpack.c.l.b16 %v599
          %v688 = vunpack.c.h.b16 %v599
          %v689 = vunpack.c.l.b16 %v600
          %v690 = vunpack.c.l.b16 %v601
          %v691 = vunpack.c.h.b16 %v601
          %v692 = vunpack.c.l.b16 %v602
          %v693 = vunpack.c.l.b16 %v603
          %v694 = vunpack.c.h.b16 %v603
          %v695 = vunpack.c.l.b16 %v604
          %v696 = vunpack.c.l.b16 %v605
          %v697 = vunpack.c.h.b16 %v605
          %v698 = vunpack.c.l.b16 %v606
          %v699 = vunpack.c.l.b16 %v607
          %v700 = vunpack.c.h.b16 %v607
          %v701 = vunpack.c.l.b16 %v608
          %v702 = vunpack.c.l.b16 %v609
          %v703 = vunpack.c.h.b16 %v609
          %v704 = vunpack.c.l.b16 %v610
          %v705 = vunpack.c.l.b16 %v611
          %v706 = vunpack.c.h.b16 %v611
          %v707 = vunpack.c.l.b16 %v612
          %v708 = vunpack.c.l.b16 %v613
          %v709 = vunpack.c.h.b16 %v613
          %v710 = vunpack.c.l.b16 %v614
          %v711 = vunpack.c.l.b16 %v615
          %v712 = vunpack.c.h.b16 %v615
          %v713 = vunpack.c.l.b16 %v616
          %v714 = vpack.c.b16 %v669, %v666
          %v715 = vpack.c.b16 %v670, %v667
          %v716 = vpack.c.b16 %v671, %v668
          %v717 = vpack.c.b16 %v675, %v672
          %v718 = vpack.c.b16 %v676, %v673
          %v719 = vpack.c.b16 %v677, %v674
          %v720 = vpack.c.b16 %v681, %v678
          %v721 = vpack.c.b16 %v682, %v679
          %v722 = vpack.c.b16 %v683, %v680
          %v723 = vpack.c.b16 %v687, %v684
          %v724 = vpack.c.b16 %v688, %v685
          %v725 = vpack.c.b16 %v689, %v686
          %v726 = vpack.c.b16 %v693, %v690
          %v727 = vpack.c.b16 %v694, %v691
          %v728 = vpack.c.b16 %v695, %v692
          %v729 = vpack.c.b16 %v699, %v696
          %v730 = vpack.c.b16 %v700, %v697
          %v731 = vpack.c.b16 %v701, %v698
          %v732 = vpack.c.b16 %v705, %v702
          %v733 = vpack.c.b16 %v706, %v703
          %v734 = vpack.c.b16 %v707, %v704
          %v735 = vpack.c.b16 %v711, %v708
          %v736 = vpack.c.b16 %v712, %v709
          %v737 = vpack.c.b16 %v713, %v710
          %762 = vmatprep.subr.bf16.mxu0 %v715
          %763 = vmatpush1.bf16.msra.mxu0 %v714
          %764 = vmatprep.subr.bf16.mxu0 %v718
          %765 = vmatpush1.bf16.msra.mxu0 %v717
          %766 = vmatprep.subr.bf16.mxu0 %v721
          %767 = vmatpush1.bf16.msra.mxu0 %v720
          %768 = vmatprep.subr.bf16.mxu0 %v724
          %769 = vmatpush1.bf16.msra.mxu0 %v723
          %770 = vmatprep.subr.bf16.mxu0 %v727
          %771 = vmatpush1.bf16.msra.mxu0 %v726
          %772 = vmatprep.subr.bf16.mxu0 %v730
          %773 = vmatpush1.bf16.msra.mxu0 %v729
          %774 = vmatprep.subr.bf16.mxu0 %v733
          %775 = vmatpush1.bf16.msra.mxu0 %v732
          %776 = vmatprep.subr.bf16.mxu0 %v736
          %777 = vmatpush1.bf16.msra.mxu0 %v735
          %778 = vmatprep.subr.bf16.mxu0 0
          %779 = vmatpush1.bf16.msra.mxu0 0
          %780 = vmatprep.subr.bf16.mxu0 0
          %781 = vmatpush1.bf16.msra.mxu0 0
          %782 = vmatprep.subr.bf16.mxu0 0
          %783 = vmatpush1.bf16.msra.mxu0 0
          %784 = vmatprep.subr.bf16.mxu0 0
          %785 = vmatpush1.bf16.msra.mxu0 0
          %786 = vmatprep.subr.bf16.mxu0 0
          %787 = vmatpush1.bf16.msra.mxu0 0
          %788 = vmatprep.subr.bf16.mxu0 0
          %789 = vmatpush1.bf16.msra.mxu0 0
          %790 = vmatprep.subr.bf16.mxu0 0
          %791 = vmatpush1.bf16.msra.mxu0 0
          %792 = vmatprep.subr.bf16.mxu0 0
          %793 = vmatpush1.bf16.msra.mxu0 0
          %794 = vmatprep.mubr.bf16.mxu0 0
          %795 = vmatmul.mubr.bf16.gmra.mrb[0].mxu0 %v569
          %v796 = vpop.f32.mrb[0].mxu0
          %v797 = vadd.f32 %v622, %v796
          %v798 = vpop.f32.mrb[0].mxu0
          %v799 = vadd.f32 %v626, %v798
          %v800 = vpop.f32.mrb[0].mxu0
          %v801 = vadd.f32 %v622, %v800
          %v802 = vpop.f32.mrb[0].mxu0
          %v803 = vadd.f32 %v626, %v802
          %804 = vmatprep.mubr.bf16.mxu0 0
          %805 = vmatmul.mubr.bf16.gmra.mrb[0].mxu0 %v570
          %v806 = vpop.f32.mrb[0].mxu0
          %v807 = vadd.f32 %v622, %v806
          %v808 = vpop.f32.mrb[0].mxu0
          %v809 = vadd.f32 %v626, %v808
          %v810 = vpop.f32.mrb[0].mxu0
          %v811 = vadd.f32 %v622, %v810
          %v812 = vpop.f32.mrb[0].mxu0
          %v813 = vadd.f32 %v626, %v812
          %814 = vmatprep.mubr.bf16.mxu0 0
          %815 = vmatmul.mubr.bf16.gmra.mrb[0].mxu0 %v571
          %v816 = vpop.f32.mrb[0].mxu0
          %v817 = vadd.f32 %v622, %v816
          %v818 = vpop.f32.mrb[0].mxu0
          %v819 = vadd.f32 %v626, %v818
          %v820 = vpop.f32.mrb[0].mxu0
          %v821 = vadd.f32 %v622, %v820
          %v822 = vpop.f32.mrb[0].mxu0
          %v823 = vadd.f32 %v626, %v822
          %824 = vmatprep.mubr.bf16.mxu0 0
          %825 = vmatmul.mubr.bf16.gmra.mrb[0].mxu0 %v572
          %v826 = vpop.f32.mrb[0].mxu0
          %v827 = vadd.f32 %v622, %v826
          %v828 = vpop.f32.mrb[0].mxu0
          %v829 = vadd.f32 %v626, %v828
          %v830 = vpop.f32.mrb[0].mxu0
          %v831 = vadd.f32 %v622, %v830
          %v832 = vpop.f32.mrb[0].mxu0
          %v833 = vadd.f32 %v626, %v832
          %834 = vmatprep.mubr.bf16.mxu0 0
          %835 = vmatmul.mubr.bf16.gmra.mrb[0].mxu0 %v573
          %v836 = vpop.f32.mrb[0].mxu0
          %v837 = vadd.f32 %v622, %v836
          %v838 = vpop.f32.mrb[0].mxu0
          %v839 = vadd.f32 %v626, %v838
          %v840 = vpop.f32.mrb[0].mxu0
          %v841 = vadd.f32 %v622, %v840
          %v842 = vpop.f32.mrb[0].mxu0
          %v843 = vadd.f32 %v626, %v842
          %844 = vmatprep.mubr.bf16.mxu0 0
          %845 = vmatmul.mubr.bf16.gmra.mrb[0].mxu0 %v574
          %v846 = vpop.f32.mrb[0].mxu0
          %v847 = vadd.f32 %v622, %v846
          %v848 = vpop.f32.mrb[0].mxu0
          %v849 = vadd.f32 %v626, %v848
          %v850 = vpop.f32.mrb[0].mxu0
          %v851 = vadd.f32 %v622, %v850
          %v852 = vpop.f32.mrb[0].mxu0
          %v853 = vadd.f32 %v626, %v852
          %854 = vmatprep.mubr.bf16.mxu0 0
          %855 = vmatmul.mubr.bf16.gmra.mrb[0].mxu0 %v575
          %v856 = vpop.f32.mrb[0].mxu0
          %v857 = vadd.f32 %v622, %v856
          %v858 = vpop.f32.mrb[0].mxu0
          %v859 = vadd.f32 %v626, %v858
          %v860 = vpop.f32.mrb[0].mxu0
          %v861 = vadd.f32 %v622, %v860
          %v862 = vpop.f32.mrb[0].mxu0
          %v863 = vadd.f32 %v626, %v862
          %864 = vmatprep.mubr.bf16.mxu0 0
          %865 = vmatmul.mubr.bf16.gmra.mrb[0].mxu0 %v576
          %v866 = vpop.f32.mrb[0].mxu0
          %v867 = vadd.f32 %v622, %v866
          %v868 = vpop.f32.mrb[0].mxu0
          %v869 = vadd.f32 %v626, %v868
          %v870 = vpop.f32.mrb[0].mxu0
          %v871 = vadd.f32 %v622, %v870
          %v872 = vpop.f32.mrb[0].mxu0
          %v873 = vadd.f32 %v626, %v872
          %874 = vmatprep.mubr.bf16.mxu0 0
          %875 = vmatmul.mubr.bf16.gmra.mrb[0].mxu0 %v577
          %v876 = vpop.f32.mrb[0].mxu0
          %v877 = vadd.f32 %v622, %v876
          %v878 = vpop.f32.mrb[0].mxu0
          %v879 = vadd.f32 %v626, %v878
          %v880 = vpop.f32.mrb[0].mxu0
          %v881 = vadd.f32 %v622, %v880
          %v882 = vpop.f32.mrb[0].mxu0
          %v883 = vadd.f32 %v626, %v882
          %884 = vmatprep.mubr.bf16.mxu0 0
          %885 = vmatmul.mubr.bf16.gmra.mrb[0].mxu0 %v578
          %v886 = vpop.f32.mrb[0].mxu0
          %v887 = vadd.f32 %v622, %v886
          %v888 = vpop.f32.mrb[0].mxu0
          %v889 = vadd.f32 %v626, %v888
          %v890 = vpop.f32.mrb[0].mxu0
          %v891 = vadd.f32 %v622, %v890
          %v892 = vpop.f32.mrb[0].mxu0
          %v893 = vadd.f32 %v626, %v892
          %894 = vmatprep.mubr.bf16.mxu0 0
          %895 = vmatmul.mubr.bf16.gmra.mrb[0].mxu0 %v579
          %v896 = vpop.f32.mrb[0].mxu0
          %v897 = vadd.f32 %v622, %v896
          %v898 = vpop.f32.mrb[0].mxu0
          %v899 = vadd.f32 %v626, %v898
          %v900 = vpop.f32.mrb[0].mxu0
          %v901 = vadd.f32 %v622, %v900
          %v902 = vpop.f32.mrb[0].mxu0
          %v903 = vadd.f32 %v626, %v902
          %904 = vmatprep.mubr.bf16.mxu0 0
          %905 = vmatmul.mubr.bf16.gmra.mrb[0].mxu0 %v580
          %v906 = vpop.f32.mrb[0].mxu0
          %v907 = vadd.f32 %v622, %v906
          %v908 = vpop.f32.mrb[0].mxu0
          %v909 = vadd.f32 %v626, %v908
          %v910 = vpop.f32.mrb[0].mxu0
          %v911 = vadd.f32 %v622, %v910
          %v912 = vpop.f32.mrb[0].mxu0
          %v913 = vadd.f32 %v626, %v912
          %914 = vmatprep.mubr.bf16.mxu0 0
          %915 = vmatmul.mubr.bf16.gmra.mrb[0].mxu0 %v581
          %v916 = vpop.f32.mrb[0].mxu0
          %v917 = vadd.f32 %v622, %v916
          %v918 = vpop.f32.mrb[0].mxu0
          %v919 = vadd.f32 %v626, %v918
          %v920 = vpop.f32.mrb[0].mxu0
          %v921 = vadd.f32 %v622, %v920
          %v922 = vpop.f32.mrb[0].mxu0
          %v923 = vadd.f32 %v626, %v922
          %924 = vmatprep.mubr.bf16.mxu0 0
          %925 = vmatmul.mubr.bf16.gmra.mrb[0].mxu0 %v582
          %v926 = vpop.f32.mrb[0].mxu0
          %v927 = vadd.f32 %v622, %v926
          %v928 = vpop.f32.mrb[0].mxu0
          %v929 = vadd.f32 %v626, %v928
          %v930 = vpop.f32.mrb[0].mxu0
          %v931 = vadd.f32 %v622, %v930
          %v932 = vpop.f32.mrb[0].mxu0
          %v933 = vadd.f32 %v626, %v932
          %934 = vmatprep.mubr.bf16.mxu0 0
          %935 = vmatmul.mubr.bf16.gmra.mrb[0].mxu0 %v583
          %v936 = vpop.f32.mrb[0].mxu0
          %v937 = vadd.f32 %v622, %v936
          %v938 = vpop.f32.mrb[0].mxu0
          %v939 = vadd.f32 %v626, %v938
          %v940 = vpop.f32.mrb[0].mxu0
          %v941 = vadd.f32 %v622, %v940
          %v942 = vpop.f32.mrb[0].mxu0
          %v943 = vadd.f32 %v626, %v942
          %944 = vmatprep.mubr.bf16.mxu0 0
          %945 = vmatmul.mubr.bf16.gmra.mrb[0].mxu0 %v584
          %v946 = vpop.f32.mrb[0].mxu0
          %v947 = vadd.f32 %v622, %v946
          %v948 = vpop.f32.mrb[0].mxu0
          %v949 = vadd.f32 %v626, %v948
          %v950 = vpop.f32.mrb[0].mxu0
          %v951 = vadd.f32 %v622, %v950
          %v952 = vpop.f32.mrb[0].mxu0
          %v953 = vadd.f32 %v626, %v952
          %954 = vdwg.mxu0
          %955 = vmatprep.subr.bf16.mxu0 0
          %956 = vmatpush1.bf16.msra.mxu0 %v716
          %957 = vmatprep.subr.bf16.mxu0 0
          %958 = vmatpush1.bf16.msra.mxu0 %v719
          %959 = vmatprep.subr.bf16.mxu0 0
          %960 = vmatpush1.bf16.msra.mxu0 %v722
          %961 = vmatprep.subr.bf16.mxu0 0
          %962 = vmatpush1.bf16.msra.mxu0 %v725
          %963 = vmatprep.subr.bf16.mxu0 0
          %964 = vmatpush1.bf16.msra.mxu0 %v728
          %965 = vmatprep.subr.bf16.mxu0 0
          %966 = vmatpush1.bf16.msra.mxu0 %v731
          %967 = vmatprep.subr.bf16.mxu0 0
          %968 = vmatpush1.bf16.msra.mxu0 %v734
          %969 = vmatprep.subr.bf16.mxu0 0
          %970 = vmatpush1.bf16.msra.mxu0 %v737
          %971 = vmatprep.subr.bf16.mxu0 0
          %972 = vmatpush1.bf16.msra.mxu0 0
          %973 = vmatprep.subr.bf16.mxu0 0
          %974 = vmatpush1.bf16.msra.mxu0 0
          %975 = vmatprep.subr.bf16.mxu0 0
          %976 = vmatpush1.bf16.msra.mxu0 0
          %977 = vmatprep.subr.bf16.mxu0 0
          %978 = vmatpush1.bf16.msra.mxu0 0
          %979 = vmatprep.subr.bf16.mxu0 0
          %980 = vmatpush1.bf16.msra.mxu0 0
          %981 = vmatprep.subr.bf16.mxu0 0
          %982 = vmatpush1.bf16.msra.mxu0 0
          %983 = vmatprep.subr.bf16.mxu0 0
          %984 = vmatpush1.bf16.msra.mxu0 0
          %985 = vmatprep.subr.bf16.mxu0 0
          %986 = vmatpush1.bf16.msra.mxu0 0
          %987 = vmatprep.mubr.bf16.mxu0 0
          %988 = vmatmul.mubr.bf16.gmra.mrb[0].mxu0 %v569
          %v989 = vpop.f32.mrb[0].mxu0
          %v990 = vadd.f32 %v630, %v989
          %v991 = vpop.f32.mrb[0].mxu0
          %v992 = vpop.f32.mrb[0].mxu0
          %v993 = vadd.f32 %v630, %v992
          %v994 = vpop.f32.mrb[0].mxu0
          %995 = vmatprep.mubr.bf16.mxu0 0
          %996 = vmatmul.mubr.bf16.gmra.mrb[0].mxu0 %v570
          %v997 = vpop.f32.mrb[0].mxu0
          %v998 = vadd.f32 %v630, %v997
          %v999 = vpop.f32.mrb[0].mxu0
          %v1000 = vpop.f32.mrb[0].mxu0
          %v1001 = vadd.f32 %v630, %v1000
          %v1002 = vpop.f32.mrb[0].mxu0
          %1003 = vmatprep.mubr.bf16.mxu0 0
          %1004 = vmatmul.mubr.bf16.gmra.mrb[0].mxu0 %v571
          %v1005 = vpop.f32.mrb[0].mxu0
          %v1006 = vadd.f32 %v630, %v1005
          %v1007 = vpop.f32.mrb[0].mxu0
          %v1008 = vpop.f32.mrb[0].mxu0
          %v1009 = vadd.f32 %v630, %v1008
          %v1010 = vpop.f32.mrb[0].mxu0
          %1011 = vmatprep.mubr.bf16.mxu0 0
          %1012 = vmatmul.mubr.bf16.gmra.mrb[0].mxu0 %v572
          %v1013 = vpop.f32.mrb[0].mxu0
          %v1014 = vadd.f32 %v630, %v1013
          %v1015 = vpop.f32.mrb[0].mxu0
          %v1016 = vpop.f32.mrb[0].mxu0
          %v1017 = vadd.f32 %v630, %v1016
          %v1018 = vpop.f32.mrb[0].mxu0
          %1019 = vmatprep.mubr.bf16.mxu0 0
          %1020 = vmatmul.mubr.bf16.gmra.mrb[0].mxu0 %v573
          %v1021 = vpop.f32.mrb[0].mxu0
          %v1022 = vadd.f32 %v630, %v1021
          %v1023 = vpop.f32.mrb[0].mxu0
          %v1024 = vpop.f32.mrb[0].mxu0
          %v1025 = vadd.f32 %v630, %v1024
          %v1026 = vpop.f32.mrb[0].mxu0
          %1027 = vmatprep.mubr.bf16.mxu0 0
          %1028 = vmatmul.mubr.bf16.gmra.mrb[0].mxu0 %v574
          %v1029 = vpop.f32.mrb[0].mxu0
          %v1030 = vadd.f32 %v630, %v1029
          %v1031 = vpop.f32.mrb[0].mxu0
          %v1032 = vpop.f32.mrb[0].mxu0
          %v1033 = vadd.f32 %v630, %v1032
          %v1034 = vpop.f32.mrb[0].mxu0
          %1035 = vmatprep.mubr.bf16.mxu0 0
          %1036 = vmatmul.mubr.bf16.gmra.mrb[0].mxu0 %v575
          %v1037 = vpop.f32.mrb[0].mxu0
          %v1038 = vadd.f32 %v630, %v1037
          %v1039 = vpop.f32.mrb[0].mxu0
          %v1040 = vpop.f32.mrb[0].mxu0
          %v1041 = vadd.f32 %v630, %v1040
          %v1042 = vpop.f32.mrb[0].mxu0
          %1043 = vmatprep.mubr.bf16.mxu0 0
          %1044 = vmatmul.mubr.bf16.gmra.mrb[0].mxu0 %v576
          %v1045 = vpop.f32.mrb[0].mxu0
          %v1046 = vadd.f32 %v630, %v1045
          %v1047 = vpop.f32.mrb[0].mxu0
          %v1048 = vpop.f32.mrb[0].mxu0
          %v1049 = vadd.f32 %v630, %v1048
          %v1050 = vpop.f32.mrb[0].mxu0
          %1051 = vmatprep.mubr.bf16.mxu0 0
          %1052 = vmatmul.mubr.bf16.gmra.mrb[0].mxu0 %v577
          %v1053 = vpop.f32.mrb[0].mxu0
          %v1054 = vadd.f32 %v630, %v1053
          %v1055 = vpop.f32.mrb[0].mxu0
          %v1056 = vpop.f32.mrb[0].mxu0
          %v1057 = vadd.f32 %v630, %v1056
          %v1058 = vpop.f32.mrb[0].mxu0
          %1059 = vmatprep.mubr.bf16.mxu0 0
          %1060 = vmatmul.mubr.bf16.gmra.mrb[0].mxu0 %v578
          %v1061 = vpop.f32.mrb[0].mxu0
          %v1062 = vadd.f32 %v630, %v1061
          %v1063 = vpop.f32.mrb[0].mxu0
          %v1064 = vpop.f32.mrb[0].mxu0
          %v1065 = vadd.f32 %v630, %v1064
          %v1066 = vpop.f32.mrb[0].mxu0
          %1067 = vmatprep.mubr.bf16.mxu0 0
          %1068 = vmatmul.mubr.bf16.gmra.mrb[0].mxu0 %v579
          %v1069 = vpop.f32.mrb[0].mxu0
          %v1070 = vadd.f32 %v630, %v1069
          %v1071 = vpop.f32.mrb[0].mxu0
          %v1072 = vpop.f32.mrb[0].mxu0
          %v1073 = vadd.f32 %v630, %v1072
          %v1074 = vpop.f32.mrb[0].mxu0
          %1075 = vmatprep.mubr.bf16.mxu0 0
          %1076 = vmatmul.mubr.bf16.gmra.mrb[0].mxu0 %v580
          %v1077 = vpop.f32.mrb[0].mxu0
          %v1078 = vadd.f32 %v630, %v1077
          %v1079 = vpop.f32.mrb[0].mxu0
          %v1080 = vpop.f32.mrb[0].mxu0
          %v1081 = vadd.f32 %v630, %v1080
          %v1082 = vpop.f32.mrb[0].mxu0
          %1083 = vmatprep.mubr.bf16.mxu0 0
          %1084 = vmatmul.mubr.bf16.gmra.mrb[0].mxu0 %v581
          %v1085 = vpop.f32.mrb[0].mxu0
          %v1086 = vadd.f32 %v630, %v1085
          %v1087 = vpop.f32.mrb[0].mxu0
          %v1088 = vpop.f32.mrb[0].mxu0
          %v1089 = vadd.f32 %v630, %v1088
          %v1090 = vpop.f32.mrb[0].mxu0
          %1091 = vmatprep.mubr.bf16.mxu0 0
          %1092 = vmatmul.mubr.bf16.gmra.mrb[0].mxu0 %v582
          %v1093 = vpop.f32.mrb[0].mxu0
          %v1094 = vadd.f32 %v630, %v1093
          %v1095 = vpop.f32.mrb[0].mxu0
          %v1096 = vpop.f32.mrb[0].mxu0
          %v1097 = vadd.f32 %v630, %v1096
          %v1098 = vpop.f32.mrb[0].mxu0
          %1099 = vmatprep.mubr.bf16.mxu0 0
          %1100 = vmatmul.mubr.bf16.gmra.mrb[0].mxu0 %v583
          %v1101 = vpop.f32.mrb[0].mxu0
          %v1102 = vadd.f32 %v630, %v1101
          %v1103 = vpop.f32.mrb[0].mxu0
          %v1104 = vpop.f32.mrb[0].mxu0
          %v1105 = vadd.f32 %v630, %v1104
          %v1106 = vpop.f32.mrb[0].mxu0
          %1107 = vmatprep.mubr.bf16.mxu0 0
          %1108 = vmatmul.mubr.bf16.gmra.mrb[0].mxu0 %v584
          %v1109 = vpop.f32.mrb[0].mxu0
          %v1110 = vadd.f32 %v630, %v1109
          %v1111 = vpop.f32.mrb[0].mxu0
          %v1112 = vpop.f32.mrb[0].mxu0
          %v1113 = vadd.f32 %v630, %v1112
          %v1114 = vpop.f32.mrb[0].mxu0
          %1115 = vdwg.mxu0
          %v1116 = vpack.c.bf16 %v801, %v797
          %v1117 = vpack.c.bf16 %v811, %v807
          %v1118 = vpack.c.bf16 %v821, %v817
          %v1119 = vpack.c.bf16 %v831, %v827
          %v1120 = vpack.c.bf16 %v841, %v837
          %v1121 = vpack.c.bf16 %v851, %v847
          %v1122 = vpack.c.bf16 %v861, %v857
          %v1123 = vpack.c.bf16 %v871, %v867
          %v1124 = vpack.c.bf16 %v881, %v877
          %v1125 = vpack.c.bf16 %v891, %v887
          %v1126 = vpack.c.bf16 %v901, %v897
          %v1127 = vpack.c.bf16 %v911, %v907
          %v1128 = vpack.c.bf16 %v921, %v917
          %v1129 = vpack.c.bf16 %v931, %v927
          %v1130 = vpack.c.bf16 %v941, %v937
          %v1131 = vpack.c.bf16 %v951, %v947
          %vm1132 = vcmask 261120
          %1133 = vst.msk [vmem:[#allocation2] sm:$0xff] %vm1132, %v1116
          %1134 = vst.msk [vmem:[#allocation2 + $0x8] sm:$0xff] %vm1132, %v1117
          %1135 = vst.msk [vmem:[#allocation2 + $0x10] sm:$0xff] %vm1132, %v1118
          %1136 = vst.msk [vmem:[#allocation2 + $0x18] sm:$0xff] %vm1132, %v1119
          %1137 = vst.msk [vmem:[#allocation2 + $0x20] sm:$0xff] %vm1132, %v1120
          %1138 = vst.msk [vmem:[#allocation2 + $0x28] sm:$0xff] %vm1132, %v1121
          %1139 = vst.msk [vmem:[#allocation2 + $0x30] sm:$0xff] %vm1132, %v1122
          %1140 = vst.msk [vmem:[#allocation2 + $0x38] sm:$0xff] %vm1132, %v1123
          %1141 = vst.msk [vmem:[#allocation2 + $0x40] sm:$0xff] %vm1132, %v1124
          %1142 = vst.msk [vmem:[#allocation2 + $0x48] sm:$0xff] %vm1132, %v1125
          %1143 = vst.msk [vmem:[#allocation2 + $0x50] sm:$0xff] %vm1132, %v1126
          %1144 = vst.msk [vmem:[#allocation2 + $0x58] sm:$0xff] %vm1132, %v1127
          %1145 = vst.msk [vmem:[#allocation2 + $0x60] sm:$0xff] %vm1132, %v1128
          %1146 = vst.msk [vmem:[#allocation2 + $0x68] sm:$0xff] %vm1132, %v1129
          %1147 = vst.msk [vmem:[#allocation2 + $0x70] sm:$0xff] %vm1132, %v1130
          %1148 = vst.msk [vmem:[#allocation2 + $0x78] sm:$0xff] %vm1132, %v1131
          %v1149 = vpack.c.bf16 %v803, %v799
          %v1150 = vpack.c.bf16 %v813, %v809
          %v1151 = vpack.c.bf16 %v823, %v819
          %v1152 = vpack.c.bf16 %v833, %v829
          %v1153 = vpack.c.bf16 %v843, %v839
          %v1154 = vpack.c.bf16 %v853, %v849
          %v1155 = vpack.c.bf16 %v863, %v859
          %v1156 = vpack.c.bf16 %v873, %v869
          %v1157 = vpack.c.bf16 %v883, %v879
          %v1158 = vpack.c.bf16 %v893, %v889
          %v1159 = vpack.c.bf16 %v903, %v899
          %v1160 = vpack.c.bf16 %v913, %v909
          %v1161 = vpack.c.bf16 %v923, %v919
          %v1162 = vpack.c.bf16 %v933, %v929
          %v1163 = vpack.c.bf16 %v943, %v939
          %v1164 = vpack.c.bf16 %v953, %v949
          %1165 = vst.msk [vmem:[#allocation3] sm:$0xff] %vm1132, %v1149
          %1166 = vst.msk [vmem:[#allocation3 + $0x8] sm:$0xff] %vm1132, %v1150
          %1167 = vst.msk [vmem:[#allocation3 + $0x10] sm:$0xff] %vm1132, %v1151
          %1168 = vst.msk [vmem:[#allocation3 + $0x18] sm:$0xff] %vm1132, %v1152
          %1169 = vst.msk [vmem:[#allocation3 + $0x20] sm:$0xff] %vm1132, %v1153
          %1170 = vst.msk [vmem:[#allocation3 + $0x28] sm:$0xff] %vm1132, %v1154
          %1171 = vst.msk [vmem:[#allocation3 + $0x30] sm:$0xff] %vm1132, %v1155
          %1172 = vst.msk [vmem:[#allocation3 + $0x38] sm:$0xff] %vm1132, %v1156
          %1173 = vst.msk [vmem:[#allocation3 + $0x40] sm:$0xff] %vm1132, %v1157
          %1174 = vst.msk [vmem:[#allocation3 + $0x48] sm:$0xff] %vm1132, %v1158
          %1175 = vst.msk [vmem:[#allocation3 + $0x50] sm:$0xff] %vm1132, %v1159
          %1176 = vst.msk [vmem:[#allocation3 + $0x58] sm:$0xff] %vm1132, %v1160
          %1177 = vst.msk [vmem:[#allocation3 + $0x60] sm:$0xff] %vm1132, %v1161
          %1178 = vst.msk [vmem:[#allocation3 + $0x68] sm:$0xff] %vm1132, %v1162
          %1179 = vst.msk [vmem:[#allocation3 + $0x70] sm:$0xff] %vm1132, %v1163
          %1180 = vst.msk [vmem:[#allocation3 + $0x78] sm:$0xff] %vm1132, %v1164
          %v1181 = vpack.c.bf16 %v993, %v990
          %v1182 = vpack.c.bf16 %v1001, %v998
          %v1183 = vpack.c.bf16 %v1009, %v1006
          %v1184 = vpack.c.bf16 %v1017, %v1014
          %v1185 = vpack.c.bf16 %v1025, %v1022
          %v1186 = vpack.c.bf16 %v1033, %v1030
          %v1187 = vpack.c.bf16 %v1041, %v1038
          %v1188 = vpack.c.bf16 %v1049, %v1046
          %v1189 = vpack.c.bf16 %v1057, %v1054
          %v1190 = vpack.c.bf16 %v1065, %v1062
          %v1191 = vpack.c.bf16 %v1073, %v1070
          %v1192 = vpack.c.bf16 %v1081, %v1078
          %v1193 = vpack.c.bf16 %v1089, %v1086
          %v1194 = vpack.c.bf16 %v1097, %v1094
          %v1195 = vpack.c.bf16 %v1105, %v1102
          %v1196 = vpack.c.bf16 %v1113, %v1110
          %1197 = vst.msk [vmem:[#allocation4] sm:$0xff] %vm1132, %v1181
          %1198 = vst.msk [vmem:[#allocation4 + $0x8] sm:$0xff] %vm1132, %v1182
          %1199 = vst.msk [vmem:[#allocation4 + $0x10] sm:$0xff] %vm1132, %v1183
          %1200 = vst.msk [vmem:[#allocation4 + $0x18] sm:$0xff] %vm1132, %v1184
          %1201 = vst.msk [vmem:[#allocation4 + $0x20] sm:$0xff] %vm1132, %v1185
          %1202 = vst.msk [vmem:[#allocation4 + $0x28] sm:$0xff] %vm1132, %v1186
          %1203 = vst.msk [vmem:[#allocation4 + $0x30] sm:$0xff] %vm1132, %v1187
          %1204 = vst.msk [vmem:[#allocation4 + $0x38] sm:$0xff] %vm1132, %v1188
          %1205 = vst.msk [vmem:[#allocation4 + $0x40] sm:$0xff] %vm1132, %v1189
          %1206 = vst.msk [vmem:[#allocation4 + $0x48] sm:$0xff] %vm1132, %v1190
          %1207 = vst.msk [vmem:[#allocation4 + $0x50] sm:$0xff] %vm1132, %v1191
          %1208 = vst.msk [vmem:[#allocation4 + $0x58] sm:$0xff] %vm1132, %v1192
          %1209 = vst.msk [vmem:[#allocation4 + $0x60] sm:$0xff] %vm1132, %v1193
          %1210 = vst.msk [vmem:[#allocation4 + $0x68] sm:$0xff] %vm1132, %v1194
          %1211 = vst.msk [vmem:[#allocation4 + $0x70] sm:$0xff] %vm1132, %v1195
          %1212 = vst.msk [vmem:[#allocation4 + $0x78] sm:$0xff] %vm1132, %v1196
          %1229 = vrot.lane.b32.xlu0 %v1116, 96
          %v1230 = vpop.permute.xlu0 %1229
          %1231 = vrot.lane.b32.xlu0 %v1117, 96
          %v1232 = vpop.permute.xlu0 %1231
          %1233 = vrot.lane.b32.xlu0 %v1118, 96
          %v1234 = vpop.permute.xlu0 %1233
          %1235 = vrot.lane.b32.xlu0 %v1119, 96
          %v1236 = vpop.permute.xlu0 %1235
          %1237 = vrot.lane.b32.xlu0 %v1120, 96
          %v1238 = vpop.permute.xlu0 %1237
          %1239 = vrot.lane.b32.xlu0 %v1121, 96
          %v1240 = vpop.permute.xlu0 %1239
          %1241 = vrot.lane.b32.xlu0 %v1122, 96
          %v1242 = vpop.permute.xlu0 %1241
          %1243 = vrot.lane.b32.xlu0 %v1123, 96
          %v1244 = vpop.permute.xlu0 %1243
          %1245 = vrot.lane.b32.xlu0 %v1124, 96
          %v1246 = vpop.permute.xlu0 %1245
          %1247 = vrot.lane.b32.xlu0 %v1125, 96
          %v1248 = vpop.permute.xlu0 %1247
          %1249 = vrot.lane.b32.xlu0 %v1126, 96
          %v1250 = vpop.permute.xlu0 %1249
          %1251 = vrot.lane.b32.xlu0 %v1127, 96
          %v1252 = vpop.permute.xlu0 %1251
          %1253 = vrot.lane.b32.xlu0 %v1128, 96
          %v1254 = vpop.permute.xlu0 %1253
          %1255 = vrot.lane.b32.xlu0 %v1129, 96
          %v1256 = vpop.permute.xlu0 %1255
          %1257 = vrot.lane.b32.xlu0 %v1130, 96
          %v1258 = vpop.permute.xlu0 %1257
          %1259 = vrot.lane.b32.xlu0 %v1131, 96
          %v1260 = vpop.permute.xlu0 %1259
          %s1277 = scalar_lea.vmem [#allocation2], 128
          %1278 = vst.msk [vmem:[%s1277] sm:$0xff] %vm1132, %v1230
          %1279 = vst.msk [vmem:[%s1277 + $0x8] sm:$0xff] %vm1132, %v1232
          %1280 = vst.msk [vmem:[%s1277 + $0x10] sm:$0xff] %vm1132, %v1234
          %1281 = vst.msk [vmem:[%s1277 + $0x18] sm:$0xff] %vm1132, %v1236
          %1282 = vst.msk [vmem:[%s1277 + $0x20] sm:$0xff] %vm1132, %v1238
          %1283 = vst.msk [vmem:[%s1277 + $0x28] sm:$0xff] %vm1132, %v1240
          %1284 = vst.msk [vmem:[%s1277 + $0x30] sm:$0xff] %vm1132, %v1242
          %1285 = vst.msk [vmem:[%s1277 + $0x38] sm:$0xff] %vm1132, %v1244
          %1286 = vst.msk [vmem:[%s1277 + $0x40] sm:$0xff] %vm1132, %v1246
          %1287 = vst.msk [vmem:[%s1277 + $0x48] sm:$0xff] %vm1132, %v1248
          %1288 = vst.msk [vmem:[%s1277 + $0x50] sm:$0xff] %vm1132, %v1250
          %1289 = vst.msk [vmem:[%s1277 + $0x58] sm:$0xff] %vm1132, %v1252
          %1290 = vst.msk [vmem:[%s1277 + $0x60] sm:$0xff] %vm1132, %v1254
          %1291 = vst.msk [vmem:[%s1277 + $0x68] sm:$0xff] %vm1132, %v1256
          %1292 = vst.msk [vmem:[%s1277 + $0x70] sm:$0xff] %vm1132, %v1258
          %1293 = vst.msk [vmem:[%s1277 + $0x78] sm:$0xff] %vm1132, %v1260
          %1310 = vrot.lane.b32.xlu0 %v1149, 96
          %v1311 = vpop.permute.xlu0 %1310
          %1312 = vrot.lane.b32.xlu0 %v1150, 96
          %v1313 = vpop.permute.xlu0 %1312
          %1314 = vrot.lane.b32.xlu0 %v1151, 96
          %v1315 = vpop.permute.xlu0 %1314
          %1316 = vrot.lane.b32.xlu0 %v1152, 96
          %v1317 = vpop.permute.xlu0 %1316
          %1318 = vrot.lane.b32.xlu0 %v1153, 96
          %v1319 = vpop.permute.xlu0 %1318
          %1320 = vrot.lane.b32.xlu0 %v1154, 96
          %v1321 = vpop.permute.xlu0 %1320
          %1322 = vrot.lane.b32.xlu0 %v1155, 96
          %v1323 = vpop.permute.xlu0 %1322
          %1324 = vrot.lane.b32.xlu0 %v1156, 96
          %v1325 = vpop.permute.xlu0 %1324
          %1326 = vrot.lane.b32.xlu0 %v1157, 96
          %v1327 = vpop.permute.xlu0 %1326
          %1328 = vrot.lane.b32.xlu0 %v1158, 96
          %v1329 = vpop.permute.xlu0 %1328
          %1330 = vrot.lane.b32.xlu0 %v1159, 96
          %v1331 = vpop.permute.xlu0 %1330
          %1332 = vrot.lane.b32.xlu0 %v1160, 96
          %v1333 = vpop.permute.xlu0 %1332
          %1334 = vrot.lane.b32.xlu0 %v1161, 96
          %v1335 = vpop.permute.xlu0 %1334
          %1336 = vrot.lane.b32.xlu0 %v1162, 96
          %v1337 = vpop.permute.xlu0 %1336
          %1338 = vrot.lane.b32.xlu0 %v1163, 96
          %v1339 = vpop.permute.xlu0 %1338
          %1340 = vrot.lane.b32.xlu0 %v1164, 96
          %v1341 = vpop.permute.xlu0 %1340
          %s1358 = scalar_lea.vmem [#allocation3], 128
          %1359 = vst.msk [vmem:[%s1358] sm:$0xff] %vm1132, %v1311
          %1360 = vst.msk [vmem:[%s1358 + $0x8] sm:$0xff] %vm1132, %v1313
          %1361 = vst.msk [vmem:[%s1358 + $0x10] sm:$0xff] %vm1132, %v1315
          %1362 = vst.msk [vmem:[%s1358 + $0x18] sm:$0xff] %vm1132, %v1317
          %1363 = vst.msk [vmem:[%s1358 + $0x20] sm:$0xff] %vm1132, %v1319
          %1364 = vst.msk [vmem:[%s1358 + $0x28] sm:$0xff] %vm1132, %v1321
          %1365 = vst.msk [vmem:[%s1358 + $0x30] sm:$0xff] %vm1132, %v1323
          %1366 = vst.msk [vmem:[%s1358 + $0x38] sm:$0xff] %vm1132, %v1325
          %1367 = vst.msk [vmem:[%s1358 + $0x40] sm:$0xff] %vm1132, %v1327
          %1368 = vst.msk [vmem:[%s1358 + $0x48] sm:$0xff] %vm1132, %v1329
          %1369 = vst.msk [vmem:[%s1358 + $0x50] sm:$0xff] %vm1132, %v1331
          %1370 = vst.msk [vmem:[%s1358 + $0x58] sm:$0xff] %vm1132, %v1333
          %1371 = vst.msk [vmem:[%s1358 + $0x60] sm:$0xff] %vm1132, %v1335
          %1372 = vst.msk [vmem:[%s1358 + $0x68] sm:$0xff] %vm1132, %v1337
          %1373 = vst.msk [vmem:[%s1358 + $0x70] sm:$0xff] %vm1132, %v1339
          %1374 = vst.msk [vmem:[%s1358 + $0x78] sm:$0xff] %vm1132, %v1341
          %1391 = vrot.lane.b32.xlu0 %v1181, 96
          %v1392 = vpop.permute.xlu0 %1391
          %1393 = vrot.lane.b32.xlu0 %v1182, 96
          %v1394 = vpop.permute.xlu0 %1393
          %1395 = vrot.lane.b32.xlu0 %v1183, 96
          %v1396 = vpop.permute.xlu0 %1395
          %1397 = vrot.lane.b32.xlu0 %v1184, 96
          %v1398 = vpop.permute.xlu0 %1397
          %1399 = vrot.lane.b32.xlu0 %v1185, 96
          %v1400 = vpop.permute.xlu0 %1399
          %1401 = vrot.lane.b32.xlu0 %v1186, 96
          %v1402 = vpop.permute.xlu0 %1401
          %1403 = vrot.lane.b32.xlu0 %v1187, 96
          %v1404 = vpop.permute.xlu0 %1403
          %1405 = vrot.lane.b32.xlu0 %v1188, 96
          %v1406 = vpop.permute.xlu0 %1405
          %1407 = vrot.lane.b32.xlu0 %v1189, 96
          %v1408 = vpop.permute.xlu0 %1407
          %1409 = vrot.lane.b32.xlu0 %v1190, 96
          %v1410 = vpop.permute.xlu0 %1409
          %1411 = vrot.lane.b32.xlu0 %v1191, 96
          %v1412 = vpop.permute.xlu0 %1411
          %1413 = vrot.lane.b32.xlu0 %v1192, 96
          %v1414 = vpop.permute.xlu0 %1413
          %1415 = vrot.lane.b32.xlu0 %v1193, 96
          %v1416 = vpop.permute.xlu0 %1415
          %1417 = vrot.lane.b32.xlu0 %v1194, 96
          %v1418 = vpop.permute.xlu0 %1417
          %1419 = vrot.lane.b32.xlu0 %v1195, 96
          %v1420 = vpop.permute.xlu0 %1419
          %1421 = vrot.lane.b32.xlu0 %v1196, 96
          %v1422 = vpop.permute.xlu0 %1421
          %s1439 = scalar_lea.vmem [#allocation4], 128
          %1440 = vst.msk [vmem:[%s1439] sm:$0xff] %vm1132, %v1392
          %1441 = vst.msk [vmem:[%s1439 + $0x8] sm:$0xff] %vm1132, %v1394
          %1442 = vst.msk [vmem:[%s1439 + $0x10] sm:$0xff] %vm1132, %v1396
          %1443 = vst.msk [vmem:[%s1439 + $0x18] sm:$0xff] %vm1132, %v1398
          %1444 = vst.msk [vmem:[%s1439 + $0x20] sm:$0xff] %vm1132, %v1400
          %1445 = vst.msk [vmem:[%s1439 + $0x28] sm:$0xff] %vm1132, %v1402
          %1446 = vst.msk [vmem:[%s1439 + $0x30] sm:$0xff] %vm1132, %v1404
          %1447 = vst.msk [vmem:[%s1439 + $0x38] sm:$0xff] %vm1132, %v1406
          %1448 = vst.msk [vmem:[%s1439 + $0x40] sm:$0xff] %vm1132, %v1408
          %1449 = vst.msk [vmem:[%s1439 + $0x48] sm:$0xff] %vm1132, %v1410
          %1450 = vst.msk [vmem:[%s1439 + $0x50] sm:$0xff] %vm1132, %v1412
          %1451 = vst.msk [vmem:[%s1439 + $0x58] sm:$0xff] %vm1132, %v1414
          %1452 = vst.msk [vmem:[%s1439 + $0x60] sm:$0xff] %vm1132, %v1416
          %1453 = vst.msk [vmem:[%s1439 + $0x68] sm:$0xff] %vm1132, %v1418
          %1454 = vst.msk [vmem:[%s1439 + $0x70] sm:$0xff] %vm1132, %v1420
          %1455 = vst.msk [vmem:[%s1439 + $0x78] sm:$0xff] %vm1132, %v1422
          %1456 = vrot.lane.b32.xlu0 %v1116, 64
          %v1457 = vpop.permute.xlu0 %1456
          %1458 = vrot.lane.b32.xlu0 %v1117, 64
          %v1459 = vpop.permute.xlu0 %1458
          %1460 = vrot.lane.b32.xlu0 %v1118, 64
          %v1461 = vpop.permute.xlu0 %1460
          %1462 = vrot.lane.b32.xlu0 %v1119, 64
          %v1463 = vpop.permute.xlu0 %1462
          %1464 = vrot.lane.b32.xlu0 %v1120, 64
          %v1465 = vpop.permute.xlu0 %1464
          %1466 = vrot.lane.b32.xlu0 %v1121, 64
          %v1467 = vpop.permute.xlu0 %1466
          %1468 = vrot.lane.b32.xlu0 %v1122, 64
          %v1469 = vpop.permute.xlu0 %1468
          %1470 = vrot.lane.b32.xlu0 %v1123, 64
          %v1471 = vpop.permute.xlu0 %1470
          %1472 = vrot.lane.b32.xlu0 %v1124, 64
          %v1473 = vpop.permute.xlu0 %1472
          %1474 = vrot.lane.b32.xlu0 %v1125, 64
          %v1475 = vpop.permute.xlu0 %1474
          %1476 = vrot.lane.b32.xlu0 %v1126, 64
          %v1477 = vpop.permute.xlu0 %1476
          %1478 = vrot.lane.b32.xlu0 %v1127, 64
          %v1479 = vpop.permute.xlu0 %1478
          %1480 = vrot.lane.b32.xlu0 %v1128, 64
          %v1481 = vpop.permute.xlu0 %1480
          %1482 = vrot.lane.b32.xlu0 %v1129, 64
          %v1483 = vpop.permute.xlu0 %1482
          %1484 = vrot.lane.b32.xlu0 %v1130, 64
          %v1485 = vpop.permute.xlu0 %1484
          %1486 = vrot.lane.b32.xlu0 %v1131, 64
          %v1487 = vpop.permute.xlu0 %1486
          %s1504 = scalar_lea.vmem [#allocation2], 256
          %1505 = vst.msk [vmem:[%s1504] sm:$0xff] %vm1132, %v1457
          %1506 = vst.msk [vmem:[%s1504 + $0x8] sm:$0xff] %vm1132, %v1459
          %1507 = vst.msk [vmem:[%s1504 + $0x10] sm:$0xff] %vm1132, %v1461
          %1508 = vst.msk [vmem:[%s1504 + $0x18] sm:$0xff] %vm1132, %v1463
          %1509 = vst.msk [vmem:[%s1504 + $0x20] sm:$0xff] %vm1132, %v1465
          %1510 = vst.msk [vmem:[%s1504 + $0x28] sm:$0xff] %vm1132, %v1467
          %1511 = vst.msk [vmem:[%s1504 + $0x30] sm:$0xff] %vm1132, %v1469
          %1512 = vst.msk [vmem:[%s1504 + $0x38] sm:$0xff] %vm1132, %v1471
          %1513 = vst.msk [vmem:[%s1504 + $0x40] sm:$0xff] %vm1132, %v1473
          %1514 = vst.msk [vmem:[%s1504 + $0x48] sm:$0xff] %vm1132, %v1475
          %1515 = vst.msk [vmem:[%s1504 + $0x50] sm:$0xff] %vm1132, %v1477
          %1516 = vst.msk [vmem:[%s1504 + $0x58] sm:$0xff] %vm1132, %v1479
          %1517 = vst.msk [vmem:[%s1504 + $0x60] sm:$0xff] %vm1132, %v1481
          %1518 = vst.msk [vmem:[%s1504 + $0x68] sm:$0xff] %vm1132, %v1483
          %1519 = vst.msk [vmem:[%s1504 + $0x70] sm:$0xff] %vm1132, %v1485
          %1520 = vst.msk [vmem:[%s1504 + $0x78] sm:$0xff] %vm1132, %v1487
          %1521 = vrot.lane.b32.xlu0 %v1149, 64
          %v1522 = vpop.permute.xlu0 %1521
          %1523 = vrot.lane.b32.xlu0 %v1150, 64
          %v1524 = vpop.permute.xlu0 %1523
          %1525 = vrot.lane.b32.xlu0 %v1151, 64
          %v1526 = vpop.permute.xlu0 %1525
          %1527 = vrot.lane.b32.xlu0 %v1152, 64
          %v1528 = vpop.permute.xlu0 %1527
          %1529 = vrot.lane.b32.xlu0 %v1153, 64
          %v1530 = vpop.permute.xlu0 %1529
          %1531 = vrot.lane.b32.xlu0 %v1154, 64
          %v1532 = vpop.permute.xlu0 %1531
          %1533 = vrot.lane.b32.xlu0 %v1155, 64
          %v1534 = vpop.permute.xlu0 %1533
          %1535 = vrot.lane.b32.xlu0 %v1156, 64
          %v1536 = vpop.permute.xlu0 %1535
          %1537 = vrot.lane.b32.xlu0 %v1157, 64
          %v1538 = vpop.permute.xlu0 %1537
          %1539 = vrot.lane.b32.xlu0 %v1158, 64
          %v1540 = vpop.permute.xlu0 %1539
          %1541 = vrot.lane.b32.xlu0 %v1159, 64
          %v1542 = vpop.permute.xlu0 %1541
          %1543 = vrot.lane.b32.xlu0 %v1160, 64
          %v1544 = vpop.permute.xlu0 %1543
          %1545 = vrot.lane.b32.xlu0 %v1161, 64
          %v1546 = vpop.permute.xlu0 %1545
          %1547 = vrot.lane.b32.xlu0 %v1162, 64
          %v1548 = vpop.permute.xlu0 %1547
          %1549 = vrot.lane.b32.xlu0 %v1163, 64
          %v1550 = vpop.permute.xlu0 %1549
          %1551 = vrot.lane.b32.xlu0 %v1164, 64
          %v1552 = vpop.permute.xlu0 %1551
          %s1569 = scalar_lea.vmem [#allocation3], 256
          %1570 = vst.msk [vmem:[%s1569] sm:$0xff] %vm1132, %v1522
          %1571 = vst.msk [vmem:[%s1569 + $0x8] sm:$0xff] %vm1132, %v1524
          %1572 = vst.msk [vmem:[%s1569 + $0x10] sm:$0xff] %vm1132, %v1526
          %1573 = vst.msk [vmem:[%s1569 + $0x18] sm:$0xff] %vm1132, %v1528
          %1574 = vst.msk [vmem:[%s1569 + $0x20] sm:$0xff] %vm1132, %v1530
          %1575 = vst.msk [vmem:[%s1569 + $0x28] sm:$0xff] %vm1132, %v1532
          %1576 = vst.msk [vmem:[%s1569 + $0x30] sm:$0xff] %vm1132, %v1534
          %1577 = vst.msk [vmem:[%s1569 + $0x38] sm:$0xff] %vm1132, %v1536
          %1578 = vst.msk [vmem:[%s1569 + $0x40] sm:$0xff] %vm1132, %v1538
          %1579 = vst.msk [vmem:[%s1569 + $0x48] sm:$0xff] %vm1132, %v1540
          %1580 = vst.msk [vmem:[%s1569 + $0x50] sm:$0xff] %vm1132, %v1542
          %1581 = vst.msk [vmem:[%s1569 + $0x58] sm:$0xff] %vm1132, %v1544
          %1582 = vst.msk [vmem:[%s1569 + $0x60] sm:$0xff] %vm1132, %v1546
          %1583 = vst.msk [vmem:[%s1569 + $0x68] sm:$0xff] %vm1132, %v1548
          %1584 = vst.msk [vmem:[%s1569 + $0x70] sm:$0xff] %vm1132, %v1550
          %1585 = vst.msk [vmem:[%s1569 + $0x78] sm:$0xff] %vm1132, %v1552
          %1586 = vrot.lane.b32.xlu0 %v1181, 64
          %v1587 = vpop.permute.xlu0 %1586
          %1588 = vrot.lane.b32.xlu0 %v1182, 64
          %v1589 = vpop.permute.xlu0 %1588
          %1590 = vrot.lane.b32.xlu0 %v1183, 64
          %v1591 = vpop.permute.xlu0 %1590
          %1592 = vrot.lane.b32.xlu0 %v1184, 64
          %v1593 = vpop.permute.xlu0 %1592
          %1594 = vrot.lane.b32.xlu0 %v1185, 64
          %v1595 = vpop.permute.xlu0 %1594
          %1596 = vrot.lane.b32.xlu0 %v1186, 64
          %v1597 = vpop.permute.xlu0 %1596
          %1598 = vrot.lane.b32.xlu0 %v1187, 64
          %v1599 = vpop.permute.xlu0 %1598
          %1600 = vrot.lane.b32.xlu0 %v1188, 64
          %v1601 = vpop.permute.xlu0 %1600
          %1602 = vrot.lane.b32.xlu0 %v1189, 64
          %v1603 = vpop.permute.xlu0 %1602
          %1604 = vrot.lane.b32.xlu0 %v1190, 64
          %v1605 = vpop.permute.xlu0 %1604
          %1606 = vrot.lane.b32.xlu0 %v1191, 64
          %v1607 = vpop.permute.xlu0 %1606
          %1608 = vrot.lane.b32.xlu0 %v1192, 64
          %v1609 = vpop.permute.xlu0 %1608
          %1610 = vrot.lane.b32.xlu0 %v1193, 64
          %v1611 = vpop.permute.xlu0 %1610
          %1612 = vrot.lane.b32.xlu0 %v1194, 64
          %v1613 = vpop.permute.xlu0 %1612
          %1614 = vrot.lane.b32.xlu0 %v1195, 64
          %v1615 = vpop.permute.xlu0 %1614
          %1616 = vrot.lane.b32.xlu0 %v1196, 64
          %v1617 = vpop.permute.xlu0 %1616
          %s1634 = scalar_lea.vmem [#allocation4], 256
          %1635 = vst.msk [vmem:[%s1634] sm:$0xff] %vm1132, %v1587
          %1636 = vst.msk [vmem:[%s1634 + $0x8] sm:$0xff] %vm1132, %v1589
          %1637 = vst.msk [vmem:[%s1634 + $0x10] sm:$0xff] %vm1132, %v1591
          %1638 = vst.msk [vmem:[%s1634 + $0x18] sm:$0xff] %vm1132, %v1593
          %1639 = vst.msk [vmem:[%s1634 + $0x20] sm:$0xff] %vm1132, %v1595
          %1640 = vst.msk [vmem:[%s1634 + $0x28] sm:$0xff] %vm1132, %v1597
          %1641 = vst.msk [vmem:[%s1634 + $0x30] sm:$0xff] %vm1132, %v1599
          %1642 = vst.msk [vmem:[%s1634 + $0x38] sm:$0xff] %vm1132, %v1601
          %1643 = vst.msk [vmem:[%s1634 + $0x40] sm:$0xff] %vm1132, %v1603
          %1644 = vst.msk [vmem:[%s1634 + $0x48] sm:$0xff] %vm1132, %v1605
          %1645 = vst.msk [vmem:[%s1634 + $0x50] sm:$0xff] %vm1132, %v1607
          %1646 = vst.msk [vmem:[%s1634 + $0x58] sm:$0xff] %vm1132, %v1609
          %1647 = vst.msk [vmem:[%s1634 + $0x60] sm:$0xff] %vm1132, %v1611
          %1648 = vst.msk [vmem:[%s1634 + $0x68] sm:$0xff] %vm1132, %v1613
          %1649 = vst.msk [vmem:[%s1634 + $0x70] sm:$0xff] %vm1132, %v1615
          %1650 = vst.msk [vmem:[%s1634 + $0x78] sm:$0xff] %vm1132, %v1617
          %1651 = vrot.lane.b32.xlu0 %v1116, 32
          %v1652 = vpop.permute.xlu0 %1651
          %1653 = vrot.lane.b32.xlu0 %v1117, 32
          %v1654 = vpop.permute.xlu0 %1653
          %1655 = vrot.lane.b32.xlu0 %v1118, 32
          %v1656 = vpop.permute.xlu0 %1655
          %1657 = vrot.lane.b32.xlu0 %v1119, 32
          %v1658 = vpop.permute.xlu0 %1657
          %1659 = vrot.lane.b32.xlu0 %v1120, 32
          %v1660 = vpop.permute.xlu0 %1659
          %1661 = vrot.lane.b32.xlu0 %v1121, 32
          %v1662 = vpop.permute.xlu0 %1661
          %1663 = vrot.lane.b32.xlu0 %v1122, 32
          %v1664 = vpop.permute.xlu0 %1663
          %1665 = vrot.lane.b32.xlu0 %v1123, 32
          %v1666 = vpop.permute.xlu0 %1665
          %1667 = vrot.lane.b32.xlu0 %v1124, 32
          %v1668 = vpop.permute.xlu0 %1667
          %1669 = vrot.lane.b32.xlu0 %v1125, 32
          %v1670 = vpop.permute.xlu0 %1669
          %1671 = vrot.lane.b32.xlu0 %v1126, 32
          %v1672 = vpop.permute.xlu0 %1671
          %1673 = vrot.lane.b32.xlu0 %v1127, 32
          %v1674 = vpop.permute.xlu0 %1673
          %1675 = vrot.lane.b32.xlu0 %v1128, 32
          %v1676 = vpop.permute.xlu0 %1675
          %1677 = vrot.lane.b32.xlu0 %v1129, 32
          %v1678 = vpop.permute.xlu0 %1677
          %1679 = vrot.lane.b32.xlu0 %v1130, 32
          %v1680 = vpop.permute.xlu0 %1679
          %1681 = vrot.lane.b32.xlu0 %v1131, 32
          %v1682 = vpop.permute.xlu0 %1681
          %s1699 = scalar_lea.vmem [#allocation2], 384
          %1700 = vst.msk [vmem:[%s1699] sm:$0xff] %vm1132, %v1652
          %1701 = vst.msk [vmem:[%s1699 + $0x8] sm:$0xff] %vm1132, %v1654
          %1702 = vst.msk [vmem:[%s1699 + $0x10] sm:$0xff] %vm1132, %v1656
          %1703 = vst.msk [vmem:[%s1699 + $0x18] sm:$0xff] %vm1132, %v1658
          %1704 = vst.msk [vmem:[%s1699 + $0x20] sm:$0xff] %vm1132, %v1660
          %1705 = vst.msk [vmem:[%s1699 + $0x28] sm:$0xff] %vm1132, %v1662
          %1706 = vst.msk [vmem:[%s1699 + $0x30] sm:$0xff] %vm1132, %v1664
          %1707 = vst.msk [vmem:[%s1699 + $0x38] sm:$0xff] %vm1132, %v1666
          %1708 = vst.msk [vmem:[%s1699 + $0x40] sm:$0xff] %vm1132, %v1668
          %1709 = vst.msk [vmem:[%s1699 + $0x48] sm:$0xff] %vm1132, %v1670
          %1710 = vst.msk [vmem:[%s1699 + $0x50] sm:$0xff] %vm1132, %v1672
          %1711 = vst.msk [vmem:[%s1699 + $0x58] sm:$0xff] %vm1132, %v1674
          %1712 = vst.msk [vmem:[%s1699 + $0x60] sm:$0xff] %vm1132, %v1676
          %1713 = vst.msk [vmem:[%s1699 + $0x68] sm:$0xff] %vm1132, %v1678
          %1714 = vst.msk [vmem:[%s1699 + $0x70] sm:$0xff] %vm1132, %v1680
          %1715 = vst.msk [vmem:[%s1699 + $0x78] sm:$0xff] %vm1132, %v1682
          %1716 = vrot.lane.b32.xlu0 %v1149, 32
          %v1717 = vpop.permute.xlu0 %1716
          %1718 = vrot.lane.b32.xlu0 %v1150, 32
          %v1719 = vpop.permute.xlu0 %1718
          %1720 = vrot.lane.b32.xlu0 %v1151, 32
          %v1721 = vpop.permute.xlu0 %1720
          %1722 = vrot.lane.b32.xlu0 %v1152, 32
          %v1723 = vpop.permute.xlu0 %1722
          %1724 = vrot.lane.b32.xlu0 %v1153, 32
          %v1725 = vpop.permute.xlu0 %1724
          %1726 = vrot.lane.b32.xlu0 %v1154, 32
          %v1727 = vpop.permute.xlu0 %1726
          %1728 = vrot.lane.b32.xlu0 %v1155, 32
          %v1729 = vpop.permute.xlu0 %1728
          %1730 = vrot.lane.b32.xlu0 %v1156, 32
          %v1731 = vpop.permute.xlu0 %1730
          %1732 = vrot.lane.b32.xlu0 %v1157, 32
          %v1733 = vpop.permute.xlu0 %1732
          %1734 = vrot.lane.b32.xlu0 %v1158, 32
          %v1735 = vpop.permute.xlu0 %1734
          %1736 = vrot.lane.b32.xlu0 %v1159, 32
          %v1737 = vpop.permute.xlu0 %1736
          %1738 = vrot.lane.b32.xlu0 %v1160, 32
          %v1739 = vpop.permute.xlu0 %1738
          %1740 = vrot.lane.b32.xlu0 %v1161, 32
          %v1741 = vpop.permute.xlu0 %1740
          %1742 = vrot.lane.b32.xlu0 %v1162, 32
          %v1743 = vpop.permute.xlu0 %1742
          %1744 = vrot.lane.b32.xlu0 %v1163, 32
          %v1745 = vpop.permute.xlu0 %1744
          %1746 = vrot.lane.b32.xlu0 %v1164, 32
          %v1747 = vpop.permute.xlu0 %1746
          %s1764 = scalar_lea.vmem [#allocation3], 384
          %1765 = vst.msk [vmem:[%s1764] sm:$0xff] %vm1132, %v1717
          %1766 = vst.msk [vmem:[%s1764 + $0x8] sm:$0xff] %vm1132, %v1719
          %1767 = vst.msk [vmem:[%s1764 + $0x10] sm:$0xff] %vm1132, %v1721
          %1768 = vst.msk [vmem:[%s1764 + $0x18] sm:$0xff] %vm1132, %v1723
          %1769 = vst.msk [vmem:[%s1764 + $0x20] sm:$0xff] %vm1132, %v1725
          %1770 = vst.msk [vmem:[%s1764 + $0x28] sm:$0xff] %vm1132, %v1727
          %1771 = vst.msk [vmem:[%s1764 + $0x30] sm:$0xff] %vm1132, %v1729
          %1772 = vst.msk [vmem:[%s1764 + $0x38] sm:$0xff] %vm1132, %v1731
          %1773 = vst.msk [vmem:[%s1764 + $0x40] sm:$0xff] %vm1132, %v1733
          %1774 = vst.msk [vmem:[%s1764 + $0x48] sm:$0xff] %vm1132, %v1735
          %1775 = vst.msk [vmem:[%s1764 + $0x50] sm:$0xff] %vm1132, %v1737
          %1776 = vst.msk [vmem:[%s1764 + $0x58] sm:$0xff] %vm1132, %v1739
          %1777 = vst.msk [vmem:[%s1764 + $0x60] sm:$0xff] %vm1132, %v1741
          %1778 = vst.msk [vmem:[%s1764 + $0x68] sm:$0xff] %vm1132, %v1743
          %1779 = vst.msk [vmem:[%s1764 + $0x70] sm:$0xff] %vm1132, %v1745
          %1780 = vst.msk [vmem:[%s1764 + $0x78] sm:$0xff] %vm1132, %v1747
          %1781 = vrot.lane.b32.xlu0 %v1181, 32
          %v1782 = vpop.permute.xlu0 %1781
          %1783 = vrot.lane.b32.xlu0 %v1182, 32
          %v1784 = vpop.permute.xlu0 %1783
          %1785 = vrot.lane.b32.xlu0 %v1183, 32
          %v1786 = vpop.permute.xlu0 %1785
          %1787 = vrot.lane.b32.xlu0 %v1184, 32
          %v1788 = vpop.permute.xlu0 %1787
          %1789 = vrot.lane.b32.xlu0 %v1185, 32
          %v1790 = vpop.permute.xlu0 %1789
          %1791 = vrot.lane.b32.xlu0 %v1186, 32
          %v1792 = vpop.permute.xlu0 %1791
          %1793 = vrot.lane.b32.xlu0 %v1187, 32
          %v1794 = vpop.permute.xlu0 %1793
          %1795 = vrot.lane.b32.xlu0 %v1188, 32
          %v1796 = vpop.permute.xlu0 %1795
          %1797 = vrot.lane.b32.xlu0 %v1189, 32
          %v1798 = vpop.permute.xlu0 %1797
          %1799 = vrot.lane.b32.xlu0 %v1190, 32
          %v1800 = vpop.permute.xlu0 %1799
          %1801 = vrot.lane.b32.xlu0 %v1191, 32
          %v1802 = vpop.permute.xlu0 %1801
          %1803 = vrot.lane.b32.xlu0 %v1192, 32
          %v1804 = vpop.permute.xlu0 %1803
          %1805 = vrot.lane.b32.xlu0 %v1193, 32
          %v1806 = vpop.permute.xlu0 %1805
          %1807 = vrot.lane.b32.xlu0 %v1194, 32
          %v1808 = vpop.permute.xlu0 %1807
          %1809 = vrot.lane.b32.xlu0 %v1195, 32
          %v1810 = vpop.permute.xlu0 %1809
          %1811 = vrot.lane.b32.xlu0 %v1196, 32
          %v1812 = vpop.permute.xlu0 %1811
          %s1829 = scalar_lea.vmem [#allocation4], 384
          %1830 = vst.msk [vmem:[%s1829] sm:$0xff] %vm1132, %v1782
          %1831 = vst.msk [vmem:[%s1829 + $0x8] sm:$0xff] %vm1132, %v1784
          %1832 = vst.msk [vmem:[%s1829 + $0x10] sm:$0xff] %vm1132, %v1786
          %1833 = vst.msk [vmem:[%s1829 + $0x18] sm:$0xff] %vm1132, %v1788
          %1834 = vst.msk [vmem:[%s1829 + $0x20] sm:$0xff] %vm1132, %v1790
          %1835 = vst.msk [vmem:[%s1829 + $0x28] sm:$0xff] %vm1132, %v1792
          %1836 = vst.msk [vmem:[%s1829 + $0x30] sm:$0xff] %vm1132, %v1794
          %1837 = vst.msk [vmem:[%s1829 + $0x38] sm:$0xff] %vm1132, %v1796
          %1838 = vst.msk [vmem:[%s1829 + $0x40] sm:$0xff] %vm1132, %v1798
          %1839 = vst.msk [vmem:[%s1829 + $0x48] sm:$0xff] %vm1132, %v1800
          %1840 = vst.msk [vmem:[%s1829 + $0x50] sm:$0xff] %vm1132, %v1802
          %1841 = vst.msk [vmem:[%s1829 + $0x58] sm:$0xff] %vm1132, %v1804
          %1842 = vst.msk [vmem:[%s1829 + $0x60] sm:$0xff] %vm1132, %v1806
          %1843 = vst.msk [vmem:[%s1829 + $0x68] sm:$0xff] %vm1132, %v1808
          %1844 = vst.msk [vmem:[%s1829 + $0x70] sm:$0xff] %vm1132, %v1810
          %1845 = vst.msk [vmem:[%s1829 + $0x78] sm:$0xff] %vm1132, %v1812
        $region96: #{tpu_custom_call.1} parent=71 // pred_fallthru
          _
        %s1846 = smul.u32 %s37, 128
        %s1847 = sshra.s32 %s1846, 4
        %s1848 = sand.u32 %s1846, 15
        %s1849 = smul.addr %s1847, 8
        %s1850 = scalar_lea.vmem [#allocation2], %s1849
        %v1851 = vld [vmem:[%s1850] sm:$0xff]
        %v1852 = vld [vmem:[%s1850 + $0x8] sm:$0xff]
        %v1853 = vld [vmem:[%s1850 + $0x10] sm:$0xff]
        %v1854 = vld [vmem:[%s1850 + $0x18] sm:$0xff]
        %v1855 = vld [vmem:[%s1850 + $0x20] sm:$0xff]
        %v1856 = vld [vmem:[%s1850 + $0x28] sm:$0xff]
        %v1857 = vld [vmem:[%s1850 + $0x30] sm:$0xff]
        %v1858 = vld [vmem:[%s1850 + $0x38] sm:$0xff]
        %v1859 = vld [vmem:[%s1850 + $0x80] sm:$0xff]
        %v1860 = vld [vmem:[%s1850 + $0x88] sm:$0xff]
        %v1861 = vld [vmem:[%s1850 + $0x90] sm:$0xff]
        %v1862 = vld [vmem:[%s1850 + $0x98] sm:$0xff]
        %v1863 = vld [vmem:[%s1850 + $0xa0] sm:$0xff]
        %v1864 = vld [vmem:[%s1850 + $0xa8] sm:$0xff]
        %v1865 = vld [vmem:[%s1850 + $0xb0] sm:$0xff]
        %v1866 = vld [vmem:[%s1850 + $0xb8] sm:$0xff]
        %v1867 = vld [vmem:[%s1850 + $0x100] sm:$0xff]
        %v1868 = vld [vmem:[%s1850 + $0x108] sm:$0xff]
        %v1869 = vld [vmem:[%s1850 + $0x110] sm:$0xff]
        %v1870 = vld [vmem:[%s1850 + $0x118] sm:$0xff]
        %v1871 = vld [vmem:[%s1850 + $0x120] sm:$0xff]
        %v1872 = vld [vmem:[%s1850 + $0x128] sm:$0xff]
        %v1873 = vld [vmem:[%s1850 + $0x130] sm:$0xff]
        %v1874 = vld [vmem:[%s1850 + $0x138] sm:$0xff]
        %v1875 = vld [vmem:[%s1850 + $0x180] sm:$0xff]
        %v1876 = vld [vmem:[%s1850 + $0x188] sm:$0xff]
        %v1877 = vld [vmem:[%s1850 + $0x190] sm:$0xff]
        %v1878 = vld [vmem:[%s1850 + $0x198] sm:$0xff]
        %v1879 = vld [vmem:[%s1850 + $0x1a0] sm:$0xff]
        %v1880 = vld [vmem:[%s1850 + $0x1a8] sm:$0xff]
        %v1881 = vld [vmem:[%s1850 + $0x1b0] sm:$0xff]
        %v1882 = vld [vmem:[%s1850 + $0x1b8] sm:$0xff]
        %v1883 = vld [vmem:[#allocation3] sm:$0xff]
        %v1884 = vld [vmem:[#allocation3 + $0x8] sm:$0xff]
        %v1885 = vld [vmem:[#allocation3 + $0x10] sm:$0xff]
        %v1886 = vld [vmem:[#allocation3 + $0x18] sm:$0xff]
        %v1887 = vld [vmem:[#allocation3 + $0x20] sm:$0xff]
        %v1888 = vld [vmem:[#allocation3 + $0x28] sm:$0xff]
        %v1889 = vld [vmem:[#allocation3 + $0x30] sm:$0xff]
        %v1890 = vld [vmem:[#allocation3 + $0x38] sm:$0xff]
        %v1891 = vld [vmem:[#allocation3 + $0x40] sm:$0xff]
        %v1892 = vld [vmem:[#allocation3 + $0x48] sm:$0xff]
        %v1893 = vld [vmem:[#allocation3 + $0x50] sm:$0xff]
        %v1894 = vld [vmem:[#allocation3 + $0x58] sm:$0xff]
        %v1895 = vld [vmem:[#allocation3 + $0x60] sm:$0xff]
        %v1896 = vld [vmem:[#allocation3 + $0x68] sm:$0xff]
        %v1897 = vld [vmem:[#allocation3 + $0x70] sm:$0xff]
        %v1898 = vld [vmem:[#allocation3 + $0x78] sm:$0xff]
        %v1899 = vld [vmem:[#allocation3 + $0x80] sm:$0xff]
        %v1900 = vld [vmem:[#allocation3 + $0x88] sm:$0xff]
        %v1901 = vld [vmem:[#allocation3 + $0x90] sm:$0xff]
        %v1902 = vld [vmem:[#allocation3 + $0x98] sm:$0xff]
        %v1903 = vld [vmem:[#allocation3 + $0xa0] sm:$0xff]
        %v1904 = vld [vmem:[#allocation3 + $0xa8] sm:$0xff]
        %v1905 = vld [vmem:[#allocation3 + $0xb0] sm:$0xff]
        %v1906 = vld [vmem:[#allocation3 + $0xb8] sm:$0xff]
        %v1907 = vld [vmem:[#allocation3 + $0xc0] sm:$0xff]
        %v1908 = vld [vmem:[#allocation3 + $0xc8] sm:$0xff]
        %v1909 = vld [vmem:[#allocation3 + $0xd0] sm:$0xff]
        %v1910 = vld [vmem:[#allocation3 + $0xd8] sm:$0xff]
        %v1911 = vld [vmem:[#allocation3 + $0xe0] sm:$0xff]
        %v1912 = vld [vmem:[#allocation3 + $0xe8] sm:$0xff]
        %v1913 = vld [vmem:[#allocation3 + $0xf0] sm:$0xff]
        %v1914 = vld [vmem:[#allocation3 + $0xf8] sm:$0xff]
        %v1915 = vld [vmem:[#allocation3 + $0x100] sm:$0xff]
        %v1916 = vld [vmem:[#allocation3 + $0x108] sm:$0xff]
        %v1917 = vld [vmem:[#allocation3 + $0x110] sm:$0xff]
        %v1918 = vld [vmem:[#allocation3 + $0x118] sm:$0xff]
        %v1919 = vld [vmem:[#allocation3 + $0x120] sm:$0xff]
        %v1920 = vld [vmem:[#allocation3 + $0x128] sm:$0xff]
        %v1921 = vld [vmem:[#allocation3 + $0x130] sm:$0xff]
        %v1922 = vld [vmem:[#allocation3 + $0x138] sm:$0xff]
        %v1923 = vld [vmem:[#allocation3 + $0x140] sm:$0xff]
        %v1924 = vld [vmem:[#allocation3 + $0x148] sm:$0xff]
        %v1925 = vld [vmem:[#allocation3 + $0x150] sm:$0xff]
        %v1926 = vld [vmem:[#allocation3 + $0x158] sm:$0xff]
        %v1927 = vld [vmem:[#allocation3 + $0x160] sm:$0xff]
        %v1928 = vld [vmem:[#allocation3 + $0x168] sm:$0xff]
        %v1929 = vld [vmem:[#allocation3 + $0x170] sm:$0xff]
        %v1930 = vld [vmem:[#allocation3 + $0x178] sm:$0xff]
        %v1931 = vld [vmem:[#allocation3 + $0x180] sm:$0xff]
        %v1932 = vld [vmem:[#allocation3 + $0x188] sm:$0xff]
        %v1933 = vld [vmem:[#allocation3 + $0x190] sm:$0xff]
        %v1934 = vld [vmem:[#allocation3 + $0x198] sm:$0xff]
        %v1935 = vld [vmem:[#allocation3 + $0x1a0] sm:$0xff]
        %v1936 = vld [vmem:[#allocation3 + $0x1a8] sm:$0xff]
        %v1937 = vld [vmem:[#allocation3 + $0x1b0] sm:$0xff]
        %v1938 = vld [vmem:[#allocation3 + $0x1b8] sm:$0xff]
        %v1939 = vld [vmem:[#allocation3 + $0x1c0] sm:$0xff]
        %v1940 = vld [vmem:[#allocation3 + $0x1c8] sm:$0xff]
        %v1941 = vld [vmem:[#allocation3 + $0x1d0] sm:$0xff]
        %v1942 = vld [vmem:[#allocation3 + $0x1d8] sm:$0xff]
        %v1943 = vld [vmem:[#allocation3 + $0x1e0] sm:$0xff]
        %v1944 = vld [vmem:[#allocation3 + $0x1e8] sm:$0xff]
        %v1945 = vld [vmem:[#allocation3 + $0x1f0] sm:$0xff]
        %v1946 = vld [vmem:[#allocation3 + $0x1f8] sm:$0xff]
        %v1947 = vld [vmem:[#allocation4] sm:$0xff]
        %v1948 = vld [vmem:[#allocation4 + $0x8] sm:$0xff]
        %v1949 = vld [vmem:[#allocation4 + $0x10] sm:$0xff]
        %v1950 = vld [vmem:[#allocation4 + $0x18] sm:$0xff]
        %v1951 = vld [vmem:[#allocation4 + $0x20] sm:$0xff]
        %v1952 = vld [vmem:[#allocation4 + $0x28] sm:$0xff]
        %v1953 = vld [vmem:[#allocation4 + $0x30] sm:$0xff]
        %v1954 = vld [vmem:[#allocation4 + $0x38] sm:$0xff]
        %v1955 = vld [vmem:[#allocation4 + $0x40] sm:$0xff]
        %v1956 = vld [vmem:[#allocation4 + $0x48] sm:$0xff]
        %v1957 = vld [vmem:[#allocation4 + $0x50] sm:$0xff]
        %v1958 = vld [vmem:[#allocation4 + $0x58] sm:$0xff]
        %v1959 = vld [vmem:[#allocation4 + $0x60] sm:$0xff]
        %v1960 = vld [vmem:[#allocation4 + $0x68] sm:$0xff]
        %v1961 = vld [vmem:[#allocation4 + $0x70] sm:$0xff]
        %v1962 = vld [vmem:[#allocation4 + $0x78] sm:$0xff]
        %v1963 = vld [vmem:[#allocation4 + $0x80] sm:$0xff]
        %v1964 = vld [vmem:[#allocation4 + $0x88] sm:$0xff]
        %v1965 = vld [vmem:[#allocation4 + $0x90] sm:$0xff]
        %v1966 = vld [vmem:[#allocation4 + $0x98] sm:$0xff]
        %v1967 = vld [vmem:[#allocation4 + $0xa0] sm:$0xff]
        %v1968 = vld [vmem:[#allocation4 + $0xa8] sm:$0xff]
        %v1969 = vld [vmem:[#allocation4 + $0xb0] sm:$0xff]
        %v1970 = vld [vmem:[#allocation4 + $0xb8] sm:$0xff]
        %v1971 = vld [vmem:[#allocation4 + $0xc0] sm:$0xff]
        %v1972 = vld [vmem:[#allocation4 + $0xc8] sm:$0xff]
        %v1973 = vld [vmem:[#allocation4 + $0xd0] sm:$0xff]
        %v1974 = vld [vmem:[#allocation4 + $0xd8] sm:$0xff]
        %v1975 = vld [vmem:[#allocation4 + $0xe0] sm:$0xff]
        %v1976 = vld [vmem:[#allocation4 + $0xe8] sm:$0xff]
        %v1977 = vld [vmem:[#allocation4 + $0xf0] sm:$0xff]
        %v1978 = vld [vmem:[#allocation4 + $0xf8] sm:$0xff]
        %v1979 = vld [vmem:[#allocation4 + $0x100] sm:$0xff]
        %v1980 = vld [vmem:[#allocation4 + $0x108] sm:$0xff]
        %v1981 = vld [vmem:[#allocation4 + $0x110] sm:$0xff]
        %v1982 = vld [vmem:[#allocation4 + $0x118] sm:$0xff]
        %v1983 = vld [vmem:[#allocation4 + $0x120] sm:$0xff]
        %v1984 = vld [vmem:[#allocation4 + $0x128] sm:$0xff]
        %v1985 = vld [vmem:[#allocation4 + $0x130] sm:$0xff]
        %v1986 = vld [vmem:[#allocation4 + $0x138] sm:$0xff]
        %v1987 = vld [vmem:[#allocation4 + $0x140] sm:$0xff]
        %v1988 = vld [vmem:[#allocation4 + $0x148] sm:$0xff]
        %v1989 = vld [vmem:[#allocation4 + $0x150] sm:$0xff]
        %v1990 = vld [vmem:[#allocation4 + $0x158] sm:$0xff]
        %v1991 = vld [vmem:[#allocation4 + $0x160] sm:$0xff]
        %v1992 = vld [vmem:[#allocation4 + $0x168] sm:$0xff]
        %v1993 = vld [vmem:[#allocation4 + $0x170] sm:$0xff]
        %v1994 = vld [vmem:[#allocation4 + $0x178] sm:$0xff]
        %v1995 = vld [vmem:[#allocation4 + $0x180] sm:$0xff]
        %v1996 = vld [vmem:[#allocation4 + $0x188] sm:$0xff]
        %v1997 = vld [vmem:[#allocation4 + $0x190] sm:$0xff]
        %v1998 = vld [vmem:[#allocation4 + $0x198] sm:$0xff]
        %v1999 = vld [vmem:[#allocation4 + $0x1a0] sm:$0xff]
        %v2000 = vld [vmem:[#allocation4 + $0x1a8] sm:$0xff]
        %v2001 = vld [vmem:[#allocation4 + $0x1b0] sm:$0xff]
        %v2002 = vld [vmem:[#allocation4 + $0x1b8] sm:$0xff]
        %v2003 = vld [vmem:[#allocation4 + $0x1c0] sm:$0xff]
        %v2004 = vld [vmem:[#allocation4 + $0x1c8] sm:$0xff]
        %v2005 = vld [vmem:[#allocation4 + $0x1d0] sm:$0xff]
        %v2006 = vld [vmem:[#allocation4 + $0x1d8] sm:$0xff]
        %v2007 = vld [vmem:[#allocation4 + $0x1e0] sm:$0xff]
        %v2008 = vld [vmem:[#allocation4 + $0x1e8] sm:$0xff]
        %v2009 = vld [vmem:[#allocation4 + $0x1f0] sm:$0xff]
        %v2010 = vld [vmem:[#allocation4 + $0x1f8] sm:$0xff]
        %vm2011 = vcmask 261120
        %v2013 = vsel %vm2011, %v1851, 0
        %v2016 = vsel %vm2011, %v1852, 0
        %v2019 = vsel %vm2011, %v1853, 0
        %v2022 = vsel %vm2011, %v1854, 0
        %v2025 = vsel %vm2011, %v1855, 0
        %v2028 = vsel %vm2011, %v1856, 0
        %v2031 = vsel %vm2011, %v1857, 0
        %v2034 = vsel %vm2011, %v1858, 0
        %v2037 = vsel %vm2011, %v1883, 0
        %v2040 = vsel %vm2011, %v1884, 0
        %v2043 = vsel %vm2011, %v1885, 0
        %v2046 = vsel %vm2011, %v1886, 0
        %v2049 = vsel %vm2011, %v1887, 0
        %v2052 = vsel %vm2011, %v1888, 0
        %v2055 = vsel %vm2011, %v1889, 0
        %v2058 = vsel %vm2011, %v1890, 0
        %v2061 = vsel %vm2011, %v1891, 0
        %v2064 = vsel %vm2011, %v1892, 0
        %v2067 = vsel %vm2011, %v1893, 0
        %v2070 = vsel %vm2011, %v1894, 0
        %v2073 = vsel %vm2011, %v1895, 0
        %v2076 = vsel %vm2011, %v1896, 0
        %v2079 = vsel %vm2011, %v1897, 0
        %v2082 = vsel %vm2011, %v1898, 0
        %2084 = vmatprep.subr.bf16.mxu0 0
        %2085 = vmatpush1.bf16.xpose.msra.mxu0 %v2037
        %2086 = vmatprep.subr.bf16.mxu0 0
        %2087 = vmatpush1.bf16.xpose.msra.mxu0 %v2040
        %2088 = vmatprep.subr.bf16.mxu0 0
        %2089 = vmatpush1.bf16.xpose.msra.mxu0 %v2043
        %2090 = vmatprep.subr.bf16.mxu0 0
        %2091 = vmatpush1.bf16.xpose.msra.mxu0 %v2046
        %2092 = vmatprep.subr.bf16.mxu0 0
        %2093 = vmatpush1.bf16.xpose.msra.mxu0 %v2049
        %2094 = vmatprep.subr.bf16.mxu0 0
        %2095 = vmatpush1.bf16.xpose.msra.mxu0 %v2052
        %2096 = vmatprep.subr.bf16.mxu0 0
        %2097 = vmatpush1.bf16.xpose.msra.mxu0 %v2055
        %2098 = vmatprep.subr.bf16.mxu0 0
        %2099 = vmatpush1.bf16.xpose.msra.mxu0 %v2058
        %2100 = vmatprep.subr.bf16.mxu0 0
        %2101 = vmatpush1.bf16.xpose.msra.mxu0 %v2061
        %2102 = vmatprep.subr.bf16.mxu0 0
        %2103 = vmatpush1.bf16.xpose.msra.mxu0 %v2064
        %2104 = vmatprep.subr.bf16.mxu0 0
        %2105 = vmatpush1.bf16.xpose.msra.mxu0 %v2067
        %2106 = vmatprep.subr.bf16.mxu0 0
        %2107 = vmatpush1.bf16.xpose.msra.mxu0 %v2070
        %2108 = vmatprep.subr.bf16.mxu0 0
        %2109 = vmatpush1.bf16.xpose.msra.mxu0 %v2073
        %2110 = vmatprep.subr.bf16.mxu0 0
        %2111 = vmatpush1.bf16.xpose.msra.mxu0 %v2076
        %2112 = vmatprep.subr.bf16.mxu0 0
        %2113 = vmatpush1.bf16.xpose.msra.mxu0 %v2079
        %2114 = vmatprep.subr.bf16.mxu0 0
        %2115 = vmatpush1.bf16.xpose.msra.mxu0 %v2082
        %2116 = vmatprep.mubr.bf16.mxu0 0
        %2117 = vmatmul.mubr.bf16.gmra.mrb[0].mxu0 %v2013
        %v2118 = vpop.f32.mrb[0].mxu0
        %v2119 = vadd.f32 0.0, %v2118
        %v2120 = vpop.f32.mrb[0].mxu0
        %v2121 = vadd.f32 0.0, %v2120
        %v2122 = vpop.f32.mrb[0].mxu0
        %v2123 = vadd.f32 0.0, %v2122
        %v2124 = vpop.f32.mrb[0].mxu0
        %v2125 = vadd.f32 0.0, %v2124
        %2126 = vmatprep.mubr.bf16.mxu0 0
        %2127 = vmatmul.mubr.bf16.gmra.mrb[0].mxu0 %v2016
        %v2128 = vpop.f32.mrb[0].mxu0
        %v2129 = vadd.f32 0.0, %v2128
        %v2130 = vpop.f32.mrb[0].mxu0
        %v2131 = vadd.f32 0.0, %v2130
        %v2132 = vpop.f32.mrb[0].mxu0
        %v2133 = vadd.f32 0.0, %v2132
        %v2134 = vpop.f32.mrb[0].mxu0
        %v2135 = vadd.f32 0.0, %v2134
        %2136 = vmatprep.mubr.bf16.mxu0 0
        %2137 = vmatmul.mubr.bf16.gmra.mrb[0].mxu0 %v2019
        %v2138 = vpop.f32.mrb[0].mxu0
        %v2139 = vadd.f32 0.0, %v2138
        %v2140 = vpop.f32.mrb[0].mxu0
        %v2141 = vadd.f32 0.0, %v2140
        %v2142 = vpop.f32.mrb[0].mxu0
        %v2143 = vadd.f32 0.0, %v2142
        %v2144 = vpop.f32.mrb[0].mxu0
        %v2145 = vadd.f32 0.0, %v2144
        %2146 = vmatprep.mubr.bf16.mxu0 0
        %2147 = vmatmul.mubr.bf16.gmra.mrb[0].mxu0 %v2022
        %v2148 = vpop.f32.mrb[0].mxu0
        %v2149 = vadd.f32 0.0, %v2148
        %v2150 = vpop.f32.mrb[0].mxu0
        %v2151 = vadd.f32 0.0, %v2150
        %v2152 = vpop.f32.mrb[0].mxu0
        %v2153 = vadd.f32 0.0, %v2152
        %v2154 = vpop.f32.mrb[0].mxu0
        %v2155 = vadd.f32 0.0, %v2154
        %2156 = vmatprep.mubr.bf16.mxu0 0
        %2157 = vmatmul.mubr.bf16.gmra.mrb[0].mxu0 %v2025
        %v2158 = vpop.f32.mrb[0].mxu0
        %v2159 = vadd.f32 0.0, %v2158
        %v2160 = vpop.f32.mrb[0].mxu0
        %v2161 = vadd.f32 0.0, %v2160
        %v2162 = vpop.f32.mrb[0].mxu0
        %v2163 = vadd.f32 0.0, %v2162
        %v2164 = vpop.f32.mrb[0].mxu0
        %v2165 = vadd.f32 0.0, %v2164
        %2166 = vmatprep.mubr.bf16.mxu0 0
        %2167 = vmatmul.mubr.bf16.gmra.mrb[0].mxu0 %v2028
        %v2168 = vpop.f32.mrb[0].mxu0
        %v2169 = vadd.f32 0.0, %v2168
        %v2170 = vpop.f32.mrb[0].mxu0
        %v2171 = vadd.f32 0.0, %v2170
        %v2172 = vpop.f32.mrb[0].mxu0
        %v2173 = vadd.f32 0.0, %v2172
        %v2174 = vpop.f32.mrb[0].mxu0
        %v2175 = vadd.f32 0.0, %v2174
        %2176 = vmatprep.mubr.bf16.mxu0 0
        %2177 = vmatmul.mubr.bf16.gmra.mrb[0].mxu0 %v2031
        %v2178 = vpop.f32.mrb[0].mxu0
        %v2179 = vadd.f32 0.0, %v2178
        %v2180 = vpop.f32.mrb[0].mxu0
        %v2181 = vadd.f32 0.0, %v2180
        %v2182 = vpop.f32.mrb[0].mxu0
        %v2183 = vadd.f32 0.0, %v2182
        %v2184 = vpop.f32.mrb[0].mxu0
        %v2185 = vadd.f32 0.0, %v2184
        %2186 = vmatprep.mubr.bf16.mxu0 0
        %2187 = vmatmul.mubr.bf16.gmra.mrb[0].mxu0 %v2034
        %v2188 = vpop.f32.mrb[0].mxu0
        %v2189 = vadd.f32 0.0, %v2188
        %v2190 = vpop.f32.mrb[0].mxu0
        %v2191 = vadd.f32 0.0, %v2190
        %v2192 = vpop.f32.mrb[0].mxu0
        %v2193 = vadd.f32 0.0, %v2192
        %v2194 = vpop.f32.mrb[0].mxu0
        %v2195 = vadd.f32 0.0, %v2194
        %2196 = vdwg.mxu0
        %v2198 = vsel %vm2011, %v1859, 0
        %v2201 = vsel %vm2011, %v1860, 0
        %v2204 = vsel %vm2011, %v1861, 0
        %v2207 = vsel %vm2011, %v1862, 0
        %v2210 = vsel %vm2011, %v1863, 0
        %v2213 = vsel %vm2011, %v1864, 0
        %v2216 = vsel %vm2011, %v1865, 0
        %v2219 = vsel %vm2011, %v1866, 0
        %v2222 = vsel %vm2011, %v1899, 0
        %v2225 = vsel %vm2011, %v1900, 0
        %v2228 = vsel %vm2011, %v1901, 0
        %v2231 = vsel %vm2011, %v1902, 0
        %v2234 = vsel %vm2011, %v1903, 0
        %v2237 = vsel %vm2011, %v1904, 0
        %v2240 = vsel %vm2011, %v1905, 0
        %v2243 = vsel %vm2011, %v1906, 0
        %v2246 = vsel %vm2011, %v1907, 0
        %v2249 = vsel %vm2011, %v1908, 0
        %v2252 = vsel %vm2011, %v1909, 0
        %v2255 = vsel %vm2011, %v1910, 0
        %v2258 = vsel %vm2011, %v1911, 0
        %v2261 = vsel %vm2011, %v1912, 0
        %v2264 = vsel %vm2011, %v1913, 0
        %v2267 = vsel %vm2011, %v1914, 0
        %2269 = vmatprep.subr.bf16.mxu0 0
        %2270 = vmatpush1.bf16.xpose.msra.mxu0 %v2222
        %2271 = vmatprep.subr.bf16.mxu0 0
        %2272 = vmatpush1.bf16.xpose.msra.mxu0 %v2225
        %2273 = vmatprep.subr.bf16.mxu0 0
        %2274 = vmatpush1.bf16.xpose.msra.mxu0 %v2228
        %2275 = vmatprep.subr.bf16.mxu0 0
        %2276 = vmatpush1.bf16.xpose.msra.mxu0 %v2231
        %2277 = vmatprep.subr.bf16.mxu0 0
        %2278 = vmatpush1.bf16.xpose.msra.mxu0 %v2234
        %2279 = vmatprep.subr.bf16.mxu0 0
        %2280 = vmatpush1.bf16.xpose.msra.mxu0 %v2237
        %2281 = vmatprep.subr.bf16.mxu0 0
        %2282 = vmatpush1.bf16.xpose.msra.mxu0 %v2240
        %2283 = vmatprep.subr.bf16.mxu0 0
        %2284 = vmatpush1.bf16.xpose.msra.mxu0 %v2243
        %2285 = vmatprep.subr.bf16.mxu0 0
        %2286 = vmatpush1.bf16.xpose.msra.mxu0 %v2246
        %2287 = vmatprep.subr.bf16.mxu0 0
        %2288 = vmatpush1.bf16.xpose.msra.mxu0 %v2249
        %2289 = vmatprep.subr.bf16.mxu0 0
        %2290 = vmatpush1.bf16.xpose.msra.mxu0 %v2252
        %2291 = vmatprep.subr.bf16.mxu0 0
        %2292 = vmatpush1.bf16.xpose.msra.mxu0 %v2255
        %2293 = vmatprep.subr.bf16.mxu0 0
        %2294 = vmatpush1.bf16.xpose.msra.mxu0 %v2258
        %2295 = vmatprep.subr.bf16.mxu0 0
        %2296 = vmatpush1.bf16.xpose.msra.mxu0 %v2261
        %2297 = vmatprep.subr.bf16.mxu0 0
        %2298 = vmatpush1.bf16.xpose.msra.mxu0 %v2264
        %2299 = vmatprep.subr.bf16.mxu0 0
        %2300 = vmatpush1.bf16.xpose.msra.mxu0 %v2267
        %2301 = vmatprep.mubr.bf16.mxu0 0
        %2302 = vmatmul.mubr.bf16.gmra.mrb[0].mxu0 %v2198
        %v2303 = vpop.f32.mrb[0].mxu0
        %v2304 = vadd.f32 0.0, %v2303
        %v2305 = vpop.f32.mrb[0].mxu0
        %v2306 = vadd.f32 0.0, %v2305
        %v2307 = vpop.f32.mrb[0].mxu0
        %v2308 = vadd.f32 0.0, %v2307
        %v2309 = vpop.f32.mrb[0].mxu0
        %v2310 = vadd.f32 0.0, %v2309
        %2311 = vmatprep.mubr.bf16.mxu0 0
        %2312 = vmatmul.mubr.bf16.gmra.mrb[0].mxu0 %v2201
        %v2313 = vpop.f32.mrb[0].mxu0
        %v2314 = vadd.f32 0.0, %v2313
        %v2315 = vpop.f32.mrb[0].mxu0
        %v2316 = vadd.f32 0.0, %v2315
        %v2317 = vpop.f32.mrb[0].mxu0
        %v2318 = vadd.f32 0.0, %v2317
        %v2319 = vpop.f32.mrb[0].mxu0
        %v2320 = vadd.f32 0.0, %v2319
        %2321 = vmatprep.mubr.bf16.mxu0 0
        %2322 = vmatmul.mubr.bf16.gmra.mrb[0].mxu0 %v2204
        %v2323 = vpop.f32.mrb[0].mxu0
        %v2324 = vadd.f32 0.0, %v2323
        %v2325 = vpop.f32.mrb[0].mxu0
        %v2326 = vadd.f32 0.0, %v2325
        %v2327 = vpop.f32.mrb[0].mxu0
        %v2328 = vadd.f32 0.0, %v2327
        %v2329 = vpop.f32.mrb[0].mxu0
        %v2330 = vadd.f32 0.0, %v2329
        %2331 = vmatprep.mubr.bf16.mxu0 0
        %2332 = vmatmul.mubr.bf16.gmra.mrb[0].mxu0 %v2207
        %v2333 = vpop.f32.mrb[0].mxu0
        %v2334 = vadd.f32 0.0, %v2333
        %v2335 = vpop.f32.mrb[0].mxu0
        %v2336 = vadd.f32 0.0, %v2335
        %v2337 = vpop.f32.mrb[0].mxu0
        %v2338 = vadd.f32 0.0, %v2337
        %v2339 = vpop.f32.mrb[0].mxu0
        %v2340 = vadd.f32 0.0, %v2339
        %2341 = vmatprep.mubr.bf16.mxu0 0
        %2342 = vmatmul.mubr.bf16.gmra.mrb[0].mxu0 %v2210
        %v2343 = vpop.f32.mrb[0].mxu0
        %v2344 = vadd.f32 0.0, %v2343
        %v2345 = vpop.f32.mrb[0].mxu0
        %v2346 = vadd.f32 0.0, %v2345
        %v2347 = vpop.f32.mrb[0].mxu0
        %v2348 = vadd.f32 0.0, %v2347
        %v2349 = vpop.f32.mrb[0].mxu0
        %v2350 = vadd.f32 0.0, %v2349
        %2351 = vmatprep.mubr.bf16.mxu0 0
        %2352 = vmatmul.mubr.bf16.gmra.mrb[0].mxu0 %v2213
        %v2353 = vpop.f32.mrb[0].mxu0
        %v2354 = vadd.f32 0.0, %v2353
        %v2355 = vpop.f32.mrb[0].mxu0
        %v2356 = vadd.f32 0.0, %v2355
        %v2357 = vpop.f32.mrb[0].mxu0
        %v2358 = vadd.f32 0.0, %v2357
        %v2359 = vpop.f32.mrb[0].mxu0
        %v2360 = vadd.f32 0.0, %v2359
        %2361 = vmatprep.mubr.bf16.mxu0 0
        %2362 = vmatmul.mubr.bf16.gmra.mrb[0].mxu0 %v2216
        %v2363 = vpop.f32.mrb[0].mxu0
        %v2364 = vadd.f32 0.0, %v2363
        %v2365 = vpop.f32.mrb[0].mxu0
        %v2366 = vadd.f32 0.0, %v2365
        %v2367 = vpop.f32.mrb[0].mxu0
        %v2368 = vadd.f32 0.0, %v2367
        %v2369 = vpop.f32.mrb[0].mxu0
        %v2370 = vadd.f32 0.0, %v2369
        %2371 = vmatprep.mubr.bf16.mxu0 0
        %2372 = vmatmul.mubr.bf16.gmra.mrb[0].mxu0 %v2219
        %v2373 = vpop.f32.mrb[0].mxu0
        %v2374 = vadd.f32 0.0, %v2373
        %v2375 = vpop.f32.mrb[0].mxu0
        %v2376 = vadd.f32 0.0, %v2375
        %v2377 = vpop.f32.mrb[0].mxu0
        %v2378 = vadd.f32 0.0, %v2377
        %v2379 = vpop.f32.mrb[0].mxu0
        %v2380 = vadd.f32 0.0, %v2379
        %2381 = vdwg.mxu0
        %v2383 = vsel %vm2011, %v1867, 0
        %v2386 = vsel %vm2011, %v1868, 0
        %v2389 = vsel %vm2011, %v1869, 0
        %v2392 = vsel %vm2011, %v1870, 0
        %v2395 = vsel %vm2011, %v1871, 0
        %v2398 = vsel %vm2011, %v1872, 0
        %v2401 = vsel %vm2011, %v1873, 0
        %v2404 = vsel %vm2011, %v1874, 0
        %v2407 = vsel %vm2011, %v1915, 0
        %v2410 = vsel %vm2011, %v1916, 0
        %v2413 = vsel %vm2011, %v1917, 0
        %v2416 = vsel %vm2011, %v1918, 0
        %v2419 = vsel %vm2011, %v1919, 0
        %v2422 = vsel %vm2011, %v1920, 0
        %v2425 = vsel %vm2011, %v1921, 0
        %v2428 = vsel %vm2011, %v1922, 0
        %v2431 = vsel %vm2011, %v1923, 0
        %v2434 = vsel %vm2011, %v1924, 0
        %v2437 = vsel %vm2011, %v1925, 0
        %v2440 = vsel %vm2011, %v1926, 0
        %v2443 = vsel %vm2011, %v1927, 0
        %v2446 = vsel %vm2011, %v1928, 0
        %v2449 = vsel %vm2011, %v1929, 0
        %v2452 = vsel %vm2011, %v1930, 0
        %2454 = vmatprep.subr.bf16.mxu0 0
        %2455 = vmatpush1.bf16.xpose.msra.mxu0 %v2407
        %2456 = vmatprep.subr.bf16.mxu0 0
        %2457 = vmatpush1.bf16.xpose.msra.mxu0 %v2410
        %2458 = vmatprep.subr.bf16.mxu0 0
        %2459 = vmatpush1.bf16.xpose.msra.mxu0 %v2413
        %2460 = vmatprep.subr.bf16.mxu0 0
        %2461 = vmatpush1.bf16.xpose.msra.mxu0 %v2416
        %2462 = vmatprep.subr.bf16.mxu0 0
        %2463 = vmatpush1.bf16.xpose.msra.mxu0 %v2419
        %2464 = vmatprep.subr.bf16.mxu0 0
        %2465 = vmatpush1.bf16.xpose.msra.mxu0 %v2422
        %2466 = vmatprep.subr.bf16.mxu0 0
        %2467 = vmatpush1.bf16.xpose.msra.mxu0 %v2425
        %2468 = vmatprep.subr.bf16.mxu0 0
        %2469 = vmatpush1.bf16.xpose.msra.mxu0 %v2428
        %2470 = vmatprep.subr.bf16.mxu0 0
        %2471 = vmatpush1.bf16.xpose.msra.mxu0 %v2431
        %2472 = vmatprep.subr.bf16.mxu0 0
        %2473 = vmatpush1.bf16.xpose.msra.mxu0 %v2434
        %2474 = vmatprep.subr.bf16.mxu0 0
        %2475 = vmatpush1.bf16.xpose.msra.mxu0 %v2437
        %2476 = vmatprep.subr.bf16.mxu0 0
        %2477 = vmatpush1.bf16.xpose.msra.mxu0 %v2440
        %2478 = vmatprep.subr.bf16.mxu0 0
        %2479 = vmatpush1.bf16.xpose.msra.mxu0 %v2443
        %2480 = vmatprep.subr.bf16.mxu0 0
        %2481 = vmatpush1.bf16.xpose.msra.mxu0 %v2446
        %2482 = vmatprep.subr.bf16.mxu0 0
        %2483 = vmatpush1.bf16.xpose.msra.mxu0 %v2449
        %2484 = vmatprep.subr.bf16.mxu0 0
        %2485 = vmatpush1.bf16.xpose.msra.mxu0 %v2452
        %2486 = vmatprep.mubr.bf16.mxu0 0
        %2487 = vmatmul.mubr.bf16.gmra.mrb[0].mxu0 %v2383
        %v2488 = vpop.f32.mrb[0].mxu0
        %v2489 = vadd.f32 0.0, %v2488
        %v2490 = vpop.f32.mrb[0].mxu0
        %v2491 = vadd.f32 0.0, %v2490
        %v2492 = vpop.f32.mrb[0].mxu0
        %v2493 = vadd.f32 0.0, %v2492
        %v2494 = vpop.f32.mrb[0].mxu0
        %v2495 = vadd.f32 0.0, %v2494
        %2496 = vmatprep.mubr.bf16.mxu0 0
        %2497 = vmatmul.mubr.bf16.gmra.mrb[0].mxu0 %v2386
        %v2498 = vpop.f32.mrb[0].mxu0
        %v2499 = vadd.f32 0.0, %v2498
        %v2500 = vpop.f32.mrb[0].mxu0
        %v2501 = vadd.f32 0.0, %v2500
        %v2502 = vpop.f32.mrb[0].mxu0
        %v2503 = vadd.f32 0.0, %v2502
        %v2504 = vpop.f32.mrb[0].mxu0
        %v2505 = vadd.f32 0.0, %v2504
        %2506 = vmatprep.mubr.bf16.mxu0 0
        %2507 = vmatmul.mubr.bf16.gmra.mrb[0].mxu0 %v2389
        %v2508 = vpop.f32.mrb[0].mxu0
        %v2509 = vadd.f32 0.0, %v2508
        %v2510 = vpop.f32.mrb[0].mxu0
        %v2511 = vadd.f32 0.0, %v2510
        %v2512 = vpop.f32.mrb[0].mxu0
        %v2513 = vadd.f32 0.0, %v2512
        %v2514 = vpop.f32.mrb[0].mxu0
        %v2515 = vadd.f32 0.0, %v2514
        %2516 = vmatprep.mubr.bf16.mxu0 0
        %2517 = vmatmul.mubr.bf16.gmra.mrb[0].mxu0 %v2392
        %v2518 = vpop.f32.mrb[0].mxu0
        %v2519 = vadd.f32 0.0, %v2518
        %v2520 = vpop.f32.mrb[0].mxu0
        %v2521 = vadd.f32 0.0, %v2520
        %v2522 = vpop.f32.mrb[0].mxu0
        %v2523 = vadd.f32 0.0, %v2522
        %v2524 = vpop.f32.mrb[0].mxu0
        %v2525 = vadd.f32 0.0, %v2524
        %2526 = vmatprep.mubr.bf16.mxu0 0
        %2527 = vmatmul.mubr.bf16.gmra.mrb[0].mxu0 %v2395
        %v2528 = vpop.f32.mrb[0].mxu0
        %v2529 = vadd.f32 0.0, %v2528
        %v2530 = vpop.f32.mrb[0].mxu0
        %v2531 = vadd.f32 0.0, %v2530
        %v2532 = vpop.f32.mrb[0].mxu0
        %v2533 = vadd.f32 0.0, %v2532
        %v2534 = vpop.f32.mrb[0].mxu0
        %v2535 = vadd.f32 0.0, %v2534
        %2536 = vmatprep.mubr.bf16.mxu0 0
        %2537 = vmatmul.mubr.bf16.gmra.mrb[0].mxu0 %v2398
        %v2538 = vpop.f32.mrb[0].mxu0
        %v2539 = vadd.f32 0.0, %v2538
        %v2540 = vpop.f32.mrb[0].mxu0
        %v2541 = vadd.f32 0.0, %v2540
        %v2542 = vpop.f32.mrb[0].mxu0
        %v2543 = vadd.f32 0.0, %v2542
        %v2544 = vpop.f32.mrb[0].mxu0
        %v2545 = vadd.f32 0.0, %v2544
        %2546 = vmatprep.mubr.bf16.mxu0 0
        %2547 = vmatmul.mubr.bf16.gmra.mrb[0].mxu0 %v2401
        %v2548 = vpop.f32.mrb[0].mxu0
        %v2549 = vadd.f32 0.0, %v2548
        %v2550 = vpop.f32.mrb[0].mxu0
        %v2551 = vadd.f32 0.0, %v2550
        %v2552 = vpop.f32.mrb[0].mxu0
        %v2553 = vadd.f32 0.0, %v2552
        %v2554 = vpop.f32.mrb[0].mxu0
        %v2555 = vadd.f32 0.0, %v2554
        %2556 = vmatprep.mubr.bf16.mxu0 0
        %2557 = vmatmul.mubr.bf16.gmra.mrb[0].mxu0 %v2404
        %v2558 = vpop.f32.mrb[0].mxu0
        %v2559 = vadd.f32 0.0, %v2558
        %v2560 = vpop.f32.mrb[0].mxu0
        %v2561 = vadd.f32 0.0, %v2560
        %v2562 = vpop.f32.mrb[0].mxu0
        %v2563 = vadd.f32 0.0, %v2562
        %v2564 = vpop.f32.mrb[0].mxu0
        %v2565 = vadd.f32 0.0, %v2564
        %2566 = vdwg.mxu0
        %v2568 = vsel %vm2011, %v1875, 0
        %v2571 = vsel %vm2011, %v1876, 0
        %v2574 = vsel %vm2011, %v1877, 0
        %v2577 = vsel %vm2011, %v1878, 0
        %v2580 = vsel %vm2011, %v1879, 0
        %v2583 = vsel %vm2011, %v1880, 0
        %v2586 = vsel %vm2011, %v1881, 0
        %v2589 = vsel %vm2011, %v1882, 0
        %v2592 = vsel %vm2011, %v1931, 0
        %v2595 = vsel %vm2011, %v1932, 0
        %v2598 = vsel %vm2011, %v1933, 0
        %v2601 = vsel %vm2011, %v1934, 0
        %v2604 = vsel %vm2011, %v1935, 0
        %v2607 = vsel %vm2011, %v1936, 0
        %v2610 = vsel %vm2011, %v1937, 0
        %v2613 = vsel %vm2011, %v1938, 0
        %v2616 = vsel %vm2011, %v1939, 0
        %v2619 = vsel %vm2011, %v1940, 0
        %v2622 = vsel %vm2011, %v1941, 0
        %v2625 = vsel %vm2011, %v1942, 0
        %v2628 = vsel %vm2011, %v1943, 0
        %v2631 = vsel %vm2011, %v1944, 0
        %v2634 = vsel %vm2011, %v1945, 0
        %v2637 = vsel %vm2011, %v1946, 0
        %2639 = vmatprep.subr.bf16.mxu0 0
        %2640 = vmatpush1.bf16.xpose.msra.mxu0 %v2592
        %2641 = vmatprep.subr.bf16.mxu0 0
        %2642 = vmatpush1.bf16.xpose.msra.mxu0 %v2595
        %2643 = vmatprep.subr.bf16.mxu0 0
        %2644 = vmatpush1.bf16.xpose.msra.mxu0 %v2598
        %2645 = vmatprep.subr.bf16.mxu0 0
        %2646 = vmatpush1.bf16.xpose.msra.mxu0 %v2601
        %2647 = vmatprep.subr.bf16.mxu0 0
        %2648 = vmatpush1.bf16.xpose.msra.mxu0 %v2604
        %2649 = vmatprep.subr.bf16.mxu0 0
        %2650 = vmatpush1.bf16.xpose.msra.mxu0 %v2607
        %2651 = vmatprep.subr.bf16.mxu0 0
        %2652 = vmatpush1.bf16.xpose.msra.mxu0 %v2610
        %2653 = vmatprep.subr.bf16.mxu0 0
        %2654 = vmatpush1.bf16.xpose.msra.mxu0 %v2613
        %2655 = vmatprep.subr.bf16.mxu0 0
        %2656 = vmatpush1.bf16.xpose.msra.mxu0 %v2616
        %2657 = vmatprep.subr.bf16.mxu0 0
        %2658 = vmatpush1.bf16.xpose.msra.mxu0 %v2619
        %2659 = vmatprep.subr.bf16.mxu0 0
        %2660 = vmatpush1.bf16.xpose.msra.mxu0 %v2622
        %2661 = vmatprep.subr.bf16.mxu0 0
        %2662 = vmatpush1.bf16.xpose.msra.mxu0 %v2625
        %2663 = vmatprep.subr.bf16.mxu0 0
        %2664 = vmatpush1.bf16.xpose.msra.mxu0 %v2628
        %2665 = vmatprep.subr.bf16.mxu0 0
        %2666 = vmatpush1.bf16.xpose.msra.mxu0 %v2631
        %2667 = vmatprep.subr.bf16.mxu0 0
        %2668 = vmatpush1.bf16.xpose.msra.mxu0 %v2634
        %2669 = vmatprep.subr.bf16.mxu0 0
        %2670 = vmatpush1.bf16.xpose.msra.mxu0 %v2637
        %2671 = vmatprep.mubr.bf16.mxu0 0
        %2672 = vmatmul.mubr.bf16.gmra.mrb[0].mxu0 %v2568
        %v2673 = vpop.f32.mrb[0].mxu0
        %v2674 = vadd.f32 0.0, %v2673
        %v2675 = vpop.f32.mrb[0].mxu0
        %v2676 = vadd.f32 0.0, %v2675
        %v2677 = vpop.f32.mrb[0].mxu0
        %v2678 = vadd.f32 0.0, %v2677
        %v2679 = vpop.f32.mrb[0].mxu0
        %v2680 = vadd.f32 0.0, %v2679
        %2681 = vmatprep.mubr.bf16.mxu0 0
        %2682 = vmatmul.mubr.bf16.gmra.mrb[0].mxu0 %v2571
        %v2683 = vpop.f32.mrb[0].mxu0
        %v2684 = vadd.f32 0.0, %v2683
        %v2685 = vpop.f32.mrb[0].mxu0
        %v2686 = vadd.f32 0.0, %v2685
        %v2687 = vpop.f32.mrb[0].mxu0
        %v2688 = vadd.f32 0.0, %v2687
        %v2689 = vpop.f32.mrb[0].mxu0
        %v2690 = vadd.f32 0.0, %v2689
        %2691 = vmatprep.mubr.bf16.mxu0 0
        %2692 = vmatmul.mubr.bf16.gmra.mrb[0].mxu0 %v2574
        %v2693 = vpop.f32.mrb[0].mxu0
        %v2694 = vadd.f32 0.0, %v2693
        %v2695 = vpop.f32.mrb[0].mxu0
        %v2696 = vadd.f32 0.0, %v2695
        %v2697 = vpop.f32.mrb[0].mxu0
        %v2698 = vadd.f32 0.0, %v2697
        %v2699 = vpop.f32.mrb[0].mxu0
        %v2700 = vadd.f32 0.0, %v2699
        %2701 = vmatprep.mubr.bf16.mxu0 0
        %2702 = vmatmul.mubr.bf16.gmra.mrb[0].mxu0 %v2577
        %v2703 = vpop.f32.mrb[0].mxu0
        %v2704 = vadd.f32 0.0, %v2703
        %v2705 = vpop.f32.mrb[0].mxu0
        %v2706 = vadd.f32 0.0, %v2705
        %v2707 = vpop.f32.mrb[0].mxu0
        %v2708 = vadd.f32 0.0, %v2707
        %v2709 = vpop.f32.mrb[0].mxu0
        %v2710 = vadd.f32 0.0, %v2709
        %2711 = vmatprep.mubr.bf16.mxu0 0
        %2712 = vmatmul.mubr.bf16.gmra.mrb[0].mxu0 %v2580
        %v2713 = vpop.f32.mrb[0].mxu0
        %v2714 = vadd.f32 0.0, %v2713
        %v2715 = vpop.f32.mrb[0].mxu0
        %v2716 = vadd.f32 0.0, %v2715
        %v2717 = vpop.f32.mrb[0].mxu0
        %v2718 = vadd.f32 0.0, %v2717
        %v2719 = vpop.f32.mrb[0].mxu0
        %v2720 = vadd.f32 0.0, %v2719
        %2721 = vmatprep.mubr.bf16.mxu0 0
        %2722 = vmatmul.mubr.bf16.gmra.mrb[0].mxu0 %v2583
        %v2723 = vpop.f32.mrb[0].mxu0
        %v2724 = vadd.f32 0.0, %v2723
        %v2725 = vpop.f32.mrb[0].mxu0
        %v2726 = vadd.f32 0.0, %v2725
        %v2727 = vpop.f32.mrb[0].mxu0
        %v2728 = vadd.f32 0.0, %v2727
        %v2729 = vpop.f32.mrb[0].mxu0
        %v2730 = vadd.f32 0.0, %v2729
        %2731 = vmatprep.mubr.bf16.mxu0 0
        %2732 = vmatmul.mubr.bf16.gmra.mrb[0].mxu0 %v2586
        %v2733 = vpop.f32.mrb[0].mxu0
        %v2734 = vadd.f32 0.0, %v2733
        %v2735 = vpop.f32.mrb[0].mxu0
        %v2736 = vadd.f32 0.0, %v2735
        %v2737 = vpop.f32.mrb[0].mxu0
        %v2738 = vadd.f32 0.0, %v2737
        %v2739 = vpop.f32.mrb[0].mxu0
        %v2740 = vadd.f32 0.0, %v2739
        %2741 = vmatprep.mubr.bf16.mxu0 0
        %2742 = vmatmul.mubr.bf16.gmra.mrb[0].mxu0 %v2589
        %v2743 = vpop.f32.mrb[0].mxu0
        %v2744 = vadd.f32 0.0, %v2743
        %v2745 = vpop.f32.mrb[0].mxu0
        %v2746 = vadd.f32 0.0, %v2745
        %v2747 = vpop.f32.mrb[0].mxu0
        %v2748 = vadd.f32 0.0, %v2747
        %v2749 = vpop.f32.mrb[0].mxu0
        %v2750 = vadd.f32 0.0, %v2749
        %2751 = vdwg.mxu0
        %v2752 = vmul.f32 %v2119, 0.17677669
        %v2753 = vmul.f32 %v2121, 0.17677669
        %v2754 = vmul.f32 %v2123, 0.17677669
        %v2755 = vmul.f32 %v2125, 0.17677669
        %v2756 = vmul.f32 %v2129, 0.17677669
        %v2757 = vmul.f32 %v2131, 0.17677669
        %v2758 = vmul.f32 %v2133, 0.17677669
        %v2759 = vmul.f32 %v2135, 0.17677669
        %v2760 = vmul.f32 %v2139, 0.17677669
        %v2761 = vmul.f32 %v2141, 0.17677669
        %v2762 = vmul.f32 %v2143, 0.17677669
        %v2763 = vmul.f32 %v2145, 0.17677669
        %v2764 = vmul.f32 %v2149, 0.17677669
        %v2765 = vmul.f32 %v2151, 0.17677669
        %v2766 = vmul.f32 %v2153, 0.17677669
        %v2767 = vmul.f32 %v2155, 0.17677669
        %v2768 = vmul.f32 %v2159, 0.17677669
        %v2769 = vmul.f32 %v2161, 0.17677669
        %v2770 = vmul.f32 %v2163, 0.17677669
        %v2771 = vmul.f32 %v2165, 0.17677669
        %v2772 = vmul.f32 %v2169, 0.17677669
        %v2773 = vmul.f32 %v2171, 0.17677669
        %v2774 = vmul.f32 %v2173, 0.17677669
        %v2775 = vmul.f32 %v2175, 0.17677669
        %v2776 = vmul.f32 %v2179, 0.17677669
        %v2777 = vmul.f32 %v2181, 0.17677669
        %v2778 = vmul.f32 %v2183, 0.17677669
        %v2779 = vmul.f32 %v2185, 0.17677669
        %v2780 = vmul.f32 %v2189, 0.17677669
        %v2781 = vmul.f32 %v2191, 0.17677669
        %v2782 = vmul.f32 %v2193, 0.17677669
        %v2783 = vmul.f32 %v2195, 0.17677669
        %v2784 = vmul.f32 %v2304, 0.17677669
        %v2785 = vmul.f32 %v2306, 0.17677669
        %v2786 = vmul.f32 %v2308, 0.17677669
        %v2787 = vmul.f32 %v2310, 0.17677669
        %v2788 = vmul.f32 %v2314, 0.17677669
        %v2789 = vmul.f32 %v2316, 0.17677669
        %v2790 = vmul.f32 %v2318, 0.17677669
        %v2791 = vmul.f32 %v2320, 0.17677669
        %v2792 = vmul.f32 %v2324, 0.17677669
        %v2793 = vmul.f32 %v2326, 0.17677669
        %v2794 = vmul.f32 %v2328, 0.17677669
        %v2795 = vmul.f32 %v2330, 0.17677669
        %v2796 = vmul.f32 %v2334, 0.17677669
        %v2797 = vmul.f32 %v2336, 0.17677669
        %v2798 = vmul.f32 %v2338, 0.17677669
        %v2799 = vmul.f32 %v2340, 0.17677669
        %v2800 = vmul.f32 %v2344, 0.17677669
        %v2801 = vmul.f32 %v2346, 0.17677669
        %v2802 = vmul.f32 %v2348, 0.17677669
        %v2803 = vmul.f32 %v2350, 0.17677669
        %v2804 = vmul.f32 %v2354, 0.17677669
        %v2805 = vmul.f32 %v2356, 0.17677669
        %v2806 = vmul.f32 %v2358, 0.17677669
        %v2807 = vmul.f32 %v2360, 0.17677669
        %v2808 = vmul.f32 %v2364, 0.17677669
        %v2809 = vmul.f32 %v2366, 0.17677669
        %v2810 = vmul.f32 %v2368, 0.17677669
        %v2811 = vmul.f32 %v2370, 0.17677669
        %v2812 = vmul.f32 %v2374, 0.17677669
        %v2813 = vmul.f32 %v2376, 0.17677669
        %v2814 = vmul.f32 %v2378, 0.17677669
        %v2815 = vmul.f32 %v2380, 0.17677669
        %v2816 = vmul.f32 %v2489, 0.17677669
        %v2817 = vmul.f32 %v2491, 0.17677669
        %v2818 = vmul.f32 %v2493, 0.17677669
        %v2819 = vmul.f32 %v2495, 0.17677669
        %v2820 = vmul.f32 %v2499, 0.17677669
        %v2821 = vmul.f32 %v2501, 0.17677669
        %v2822 = vmul.f32 %v2503, 0.17677669
        %v2823 = vmul.f32 %v2505, 0.17677669
        %v2824 = vmul.f32 %v2509, 0.17677669
        %v2825 = vmul.f32 %v2511, 0.17677669
        %v2826 = vmul.f32 %v2513, 0.17677669
        %v2827 = vmul.f32 %v2515, 0.17677669
        %v2828 = vmul.f32 %v2519, 0.17677669
        %v2829 = vmul.f32 %v2521, 0.17677669
        %v2830 = vmul.f32 %v2523, 0.17677669
        %v2831 = vmul.f32 %v2525, 0.17677669
        %v2832 = vmul.f32 %v2529, 0.17677669
        %v2833 = vmul.f32 %v2531, 0.17677669
        %v2834 = vmul.f32 %v2533, 0.17677669
        %v2835 = vmul.f32 %v2535, 0.17677669
        %v2836 = vmul.f32 %v2539, 0.17677669
        %v2837 = vmul.f32 %v2541, 0.17677669
        %v2838 = vmul.f32 %v2543, 0.17677669
        %v2839 = vmul.f32 %v2545, 0.17677669
        %v2840 = vmul.f32 %v2549, 0.17677669
        %v2841 = vmul.f32 %v2551, 0.17677669
        %v2842 = vmul.f32 %v2553, 0.17677669
        %v2843 = vmul.f32 %v2555, 0.17677669
        %v2844 = vmul.f32 %v2559, 0.17677669
        %v2845 = vmul.f32 %v2561, 0.17677669
        %v2846 = vmul.f32 %v2563, 0.17677669
        %v2847 = vmul.f32 %v2565, 0.17677669
        %v2848 = vmul.f32 %v2674, 0.17677669
        %v2849 = vmul.f32 %v2676, 0.17677669
        %v2850 = vmul.f32 %v2678, 0.17677669
        %v2851 = vmul.f32 %v2680, 0.17677669
        %v2852 = vmul.f32 %v2684, 0.17677669
        %v2853 = vmul.f32 %v2686, 0.17677669
        %v2854 = vmul.f32 %v2688, 0.17677669
        %v2855 = vmul.f32 %v2690, 0.17677669
        %v2856 = vmul.f32 %v2694, 0.17677669
        %v2857 = vmul.f32 %v2696, 0.17677669
        %v2858 = vmul.f32 %v2698, 0.17677669
        %v2859 = vmul.f32 %v2700, 0.17677669
        %v2860 = vmul.f32 %v2704, 0.17677669
        %v2861 = vmul.f32 %v2706, 0.17677669
        %v2862 = vmul.f32 %v2708, 0.17677669
        %v2863 = vmul.f32 %v2710, 0.17677669
        %v2864 = vmul.f32 %v2714, 0.17677669
        %v2865 = vmul.f32 %v2716, 0.17677669
        %v2866 = vmul.f32 %v2718, 0.17677669
        %v2867 = vmul.f32 %v2720, 0.17677669
        %v2868 = vmul.f32 %v2724, 0.17677669
        %v2869 = vmul.f32 %v2726, 0.17677669
        %v2870 = vmul.f32 %v2728, 0.17677669
        %v2871 = vmul.f32 %v2730, 0.17677669
        %v2872 = vmul.f32 %v2734, 0.17677669
        %v2873 = vmul.f32 %v2736, 0.17677669
        %v2874 = vmul.f32 %v2738, 0.17677669
        %v2875 = vmul.f32 %v2740, 0.17677669
        %v2876 = vmul.f32 %v2744, 0.17677669
        %v2877 = vmul.f32 %v2746, 0.17677669
        %v2878 = vmul.f32 %v2748, 0.17677669
        %v2879 = vmul.f32 %v2750, 0.17677669
        %v2880 = vmax.f32 %v2752, %v2753
        %2881 = vmax.xlane.f32.xlu0 %v2880
        %v2882 = vpop.xlane.xlu0 %2881
        %v2883 = vmax.f32 %v2754, %v2755
        %2884 = vmax.xlane.f32.xlu0 %v2883
        %v2885 = vpop.xlane.xlu0 %2884
        %v2886 = vmax.f32 %v2756, %v2757
        %2887 = vmax.xlane.f32.xlu0 %v2886
        %v2888 = vpop.xlane.xlu0 %2887
        %v2889 = vmax.f32 %v2758, %v2759
        %2890 = vmax.xlane.f32.xlu0 %v2889
        %v2891 = vpop.xlane.xlu0 %2890
        %v2892 = vmax.f32 %v2760, %v2761
        %2893 = vmax.xlane.f32.xlu0 %v2892
        %v2894 = vpop.xlane.xlu0 %2893
        %v2895 = vmax.f32 %v2762, %v2763
        %2896 = vmax.xlane.f32.xlu0 %v2895
        %v2897 = vpop.xlane.xlu0 %2896
        %v2898 = vmax.f32 %v2764, %v2765
        %2899 = vmax.xlane.f32.xlu0 %v2898
        %v2900 = vpop.xlane.xlu0 %2899
        %v2901 = vmax.f32 %v2766, %v2767
        %2902 = vmax.xlane.f32.xlu0 %v2901
        %v2903 = vpop.xlane.xlu0 %2902
        %v2904 = vmax.f32 %v2768, %v2769
        %2905 = vmax.xlane.f32.xlu0 %v2904
        %v2906 = vpop.xlane.xlu0 %2905
        %v2907 = vmax.f32 %v2770, %v2771
        %2908 = vmax.xlane.f32.xlu0 %v2907
        %v2909 = vpop.xlane.xlu0 %2908
        %v2910 = vmax.f32 %v2772, %v2773
        %2911 = vmax.xlane.f32.xlu0 %v2910
        %v2912 = vpop.xlane.xlu0 %2911
        %v2913 = vmax.f32 %v2774, %v2775
        %2914 = vmax.xlane.f32.xlu0 %v2913
        %v2915 = vpop.xlane.xlu0 %2914
        %v2916 = vmax.f32 %v2776, %v2777
        %2917 = vmax.xlane.f32.xlu0 %v2916
        %v2918 = vpop.xlane.xlu0 %2917
        %v2919 = vmax.f32 %v2778, %v2779
        %2920 = vmax.xlane.f32.xlu0 %v2919
        %v2921 = vpop.xlane.xlu0 %2920
        %v2922 = vmax.f32 %v2780, %v2781
        %2923 = vmax.xlane.f32.xlu0 %v2922
        %v2924 = vpop.xlane.xlu0 %2923
        %v2925 = vmax.f32 %v2782, %v2783
        %2926 = vmax.xlane.f32.xlu0 %v2925
        %v2927 = vpop.xlane.xlu0 %2926
        %v2928 = vmax.f32 %v2784, %v2785
        %2929 = vmax.xlane.f32.xlu0 %v2928
        %v2930 = vpop.xlane.xlu0 %2929
        %v2931 = vmax.f32 %v2786, %v2787
        %2932 = vmax.xlane.f32.xlu0 %v2931
        %v2933 = vpop.xlane.xlu0 %2932
        %v2934 = vmax.f32 %v2788, %v2789
        %2935 = vmax.xlane.f32.xlu0 %v2934
        %v2936 = vpop.xlane.xlu0 %2935
        %v2937 = vmax.f32 %v2790, %v2791
        %2938 = vmax.xlane.f32.xlu0 %v2937
        %v2939 = vpop.xlane.xlu0 %2938
        %v2940 = vmax.f32 %v2792, %v2793
        %2941 = vmax.xlane.f32.xlu0 %v2940
        %v2942 = vpop.xlane.xlu0 %2941
        %v2943 = vmax.f32 %v2794, %v2795
        %2944 = vmax.xlane.f32.xlu0 %v2943
        %v2945 = vpop.xlane.xlu0 %2944
        %v2946 = vmax.f32 %v2796, %v2797
        %2947 = vmax.xlane.f32.xlu0 %v2946
        %v2948 = vpop.xlane.xlu0 %2947
        %v2949 = vmax.f32 %v2798, %v2799
        %2950 = vmax.xlane.f32.xlu0 %v2949
        %v2951 = vpop.xlane.xlu0 %2950
        %v2952 = vmax.f32 %v2800, %v2801
        %2953 = vmax.xlane.f32.xlu0 %v2952
        %v2954 = vpop.xlane.xlu0 %2953
        %v2955 = vmax.f32 %v2802, %v2803
        %2956 = vmax.xlane.f32.xlu0 %v2955
        %v2957 = vpop.xlane.xlu0 %2956
        %v2958 = vmax.f32 %v2804, %v2805
        %2959 = vmax.xlane.f32.xlu0 %v2958
        %v2960 = vpop.xlane.xlu0 %2959
        %v2961 = vmax.f32 %v2806, %v2807
        %2962 = vmax.xlane.f32.xlu0 %v2961
        %v2963 = vpop.xlane.xlu0 %2962
        %v2964 = vmax.f32 %v2808, %v2809
        %2965 = vmax.xlane.f32.xlu0 %v2964
        %v2966 = vpop.xlane.xlu0 %2965
        %v2967 = vmax.f32 %v2810, %v2811
        %2968 = vmax.xlane.f32.xlu0 %v2967
        %v2969 = vpop.xlane.xlu0 %2968
        %v2970 = vmax.f32 %v2812, %v2813
        %2971 = vmax.xlane.f32.xlu0 %v2970
        %v2972 = vpop.xlane.xlu0 %2971
        %v2973 = vmax.f32 %v2814, %v2815
        %2974 = vmax.xlane.f32.xlu0 %v2973
        %v2975 = vpop.xlane.xlu0 %2974
        %v2976 = vmax.f32 %v2816, %v2817
        %2977 = vmax.xlane.f32.xlu0 %v2976
        %v2978 = vpop.xlane.xlu0 %2977
        %v2979 = vmax.f32 %v2818, %v2819
        %2980 = vmax.xlane.f32.xlu0 %v2979
        %v2981 = vpop.xlane.xlu0 %2980
        %v2982 = vmax.f32 %v2820, %v2821
        %2983 = vmax.xlane.f32.xlu0 %v2982
        %v2984 = vpop.xlane.xlu0 %2983
        %v2985 = vmax.f32 %v2822, %v2823
        %2986 = vmax.xlane.f32.xlu0 %v2985
        %v2987 = vpop.xlane.xlu0 %2986
        %v2988 = vmax.f32 %v2824, %v2825
        %2989 = vmax.xlane.f32.xlu0 %v2988
        %v2990 = vpop.xlane.xlu0 %2989
        %v2991 = vmax.f32 %v2826, %v2827
        %2992 = vmax.xlane.f32.xlu0 %v2991
        %v2993 = vpop.xlane.xlu0 %2992
        %v2994 = vmax.f32 %v2828, %v2829
        %2995 = vmax.xlane.f32.xlu0 %v2994
        %v2996 = vpop.xlane.xlu0 %2995
        %v2997 = vmax.f32 %v2830, %v2831
        %2998 = vmax.xlane.f32.xlu0 %v2997
        %v2999 = vpop.xlane.xlu0 %2998
        %v3000 = vmax.f32 %v2832, %v2833
        %3001 = vmax.xlane.f32.xlu0 %v3000
        %v3002 = vpop.xlane.xlu0 %3001
        %v3003 = vmax.f32 %v2834, %v2835
        %3004 = vmax.xlane.f32.xlu0 %v3003
        %v3005 = vpop.xlane.xlu0 %3004
        %v3006 = vmax.f32 %v2836, %v2837
        %3007 = vmax.xlane.f32.xlu0 %v3006
        %v3008 = vpop.xlane.xlu0 %3007
        %v3009 = vmax.f32 %v2838, %v2839
        %3010 = vmax.xlane.f32.xlu0 %v3009
        %v3011 = vpop.xlane.xlu0 %3010
        %v3012 = vmax.f32 %v2840, %v2841
        %3013 = vmax.xlane.f32.xlu0 %v3012
        %v3014 = vpop.xlane.xlu0 %3013
        %v3015 = vmax.f32 %v2842, %v2843
        %3016 = vmax.xlane.f32.xlu0 %v3015
        %v3017 = vpop.xlane.xlu0 %3016
        %v3018 = vmax.f32 %v2844, %v2845
        %3019 = vmax.xlane.f32.xlu0 %v3018
        %v3020 = vpop.xlane.xlu0 %3019
        %v3021 = vmax.f32 %v2846, %v2847
        %3022 = vmax.xlane.f32.xlu0 %v3021
        %v3023 = vpop.xlane.xlu0 %3022
        %v3024 = vmax.f32 %v2848, %v2849
        %3025 = vmax.xlane.f32.xlu0 %v3024
        %v3026 = vpop.xlane.xlu0 %3025
        %v3027 = vmax.f32 %v2850, %v2851
        %3028 = vmax.xlane.f32.xlu0 %v3027
        %v3029 = vpop.xlane.xlu0 %3028
        %v3030 = vmax.f32 %v2852, %v2853
        %3031 = vmax.xlane.f32.xlu0 %v3030
        %v3032 = vpop.xlane.xlu0 %3031
        %v3033 = vmax.f32 %v2854, %v2855
        %3034 = vmax.xlane.f32.xlu0 %v3033
        %v3035 = vpop.xlane.xlu0 %3034
        %v3036 = vmax.f32 %v2856, %v2857
        %3037 = vmax.xlane.f32.xlu0 %v3036
        %v3038 = vpop.xlane.xlu0 %3037
        %v3039 = vmax.f32 %v2858, %v2859
        %3040 = vmax.xlane.f32.xlu0 %v3039
        %v3041 = vpop.xlane.xlu0 %3040
        %v3042 = vmax.f32 %v2860, %v2861
        %3043 = vmax.xlane.f32.xlu0 %v3042
        %v3044 = vpop.xlane.xlu0 %3043
        %v3045 = vmax.f32 %v2862, %v2863
        %3046 = vmax.xlane.f32.xlu0 %v3045
        %v3047 = vpop.xlane.xlu0 %3046
        %v3048 = vmax.f32 %v2864, %v2865
        %3049 = vmax.xlane.f32.xlu0 %v3048
        %v3050 = vpop.xlane.xlu0 %3049
        %v3051 = vmax.f32 %v2866, %v2867
        %3052 = vmax.xlane.f32.xlu0 %v3051
        %v3053 = vpop.xlane.xlu0 %3052
        %v3054 = vmax.f32 %v2868, %v2869
        %3055 = vmax.xlane.f32.xlu0 %v3054
        %v3056 = vpop.xlane.xlu0 %3055
        %v3057 = vmax.f32 %v2870, %v2871
        %3058 = vmax.xlane.f32.xlu0 %v3057
        %v3059 = vpop.xlane.xlu0 %3058
        %v3060 = vmax.f32 %v2872, %v2873
        %3061 = vmax.xlane.f32.xlu0 %v3060
        %v3062 = vpop.xlane.xlu0 %3061
        %v3063 = vmax.f32 %v2874, %v2875
        %3064 = vmax.xlane.f32.xlu0 %v3063
        %v3065 = vpop.xlane.xlu0 %3064
        %v3066 = vmax.f32 %v2876, %v2877
        %3067 = vmax.xlane.f32.xlu0 %v3066
        %v3068 = vpop.xlane.xlu0 %3067
        %v3069 = vmax.f32 %v2878, %v2879
        %3070 = vmax.xlane.f32.xlu0 %v3069
        %v3071 = vpop.xlane.xlu0 %3070
        %v3072 = vsub.f32 %v2752, %v2882
        %v3073 = vsub.f32 %v2753, %v2882
        %v3074 = vsub.f32 %v2754, %v2885
        %v3075 = vsub.f32 %v2755, %v2885
        %v3076 = vsub.f32 %v2756, %v2888
        %v3077 = vsub.f32 %v2757, %v2888
        %v3078 = vsub.f32 %v2758, %v2891
        %v3079 = vsub.f32 %v2759, %v2891
        %v3080 = vsub.f32 %v2760, %v2894
        %v3081 = vsub.f32 %v2761, %v2894
        %v3082 = vsub.f32 %v2762, %v2897
        %v3083 = vsub.f32 %v2763, %v2897
        %v3084 = vsub.f32 %v2764, %v2900
        %v3085 = vsub.f32 %v2765, %v2900
        %v3086 = vsub.f32 %v2766, %v2903
        %v3087 = vsub.f32 %v2767, %v2903
        %v3088 = vsub.f32 %v2768, %v2906
        %v3089 = vsub.f32 %v2769, %v2906
        %v3090 = vsub.f32 %v2770, %v2909
        %v3091 = vsub.f32 %v2771, %v2909
        %v3092 = vsub.f32 %v2772, %v2912
        %v3093 = vsub.f32 %v2773, %v2912
        %v3094 = vsub.f32 %v2774, %v2915
        %v3095 = vsub.f32 %v2775, %v2915
        %v3096 = vsub.f32 %v2776, %v2918
        %v3097 = vsub.f32 %v2777, %v2918
        %v3098 = vsub.f32 %v2778, %v2921
        %v3099 = vsub.f32 %v2779, %v2921
        %v3100 = vsub.f32 %v2780, %v2924
        %v3101 = vsub.f32 %v2781, %v2924
        %v3102 = vsub.f32 %v2782, %v2927
        %v3103 = vsub.f32 %v2783, %v2927
        %v3104 = vsub.f32 %v2784, %v2930
        %v3105 = vsub.f32 %v2785, %v2930
        %v3106 = vsub.f32 %v2786, %v2933
        %v3107 = vsub.f32 %v2787, %v2933
        %v3108 = vsub.f32 %v2788, %v2936
        %v3109 = vsub.f32 %v2789, %v2936
        %v3110 = vsub.f32 %v2790, %v2939
        %v3111 = vsub.f32 %v2791, %v2939
        %v3112 = vsub.f32 %v2792, %v2942
        %v3113 = vsub.f32 %v2793, %v2942
        %v3114 = vsub.f32 %v2794, %v2945
        %v3115 = vsub.f32 %v2795, %v2945
        %v3116 = vsub.f32 %v2796, %v2948
        %v3117 = vsub.f32 %v2797, %v2948
        %v3118 = vsub.f32 %v2798, %v2951
        %v3119 = vsub.f32 %v2799, %v2951
        %v3120 = vsub.f32 %v2800, %v2954
        %v3121 = vsub.f32 %v2801, %v2954
        %v3122 = vsub.f32 %v2802, %v2957
        %v3123 = vsub.f32 %v2803, %v2957
        %v3124 = vsub.f32 %v2804, %v2960
        %v3125 = vsub.f32 %v2805, %v2960
        %v3126 = vsub.f32 %v2806, %v2963
        %v3127 = vsub.f32 %v2807, %v2963
        %v3128 = vsub.f32 %v2808, %v2966
        %v3129 = vsub.f32 %v2809, %v2966
        %v3130 = vsub.f32 %v2810, %v2969
        %v3131 = vsub.f32 %v2811, %v2969
        %v3132 = vsub.f32 %v2812, %v2972
        %v3133 = vsub.f32 %v2813, %v2972
        %v3134 = vsub.f32 %v2814, %v2975
        %v3135 = vsub.f32 %v2815, %v2975
        %v3136 = vsub.f32 %v2816, %v2978
        %v3137 = vsub.f32 %v2817, %v2978
        %v3138 = vsub.f32 %v2818, %v2981
        %v3139 = vsub.f32 %v2819, %v2981
        %v3140 = vsub.f32 %v2820, %v2984
        %v3141 = vsub.f32 %v2821, %v2984
        %v3142 = vsub.f32 %v2822, %v2987
        %v3143 = vsub.f32 %v2823, %v2987
        %v3144 = vsub.f32 %v2824, %v2990
        %v3145 = vsub.f32 %v2825, %v2990
        %v3146 = vsub.f32 %v2826, %v2993
        %v3147 = vsub.f32 %v2827, %v2993
        %v3148 = vsub.f32 %v2828, %v2996
        %v3149 = vsub.f32 %v2829, %v2996
        %v3150 = vsub.f32 %v2830, %v2999
        %v3151 = vsub.f32 %v2831, %v2999
        %v3152 = vsub.f32 %v2832, %v3002
        %v3153 = vsub.f32 %v2833, %v3002
        %v3154 = vsub.f32 %v2834, %v3005
        %v3155 = vsub.f32 %v2835, %v3005
        %v3156 = vsub.f32 %v2836, %v3008
        %v3157 = vsub.f32 %v2837, %v3008
        %v3158 = vsub.f32 %v2838, %v3011
        %v3159 = vsub.f32 %v2839, %v3011
        %v3160 = vsub.f32 %v2840, %v3014
        %v3161 = vsub.f32 %v2841, %v3014
        %v3162 = vsub.f32 %v2842, %v3017
        %v3163 = vsub.f32 %v2843, %v3017
        %v3164 = vsub.f32 %v2844, %v3020
        %v3165 = vsub.f32 %v2845, %v3020
        %v3166 = vsub.f32 %v2846, %v3023
        %v3167 = vsub.f32 %v2847, %v3023
        %v3168 = vsub.f32 %v2848, %v3026
        %v3169 = vsub.f32 %v2849, %v3026
        %v3170 = vsub.f32 %v2850, %v3029
        %v3171 = vsub.f32 %v2851, %v3029
        %v3172 = vsub.f32 %v2852, %v3032
        %v3173 = vsub.f32 %v2853, %v3032
        %v3174 = vsub.f32 %v2854, %v3035
        %v3175 = vsub.f32 %v2855, %v3035
        %v3176 = vsub.f32 %v2856, %v3038
        %v3177 = vsub.f32 %v2857, %v3038
        %v3178 = vsub.f32 %v2858, %v3041
        %v3179 = vsub.f32 %v2859, %v3041
        %v3180 = vsub.f32 %v2860, %v3044
        %v3181 = vsub.f32 %v2861, %v3044
        %v3182 = vsub.f32 %v2862, %v3047
        %v3183 = vsub.f32 %v2863, %v3047
        %v3184 = vsub.f32 %v2864, %v3050
        %v3185 = vsub.f32 %v2865, %v3050
        %v3186 = vsub.f32 %v2866, %v3053
        %v3187 = vsub.f32 %v2867, %v3053
        %v3188 = vsub.f32 %v2868, %v3056
        %v3189 = vsub.f32 %v2869, %v3056
        %v3190 = vsub.f32 %v2870, %v3059
        %v3191 = vsub.f32 %v2871, %v3059
        %v3192 = vsub.f32 %v2872, %v3062
        %v3193 = vsub.f32 %v2873, %v3062
        %v3194 = vsub.f32 %v2874, %v3065
        %v3195 = vsub.f32 %v2875, %v3065
        %v3196 = vsub.f32 %v2876, %v3068
        %v3197 = vsub.f32 %v2877, %v3068
        %v3198 = vsub.f32 %v2878, %v3071
        %v3199 = vsub.f32 %v2879, %v3071
        %v3200 = vmul.f32 %v3072, 1.442695
        %v3201 = vpow.pop %v3200
        %v3202 = vmul.f32 %v3073, 1.442695
        %v3203 = vpow.pop %v3202
        %v3204 = vmul.f32 %v3074, 1.442695
        %v3205 = vpow.pop %v3204
        %v3206 = vmul.f32 %v3075, 1.442695
        %v3207 = vpow.pop %v3206
        %v3208 = vmul.f32 %v3076, 1.442695
        %v3209 = vpow.pop %v3208
        %v3210 = vmul.f32 %v3077, 1.442695
        %v3211 = vpow.pop %v3210
        %v3212 = vmul.f32 %v3078, 1.442695
        %v3213 = vpow.pop %v3212
        %v3214 = vmul.f32 %v3079, 1.442695
        %v3215 = vpow.pop %v3214
        %v3216 = vmul.f32 %v3080, 1.442695
        %v3217 = vpow.pop %v3216
        %v3218 = vmul.f32 %v3081, 1.442695
        %v3219 = vpow.pop %v3218
        %v3220 = vmul.f32 %v3082, 1.442695
        %v3221 = vpow.pop %v3220
        %v3222 = vmul.f32 %v3083, 1.442695
        %v3223 = vpow.pop %v3222
        %v3224 = vmul.f32 %v3084, 1.442695
        %v3225 = vpow.pop %v3224
        %v3226 = vmul.f32 %v3085, 1.442695
        %v3227 = vpow.pop %v3226
        %v3228 = vmul.f32 %v3086, 1.442695
        %v3229 = vpow.pop %v3228
        %v3230 = vmul.f32 %v3087, 1.442695
        %v3231 = vpow.pop %v3230
        %v3232 = vmul.f32 %v3088, 1.442695
        %v3233 = vpow.pop %v3232
        %v3234 = vmul.f32 %v3089, 1.442695
        %v3235 = vpow.pop %v3234
        %v3236 = vmul.f32 %v3090, 1.442695
        %v3237 = vpow.pop %v3236
        %v3238 = vmul.f32 %v3091, 1.442695
        %v3239 = vpow.pop %v3238
        %v3240 = vmul.f32 %v3092, 1.442695
        %v3241 = vpow.pop %v3240
        %v3242 = vmul.f32 %v3093, 1.442695
        %v3243 = vpow.pop %v3242
        %v3244 = vmul.f32 %v3094, 1.442695
        %v3245 = vpow.pop %v3244
        %v3246 = vmul.f32 %v3095, 1.442695
        %v3247 = vpow.pop %v3246
        %v3248 = vmul.f32 %v3096, 1.442695
        %v3249 = vpow.pop %v3248
        %v3250 = vmul.f32 %v3097, 1.442695
        %v3251 = vpow.pop %v3250
        %v3252 = vmul.f32 %v3098, 1.442695
        %v3253 = vpow.pop %v3252
        %v3254 = vmul.f32 %v3099, 1.442695
        %v3255 = vpow.pop %v3254
        %v3256 = vmul.f32 %v3100, 1.442695
        %v3257 = vpow.pop %v3256
        %v3258 = vmul.f32 %v3101, 1.442695
        %v3259 = vpow.pop %v3258
        %v3260 = vmul.f32 %v3102, 1.442695
        %v3261 = vpow.pop %v3260
        %v3262 = vmul.f32 %v3103, 1.442695
        %v3263 = vpow.pop %v3262
        %v3264 = vmul.f32 %v3104, 1.442695
        %v3265 = vpow.pop %v3264
        %v3266 = vmul.f32 %v3105, 1.442695
        %v3267 = vpow.pop %v3266
        %v3268 = vmul.f32 %v3106, 1.442695
        %v3269 = vpow.pop %v3268
        %v3270 = vmul.f32 %v3107, 1.442695
        %v3271 = vpow.pop %v3270
        %v3272 = vmul.f32 %v3108, 1.442695
        %v3273 = vpow.pop %v3272
        %v3274 = vmul.f32 %v3109, 1.442695
        %v3275 = vpow.pop %v3274
        %v3276 = vmul.f32 %v3110, 1.442695
        %v3277 = vpow.pop %v3276
        %v3278 = vmul.f32 %v3111, 1.442695
        %v3279 = vpow.pop %v3278
        %v3280 = vmul.f32 %v3112, 1.442695
        %v3281 = vpow.pop %v3280
        %v3282 = vmul.f32 %v3113, 1.442695
        %v3283 = vpow.pop %v3282
        %v3284 = vmul.f32 %v3114, 1.442695
        %v3285 = vpow.pop %v3284
        %v3286 = vmul.f32 %v3115, 1.442695
        %v3287 = vpow.pop %v3286
        %v3288 = vmul.f32 %v3116, 1.442695
        %v3289 = vpow.pop %v3288
        %v3290 = vmul.f32 %v3117, 1.442695
        %v3291 = vpow.pop %v3290
        %v3292 = vmul.f32 %v3118, 1.442695
        %v3293 = vpow.pop %v3292
        %v3294 = vmul.f32 %v3119, 1.442695
        %v3295 = vpow.pop %v3294
        %v3296 = vmul.f32 %v3120, 1.442695
        %v3297 = vpow.pop %v3296
        %v3298 = vmul.f32 %v3121, 1.442695
        %v3299 = vpow.pop %v3298
        %v3300 = vmul.f32 %v3122, 1.442695
        %v3301 = vpow.pop %v3300
        %v3302 = vmul.f32 %v3123, 1.442695
        %v3303 = vpow.pop %v3302
        %v3304 = vmul.f32 %v3124, 1.442695
        %v3305 = vpow.pop %v3304
        %v3306 = vmul.f32 %v3125, 1.442695
        %v3307 = vpow.pop %v3306
        %v3308 = vmul.f32 %v3126, 1.442695
        %v3309 = vpow.pop %v3308
        %v3310 = vmul.f32 %v3127, 1.442695
        %v3311 = vpow.pop %v3310
        %v3312 = vmul.f32 %v3128, 1.442695
        %v3313 = vpow.pop %v3312
        %v3314 = vmul.f32 %v3129, 1.442695
        %v3315 = vpow.pop %v3314
        %v3316 = vmul.f32 %v3130, 1.442695
        %v3317 = vpow.pop %v3316
        %v3318 = vmul.f32 %v3131, 1.442695
        %v3319 = vpow.pop %v3318
        %v3320 = vmul.f32 %v3132, 1.442695
        %v3321 = vpow.pop %v3320
        %v3322 = vmul.f32 %v3133, 1.442695
        %v3323 = vpow.pop %v3322
        %v3324 = vmul.f32 %v3134, 1.442695
        %v3325 = vpow.pop %v3324
        %v3326 = vmul.f32 %v3135, 1.442695
        %v3327 = vpow.pop %v3326
        %v3328 = vmul.f32 %v3136, 1.442695
        %v3329 = vpow.pop %v3328
        %v3330 = vmul.f32 %v3137, 1.442695
        %v3331 = vpow.pop %v3330
        %v3332 = vmul.f32 %v3138, 1.442695
        %v3333 = vpow.pop %v3332
        %v3334 = vmul.f32 %v3139, 1.442695
        %v3335 = vpow.pop %v3334
        %v3336 = vmul.f32 %v3140, 1.442695
        %v3337 = vpow.pop %v3336
        %v3338 = vmul.f32 %v3141, 1.442695
        %v3339 = vpow.pop %v3338
        %v3340 = vmul.f32 %v3142, 1.442695
        %v3341 = vpow.pop %v3340
        %v3342 = vmul.f32 %v3143, 1.442695
        %v3343 = vpow.pop %v3342
        %v3344 = vmul.f32 %v3144, 1.442695
        %v3345 = vpow.pop %v3344
        %v3346 = vmul.f32 %v3145, 1.442695
        %v3347 = vpow.pop %v3346
        %v3348 = vmul.f32 %v3146, 1.442695
        %v3349 = vpow.pop %v3348
        %v3350 = vmul.f32 %v3147, 1.442695
        %v3351 = vpow.pop %v3350
        %v3352 = vmul.f32 %v3148, 1.442695
        %v3353 = vpow.pop %v3352
        %v3354 = vmul.f32 %v3149, 1.442695
        %v3355 = vpow.pop %v3354
        %v3356 = vmul.f32 %v3150, 1.442695
        %v3357 = vpow.pop %v3356
        %v3358 = vmul.f32 %v3151, 1.442695
        %v3359 = vpow.pop %v3358
        %v3360 = vmul.f32 %v3152, 1.442695
        %v3361 = vpow.pop %v3360
        %v3362 = vmul.f32 %v3153, 1.442695
        %v3363 = vpow.pop %v3362
        %v3364 = vmul.f32 %v3154, 1.442695
        %v3365 = vpow.pop %v3364
        %v3366 = vmul.f32 %v3155, 1.442695
        %v3367 = vpow.pop %v3366
        %v3368 = vmul.f32 %v3156, 1.442695
        %v3369 = vpow.pop %v3368
        %v3370 = vmul.f32 %v3157, 1.442695
        %v3371 = vpow.pop %v3370
        %v3372 = vmul.f32 %v3158, 1.442695
        %v3373 = vpow.pop %v3372
        %v3374 = vmul.f32 %v3159, 1.442695
        %v3375 = vpow.pop %v3374
        %v3376 = vmul.f32 %v3160, 1.442695
        %v3377 = vpow.pop %v3376
        %v3378 = vmul.f32 %v3161, 1.442695
        %v3379 = vpow.pop %v3378
        %v3380 = vmul.f32 %v3162, 1.442695
        %v3381 = vpow.pop %v3380
        %v3382 = vmul.f32 %v3163, 1.442695
        %v3383 = vpow.pop %v3382
        %v3384 = vmul.f32 %v3164, 1.442695
        %v3385 = vpow.pop %v3384
        %v3386 = vmul.f32 %v3165, 1.442695
        %v3387 = vpow.pop %v3386
        %v3388 = vmul.f32 %v3166, 1.442695
        %v3389 = vpow.pop %v3388
        %v3390 = vmul.f32 %v3167, 1.442695
        %v3391 = vpow.pop %v3390
        %v3392 = vmul.f32 %v3168, 1.442695
        %v3393 = vpow.pop %v3392
        %v3394 = vmul.f32 %v3169, 1.442695
        %v3395 = vpow.pop %v3394
        %v3396 = vmul.f32 %v3170, 1.442695
        %v3397 = vpow.pop %v3396
        %v3398 = vmul.f32 %v3171, 1.442695
        %v3399 = vpow.pop %v3398
        %v3400 = vmul.f32 %v3172, 1.442695
        %v3401 = vpow.pop %v3400
        %v3402 = vmul.f32 %v3173, 1.442695
        %v3403 = vpow.pop %v3402
        %v3404 = vmul.f32 %v3174, 1.442695
        %v3405 = vpow.pop %v3404
        %v3406 = vmul.f32 %v3175, 1.442695
        %v3407 = vpow.pop %v3406
        %v3408 = vmul.f32 %v3176, 1.442695
        %v3409 = vpow.pop %v3408
        %v3410 = vmul.f32 %v3177, 1.442695
        %v3411 = vpow.pop %v3410
        %v3412 = vmul.f32 %v3178, 1.442695
        %v3413 = vpow.pop %v3412
        %v3414 = vmul.f32 %v3179, 1.442695
        %v3415 = vpow.pop %v3414
        %v3416 = vmul.f32 %v3180, 1.442695
        %v3417 = vpow.pop %v3416
        %v3418 = vmul.f32 %v3181, 1.442695
        %v3419 = vpow.pop %v3418
        %v3420 = vmul.f32 %v3182, 1.442695
        %v3421 = vpow.pop %v3420
        %v3422 = vmul.f32 %v3183, 1.442695
        %v3423 = vpow.pop %v3422
        %v3424 = vmul.f32 %v3184, 1.442695
        %v3425 = vpow.pop %v3424
        %v3426 = vmul.f32 %v3185, 1.442695
        %v3427 = vpow.pop %v3426
        %v3428 = vmul.f32 %v3186, 1.442695
        %v3429 = vpow.pop %v3428
        %v3430 = vmul.f32 %v3187, 1.442695
        %v3431 = vpow.pop %v3430
        %v3432 = vmul.f32 %v3188, 1.442695
        %v3433 = vpow.pop %v3432
        %v3434 = vmul.f32 %v3189, 1.442695
        %v3435 = vpow.pop %v3434
        %v3436 = vmul.f32 %v3190, 1.442695
        %v3437 = vpow.pop %v3436
        %v3438 = vmul.f32 %v3191, 1.442695
        %v3439 = vpow.pop %v3438
        %v3440 = vmul.f32 %v3192, 1.442695
        %v3441 = vpow.pop %v3440
        %v3442 = vmul.f32 %v3193, 1.442695
        %v3443 = vpow.pop %v3442
        %v3444 = vmul.f32 %v3194, 1.442695
        %v3445 = vpow.pop %v3444
        %v3446 = vmul.f32 %v3195, 1.442695
        %v3447 = vpow.pop %v3446
        %v3448 = vmul.f32 %v3196, 1.442695
        %v3449 = vpow.pop %v3448
        %v3450 = vmul.f32 %v3197, 1.442695
        %v3451 = vpow.pop %v3450
        %v3452 = vmul.f32 %v3198, 1.442695
        %v3453 = vpow.pop %v3452
        %v3454 = vmul.f32 %v3199, 1.442695
        %v3455 = vpow.pop %v3454
        %v3456 = vadd.f32 %v3201, %v3203
        %3457 = vadd.xlane.f32.xlu0 %v3456
        %v3458 = vpop.xlane.xlu0 %3457
        %v3459 = vadd.f32 %v3205, %v3207
        %3460 = vadd.xlane.f32.xlu0 %v3459
        %v3461 = vpop.xlane.xlu0 %3460
        %v3462 = vadd.f32 %v3209, %v3211
        %3463 = vadd.xlane.f32.xlu0 %v3462
        %v3464 = vpop.xlane.xlu0 %3463
        %v3465 = vadd.f32 %v3213, %v3215
        %3466 = vadd.xlane.f32.xlu0 %v3465
        %v3467 = vpop.xlane.xlu0 %3466
        %v3468 = vadd.f32 %v3217, %v3219
        %3469 = vadd.xlane.f32.xlu0 %v3468
        %v3470 = vpop.xlane.xlu0 %3469
        %v3471 = vadd.f32 %v3221, %v3223
        %3472 = vadd.xlane.f32.xlu0 %v3471
        %v3473 = vpop.xlane.xlu0 %3472
        %v3474 = vadd.f32 %v3225, %v3227
        %3475 = vadd.xlane.f32.xlu0 %v3474
        %v3476 = vpop.xlane.xlu0 %3475
        %v3477 = vadd.f32 %v3229, %v3231
        %3478 = vadd.xlane.f32.xlu0 %v3477
        %v3479 = vpop.xlane.xlu0 %3478
        %v3480 = vadd.f32 %v3233, %v3235
        %3481 = vadd.xlane.f32.xlu0 %v3480
        %v3482 = vpop.xlane.xlu0 %3481
        %v3483 = vadd.f32 %v3237, %v3239
        %3484 = vadd.xlane.f32.xlu0 %v3483
        %v3485 = vpop.xlane.xlu0 %3484
        %v3486 = vadd.f32 %v3241, %v3243
        %3487 = vadd.xlane.f32.xlu0 %v3486
        %v3488 = vpop.xlane.xlu0 %3487
        %v3489 = vadd.f32 %v3245, %v3247
        %3490 = vadd.xlane.f32.xlu0 %v3489
        %v3491 = vpop.xlane.xlu0 %3490
        %v3492 = vadd.f32 %v3249, %v3251
        %3493 = vadd.xlane.f32.xlu0 %v3492
        %v3494 = vpop.xlane.xlu0 %3493
        %v3495 = vadd.f32 %v3253, %v3255
        %3496 = vadd.xlane.f32.xlu0 %v3495
        %v3497 = vpop.xlane.xlu0 %3496
        %v3498 = vadd.f32 %v3257, %v3259
        %3499 = vadd.xlane.f32.xlu0 %v3498
        %v3500 = vpop.xlane.xlu0 %3499
        %v3501 = vadd.f32 %v3261, %v3263
        %3502 = vadd.xlane.f32.xlu0 %v3501
        %v3503 = vpop.xlane.xlu0 %3502
        %v3504 = vadd.f32 %v3265, %v3267
        %3505 = vadd.xlane.f32.xlu0 %v3504
        %v3506 = vpop.xlane.xlu0 %3505
        %v3507 = vadd.f32 %v3269, %v3271
        %3508 = vadd.xlane.f32.xlu0 %v3507
        %v3509 = vpop.xlane.xlu0 %3508
        %v3510 = vadd.f32 %v3273, %v3275
        %3511 = vadd.xlane.f32.xlu0 %v3510
        %v3512 = vpop.xlane.xlu0 %3511
        %v3513 = vadd.f32 %v3277, %v3279
        %3514 = vadd.xlane.f32.xlu0 %v3513
        %v3515 = vpop.xlane.xlu0 %3514
        %v3516 = vadd.f32 %v3281, %v3283
        %3517 = vadd.xlane.f32.xlu0 %v3516
        %v3518 = vpop.xlane.xlu0 %3517
        %v3519 = vadd.f32 %v3285, %v3287
        %3520 = vadd.xlane.f32.xlu0 %v3519
        %v3521 = vpop.xlane.xlu0 %3520
        %v3522 = vadd.f32 %v3289, %v3291
        %3523 = vadd.xlane.f32.xlu0 %v3522
        %v3524 = vpop.xlane.xlu0 %3523
        %v3525 = vadd.f32 %v3293, %v3295
        %3526 = vadd.xlane.f32.xlu0 %v3525
        %v3527 = vpop.xlane.xlu0 %3526
        %v3528 = vadd.f32 %v3297, %v3299
        %3529 = vadd.xlane.f32.xlu0 %v3528
        %v3530 = vpop.xlane.xlu0 %3529
        %v3531 = vadd.f32 %v3301, %v3303
        %3532 = vadd.xlane.f32.xlu0 %v3531
        %v3533 = vpop.xlane.xlu0 %3532
        %v3534 = vadd.f32 %v3305, %v3307
        %3535 = vadd.xlane.f32.xlu0 %v3534
        %v3536 = vpop.xlane.xlu0 %3535
        %v3537 = vadd.f32 %v3309, %v3311
        %3538 = vadd.xlane.f32.xlu0 %v3537
        %v3539 = vpop.xlane.xlu0 %3538
        %v3540 = vadd.f32 %v3313, %v3315
        %3541 = vadd.xlane.f32.xlu0 %v3540
        %v3542 = vpop.xlane.xlu0 %3541
        %v3543 = vadd.f32 %v3317, %v3319
        %3544 = vadd.xlane.f32.xlu0 %v3543
        %v3545 = vpop.xlane.xlu0 %3544
        %v3546 = vadd.f32 %v3321, %v3323
        %3547 = vadd.xlane.f32.xlu0 %v3546
        %v3548 = vpop.xlane.xlu0 %3547
        %v3549 = vadd.f32 %v3325, %v3327
        %3550 = vadd.xlane.f32.xlu0 %v3549
        %v3551 = vpop.xlane.xlu0 %3550
        %v3552 = vadd.f32 %v3329, %v3331
        %3553 = vadd.xlane.f32.xlu0 %v3552
        %v3554 = vpop.xlane.xlu0 %3553
        %v3555 = vadd.f32 %v3333, %v3335
        %3556 = vadd.xlane.f32.xlu0 %v3555
        %v3557 = vpop.xlane.xlu0 %3556
        %v3558 = vadd.f32 %v3337, %v3339
        %3559 = vadd.xlane.f32.xlu0 %v3558
        %v3560 = vpop.xlane.xlu0 %3559
        %v3561 = vadd.f32 %v3341, %v3343
        %3562 = vadd.xlane.f32.xlu0 %v3561
        %v3563 = vpop.xlane.xlu0 %3562
        %v3564 = vadd.f32 %v3345, %v3347
        %3565 = vadd.xlane.f32.xlu0 %v3564
        %v3566 = vpop.xlane.xlu0 %3565
        %v3567 = vadd.f32 %v3349, %v3351
        %3568 = vadd.xlane.f32.xlu0 %v3567
        %v3569 = vpop.xlane.xlu0 %3568
        %v3570 = vadd.f32 %v3353, %v3355
        %3571 = vadd.xlane.f32.xlu0 %v3570
        %v3572 = vpop.xlane.xlu0 %3571
        %v3573 = vadd.f32 %v3357, %v3359
        %3574 = vadd.xlane.f32.xlu0 %v3573
        %v3575 = vpop.xlane.xlu0 %3574
        %v3576 = vadd.f32 %v3361, %v3363
        %3577 = vadd.xlane.f32.xlu0 %v3576
        %v3578 = vpop.xlane.xlu0 %3577
        %v3579 = vadd.f32 %v3365, %v3367
        %3580 = vadd.xlane.f32.xlu0 %v3579
        %v3581 = vpop.xlane.xlu0 %3580
        %v3582 = vadd.f32 %v3369, %v3371
        %3583 = vadd.xlane.f32.xlu0 %v3582
        %v3584 = vpop.xlane.xlu0 %3583
        %v3585 = vadd.f32 %v3373, %v3375
        %3586 = vadd.xlane.f32.xlu0 %v3585
        %v3587 = vpop.xlane.xlu0 %3586
        %v3588 = vadd.f32 %v3377, %v3379
        %3589 = vadd.xlane.f32.xlu0 %v3588
        %v3590 = vpop.xlane.xlu0 %3589
        %v3591 = vadd.f32 %v3381, %v3383
        %3592 = vadd.xlane.f32.xlu0 %v3591
        %v3593 = vpop.xlane.xlu0 %3592
        %v3594 = vadd.f32 %v3385, %v3387
        %3595 = vadd.xlane.f32.xlu0 %v3594
        %v3596 = vpop.xlane.xlu0 %3595
        %v3597 = vadd.f32 %v3389, %v3391
        %3598 = vadd.xlane.f32.xlu0 %v3597
        %v3599 = vpop.xlane.xlu0 %3598
        %v3600 = vadd.f32 %v3393, %v3395
        %3601 = vadd.xlane.f32.xlu0 %v3600
        %v3602 = vpop.xlane.xlu0 %3601
        %v3603 = vadd.f32 %v3397, %v3399
        %3604 = vadd.xlane.f32.xlu0 %v3603
        %v3605 = vpop.xlane.xlu0 %3604
        %v3606 = vadd.f32 %v3401, %v3403
        %3607 = vadd.xlane.f32.xlu0 %v3606
        %v3608 = vpop.xlane.xlu0 %3607
        %v3609 = vadd.f32 %v3405, %v3407
        %3610 = vadd.xlane.f32.xlu0 %v3609
        %v3611 = vpop.xlane.xlu0 %3610
        %v3612 = vadd.f32 %v3409, %v3411
        %3613 = vadd.xlane.f32.xlu0 %v3612
        %v3614 = vpop.xlane.xlu0 %3613
        %v3615 = vadd.f32 %v3413, %v3415
        %3616 = vadd.xlane.f32.xlu0 %v3615
        %v3617 = vpop.xlane.xlu0 %3616
        %v3618 = vadd.f32 %v3417, %v3419
        %3619 = vadd.xlane.f32.xlu0 %v3618
        %v3620 = vpop.xlane.xlu0 %3619
        %v3621 = vadd.f32 %v3421, %v3423
        %3622 = vadd.xlane.f32.xlu0 %v3621
        %v3623 = vpop.xlane.xlu0 %3622
        %v3624 = vadd.f32 %v3425, %v3427
        %3625 = vadd.xlane.f32.xlu0 %v3624
        %v3626 = vpop.xlane.xlu0 %3625
        %v3627 = vadd.f32 %v3429, %v3431
        %3628 = vadd.xlane.f32.xlu0 %v3627
        %v3629 = vpop.xlane.xlu0 %3628
        %v3630 = vadd.f32 %v3433, %v3435
        %3631 = vadd.xlane.f32.xlu0 %v3630
        %v3632 = vpop.xlane.xlu0 %3631
        %v3633 = vadd.f32 %v3437, %v3439
        %3634 = vadd.xlane.f32.xlu0 %v3633
        %v3635 = vpop.xlane.xlu0 %3634
        %v3636 = vadd.f32 %v3441, %v3443
        %3637 = vadd.xlane.f32.xlu0 %v3636
        %v3638 = vpop.xlane.xlu0 %3637
        %v3639 = vadd.f32 %v3445, %v3447
        %3640 = vadd.xlane.f32.xlu0 %v3639
        %v3641 = vpop.xlane.xlu0 %3640
        %v3642 = vadd.f32 %v3449, %v3451
        %3643 = vadd.xlane.f32.xlu0 %v3642
        %v3644 = vpop.xlane.xlu0 %3643
        %v3645 = vadd.f32 %v3453, %v3455
        %3646 = vadd.xlane.f32.xlu0 %v3645
        %v3647 = vpop.xlane.xlu0 %3646
        %v3648 = vrcp.pop %v3458
        %v3649 = vrcp.pop %v3461
        %v3650 = vrcp.pop %v3464
        %v3651 = vrcp.pop %v3467
        %v3652 = vrcp.pop %v3470
        %v3653 = vrcp.pop %v3473
        %v3654 = vrcp.pop %v3476
        %v3655 = vrcp.pop %v3479
        %v3656 = vrcp.pop %v3482
        %v3657 = vrcp.pop %v3485
        %v3658 = vrcp.pop %v3488
        %v3659 = vrcp.pop %v3491
        %v3660 = vrcp.pop %v3494
        %v3661 = vrcp.pop %v3497
        %v3662 = vrcp.pop %v3500
        %v3663 = vrcp.pop %v3503
        %v3664 = vrcp.pop %v3506
        %v3665 = vrcp.pop %v3509
        %v3666 = vrcp.pop %v3512
        %v3667 = vrcp.pop %v3515
        %v3668 = vrcp.pop %v3518
        %v3669 = vrcp.pop %v3521
        %v3670 = vrcp.pop %v3524
        %v3671 = vrcp.pop %v3527
        %v3672 = vrcp.pop %v3530
        %v3673 = vrcp.pop %v3533
        %v3674 = vrcp.pop %v3536
        %v3675 = vrcp.pop %v3539
        %v3676 = vrcp.pop %v3542
        %v3677 = vrcp.pop %v3545
        %v3678 = vrcp.pop %v3548
        %v3679 = vrcp.pop %v3551
        %v3680 = vrcp.pop %v3554
        %v3681 = vrcp.pop %v3557
        %v3682 = vrcp.pop %v3560
        %v3683 = vrcp.pop %v3563
        %v3684 = vrcp.pop %v3566
        %v3685 = vrcp.pop %v3569
        %v3686 = vrcp.pop %v3572
        %v3687 = vrcp.pop %v3575
        %v3688 = vrcp.pop %v3578
        %v3689 = vrcp.pop %v3581
        %v3690 = vrcp.pop %v3584
        %v3691 = vrcp.pop %v3587
        %v3692 = vrcp.pop %v3590
        %v3693 = vrcp.pop %v3593
        %v3694 = vrcp.pop %v3596
        %v3695 = vrcp.pop %v3599
        %v3696 = vrcp.pop %v3602
        %v3697 = vrcp.pop %v3605
        %v3698 = vrcp.pop %v3608
        %v3699 = vrcp.pop %v3611
        %v3700 = vrcp.pop %v3614
        %v3701 = vrcp.pop %v3617
        %v3702 = vrcp.pop %v3620
        %v3703 = vrcp.pop %v3623
        %v3704 = vrcp.pop %v3626
        %v3705 = vrcp.pop %v3629
        %v3706 = vrcp.pop %v3632
        %v3707 = vrcp.pop %v3635
        %v3708 = vrcp.pop %v3638
        %v3709 = vrcp.pop %v3641
        %v3710 = vrcp.pop %v3644
        %v3711 = vrcp.pop %v3647
        %v3712 = vmul.f32 %v3201, %v3648
        %v3713 = vmul.f32 %v3203, %v3648
        %v3714 = vmul.f32 %v3205, %v3649
        %v3715 = vmul.f32 %v3207, %v3649
        %v3716 = vmul.f32 %v3209, %v3650
        %v3717 = vmul.f32 %v3211, %v3650
        %v3718 = vmul.f32 %v3213, %v3651
        %v3719 = vmul.f32 %v3215, %v3651
        %v3720 = vmul.f32 %v3217, %v3652
        %v3721 = vmul.f32 %v3219, %v3652
        %v3722 = vmul.f32 %v3221, %v3653
        %v3723 = vmul.f32 %v3223, %v3653
        %v3724 = vmul.f32 %v3225, %v3654
        %v3725 = vmul.f32 %v3227, %v3654
        %v3726 = vmul.f32 %v3229, %v3655
        %v3727 = vmul.f32 %v3231, %v3655
        %v3728 = vmul.f32 %v3233, %v3656
        %v3729 = vmul.f32 %v3235, %v3656
        %v3730 = vmul.f32 %v3237, %v3657
        %v3731 = vmul.f32 %v3239, %v3657
        %v3732 = vmul.f32 %v3241, %v3658
        %v3733 = vmul.f32 %v3243, %v3658
        %v3734 = vmul.f32 %v3245, %v3659
        %v3735 = vmul.f32 %v3247, %v3659
        %v3736 = vmul.f32 %v3249, %v3660
        %v3737 = vmul.f32 %v3251, %v3660
        %v3738 = vmul.f32 %v3253, %v3661
        %v3739 = vmul.f32 %v3255, %v3661
        %v3740 = vmul.f32 %v3257, %v3662
        %v3741 = vmul.f32 %v3259, %v3662
        %v3742 = vmul.f32 %v3261, %v3663
        %v3743 = vmul.f32 %v3263, %v3663
        %v3744 = vmul.f32 %v3265, %v3664
        %v3745 = vmul.f32 %v3267, %v3664
        %v3746 = vmul.f32 %v3269, %v3665
        %v3747 = vmul.f32 %v3271, %v3665
        %v3748 = vmul.f32 %v3273, %v3666
        %v3749 = vmul.f32 %v3275, %v3666
        %v3750 = vmul.f32 %v3277, %v3667
        %v3751 = vmul.f32 %v3279, %v3667
        %v3752 = vmul.f32 %v3281, %v3668
        %v3753 = vmul.f32 %v3283, %v3668
        %v3754 = vmul.f32 %v3285, %v3669
        %v3755 = vmul.f32 %v3287, %v3669
        %v3756 = vmul.f32 %v3289, %v3670
        %v3757 = vmul.f32 %v3291, %v3670
        %v3758 = vmul.f32 %v3293, %v3671
        %v3759 = vmul.f32 %v3295, %v3671
        %v3760 = vmul.f32 %v3297, %v3672
        %v3761 = vmul.f32 %v3299, %v3672
        %v3762 = vmul.f32 %v3301, %v3673
        %v3763 = vmul.f32 %v3303, %v3673
        %v3764 = vmul.f32 %v3305, %v3674
        %v3765 = vmul.f32 %v3307, %v3674
        %v3766 = vmul.f32 %v3309, %v3675
        %v3767 = vmul.f32 %v3311, %v3675
        %v3768 = vmul.f32 %v3313, %v3676
        %v3769 = vmul.f32 %v3315, %v3676
        %v3770 = vmul.f32 %v3317, %v3677
        %v3771 = vmul.f32 %v3319, %v3677
        %v3772 = vmul.f32 %v3321, %v3678
        %v3773 = vmul.f32 %v3323, %v3678
        %v3774 = vmul.f32 %v3325, %v3679
        %v3775 = vmul.f32 %v3327, %v3679
        %v3776 = vmul.f32 %v3329, %v3680
        %v3777 = vmul.f32 %v3331, %v3680
        %v3778 = vmul.f32 %v3333, %v3681
        %v3779 = vmul.f32 %v3335, %v3681
        %v3780 = vmul.f32 %v3337, %v3682
        %v3781 = vmul.f32 %v3339, %v3682
        %v3782 = vmul.f32 %v3341, %v3683
        %v3783 = vmul.f32 %v3343, %v3683
        %v3784 = vmul.f32 %v3345, %v3684
        %v3785 = vmul.f32 %v3347, %v3684
        %v3786 = vmul.f32 %v3349, %v3685
        %v3787 = vmul.f32 %v3351, %v3685
        %v3788 = vmul.f32 %v3353, %v3686
        %v3789 = vmul.f32 %v3355, %v3686
        %v3790 = vmul.f32 %v3357, %v3687
        %v3791 = vmul.f32 %v3359, %v3687
        %v3792 = vmul.f32 %v3361, %v3688
        %v3793 = vmul.f32 %v3363, %v3688
        %v3794 = vmul.f32 %v3365, %v3689
        %v3795 = vmul.f32 %v3367, %v3689
        %v3796 = vmul.f32 %v3369, %v3690
        %v3797 = vmul.f32 %v3371, %v3690
        %v3798 = vmul.f32 %v3373, %v3691
        %v3799 = vmul.f32 %v3375, %v3691
        %v3800 = vmul.f32 %v3377, %v3692
        %v3801 = vmul.f32 %v3379, %v3692
        %v3802 = vmul.f32 %v3381, %v3693
        %v3803 = vmul.f32 %v3383, %v3693
        %v3804 = vmul.f32 %v3385, %v3694
        %v3805 = vmul.f32 %v3387, %v3694
        %v3806 = vmul.f32 %v3389, %v3695
        %v3807 = vmul.f32 %v3391, %v3695
        %v3808 = vmul.f32 %v3393, %v3696
        %v3809 = vmul.f32 %v3395, %v3696
        %v3810 = vmul.f32 %v3397, %v3697
        %v3811 = vmul.f32 %v3399, %v3697
        %v3812 = vmul.f32 %v3401, %v3698
        %v3813 = vmul.f32 %v3403, %v3698
        %v3814 = vmul.f32 %v3405, %v3699
        %v3815 = vmul.f32 %v3407, %v3699
        %v3816 = vmul.f32 %v3409, %v3700
        %v3817 = vmul.f32 %v3411, %v3700
        %v3818 = vmul.f32 %v3413, %v3701
        %v3819 = vmul.f32 %v3415, %v3701
        %v3820 = vmul.f32 %v3417, %v3702
        %v3821 = vmul.f32 %v3419, %v3702
        %v3822 = vmul.f32 %v3421, %v3703
        %v3823 = vmul.f32 %v3423, %v3703
        %v3824 = vmul.f32 %v3425, %v3704
        %v3825 = vmul.f32 %v3427, %v3704
        %v3826 = vmul.f32 %v3429, %v3705
        %v3827 = vmul.f32 %v3431, %v3705
        %v3828 = vmul.f32 %v3433, %v3706
        %v3829 = vmul.f32 %v3435, %v3706
        %v3830 = vmul.f32 %v3437, %v3707
        %v3831 = vmul.f32 %v3439, %v3707
        %v3832 = vmul.f32 %v3441, %v3708
        %v3833 = vmul.f32 %v3443, %v3708
        %v3834 = vmul.f32 %v3445, %v3709
        %v3835 = vmul.f32 %v3447, %v3709
        %v3836 = vmul.f32 %v3449, %v3710
        %v3837 = vmul.f32 %v3451, %v3710
        %v3838 = vmul.f32 %v3453, %v3711
        %v3839 = vmul.f32 %v3455, %v3711
        %v3840 = vpack.c.bf16 %v3714, %v3712
        %v3841 = vpack.c.bf16 %v3715, %v3713
        %v3842 = vpack.c.bf16 %v3718, %v3716
        %v3843 = vpack.c.bf16 %v3719, %v3717
        %v3844 = vpack.c.bf16 %v3722, %v3720
        %v3845 = vpack.c.bf16 %v3723, %v3721
        %v3846 = vpack.c.bf16 %v3726, %v3724
        %v3847 = vpack.c.bf16 %v3727, %v3725
        %v3848 = vpack.c.bf16 %v3730, %v3728
        %v3849 = vpack.c.bf16 %v3731, %v3729
        %v3850 = vpack.c.bf16 %v3734, %v3732
        %v3851 = vpack.c.bf16 %v3735, %v3733
        %v3852 = vpack.c.bf16 %v3738, %v3736
        %v3853 = vpack.c.bf16 %v3739, %v3737
        %v3854 = vpack.c.bf16 %v3742, %v3740
        %v3855 = vpack.c.bf16 %v3743, %v3741
        %v3856 = vpack.c.bf16 %v3746, %v3744
        %v3857 = vpack.c.bf16 %v3747, %v3745
        %v3858 = vpack.c.bf16 %v3750, %v3748
        %v3859 = vpack.c.bf16 %v3751, %v3749
        %v3860 = vpack.c.bf16 %v3754, %v3752
        %v3861 = vpack.c.bf16 %v3755, %v3753
        %v3862 = vpack.c.bf16 %v3758, %v3756
        %v3863 = vpack.c.bf16 %v3759, %v3757
        %v3864 = vpack.c.bf16 %v3762, %v3760
        %v3865 = vpack.c.bf16 %v3763, %v3761
        %v3866 = vpack.c.bf16 %v3766, %v3764
        %v3867 = vpack.c.bf16 %v3767, %v3765
        %v3868 = vpack.c.bf16 %v3770, %v3768
        %v3869 = vpack.c.bf16 %v3771, %v3769
        %v3870 = vpack.c.bf16 %v3774, %v3772
        %v3871 = vpack.c.bf16 %v3775, %v3773
        %v3872 = vpack.c.bf16 %v3778, %v3776
        %v3873 = vpack.c.bf16 %v3779, %v3777
        %v3874 = vpack.c.bf16 %v3782, %v3780
        %v3875 = vpack.c.bf16 %v3783, %v3781
        %v3876 = vpack.c.bf16 %v3786, %v3784
        %v3877 = vpack.c.bf16 %v3787, %v3785
        %v3878 = vpack.c.bf16 %v3790, %v3788
        %v3879 = vpack.c.bf16 %v3791, %v3789
        %v3880 = vpack.c.bf16 %v3794, %v3792
        %v3881 = vpack.c.bf16 %v3795, %v3793
        %v3882 = vpack.c.bf16 %v3798, %v3796
        %v3883 = vpack.c.bf16 %v3799, %v3797
        %v3884 = vpack.c.bf16 %v3802, %v3800
        %v3885 = vpack.c.bf16 %v3803, %v3801
        %v3886 = vpack.c.bf16 %v3806, %v3804
        %v3887 = vpack.c.bf16 %v3807, %v3805
        %v3888 = vpack.c.bf16 %v3810, %v3808
        %v3889 = vpack.c.bf16 %v3811, %v3809
        %v3890 = vpack.c.bf16 %v3814, %v3812
        %v3891 = vpack.c.bf16 %v3815, %v3813
        %v3892 = vpack.c.bf16 %v3818, %v3816
        %v3893 = vpack.c.bf16 %v3819, %v3817
        %v3894 = vpack.c.bf16 %v3822, %v3820
        %v3895 = vpack.c.bf16 %v3823, %v3821
        %v3896 = vpack.c.bf16 %v3826, %v3824
        %v3897 = vpack.c.bf16 %v3827, %v3825
        %v3898 = vpack.c.bf16 %v3830, %v3828
        %v3899 = vpack.c.bf16 %v3831, %v3829
        %v3900 = vpack.c.bf16 %v3834, %v3832
        %v3901 = vpack.c.bf16 %v3835, %v3833
        %v3902 = vpack.c.bf16 %v3838, %v3836
        %v3903 = vpack.c.bf16 %v3839, %v3837
        %3904 = vmatprep.subr.bf16.mxu0 0
        %3905 = vmatpush1.bf16.msra.mxu0 %v1947
        %3906 = vmatprep.subr.bf16.mxu0 0
        %3907 = vmatpush1.bf16.msra.mxu0 %v1948
        %3908 = vmatprep.subr.bf16.mxu0 0
        %3909 = vmatpush1.bf16.msra.mxu0 %v1949
        %3910 = vmatprep.subr.bf16.mxu0 0
        %3911 = vmatpush1.bf16.msra.mxu0 %v1950
        %3912 = vmatprep.subr.bf16.mxu0 0
        %3913 = vmatpush1.bf16.msra.mxu0 %v1951
        %3914 = vmatprep.subr.bf16.mxu0 0
        %3915 = vmatpush1.bf16.msra.mxu0 %v1952
        %3916 = vmatprep.subr.bf16.mxu0 0
        %3917 = vmatpush1.bf16.msra.mxu0 %v1953
        %3918 = vmatprep.subr.bf16.mxu0 0
        %3919 = vmatpush1.bf16.msra.mxu0 %v1954
        %3920 = vmatprep.subr.bf16.mxu0 0
        %3921 = vmatpush1.bf16.msra.mxu0 %v1955
        %3922 = vmatprep.subr.bf16.mxu0 0
        %3923 = vmatpush1.bf16.msra.mxu0 %v1956
        %3924 = vmatprep.subr.bf16.mxu0 0
        %3925 = vmatpush1.bf16.msra.mxu0 %v1957
        %3926 = vmatprep.subr.bf16.mxu0 0
        %3927 = vmatpush1.bf16.msra.mxu0 %v1958
        %3928 = vmatprep.subr.bf16.mxu0 0
        %3929 = vmatpush1.bf16.msra.mxu0 %v1959
        %3930 = vmatprep.subr.bf16.mxu0 0
        %3931 = vmatpush1.bf16.msra.mxu0 %v1960
        %3932 = vmatprep.subr.bf16.mxu0 0
        %3933 = vmatpush1.bf16.msra.mxu0 %v1961
        %3934 = vmatprep.subr.bf16.mxu0 0
        %3935 = vmatpush1.bf16.msra.mxu0 %v1962
        %3936 = vmatprep.mubr.bf16.mxu0 %v3841
        %3937 = vmatmul.mubr.bf16.gmra.mrb[0].mxu0 %v3840
        %v3938 = vpop.f32.mrb[0].mxu0
        %v3939 = vadd.f32 0.0, %v3938
        %v3940 = vpop.f32.mrb[0].mxu0
        %v3941 = vpop.f32.mrb[0].mxu0
        %v3942 = vadd.f32 0.0, %v3941
        %v3943 = vpop.f32.mrb[0].mxu0
        %3944 = vmatprep.mubr.bf16.mxu0 %v3843
        %3945 = vmatmul.mubr.bf16.gmra.mrb[0].mxu0 %v3842
        %v3946 = vpop.f32.mrb[0].mxu0
        %v3947 = vadd.f32 0.0, %v3946
        %v3948 = vpop.f32.mrb[0].mxu0
        %v3949 = vpop.f32.mrb[0].mxu0
        %v3950 = vadd.f32 0.0, %v3949
        %v3951 = vpop.f32.mrb[0].mxu0
        %3952 = vmatprep.mubr.bf16.mxu0 %v3845
        %3953 = vmatmul.mubr.bf16.gmra.mrb[0].mxu0 %v3844
        %v3954 = vpop.f32.mrb[0].mxu0
        %v3955 = vadd.f32 0.0, %v3954
        %v3956 = vpop.f32.mrb[0].mxu0
        %v3957 = vpop.f32.mrb[0].mxu0
        %v3958 = vadd.f32 0.0, %v3957
        %v3959 = vpop.f32.mrb[0].mxu0
        %3960 = vmatprep.mubr.bf16.mxu0 %v3847
        %3961 = vmatmul.mubr.bf16.gmra.mrb[0].mxu0 %v3846
        %v3962 = vpop.f32.mrb[0].mxu0
        %v3963 = vadd.f32 0.0, %v3962
        %v3964 = vpop.f32.mrb[0].mxu0
        %v3965 = vpop.f32.mrb[0].mxu0
        %v3966 = vadd.f32 0.0, %v3965
        %v3967 = vpop.f32.mrb[0].mxu0
        %3968 = vmatprep.mubr.bf16.mxu0 %v3849
        %3969 = vmatmul.mubr.bf16.gmra.mrb[0].mxu0 %v3848
        %v3970 = vpop.f32.mrb[0].mxu0
        %v3971 = vadd.f32 0.0, %v3970
        %v3972 = vpop.f32.mrb[0].mxu0
        %v3973 = vpop.f32.mrb[0].mxu0
        %v3974 = vadd.f32 0.0, %v3973
        %v3975 = vpop.f32.mrb[0].mxu0
        %3976 = vmatprep.mubr.bf16.mxu0 %v3851
        %3977 = vmatmul.mubr.bf16.gmra.mrb[0].mxu0 %v3850
        %v3978 = vpop.f32.mrb[0].mxu0
        %v3979 = vadd.f32 0.0, %v3978
        %v3980 = vpop.f32.mrb[0].mxu0
        %v3981 = vpop.f32.mrb[0].mxu0
        %v3982 = vadd.f32 0.0, %v3981
        %v3983 = vpop.f32.mrb[0].mxu0
        %3984 = vmatprep.mubr.bf16.mxu0 %v3853
        %3985 = vmatmul.mubr.bf16.gmra.mrb[0].mxu0 %v3852
        %v3986 = vpop.f32.mrb[0].mxu0
        %v3987 = vadd.f32 0.0, %v3986
        %v3988 = vpop.f32.mrb[0].mxu0
        %v3989 = vpop.f32.mrb[0].mxu0
        %v3990 = vadd.f32 0.0, %v3989
        %v3991 = vpop.f32.mrb[0].mxu0
        %3992 = vmatprep.mubr.bf16.mxu0 %v3855
        %3993 = vmatmul.mubr.bf16.gmra.mrb[0].mxu0 %v3854
        %v3994 = vpop.f32.mrb[0].mxu0
        %v3995 = vadd.f32 0.0, %v3994
        %v3996 = vpop.f32.mrb[0].mxu0
        %v3997 = vpop.f32.mrb[0].mxu0
        %v3998 = vadd.f32 0.0, %v3997
        %v3999 = vpop.f32.mrb[0].mxu0
        %4000 = vdwg.mxu0
        %4001 = vmatprep.subr.bf16.mxu0 0
        %4002 = vmatpush1.bf16.msra.mxu0 %v1963
        %4003 = vmatprep.subr.bf16.mxu0 0
        %4004 = vmatpush1.bf16.msra.mxu0 %v1964
        %4005 = vmatprep.subr.bf16.mxu0 0
        %4006 = vmatpush1.bf16.msra.mxu0 %v1965
        %4007 = vmatprep.subr.bf16.mxu0 0
        %4008 = vmatpush1.bf16.msra.mxu0 %v1966
        %4009 = vmatprep.subr.bf16.mxu0 0
        %4010 = vmatpush1.bf16.msra.mxu0 %v1967
        %4011 = vmatprep.subr.bf16.mxu0 0
        %4012 = vmatpush1.bf16.msra.mxu0 %v1968
        %4013 = vmatprep.subr.bf16.mxu0 0
        %4014 = vmatpush1.bf16.msra.mxu0 %v1969
        %4015 = vmatprep.subr.bf16.mxu0 0
        %4016 = vmatpush1.bf16.msra.mxu0 %v1970
        %4017 = vmatprep.subr.bf16.mxu0 0
        %4018 = vmatpush1.bf16.msra.mxu0 %v1971
        %4019 = vmatprep.subr.bf16.mxu0 0
        %4020 = vmatpush1.bf16.msra.mxu0 %v1972
        %4021 = vmatprep.subr.bf16.mxu0 0
        %4022 = vmatpush1.bf16.msra.mxu0 %v1973
        %4023 = vmatprep.subr.bf16.mxu0 0
        %4024 = vmatpush1.bf16.msra.mxu0 %v1974
        %4025 = vmatprep.subr.bf16.mxu0 0
        %4026 = vmatpush1.bf16.msra.mxu0 %v1975
        %4027 = vmatprep.subr.bf16.mxu0 0
        %4028 = vmatpush1.bf16.msra.mxu0 %v1976
        %4029 = vmatprep.subr.bf16.mxu0 0
        %4030 = vmatpush1.bf16.msra.mxu0 %v1977
        %4031 = vmatprep.subr.bf16.mxu0 0
        %4032 = vmatpush1.bf16.msra.mxu0 %v1978
        %4033 = vmatprep.mubr.bf16.mxu0 %v3857
        %4034 = vmatmul.mubr.bf16.gmra.mrb[0].mxu0 %v3856
        %v4035 = vpop.f32.mrb[0].mxu0
        %v4036 = vadd.f32 0.0, %v4035
        %v4037 = vpop.f32.mrb[0].mxu0
        %v4038 = vpop.f32.mrb[0].mxu0
        %v4039 = vadd.f32 0.0, %v4038
        %v4040 = vpop.f32.mrb[0].mxu0
        %4041 = vmatprep.mubr.bf16.mxu0 %v3859
        %4042 = vmatmul.mubr.bf16.gmra.mrb[0].mxu0 %v3858
        %v4043 = vpop.f32.mrb[0].mxu0
        %v4044 = vadd.f32 0.0, %v4043
        %v4045 = vpop.f32.mrb[0].mxu0
        %v4046 = vpop.f32.mrb[0].mxu0
        %v4047 = vadd.f32 0.0, %v4046
        %v4048 = vpop.f32.mrb[0].mxu0
        %4049 = vmatprep.mubr.bf16.mxu0 %v3861
        %4050 = vmatmul.mubr.bf16.gmra.mrb[0].mxu0 %v3860
        %v4051 = vpop.f32.mrb[0].mxu0
        %v4052 = vadd.f32 0.0, %v4051
        %v4053 = vpop.f32.mrb[0].mxu0
        %v4054 = vpop.f32.mrb[0].mxu0
        %v4055 = vadd.f32 0.0, %v4054
        %v4056 = vpop.f32.mrb[0].mxu0
        %4057 = vmatprep.mubr.bf16.mxu0 %v3863
        %4058 = vmatmul.mubr.bf16.gmra.mrb[0].mxu0 %v3862
        %v4059 = vpop.f32.mrb[0].mxu0
        %v4060 = vadd.f32 0.0, %v4059
        %v4061 = vpop.f32.mrb[0].mxu0
        %v4062 = vpop.f32.mrb[0].mxu0
        %v4063 = vadd.f32 0.0, %v4062
        %v4064 = vpop.f32.mrb[0].mxu0
        %4065 = vmatprep.mubr.bf16.mxu0 %v3865
        %4066 = vmatmul.mubr.bf16.gmra.mrb[0].mxu0 %v3864
        %v4067 = vpop.f32.mrb[0].mxu0
        %v4068 = vadd.f32 0.0, %v4067
        %v4069 = vpop.f32.mrb[0].mxu0
        %v4070 = vpop.f32.mrb[0].mxu0
        %v4071 = vadd.f32 0.0, %v4070
        %v4072 = vpop.f32.mrb[0].mxu0
        %4073 = vmatprep.mubr.bf16.mxu0 %v3867
        %4074 = vmatmul.mubr.bf16.gmra.mrb[0].mxu0 %v3866
        %v4075 = vpop.f32.mrb[0].mxu0
        %v4076 = vadd.f32 0.0, %v4075
        %v4077 = vpop.f32.mrb[0].mxu0
        %v4078 = vpop.f32.mrb[0].mxu0
        %v4079 = vadd.f32 0.0, %v4078
        %v4080 = vpop.f32.mrb[0].mxu0
        %4081 = vmatprep.mubr.bf16.mxu0 %v3869
        %4082 = vmatmul.mubr.bf16.gmra.mrb[0].mxu0 %v3868
        %v4083 = vpop.f32.mrb[0].mxu0
        %v4084 = vadd.f32 0.0, %v4083
        %v4085 = vpop.f32.mrb[0].mxu0
        %v4086 = vpop.f32.mrb[0].mxu0
        %v4087 = vadd.f32 0.0, %v4086
        %v4088 = vpop.f32.mrb[0].mxu0
        %4089 = vmatprep.mubr.bf16.mxu0 %v3871
        %4090 = vmatmul.mubr.bf16.gmra.mrb[0].mxu0 %v3870
        %v4091 = vpop.f32.mrb[0].mxu0
        %v4092 = vadd.f32 0.0, %v4091
        %v4093 = vpop.f32.mrb[0].mxu0
        %v4094 = vpop.f32.mrb[0].mxu0
        %v4095 = vadd.f32 0.0, %v4094
        %v4096 = vpop.f32.mrb[0].mxu0
        %4097 = vdwg.mxu0
        %4098 = vmatprep.subr.bf16.mxu0 0
        %4099 = vmatpush1.bf16.msra.mxu0 %v1979
        %4100 = vmatprep.subr.bf16.mxu0 0
        %4101 = vmatpush1.bf16.msra.mxu0 %v1980
        %4102 = vmatprep.subr.bf16.mxu0 0
        %4103 = vmatpush1.bf16.msra.mxu0 %v1981
        %4104 = vmatprep.subr.bf16.mxu0 0
        %4105 = vmatpush1.bf16.msra.mxu0 %v1982
        %4106 = vmatprep.subr.bf16.mxu0 0
        %4107 = vmatpush1.bf16.msra.mxu0 %v1983
        %4108 = vmatprep.subr.bf16.mxu0 0
        %4109 = vmatpush1.bf16.msra.mxu0 %v1984
        %4110 = vmatprep.subr.bf16.mxu0 0
        %4111 = vmatpush1.bf16.msra.mxu0 %v1985
        %4112 = vmatprep.subr.bf16.mxu0 0
        %4113 = vmatpush1.bf16.msra.mxu0 %v1986
        %4114 = vmatprep.subr.bf16.mxu0 0
        %4115 = vmatpush1.bf16.msra.mxu0 %v1987
        %4116 = vmatprep.subr.bf16.mxu0 0
        %4117 = vmatpush1.bf16.msra.mxu0 %v1988
        %4118 = vmatprep.subr.bf16.mxu0 0
        %4119 = vmatpush1.bf16.msra.mxu0 %v1989
        %4120 = vmatprep.subr.bf16.mxu0 0
        %4121 = vmatpush1.bf16.msra.mxu0 %v1990
        %4122 = vmatprep.subr.bf16.mxu0 0
        %4123 = vmatpush1.bf16.msra.mxu0 %v1991
        %4124 = vmatprep.subr.bf16.mxu0 0
        %4125 = vmatpush1.bf16.msra.mxu0 %v1992
        %4126 = vmatprep.subr.bf16.mxu0 0
        %4127 = vmatpush1.bf16.msra.mxu0 %v1993
        %4128 = vmatprep.subr.bf16.mxu0 0
        %4129 = vmatpush1.bf16.msra.mxu0 %v1994
        %4130 = vmatprep.mubr.bf16.mxu0 %v3873
        %4131 = vmatmul.mubr.bf16.gmra.mrb[0].mxu0 %v3872
        %v4132 = vpop.f32.mrb[0].mxu0
        %v4133 = vadd.f32 0.0, %v4132
        %v4134 = vpop.f32.mrb[0].mxu0
        %v4135 = vpop.f32.mrb[0].mxu0
        %v4136 = vadd.f32 0.0, %v4135
        %v4137 = vpop.f32.mrb[0].mxu0
        %4138 = vmatprep.mubr.bf16.mxu0 %v3875
        %4139 = vmatmul.mubr.bf16.gmra.mrb[0].mxu0 %v3874
        %v4140 = vpop.f32.mrb[0].mxu0
        %v4141 = vadd.f32 0.0, %v4140
        %v4142 = vpop.f32.mrb[0].mxu0
        %v4143 = vpop.f32.mrb[0].mxu0
        %v4144 = vadd.f32 0.0, %v4143
        %v4145 = vpop.f32.mrb[0].mxu0
        %4146 = vmatprep.mubr.bf16.mxu0 %v3877
        %4147 = vmatmul.mubr.bf16.gmra.mrb[0].mxu0 %v3876
        %v4148 = vpop.f32.mrb[0].mxu0
        %v4149 = vadd.f32 0.0, %v4148
        %v4150 = vpop.f32.mrb[0].mxu0
        %v4151 = vpop.f32.mrb[0].mxu0
        %v4152 = vadd.f32 0.0, %v4151
        %v4153 = vpop.f32.mrb[0].mxu0
        %4154 = vmatprep.mubr.bf16.mxu0 %v3879
        %4155 = vmatmul.mubr.bf16.gmra.mrb[0].mxu0 %v3878
        %v4156 = vpop.f32.mrb[0].mxu0
        %v4157 = vadd.f32 0.0, %v4156
        %v4158 = vpop.f32.mrb[0].mxu0
        %v4159 = vpop.f32.mrb[0].mxu0
        %v4160 = vadd.f32 0.0, %v4159
        %v4161 = vpop.f32.mrb[0].mxu0
        %4162 = vmatprep.mubr.bf16.mxu0 %v3881
        %4163 = vmatmul.mubr.bf16.gmra.mrb[0].mxu0 %v3880
        %v4164 = vpop.f32.mrb[0].mxu0
        %v4165 = vadd.f32 0.0, %v4164
        %v4166 = vpop.f32.mrb[0].mxu0
        %v4167 = vpop.f32.mrb[0].mxu0
        %v4168 = vadd.f32 0.0, %v4167
        %v4169 = vpop.f32.mrb[0].mxu0
        %4170 = vmatprep.mubr.bf16.mxu0 %v3883
        %4171 = vmatmul.mubr.bf16.gmra.mrb[0].mxu0 %v3882
        %v4172 = vpop.f32.mrb[0].mxu0
        %v4173 = vadd.f32 0.0, %v4172
        %v4174 = vpop.f32.mrb[0].mxu0
        %v4175 = vpop.f32.mrb[0].mxu0
        %v4176 = vadd.f32 0.0, %v4175
        %v4177 = vpop.f32.mrb[0].mxu0
        %4178 = vmatprep.mubr.bf16.mxu0 %v3885
        %4179 = vmatmul.mubr.bf16.gmra.mrb[0].mxu0 %v3884
        %v4180 = vpop.f32.mrb[0].mxu0
        %v4181 = vadd.f32 0.0, %v4180
        %v4182 = vpop.f32.mrb[0].mxu0
        %v4183 = vpop.f32.mrb[0].mxu0
        %v4184 = vadd.f32 0.0, %v4183
        %v4185 = vpop.f32.mrb[0].mxu0
        %4186 = vmatprep.mubr.bf16.mxu0 %v3887
        %4187 = vmatmul.mubr.bf16.gmra.mrb[0].mxu0 %v3886
        %v4188 = vpop.f32.mrb[0].mxu0
        %v4189 = vadd.f32 0.0, %v4188
        %v4190 = vpop.f32.mrb[0].mxu0
        %v4191 = vpop.f32.mrb[0].mxu0
        %v4192 = vadd.f32 0.0, %v4191
        %v4193 = vpop.f32.mrb[0].mxu0
        %4194 = vdwg.mxu0
        %4195 = vmatprep.subr.bf16.mxu0 0
        %4196 = vmatpush1.bf16.msra.mxu0 %v1995
        %4197 = vmatprep.subr.bf16.mxu0 0
        %4198 = vmatpush1.bf16.msra.mxu0 %v1996
        %4199 = vmatprep.subr.bf16.mxu0 0
        %4200 = vmatpush1.bf16.msra.mxu0 %v1997
        %4201 = vmatprep.subr.bf16.mxu0 0
        %4202 = vmatpush1.bf16.msra.mxu0 %v1998
        %4203 = vmatprep.subr.bf16.mxu0 0
        %4204 = vmatpush1.bf16.msra.mxu0 %v1999
        %4205 = vmatprep.subr.bf16.mxu0 0
        %4206 = vmatpush1.bf16.msra.mxu0 %v2000
        %4207 = vmatprep.subr.bf16.mxu0 0
        %4208 = vmatpush1.bf16.msra.mxu0 %v2001
        %4209 = vmatprep.subr.bf16.mxu0 0
        %4210 = vmatpush1.bf16.msra.mxu0 %v2002
        %4211 = vmatprep.subr.bf16.mxu0 0
        %4212 = vmatpush1.bf16.msra.mxu0 %v2003
        %4213 = vmatprep.subr.bf16.mxu0 0
        %4214 = vmatpush1.bf16.msra.mxu0 %v2004
        %4215 = vmatprep.subr.bf16.mxu0 0
        %4216 = vmatpush1.bf16.msra.mxu0 %v2005
        %4217 = vmatprep.subr.bf16.mxu0 0
        %4218 = vmatpush1.bf16.msra.mxu0 %v2006
        %4219 = vmatprep.subr.bf16.mxu0 0
        %4220 = vmatpush1.bf16.msra.mxu0 %v2007
        %4221 = vmatprep.subr.bf16.mxu0 0
        %4222 = vmatpush1.bf16.msra.mxu0 %v2008
        %4223 = vmatprep.subr.bf16.mxu0 0
        %4224 = vmatpush1.bf16.msra.mxu0 %v2009
        %4225 = vmatprep.subr.bf16.mxu0 0
        %4226 = vmatpush1.bf16.msra.mxu0 %v2010
        %4227 = vmatprep.mubr.bf16.mxu0 %v3889
        %4228 = vmatmul.mubr.bf16.gmra.mrb[0].mxu0 %v3888
        %v4229 = vpop.f32.mrb[0].mxu0
        %v4230 = vadd.f32 0.0, %v4229
        %v4231 = vpop.f32.mrb[0].mxu0
        %v4232 = vpop.f32.mrb[0].mxu0
        %v4233 = vadd.f32 0.0, %v4232
        %v4234 = vpop.f32.mrb[0].mxu0
        %4235 = vmatprep.mubr.bf16.mxu0 %v3891
        %4236 = vmatmul.mubr.bf16.gmra.mrb[0].mxu0 %v3890
        %v4237 = vpop.f32.mrb[0].mxu0
        %v4238 = vadd.f32 0.0, %v4237
        %v4239 = vpop.f32.mrb[0].mxu0
        %v4240 = vpop.f32.mrb[0].mxu0
        %v4241 = vadd.f32 0.0, %v4240
        %v4242 = vpop.f32.mrb[0].mxu0
        %4243 = vmatprep.mubr.bf16.mxu0 %v3893
        %4244 = vmatmul.mubr.bf16.gmra.mrb[0].mxu0 %v3892
        %v4245 = vpop.f32.mrb[0].mxu0
        %v4246 = vadd.f32 0.0, %v4245
        %v4247 = vpop.f32.mrb[0].mxu0
        %v4248 = vpop.f32.mrb[0].mxu0
        %v4249 = vadd.f32 0.0, %v4248
        %v4250 = vpop.f32.mrb[0].mxu0
        %4251 = vmatprep.mubr.bf16.mxu0 %v3895
        %4252 = vmatmul.mubr.bf16.gmra.mrb[0].mxu0 %v3894
        %v4253 = vpop.f32.mrb[0].mxu0
        %v4254 = vadd.f32 0.0, %v4253
        %v4255 = vpop.f32.mrb[0].mxu0
        %v4256 = vpop.f32.mrb[0].mxu0
        %v4257 = vadd.f32 0.0, %v4256
        %v4258 = vpop.f32.mrb[0].mxu0
        %4259 = vmatprep.mubr.bf16.mxu0 %v3897
        %4260 = vmatmul.mubr.bf16.gmra.mrb[0].mxu0 %v3896
        %v4261 = vpop.f32.mrb[0].mxu0
        %v4262 = vadd.f32 0.0, %v4261
        %v4263 = vpop.f32.mrb[0].mxu0
        %v4264 = vpop.f32.mrb[0].mxu0
        %v4265 = vadd.f32 0.0, %v4264
        %v4266 = vpop.f32.mrb[0].mxu0
        %4267 = vmatprep.mubr.bf16.mxu0 %v3899
        %4268 = vmatmul.mubr.bf16.gmra.mrb[0].mxu0 %v3898
        %v4269 = vpop.f32.mrb[0].mxu0
        %v4270 = vadd.f32 0.0, %v4269
        %v4271 = vpop.f32.mrb[0].mxu0
        %v4272 = vpop.f32.mrb[0].mxu0
        %v4273 = vadd.f32 0.0, %v4272
        %v4274 = vpop.f32.mrb[0].mxu0
        %4275 = vmatprep.mubr.bf16.mxu0 %v3901
        %4276 = vmatmul.mubr.bf16.gmra.mrb[0].mxu0 %v3900
        %v4277 = vpop.f32.mrb[0].mxu0
        %v4278 = vadd.f32 0.0, %v4277
        %v4279 = vpop.f32.mrb[0].mxu0
        %v4280 = vpop.f32.mrb[0].mxu0
        %v4281 = vadd.f32 0.0, %v4280
        %v4282 = vpop.f32.mrb[0].mxu0
        %4283 = vmatprep.mubr.bf16.mxu0 %v3903
        %4284 = vmatmul.mubr.bf16.gmra.mrb[0].mxu0 %v3902
        %v4285 = vpop.f32.mrb[0].mxu0
        %v4286 = vadd.f32 0.0, %v4285
        %v4287 = vpop.f32.mrb[0].mxu0
        %v4288 = vpop.f32.mrb[0].mxu0
        %v4289 = vadd.f32 0.0, %v4288
        %v4290 = vpop.f32.mrb[0].mxu0
        %4291 = vdwg.mxu0
        %v4292 = vpack.c.bf16 %v3942, %v3939
        %v4293 = vpack.c.bf16 %v3950, %v3947
        %v4294 = vpack.c.bf16 %v3958, %v3955
        %v4295 = vpack.c.bf16 %v3966, %v3963
        %v4296 = vpack.c.bf16 %v3974, %v3971
        %v4297 = vpack.c.bf16 %v3982, %v3979
        %v4298 = vpack.c.bf16 %v3990, %v3987
        %v4299 = vpack.c.bf16 %v3998, %v3995
        %v4300 = vld [vmem:[#allocation10] sm:$0xf]
        %v4301 = vld [vmem:[#allocation10 + $0x4] sm:$0xf]
        %v4302 = vld [vmem:[#allocation10 + $0x8] sm:$0xf]
        %v4303 = vld [vmem:[#allocation10 + $0xc] sm:$0xf]
        %v4304 = vpack.c.bf16 %v4039, %v4036
        %v4305 = vpack.c.bf16 %v4047, %v4044
        %v4306 = vpack.c.bf16 %v4055, %v4052
        %v4307 = vpack.c.bf16 %v4063, %v4060
        %v4308 = vpack.c.bf16 %v4071, %v4068
        %v4309 = vpack.c.bf16 %v4079, %v4076
        %v4310 = vpack.c.bf16 %v4087, %v4084
        %v4311 = vpack.c.bf16 %v4095, %v4092
        %v4312 = vld [vmem:[#allocation10 + $0x10] sm:$0xf]
        %v4313 = vld [vmem:[#allocation10 + $0x14] sm:$0xf]
        %v4314 = vld [vmem:[#allocation10 + $0x18] sm:$0xf]
        %v4315 = vld [vmem:[#allocation10 + $0x1c] sm:$0xf]
        %v4320 = vunpack.c.l.b16 %v4312
        %v4321 = vunpack.c.l.b16 %v4313
        %v4322 = vunpack.c.l.b16 %v4314
        %v4323 = vunpack.c.l.b16 %v4315
        %v4324 = vpack.c.b16 %v4321, %v4320
        %v4325 = vpack.c.b16 %v4323, %v4322
        %v4329 = vsel %vm2011, %v4304, 0
        %v4332 = vsel %vm2011, %v4305, 0
        %v4335 = vsel %vm2011, %v4306, 0
        %v4338 = vsel %vm2011, %v4307, 0
        %v4341 = vsel %vm2011, %v4308, 0
        %v4344 = vsel %vm2011, %v4309, 0
        %v4347 = vsel %vm2011, %v4310, 0
        %v4350 = vsel %vm2011, %v4311, 0
        %4352 = vmatprep.subr.bf16.mxu0 0
        %4353 = vmatpush1.bf16.msra.mxu0 %v4324
        %4354 = vmatprep.subr.bf16.mxu0 0
        %4355 = vmatpush1.bf16.msra.mxu0 %v4325
        %4356 = vmatprep.subr.bf16.mxu0 0
        %4357 = vmatpush1.bf16.msra.mxu0 0
        %4358 = vmatprep.subr.bf16.mxu0 0
        %4359 = vmatpush1.bf16.msra.mxu0 0
        %4360 = vmatprep.subr.bf16.mxu0 0
        %4361 = vmatpush1.bf16.msra.mxu0 0
        %4362 = vmatprep.subr.bf16.mxu0 0
        %4363 = vmatpush1.bf16.msra.mxu0 0
        %4364 = vmatprep.subr.bf16.mxu0 0
        %4365 = vmatpush1.bf16.msra.mxu0 0
        %4366 = vmatprep.subr.bf16.mxu0 0
        %4367 = vmatpush1.bf16.msra.mxu0 0
        %4368 = vmatprep.subr.bf16.mxu0 0
        %4369 = vmatpush1.bf16.msra.mxu0 0
        %4370 = vmatprep.subr.bf16.mxu0 0
        %4371 = vmatpush1.bf16.msra.mxu0 0
        %4372 = vmatprep.subr.bf16.mxu0 0
        %4373 = vmatpush1.bf16.msra.mxu0 0
        %4374 = vmatprep.subr.bf16.mxu0 0
        %4375 = vmatpush1.bf16.msra.mxu0 0
        %4376 = vmatprep.subr.bf16.mxu0 0
        %4377 = vmatpush1.bf16.msra.mxu0 0
        %4378 = vmatprep.subr.bf16.mxu0 0
        %4379 = vmatpush1.bf16.msra.mxu0 0
        %4380 = vmatprep.subr.bf16.mxu0 0
        %4381 = vmatpush1.bf16.msra.mxu0 0
        %4382 = vmatprep.subr.bf16.mxu0 0
        %4383 = vmatpush1.bf16.msra.mxu0 0
        %4384 = vmatprep.mubr.bf16.mxu0 0
        %4385 = vmatmul.mubr.bf16.gmra.mrb[0].mxu0 %v4329
        %v4386 = vpop.f32.mrb[0].mxu0
        %v4387 = vadd.f32 0.0, %v4386
        %v4388 = vpop.f32.mrb[0].mxu0
        %v4389 = vpop.f32.mrb[0].mxu0
        %v4390 = vadd.f32 0.0, %v4389
        %v4391 = vpop.f32.mrb[0].mxu0
        %4392 = vmatprep.mubr.bf16.mxu0 0
        %4393 = vmatmul.mubr.bf16.gmra.mrb[0].mxu0 %v4332
        %v4394 = vpop.f32.mrb[0].mxu0
        %v4395 = vadd.f32 0.0, %v4394
        %v4396 = vpop.f32.mrb[0].mxu0
        %v4397 = vpop.f32.mrb[0].mxu0
        %v4398 = vadd.f32 0.0, %v4397
        %v4399 = vpop.f32.mrb[0].mxu0
        %4400 = vmatprep.mubr.bf16.mxu0 0
        %4401 = vmatmul.mubr.bf16.gmra.mrb[0].mxu0 %v4335
        %v4402 = vpop.f32.mrb[0].mxu0
        %v4403 = vadd.f32 0.0, %v4402
        %v4404 = vpop.f32.mrb[0].mxu0
        %v4405 = vpop.f32.mrb[0].mxu0
        %v4406 = vadd.f32 0.0, %v4405
        %v4407 = vpop.f32.mrb[0].mxu0
        %4408 = vmatprep.mubr.bf16.mxu0 0
        %4409 = vmatmul.mubr.bf16.gmra.mrb[0].mxu0 %v4338
        %v4410 = vpop.f32.mrb[0].mxu0
        %v4411 = vadd.f32 0.0, %v4410
        %v4412 = vpop.f32.mrb[0].mxu0
        %v4413 = vpop.f32.mrb[0].mxu0
        %v4414 = vadd.f32 0.0, %v4413
        %v4415 = vpop.f32.mrb[0].mxu0
        %4416 = vmatprep.mubr.bf16.mxu0 0
        %4417 = vmatmul.mubr.bf16.gmra.mrb[0].mxu0 %v4341
        %v4418 = vpop.f32.mrb[0].mxu0
        %v4419 = vadd.f32 0.0, %v4418
        %v4420 = vpop.f32.mrb[0].mxu0
        %v4421 = vpop.f32.mrb[0].mxu0
        %v4422 = vadd.f32 0.0, %v4421
        %v4423 = vpop.f32.mrb[0].mxu0
        %4424 = vmatprep.mubr.bf16.mxu0 0
        %4425 = vmatmul.mubr.bf16.gmra.mrb[0].mxu0 %v4344
        %v4426 = vpop.f32.mrb[0].mxu0
        %v4427 = vadd.f32 0.0, %v4426
        %v4428 = vpop.f32.mrb[0].mxu0
        %v4429 = vpop.f32.mrb[0].mxu0
        %v4430 = vadd.f32 0.0, %v4429
        %v4431 = vpop.f32.mrb[0].mxu0
        %4432 = vmatprep.mubr.bf16.mxu0 0
        %4433 = vmatmul.mubr.bf16.gmra.mrb[0].mxu0 %v4347
        %v4434 = vpop.f32.mrb[0].mxu0
        %v4435 = vadd.f32 0.0, %v4434
        %v4436 = vpop.f32.mrb[0].mxu0
        %v4437 = vpop.f32.mrb[0].mxu0
        %v4438 = vadd.f32 0.0, %v4437
        %v4439 = vpop.f32.mrb[0].mxu0
        %4440 = vmatprep.mubr.bf16.mxu0 0
        %4441 = vmatmul.mubr.bf16.gmra.mrb[0].mxu0 %v4350
        %v4442 = vpop.f32.mrb[0].mxu0
        %v4443 = vadd.f32 0.0, %v4442
        %v4444 = vpop.f32.mrb[0].mxu0
        %v4445 = vpop.f32.mrb[0].mxu0
        %v4446 = vadd.f32 0.0, %v4445
        %v4447 = vpop.f32.mrb[0].mxu0
        %4448 = vdwg.mxu0
        %v4453 = vunpack.c.l.b16 %v4300
        %v4454 = vunpack.c.l.b16 %v4301
        %v4455 = vunpack.c.l.b16 %v4302
        %v4456 = vunpack.c.l.b16 %v4303
        %v4457 = vpack.c.b16 %v4454, %v4453
        %v4458 = vpack.c.b16 %v4456, %v4455
        %v4462 = vsel %vm2011, %v4292, 0
        %v4465 = vsel %vm2011, %v4293, 0
        %v4468 = vsel %vm2011, %v4294, 0
        %v4471 = vsel %vm2011, %v4295, 0
        %v4474 = vsel %vm2011, %v4296, 0
        %v4477 = vsel %vm2011, %v4297, 0
        %v4480 = vsel %vm2011, %v4298, 0
        %v4483 = vsel %vm2011, %v4299, 0
        %4485 = vmatprep.subr.bf16.mxu0 0
        %4486 = vmatpush1.bf16.msra.mxu0 %v4457
        %4487 = vmatprep.subr.bf16.mxu0 0
        %4488 = vmatpush1.bf16.msra.mxu0 %v4458
        %4489 = vmatprep.subr.bf16.mxu0 0
        %4490 = vmatpush1.bf16.msra.mxu0 0
        %4491 = vmatprep.subr.bf16.mxu0 0
        %4492 = vmatpush1.bf16.msra.mxu0 0
        %4493 = vmatprep.subr.bf16.mxu0 0
        %4494 = vmatpush1.bf16.msra.mxu0 0
        %4495 = vmatprep.subr.bf16.mxu0 0
        %4496 = vmatpush1.bf16.msra.mxu0 0
        %4497 = vmatprep.subr.bf16.mxu0 0
        %4498 = vmatpush1.bf16.msra.mxu0 0
        %4499 = vmatprep.subr.bf16.mxu0 0
        %4500 = vmatpush1.bf16.msra.mxu0 0
        %4501 = vmatprep.subr.bf16.mxu0 0
        %4502 = vmatpush1.bf16.msra.mxu0 0
        %4503 = vmatprep.subr.bf16.mxu0 0
        %4504 = vmatpush1.bf16.msra.mxu0 0
        %4505 = vmatprep.subr.bf16.mxu0 0
        %4506 = vmatpush1.bf16.msra.mxu0 0
        %4507 = vmatprep.subr.bf16.mxu0 0
        %4508 = vmatpush1.bf16.msra.mxu0 0
        %4509 = vmatprep.subr.bf16.mxu0 0
        %4510 = vmatpush1.bf16.msra.mxu0 0
        %4511 = vmatprep.subr.bf16.mxu0 0
        %4512 = vmatpush1.bf16.msra.mxu0 0
        %4513 = vmatprep.subr.bf16.mxu0 0
        %4514 = vmatpush1.bf16.msra.mxu0 0
        %4515 = vmatprep.subr.bf16.mxu0 0
        %4516 = vmatpush1.bf16.msra.mxu0 0
        %4517 = vmatprep.mubr.bf16.mxu0 0
        %4518 = vmatmul.mubr.bf16.gmra.mrb[0].mxu0 %v4462
        %v4519 = vpop.f32.mrb[0].mxu0
        %v4520 = vadd.f32 %v4387, %v4519
        %v4521 = vpop.f32.mrb[0].mxu0
        %v4522 = vpop.f32.mrb[0].mxu0
        %v4523 = vadd.f32 %v4390, %v4522
        %v4524 = vpop.f32.mrb[0].mxu0
        %4525 = vmatprep.mubr.bf16.mxu0 0
        %4526 = vmatmul.mubr.bf16.gmra.mrb[0].mxu0 %v4465
        %v4527 = vpop.f32.mrb[0].mxu0
        %v4528 = vadd.f32 %v4395, %v4527
        %v4529 = vpop.f32.mrb[0].mxu0
        %v4530 = vpop.f32.mrb[0].mxu0
        %v4531 = vadd.f32 %v4398, %v4530
        %v4532 = vpop.f32.mrb[0].mxu0
        %4533 = vmatprep.mubr.bf16.mxu0 0
        %4534 = vmatmul.mubr.bf16.gmra.mrb[0].mxu0 %v4468
        %v4535 = vpop.f32.mrb[0].mxu0
        %v4536 = vadd.f32 %v4403, %v4535
        %v4537 = vpop.f32.mrb[0].mxu0
        %v4538 = vpop.f32.mrb[0].mxu0
        %v4539 = vadd.f32 %v4406, %v4538
        %v4540 = vpop.f32.mrb[0].mxu0
        %4541 = vmatprep.mubr.bf16.mxu0 0
        %4542 = vmatmul.mubr.bf16.gmra.mrb[0].mxu0 %v4471
        %v4543 = vpop.f32.mrb[0].mxu0
        %v4544 = vadd.f32 %v4411, %v4543
        %v4545 = vpop.f32.mrb[0].mxu0
        %v4546 = vpop.f32.mrb[0].mxu0
        %v4547 = vadd.f32 %v4414, %v4546
        %v4548 = vpop.f32.mrb[0].mxu0
        %4549 = vmatprep.mubr.bf16.mxu0 0
        %4550 = vmatmul.mubr.bf16.gmra.mrb[0].mxu0 %v4474
        %v4551 = vpop.f32.mrb[0].mxu0
        %v4552 = vadd.f32 %v4419, %v4551
        %v4553 = vpop.f32.mrb[0].mxu0
        %v4554 = vpop.f32.mrb[0].mxu0
        %v4555 = vadd.f32 %v4422, %v4554
        %v4556 = vpop.f32.mrb[0].mxu0
        %4557 = vmatprep.mubr.bf16.mxu0 0
        %4558 = vmatmul.mubr.bf16.gmra.mrb[0].mxu0 %v4477
        %v4559 = vpop.f32.mrb[0].mxu0
        %v4560 = vadd.f32 %v4427, %v4559
        %v4561 = vpop.f32.mrb[0].mxu0
        %v4562 = vpop.f32.mrb[0].mxu0
        %v4563 = vadd.f32 %v4430, %v4562
        %v4564 = vpop.f32.mrb[0].mxu0
        %4565 = vmatprep.mubr.bf16.mxu0 0
        %4566 = vmatmul.mubr.bf16.gmra.mrb[0].mxu0 %v4480
        %v4567 = vpop.f32.mrb[0].mxu0
        %v4568 = vadd.f32 %v4435, %v4567
        %v4569 = vpop.f32.mrb[0].mxu0
        %v4570 = vpop.f32.mrb[0].mxu0
        %v4571 = vadd.f32 %v4438, %v4570
        %v4572 = vpop.f32.mrb[0].mxu0
        %4573 = vmatprep.mubr.bf16.mxu0 0
        %4574 = vmatmul.mubr.bf16.gmra.mrb[0].mxu0 %v4483
        %v4575 = vpop.f32.mrb[0].mxu0
        %v4576 = vadd.f32 %v4443, %v4575
        %v4577 = vpop.f32.mrb[0].mxu0
        %v4578 = vpop.f32.mrb[0].mxu0
        %v4579 = vadd.f32 %v4446, %v4578
        %v4580 = vpop.f32.mrb[0].mxu0
        %4581 = vdwg.mxu0
        %v4582 = vpack.c.bf16 %v4136, %v4133
        %v4583 = vpack.c.bf16 %v4144, %v4141
        %v4584 = vpack.c.bf16 %v4152, %v4149
        %v4585 = vpack.c.bf16 %v4160, %v4157
        %v4586 = vpack.c.bf16 %v4168, %v4165
        %v4587 = vpack.c.bf16 %v4176, %v4173
        %v4588 = vpack.c.bf16 %v4184, %v4181
        %v4589 = vpack.c.bf16 %v4192, %v4189
        %v4590 = vld [vmem:[#allocation10 + $0x20] sm:$0xf]
        %v4591 = vld [vmem:[#allocation10 + $0x24] sm:$0xf]
        %v4592 = vld [vmem:[#allocation10 + $0x28] sm:$0xf]
        %v4593 = vld [vmem:[#allocation10 + $0x2c] sm:$0xf]
        %v4598 = vunpack.c.l.b16 %v4590
        %v4599 = vunpack.c.l.b16 %v4591
        %v4600 = vunpack.c.l.b16 %v4592
        %v4601 = vunpack.c.l.b16 %v4593
        %v4602 = vpack.c.b16 %v4599, %v4598
        %v4603 = vpack.c.b16 %v4601, %v4600
        %v4607 = vsel %vm2011, %v4582, 0
        %v4610 = vsel %vm2011, %v4583, 0
        %v4613 = vsel %vm2011, %v4584, 0
        %v4616 = vsel %vm2011, %v4585, 0
        %v4619 = vsel %vm2011, %v4586, 0
        %v4622 = vsel %vm2011, %v4587, 0
        %v4625 = vsel %vm2011, %v4588, 0
        %v4628 = vsel %vm2011, %v4589, 0
        %4630 = vmatprep.subr.bf16.mxu0 0
        %4631 = vmatpush1.bf16.msra.mxu0 %v4602
        %4632 = vmatprep.subr.bf16.mxu0 0
        %4633 = vmatpush1.bf16.msra.mxu0 %v4603
        %4634 = vmatprep.subr.bf16.mxu0 0
        %4635 = vmatpush1.bf16.msra.mxu0 0
        %4636 = vmatprep.subr.bf16.mxu0 0
        %4637 = vmatpush1.bf16.msra.mxu0 0
        %4638 = vmatprep.subr.bf16.mxu0 0
        %4639 = vmatpush1.bf16.msra.mxu0 0
        %4640 = vmatprep.subr.bf16.mxu0 0
        %4641 = vmatpush1.bf16.msra.mxu0 0
        %4642 = vmatprep.subr.bf16.mxu0 0
        %4643 = vmatpush1.bf16.msra.mxu0 0
        %4644 = vmatprep.subr.bf16.mxu0 0
        %4645 = vmatpush1.bf16.msra.mxu0 0
        %4646 = vmatprep.subr.bf16.mxu0 0
        %4647 = vmatpush1.bf16.msra.mxu0 0
        %4648 = vmatprep.subr.bf16.mxu0 0
        %4649 = vmatpush1.bf16.msra.mxu0 0
        %4650 = vmatprep.subr.bf16.mxu0 0
        %4651 = vmatpush1.bf16.msra.mxu0 0
        %4652 = vmatprep.subr.bf16.mxu0 0
        %4653 = vmatpush1.bf16.msra.mxu0 0
        %4654 = vmatprep.subr.bf16.mxu0 0
        %4655 = vmatpush1.bf16.msra.mxu0 0
        %4656 = vmatprep.subr.bf16.mxu0 0
        %4657 = vmatpush1.bf16.msra.mxu0 0
        %4658 = vmatprep.subr.bf16.mxu0 0
        %4659 = vmatpush1.bf16.msra.mxu0 0
        %4660 = vmatprep.subr.bf16.mxu0 0
        %4661 = vmatpush1.bf16.msra.mxu0 0
        %4662 = vmatprep.mubr.bf16.mxu0 0
        %4663 = vmatmul.mubr.bf16.gmra.mrb[0].mxu0 %v4607
        %v4664 = vpop.f32.mrb[0].mxu0
        %v4665 = vadd.f32 0.0, %v4664
        %v4666 = vpop.f32.mrb[0].mxu0
        %v4667 = vpop.f32.mrb[0].mxu0
        %v4668 = vadd.f32 0.0, %v4667
        %v4669 = vpop.f32.mrb[0].mxu0
        %4670 = vmatprep.mubr.bf16.mxu0 0
        %4671 = vmatmul.mubr.bf16.gmra.mrb[0].mxu0 %v4610
        %v4672 = vpop.f32.mrb[0].mxu0
        %v4673 = vadd.f32 0.0, %v4672
        %v4674 = vpop.f32.mrb[0].mxu0
        %v4675 = vpop.f32.mrb[0].mxu0
        %v4676 = vadd.f32 0.0, %v4675
        %v4677 = vpop.f32.mrb[0].mxu0
        %4678 = vmatprep.mubr.bf16.mxu0 0
        %4679 = vmatmul.mubr.bf16.gmra.mrb[0].mxu0 %v4613
        %v4680 = vpop.f32.mrb[0].mxu0
        %v4681 = vadd.f32 0.0, %v4680
        %v4682 = vpop.f32.mrb[0].mxu0
        %v4683 = vpop.f32.mrb[0].mxu0
        %v4684 = vadd.f32 0.0, %v4683
        %v4685 = vpop.f32.mrb[0].mxu0
        %4686 = vmatprep.mubr.bf16.mxu0 0
        %4687 = vmatmul.mubr.bf16.gmra.mrb[0].mxu0 %v4616
        %v4688 = vpop.f32.mrb[0].mxu0
        %v4689 = vadd.f32 0.0, %v4688
        %v4690 = vpop.f32.mrb[0].mxu0
        %v4691 = vpop.f32.mrb[0].mxu0
        %v4692 = vadd.f32 0.0, %v4691
        %v4693 = vpop.f32.mrb[0].mxu0
        %4694 = vmatprep.mubr.bf16.mxu0 0
        %4695 = vmatmul.mubr.bf16.gmra.mrb[0].mxu0 %v4619
        %v4696 = vpop.f32.mrb[0].mxu0
        %v4697 = vadd.f32 0.0, %v4696
        %v4698 = vpop.f32.mrb[0].mxu0
        %v4699 = vpop.f32.mrb[0].mxu0
        %v4700 = vadd.f32 0.0, %v4699
        %v4701 = vpop.f32.mrb[0].mxu0
        %4702 = vmatprep.mubr.bf16.mxu0 0
        %4703 = vmatmul.mubr.bf16.gmra.mrb[0].mxu0 %v4622
        %v4704 = vpop.f32.mrb[0].mxu0
        %v4705 = vadd.f32 0.0, %v4704
        %v4706 = vpop.f32.mrb[0].mxu0
        %v4707 = vpop.f32.mrb[0].mxu0
        %v4708 = vadd.f32 0.0, %v4707
        %v4709 = vpop.f32.mrb[0].mxu0
        %4710 = vmatprep.mubr.bf16.mxu0 0
        %4711 = vmatmul.mubr.bf16.gmra.mrb[0].mxu0 %v4625
        %v4712 = vpop.f32.mrb[0].mxu0
        %v4713 = vadd.f32 0.0, %v4712
        %v4714 = vpop.f32.mrb[0].mxu0
        %v4715 = vpop.f32.mrb[0].mxu0
        %v4716 = vadd.f32 0.0, %v4715
        %v4717 = vpop.f32.mrb[0].mxu0
        %4718 = vmatprep.mubr.bf16.mxu0 0
        %4719 = vmatmul.mubr.bf16.gmra.mrb[0].mxu0 %v4628
        %v4720 = vpop.f32.mrb[0].mxu0
        %v4721 = vadd.f32 0.0, %v4720
        %v4722 = vpop.f32.mrb[0].mxu0
        %v4723 = vpop.f32.mrb[0].mxu0
        %v4724 = vadd.f32 0.0, %v4723
        %v4725 = vpop.f32.mrb[0].mxu0
        %4726 = vdwg.mxu0
        %v4727 = vadd.f32 %v4520, %v4665
        %v4728 = vadd.f32 %v4523, %v4668
        %v4729 = vadd.f32 %v4528, %v4673
        %v4730 = vadd.f32 %v4531, %v4676
        %v4731 = vadd.f32 %v4536, %v4681
        %v4732 = vadd.f32 %v4539, %v4684
        %v4733 = vadd.f32 %v4544, %v4689
        %v4734 = vadd.f32 %v4547, %v4692
        %v4735 = vadd.f32 %v4552, %v4697
        %v4736 = vadd.f32 %v4555, %v4700
        %v4737 = vadd.f32 %v4560, %v4705
        %v4738 = vadd.f32 %v4563, %v4708
        %v4739 = vadd.f32 %v4568, %v4713
        %v4740 = vadd.f32 %v4571, %v4716
        %v4741 = vadd.f32 %v4576, %v4721
        %v4742 = vadd.f32 %v4579, %v4724
        %v4743 = vpack.c.bf16 %v4233, %v4230
        %v4744 = vpack.c.bf16 %v4241, %v4238
        %v4745 = vpack.c.bf16 %v4249, %v4246
        %v4746 = vpack.c.bf16 %v4257, %v4254
        %v4747 = vpack.c.bf16 %v4265, %v4262
        %v4748 = vpack.c.bf16 %v4273, %v4270
        %v4749 = vpack.c.bf16 %v4281, %v4278
        %v4750 = vpack.c.bf16 %v4289, %v4286
        %v4751 = vld [vmem:[#allocation10 + $0x30] sm:$0xf]
        %v4752 = vld [vmem:[#allocation10 + $0x34] sm:$0xf]
        %v4753 = vld [vmem:[#allocation10 + $0x38] sm:$0xf]
        %v4754 = vld [vmem:[#allocation10 + $0x3c] sm:$0xf]
        %v4759 = vunpack.c.l.b16 %v4751
        %v4760 = vunpack.c.l.b16 %v4752
        %v4761 = vunpack.c.l.b16 %v4753
        %v4762 = vunpack.c.l.b16 %v4754
        %v4763 = vpack.c.b16 %v4760, %v4759
        %v4764 = vpack.c.b16 %v4762, %v4761
        %v4768 = vsel %vm2011, %v4743, 0
        %v4771 = vsel %vm2011, %v4744, 0
        %v4774 = vsel %vm2011, %v4745, 0
        %v4777 = vsel %vm2011, %v4746, 0
        %v4780 = vsel %vm2011, %v4747, 0
        %v4783 = vsel %vm2011, %v4748, 0
        %v4786 = vsel %vm2011, %v4749, 0
        %v4789 = vsel %vm2011, %v4750, 0
        %4791 = vmatprep.subr.bf16.mxu0 0
        %4792 = vmatpush1.bf16.msra.mxu0 %v4763
        %4793 = vmatprep.subr.bf16.mxu0 0
        %4794 = vmatpush1.bf16.msra.mxu0 %v4764
        %4795 = vmatprep.subr.bf16.mxu0 0
        %4796 = vmatpush1.bf16.msra.mxu0 0
        %4797 = vmatprep.subr.bf16.mxu0 0
        %4798 = vmatpush1.bf16.msra.mxu0 0
        %4799 = vmatprep.subr.bf16.mxu0 0
        %4800 = vmatpush1.bf16.msra.mxu0 0
        %4801 = vmatprep.subr.bf16.mxu0 0
        %4802 = vmatpush1.bf16.msra.mxu0 0
        %4803 = vmatprep.subr.bf16.mxu0 0
        %4804 = vmatpush1.bf16.msra.mxu0 0
        %4805 = vmatprep.subr.bf16.mxu0 0
        %4806 = vmatpush1.bf16.msra.mxu0 0
        %4807 = vmatprep.subr.bf16.mxu0 0
        %4808 = vmatpush1.bf16.msra.mxu0 0
        %4809 = vmatprep.subr.bf16.mxu0 0
        %4810 = vmatpush1.bf16.msra.mxu0 0
        %4811 = vmatprep.subr.bf16.mxu0 0
        %4812 = vmatpush1.bf16.msra.mxu0 0
        %4813 = vmatprep.subr.bf16.mxu0 0
        %4814 = vmatpush1.bf16.msra.mxu0 0
        %4815 = vmatprep.subr.bf16.mxu0 0
        %4816 = vmatpush1.bf16.msra.mxu0 0
        %4817 = vmatprep.subr.bf16.mxu0 0
        %4818 = vmatpush1.bf16.msra.mxu0 0
        %4819 = vmatprep.subr.bf16.mxu0 0
        %4820 = vmatpush1.bf16.msra.mxu0 0
        %4821 = vmatprep.subr.bf16.mxu0 0
        %4822 = vmatpush1.bf16.msra.mxu0 0
        %4823 = vmatprep.mubr.bf16.mxu0 0
        %4824 = vmatmul.mubr.bf16.gmra.mrb[0].mxu0 %v4768
        %v4825 = vpop.f32.mrb[0].mxu0
        %v4826 = vadd.f32 0.0, %v4825
        %v4827 = vpop.f32.mrb[0].mxu0
        %v4828 = vpop.f32.mrb[0].mxu0
        %v4829 = vadd.f32 0.0, %v4828
        %v4830 = vpop.f32.mrb[0].mxu0
        %4831 = vmatprep.mubr.bf16.mxu0 0
        %4832 = vmatmul.mubr.bf16.gmra.mrb[0].mxu0 %v4771
        %v4833 = vpop.f32.mrb[0].mxu0
        %v4834 = vadd.f32 0.0, %v4833
        %v4835 = vpop.f32.mrb[0].mxu0
        %v4836 = vpop.f32.mrb[0].mxu0
        %v4837 = vadd.f32 0.0, %v4836
        %v4838 = vpop.f32.mrb[0].mxu0
        %4839 = vmatprep.mubr.bf16.mxu0 0
        %4840 = vmatmul.mubr.bf16.gmra.mrb[0].mxu0 %v4774
        %v4841 = vpop.f32.mrb[0].mxu0
        %v4842 = vadd.f32 0.0, %v4841
        %v4843 = vpop.f32.mrb[0].mxu0
        %v4844 = vpop.f32.mrb[0].mxu0
        %v4845 = vadd.f32 0.0, %v4844
        %v4846 = vpop.f32.mrb[0].mxu0
        %4847 = vmatprep.mubr.bf16.mxu0 0
        %4848 = vmatmul.mubr.bf16.gmra.mrb[0].mxu0 %v4777
        %v4849 = vpop.f32.mrb[0].mxu0
        %v4850 = vadd.f32 0.0, %v4849
        %v4851 = vpop.f32.mrb[0].mxu0
        %v4852 = vpop.f32.mrb[0].mxu0
        %v4853 = vadd.f32 0.0, %v4852
        %v4854 = vpop.f32.mrb[0].mxu0
        %4855 = vmatprep.mubr.bf16.mxu0 0
        %4856 = vmatmul.mubr.bf16.gmra.mrb[0].mxu0 %v4780
        %v4857 = vpop.f32.mrb[0].mxu0
        %v4858 = vadd.f32 0.0, %v4857
        %v4859 = vpop.f32.mrb[0].mxu0
        %v4860 = vpop.f32.mrb[0].mxu0
        %v4861 = vadd.f32 0.0, %v4860
        %v4862 = vpop.f32.mrb[0].mxu0
        %4863 = vmatprep.mubr.bf16.mxu0 0
        %4864 = vmatmul.mubr.bf16.gmra.mrb[0].mxu0 %v4783
        %v4865 = vpop.f32.mrb[0].mxu0
        %v4866 = vadd.f32 0.0, %v4865
        %v4867 = vpop.f32.mrb[0].mxu0
        %v4868 = vpop.f32.mrb[0].mxu0
        %v4869 = vadd.f32 0.0, %v4868
        %v4870 = vpop.f32.mrb[0].mxu0
        %4871 = vmatprep.mubr.bf16.mxu0 0
        %4872 = vmatmul.mubr.bf16.gmra.mrb[0].mxu0 %v4786
        %v4873 = vpop.f32.mrb[0].mxu0
        %v4874 = vadd.f32 0.0, %v4873
        %v4875 = vpop.f32.mrb[0].mxu0
        %v4876 = vpop.f32.mrb[0].mxu0
        %v4877 = vadd.f32 0.0, %v4876
        %v4878 = vpop.f32.mrb[0].mxu0
        %4879 = vmatprep.mubr.bf16.mxu0 0
        %4880 = vmatmul.mubr.bf16.gmra.mrb[0].mxu0 %v4789
        %v4881 = vpop.f32.mrb[0].mxu0
        %v4882 = vadd.f32 0.0, %v4881
        %v4883 = vpop.f32.mrb[0].mxu0
        %v4884 = vpop.f32.mrb[0].mxu0
        %v4885 = vadd.f32 0.0, %v4884
        %v4886 = vpop.f32.mrb[0].mxu0
        %4887 = vdwg.mxu0
        %v4888 = vadd.f32 %v4727, %v4826
        %v4889 = vadd.f32 %v4728, %v4829
        %v4890 = vadd.f32 %v4729, %v4834
        %v4891 = vadd.f32 %v4730, %v4837
        %v4892 = vadd.f32 %v4731, %v4842
        %v4893 = vadd.f32 %v4732, %v4845
        %v4894 = vadd.f32 %v4733, %v4850
        %v4895 = vadd.f32 %v4734, %v4853
        %v4896 = vadd.f32 %v4735, %v4858
        %v4897 = vadd.f32 %v4736, %v4861
        %v4898 = vadd.f32 %v4737, %v4866
        %v4899 = vadd.f32 %v4738, %v4869
        %v4900 = vadd.f32 %v4739, %v4874
        %v4901 = vadd.f32 %v4740, %v4877
        %v4902 = vadd.f32 %v4741, %v4882
        %v4903 = vadd.f32 %v4742, %v4885
        %v4904 = vld [vmem:[%s4] sm:$0x1]
        %v4906 = vlaneseq
        %v4907 = vshrl.u32 %v4906, 7
        %v4908 = vsub.s32 0, %v4907
        %v4909 = vrot.slane %v4904, %v4908
        %v4911 = vadd.f32 %v4888, %v4909
        %v4912 = vadd.f32 %v4889, %v4909
        %v4913 = vadd.f32 %v4890, %v4909
        %v4914 = vadd.f32 %v4891, %v4909
        %v4915 = vadd.f32 %v4892, %v4909
        %v4916 = vadd.f32 %v4893, %v4909
        %v4917 = vadd.f32 %v4894, %v4909
        %v4918 = vadd.f32 %v4895, %v4909
        %v4919 = vadd.f32 %v4896, %v4909
        %v4920 = vadd.f32 %v4897, %v4909
        %v4921 = vadd.f32 %v4898, %v4909
        %v4922 = vadd.f32 %v4899, %v4909
        %v4923 = vadd.f32 %v4900, %v4909
        %v4924 = vadd.f32 %v4901, %v4909
        %v4925 = vadd.f32 %v4902, %v4909
        %v4926 = vadd.f32 %v4903, %v4909
        %s4927 = scalar_lea.vmem %s472, %s1846 [#allocation5]
        %v4928 = vld [vmem:[%s4927] sm:$0xff]
        %v4929 = vld [vmem:[%s4927 + $0x8] sm:$0xff]
        %v4930 = vld [vmem:[%s4927 + $0x10] sm:$0xff]
        %v4931 = vld [vmem:[%s4927 + $0x18] sm:$0xff]
        %v4932 = vld [vmem:[%s4927 + $0x20] sm:$0xff]
        %v4933 = vld [vmem:[%s4927 + $0x28] sm:$0xff]
        %v4934 = vld [vmem:[%s4927 + $0x30] sm:$0xff]
        %v4935 = vld [vmem:[%s4927 + $0x38] sm:$0xff]
        %v4936 = vld [vmem:[%s4927 + $0x40] sm:$0xff]
        %v4937 = vld [vmem:[%s4927 + $0x48] sm:$0xff]
        %v4938 = vld [vmem:[%s4927 + $0x50] sm:$0xff]
        %v4939 = vld [vmem:[%s4927 + $0x58] sm:$0xff]
        %v4940 = vld [vmem:[%s4927 + $0x60] sm:$0xff]
        %v4941 = vld [vmem:[%s4927 + $0x68] sm:$0xff]
        %v4942 = vld [vmem:[%s4927 + $0x70] sm:$0xff]
        %v4943 = vld [vmem:[%s4927 + $0x78] sm:$0xff]
        %v4944 = vadd.f32 %v4928, %v4911
        %v4945 = vadd.f32 %v4929, %v4912
        %v4946 = vadd.f32 %v4930, %v4913
        %v4947 = vadd.f32 %v4931, %v4914
        %v4948 = vadd.f32 %v4932, %v4915
        %v4949 = vadd.f32 %v4933, %v4916
        %v4950 = vadd.f32 %v4934, %v4917
        %v4951 = vadd.f32 %v4935, %v4918
        %v4952 = vadd.f32 %v4936, %v4919
        %v4953 = vadd.f32 %v4937, %v4920
        %v4954 = vadd.f32 %v4938, %v4921
        %v4955 = vadd.f32 %v4939, %v4922
        %v4956 = vadd.f32 %v4940, %v4923
        %v4957 = vadd.f32 %v4941, %v4924
        %v4958 = vadd.f32 %v4942, %v4925
        %v4959 = vadd.f32 %v4943, %v4926
        %v4960 = vld [vmem:[%s5] sm:$0x1]
        %v4961 = vld [vmem:[%s6] sm:$0x1]
        %4962 = vadd.xlane.f32.xlu0 %v4944
        %v4963 = vpop.xlane.xlu0 %4962
        %4964 = vadd.xlane.f32.xlu0 %v4945
        %v4965 = vpop.xlane.xlu0 %4964
        %4966 = vadd.xlane.f32.xlu0 %v4946
        %v4967 = vpop.xlane.xlu0 %4966
        %4968 = vadd.xlane.f32.xlu0 %v4947
        %v4969 = vpop.xlane.xlu0 %4968
        %4970 = vadd.xlane.f32.xlu0 %v4948
        %v4971 = vpop.xlane.xlu0 %4970
        %4972 = vadd.xlane.f32.xlu0 %v4949
        %v4973 = vpop.xlane.xlu0 %4972
        %4974 = vadd.xlane.f32.xlu0 %v4950
        %v4975 = vpop.xlane.xlu0 %4974
        %4976 = vadd.xlane.f32.xlu0 %v4951
        %v4977 = vpop.xlane.xlu0 %4976
        %4978 = vadd.xlane.f32.xlu0 %v4952
        %v4979 = vpop.xlane.xlu0 %4978
        %4980 = vadd.xlane.f32.xlu0 %v4953
        %v4981 = vpop.xlane.xlu0 %4980
        %4982 = vadd.xlane.f32.xlu0 %v4954
        %v4983 = vpop.xlane.xlu0 %4982
        %4984 = vadd.xlane.f32.xlu0 %v4955
        %v4985 = vpop.xlane.xlu0 %4984
        %4986 = vadd.xlane.f32.xlu0 %v4956
        %v4987 = vpop.xlane.xlu0 %4986
        %4988 = vadd.xlane.f32.xlu0 %v4957
        %v4989 = vpop.xlane.xlu0 %4988
        %4990 = vadd.xlane.f32.xlu0 %v4958
        %v4991 = vpop.xlane.xlu0 %4990
        %4992 = vadd.xlane.f32.xlu0 %v4959
        %v4993 = vpop.xlane.xlu0 %4992
        %v4994 = vrcp.pop 128.0
        %v4995 = vmul.f32 %v4963, %v4994
        %v4996 = vmul.f32 %v4965, %v4994
        %v4997 = vmul.f32 %v4967, %v4994
        %v4998 = vmul.f32 %v4969, %v4994
        %v4999 = vmul.f32 %v4971, %v4994
        %v5000 = vmul.f32 %v4973, %v4994
        %v5001 = vmul.f32 %v4975, %v4994
        %v5002 = vmul.f32 %v4977, %v4994
        %v5003 = vmul.f32 %v4979, %v4994
        %v5004 = vmul.f32 %v4981, %v4994
        %v5005 = vmul.f32 %v4983, %v4994
        %v5006 = vmul.f32 %v4985, %v4994
        %v5007 = vmul.f32 %v4987, %v4994
        %v5008 = vmul.f32 %v4989, %v4994
        %v5009 = vmul.f32 %v4991, %v4994
        %v5010 = vmul.f32 %v4993, %v4994
        %v5011 = vsub.f32 %v4944, %v4995
        %v5012 = vsub.f32 %v4945, %v4996
        %v5013 = vsub.f32 %v4946, %v4997
        %v5014 = vsub.f32 %v4947, %v4998
        %v5015 = vsub.f32 %v4948, %v4999
        %v5016 = vsub.f32 %v4949, %v5000
        %v5017 = vsub.f32 %v4950, %v5001
        %v5018 = vsub.f32 %v4951, %v5002
        %v5019 = vsub.f32 %v4952, %v5003
        %v5020 = vsub.f32 %v4953, %v5004
        %v5021 = vsub.f32 %v4954, %v5005
        %v5022 = vsub.f32 %v4955, %v5006
        %v5023 = vsub.f32 %v4956, %v5007
        %v5024 = vsub.f32 %v4957, %v5008
        %v5025 = vsub.f32 %v4958, %v5009
        %v5026 = vsub.f32 %v4959, %v5010
        %v5027 = vmul.f32 %v5011, %v5011
        %v5028 = vmul.f32 %v5012, %v5012
        %v5029 = vmul.f32 %v5013, %v5013
        %v5030 = vmul.f32 %v5014, %v5014
        %v5031 = vmul.f32 %v5015, %v5015
        %v5032 = vmul.f32 %v5016, %v5016
        %v5033 = vmul.f32 %v5017, %v5017
        %v5034 = vmul.f32 %v5018, %v5018
        %v5035 = vmul.f32 %v5019, %v5019
        %v5036 = vmul.f32 %v5020, %v5020
        %v5037 = vmul.f32 %v5021, %v5021
        %v5038 = vmul.f32 %v5022, %v5022
        %v5039 = vmul.f32 %v5023, %v5023
        %v5040 = vmul.f32 %v5024, %v5024
        %v5041 = vmul.f32 %v5025, %v5025
        %v5042 = vmul.f32 %v5026, %v5026
        %5043 = vadd.xlane.f32.xlu0 %v5027
        %v5044 = vpop.xlane.xlu0 %5043
        %5045 = vadd.xlane.f32.xlu0 %v5028
        %v5046 = vpop.xlane.xlu0 %5045
        %5047 = vadd.xlane.f32.xlu0 %v5029
        %v5048 = vpop.xlane.xlu0 %5047
        %5049 = vadd.xlane.f32.xlu0 %v5030
        %v5050 = vpop.xlane.xlu0 %5049
        %5051 = vadd.xlane.f32.xlu0 %v5031
        %v5052 = vpop.xlane.xlu0 %5051
        %5053 = vadd.xlane.f32.xlu0 %v5032
        %v5054 = vpop.xlane.xlu0 %5053
        %5055 = vadd.xlane.f32.xlu0 %v5033
        %v5056 = vpop.xlane.xlu0 %5055
        %5057 = vadd.xlane.f32.xlu0 %v5034
        %v5058 = vpop.xlane.xlu0 %5057
        %5059 = vadd.xlane.f32.xlu0 %v5035
        %v5060 = vpop.xlane.xlu0 %5059
        %5061 = vadd.xlane.f32.xlu0 %v5036
        %v5062 = vpop.xlane.xlu0 %5061
        %5063 = vadd.xlane.f32.xlu0 %v5037
        %v5064 = vpop.xlane.xlu0 %5063
        %5065 = vadd.xlane.f32.xlu0 %v5038
        %v5066 = vpop.xlane.xlu0 %5065
        %5067 = vadd.xlane.f32.xlu0 %v5039
        %v5068 = vpop.xlane.xlu0 %5067
        %5069 = vadd.xlane.f32.xlu0 %v5040
        %v5070 = vpop.xlane.xlu0 %5069
        %5071 = vadd.xlane.f32.xlu0 %v5041
        %v5072 = vpop.xlane.xlu0 %5071
        %5073 = vadd.xlane.f32.xlu0 %v5042
        %v5074 = vpop.xlane.xlu0 %5073
        %v5075 = vmul.f32 %v5044, %v4994
        %v5076 = vmul.f32 %v5046, %v4994
        %v5077 = vmul.f32 %v5048, %v4994
        %v5078 = vmul.f32 %v5050, %v4994
        %v5079 = vmul.f32 %v5052, %v4994
        %v5080 = vmul.f32 %v5054, %v4994
        %v5081 = vmul.f32 %v5056, %v4994
        %v5082 = vmul.f32 %v5058, %v4994
        %v5083 = vmul.f32 %v5060, %v4994
        %v5084 = vmul.f32 %v5062, %v4994
        %v5085 = vmul.f32 %v5064, %v4994
        %v5086 = vmul.f32 %v5066, %v4994
        %v5087 = vmul.f32 %v5068, %v4994
        %v5088 = vmul.f32 %v5070, %v4994
        %v5089 = vmul.f32 %v5072, %v4994
        %v5090 = vmul.f32 %v5074, %v4994
        %v5091 = vadd.f32 %v5075, 1e-05
        %v5092 = vadd.f32 %v5076, 1e-05
        %v5093 = vadd.f32 %v5077, 1e-05
        %v5094 = vadd.f32 %v5078, 1e-05
        %v5095 = vadd.f32 %v5079, 1e-05
        %v5096 = vadd.f32 %v5080, 1e-05
        %v5097 = vadd.f32 %v5081, 1e-05
        %v5098 = vadd.f32 %v5082, 1e-05
        %v5099 = vadd.f32 %v5083, 1e-05
        %v5100 = vadd.f32 %v5084, 1e-05
        %v5101 = vadd.f32 %v5085, 1e-05
        %v5102 = vadd.f32 %v5086, 1e-05
        %v5103 = vadd.f32 %v5087, 1e-05
        %v5104 = vadd.f32 %v5088, 1e-05
        %v5105 = vadd.f32 %v5089, 1e-05
        %v5106 = vadd.f32 %v5090, 1e-05
        %v5107 = vrsqrt.pop %v5091
        %v5108 = vrsqrt.pop %v5092
        %v5109 = vrsqrt.pop %v5093
        %v5110 = vrsqrt.pop %v5094
        %v5111 = vrsqrt.pop %v5095
        %v5112 = vrsqrt.pop %v5096
        %v5113 = vrsqrt.pop %v5097
        %v5114 = vrsqrt.pop %v5098
        %v5115 = vrsqrt.pop %v5099
        %v5116 = vrsqrt.pop %v5100
        %v5117 = vrsqrt.pop %v5101
        %v5118 = vrsqrt.pop %v5102
        %v5119 = vrsqrt.pop %v5103
        %v5120 = vrsqrt.pop %v5104
        %v5121 = vrsqrt.pop %v5105
        %v5122 = vrsqrt.pop %v5106
        %v5123 = vmul.f32 %v5011, %v5107
        %v5124 = vmul.f32 %v5012, %v5108
        %v5125 = vmul.f32 %v5013, %v5109
        %v5126 = vmul.f32 %v5014, %v5110
        %v5127 = vmul.f32 %v5015, %v5111
        %v5128 = vmul.f32 %v5016, %v5112
        %v5129 = vmul.f32 %v5017, %v5113
        %v5130 = vmul.f32 %v5018, %v5114
        %v5131 = vmul.f32 %v5019, %v5115
        %v5132 = vmul.f32 %v5020, %v5116
        %v5133 = vmul.f32 %v5021, %v5117
        %v5134 = vmul.f32 %v5022, %v5118
        %v5135 = vmul.f32 %v5023, %v5119
        %v5136 = vmul.f32 %v5024, %v5120
        %v5137 = vmul.f32 %v5025, %v5121
        %v5138 = vmul.f32 %v5026, %v5122
        %v5140 = vlaneseq
        %v5141 = vshrl.u32 %v5140, 7
        %v5142 = vsub.s32 0, %v5141
        %v5143 = vrot.slane %v4960, %v5142
        %v5145 = vmul.f32 %v5123, %v5143
        %v5146 = vmul.f32 %v5124, %v5143
        %v5147 = vmul.f32 %v5125, %v5143
        %v5148 = vmul.f32 %v5126, %v5143
        %v5149 = vmul.f32 %v5127, %v5143
        %v5150 = vmul.f32 %v5128, %v5143
        %v5151 = vmul.f32 %v5129, %v5143
        %v5152 = vmul.f32 %v5130, %v5143
        %v5153 = vmul.f32 %v5131, %v5143
        %v5154 = vmul.f32 %v5132, %v5143
        %v5155 = vmul.f32 %v5133, %v5143
        %v5156 = vmul.f32 %v5134, %v5143
        %v5157 = vmul.f32 %v5135, %v5143
        %v5158 = vmul.f32 %v5136, %v5143
        %v5159 = vmul.f32 %v5137, %v5143
        %v5160 = vmul.f32 %v5138, %v5143
        %v5162 = vlaneseq
        %v5163 = vshrl.u32 %v5162, 7
        %v5164 = vsub.s32 0, %v5163
        %v5165 = vrot.slane %v4961, %v5164
        %v5167 = vadd.f32 %v5145, %v5165
        %v5168 = vadd.f32 %v5146, %v5165
        %v5169 = vadd.f32 %v5147, %v5165
        %v5170 = vadd.f32 %v5148, %v5165
        %v5171 = vadd.f32 %v5149, %v5165
        %v5172 = vadd.f32 %v5150, %v5165
        %v5173 = vadd.f32 %v5151, %v5165
        %v5174 = vadd.f32 %v5152, %v5165
        %v5175 = vadd.f32 %v5153, %v5165
        %v5176 = vadd.f32 %v5154, %v5165
        %v5177 = vadd.f32 %v5155, %v5165
        %v5178 = vadd.f32 %v5156, %v5165
        %v5179 = vadd.f32 %v5157, %v5165
        %v5180 = vadd.f32 %v5158, %v5165
        %v5181 = vadd.f32 %v5159, %v5165
        %v5182 = vadd.f32 %v5160, %v5165
        %v5183 = vpack.c.bf16 %v5168, %v5167
        %v5184 = vpack.c.bf16 %v5170, %v5169
        %v5185 = vpack.c.bf16 %v5172, %v5171
        %v5186 = vpack.c.bf16 %v5174, %v5173
        %v5187 = vpack.c.bf16 %v5176, %v5175
        %v5188 = vpack.c.bf16 %v5178, %v5177
        %v5189 = vpack.c.bf16 %v5180, %v5179
        %v5190 = vpack.c.bf16 %v5182, %v5181
        %v5191 = vld [vmem:[#allocation11] sm:$0xff]
        %v5192 = vld [vmem:[#allocation11 + $0x8] sm:$0xff]
        %v5193 = vld [vmem:[#allocation11 + $0x10] sm:$0xff]
        %v5194 = vld [vmem:[#allocation11 + $0x18] sm:$0xff]
        %v5195 = vld [vmem:[#allocation11 + $0x20] sm:$0xff]
        %v5196 = vld [vmem:[#allocation11 + $0x28] sm:$0xff]
        %v5197 = vld [vmem:[#allocation11 + $0x30] sm:$0xff]
        %v5198 = vld [vmem:[#allocation11 + $0x38] sm:$0xff]
        %v5199 = vld [vmem:[#allocation11 + $0x40] sm:$0xff]
        %v5200 = vld [vmem:[#allocation11 + $0x48] sm:$0xff]
        %v5201 = vld [vmem:[#allocation11 + $0x50] sm:$0xff]
        %v5202 = vld [vmem:[#allocation11 + $0x58] sm:$0xff]
        %v5203 = vld [vmem:[#allocation11 + $0x60] sm:$0xff]
        %v5204 = vld [vmem:[#allocation11 + $0x68] sm:$0xff]
        %v5205 = vld [vmem:[#allocation11 + $0x70] sm:$0xff]
        %v5206 = vld [vmem:[#allocation11 + $0x78] sm:$0xff]
        %v5207 = vld [vmem:[#allocation11 + $0x80] sm:$0xff]
        %v5208 = vld [vmem:[#allocation11 + $0x88] sm:$0xff]
        %v5209 = vld [vmem:[#allocation11 + $0x90] sm:$0xff]
        %v5210 = vld [vmem:[#allocation11 + $0x98] sm:$0xff]
        %v5211 = vld [vmem:[#allocation11 + $0xa0] sm:$0xff]
        %v5212 = vld [vmem:[#allocation11 + $0xa8] sm:$0xff]
        %v5213 = vld [vmem:[#allocation11 + $0xb0] sm:$0xff]
        %v5214 = vld [vmem:[#allocation11 + $0xb8] sm:$0xff]
        %v5215 = vld [vmem:[#allocation11 + $0xc0] sm:$0xff]
        %v5216 = vld [vmem:[#allocation11 + $0xc8] sm:$0xff]
        %v5217 = vld [vmem:[#allocation11 + $0xd0] sm:$0xff]
        %v5218 = vld [vmem:[#allocation11 + $0xd8] sm:$0xff]
        %v5219 = vld [vmem:[#allocation11 + $0xe0] sm:$0xff]
        %v5220 = vld [vmem:[#allocation11 + $0xe8] sm:$0xff]
        %v5221 = vld [vmem:[#allocation11 + $0xf0] sm:$0xff]
        %v5222 = vld [vmem:[#allocation11 + $0xf8] sm:$0xff]
        %v5223 = vld [vmem:[%s8] sm:$0xf]
        %v5225 = vlaneseq
        %v5226 = vshrl.u32 %v5225, 7
        %v5227 = vsub.s32 0, %v5226
        %v5228 = vrot.slane %v5223, %v5227
        %v5229 = vlaneseq
        %v5230 = vshrl.u32 %v5229, 7
        %v5231 = vsub.s32 1, %v5230
        %v5232 = vrot.slane %v5223, %v5231
        %v5233 = vlaneseq
        %v5234 = vshrl.u32 %v5233, 7
        %v5235 = vsub.s32 2, %v5234
        %v5236 = vrot.slane %v5223, %v5235
        %v5237 = vlaneseq
        %v5238 = vshrl.u32 %v5237, 7
        %v5239 = vsub.s32 3, %v5238
        %v5240 = vrot.slane %v5223, %v5239
        %v5277 = vunpack.c.l.b16 %v5191
        %v5278 = vunpack.c.h.b16 %v5191
        %v5279 = vunpack.c.l.b16 %v5192
        %v5280 = vunpack.c.h.b16 %v5192
        %v5281 = vunpack.c.l.b16 %v5193
        %v5282 = vunpack.c.h.b16 %v5193
        %v5283 = vunpack.c.l.b16 %v5194
        %v5284 = vunpack.c.h.b16 %v5194
        %v5285 = vunpack.c.l.b16 %v5195
        %v5286 = vunpack.c.h.b16 %v5195
        %v5287 = vunpack.c.l.b16 %v5196
        %v5288 = vunpack.c.h.b16 %v5196
        %v5289 = vunpack.c.l.b16 %v5197
        %v5290 = vunpack.c.h.b16 %v5197
        %v5291 = vunpack.c.l.b16 %v5198
        %v5292 = vunpack.c.h.b16 %v5198
        %v5293 = vunpack.c.l.b16 %v5199
        %v5294 = vunpack.c.h.b16 %v5199
        %v5295 = vunpack.c.l.b16 %v5200
        %v5296 = vunpack.c.h.b16 %v5200
        %v5297 = vunpack.c.l.b16 %v5201
        %v5298 = vunpack.c.h.b16 %v5201
        %v5299 = vunpack.c.l.b16 %v5202
        %v5300 = vunpack.c.h.b16 %v5202
        %v5301 = vunpack.c.l.b16 %v5203
        %v5302 = vunpack.c.h.b16 %v5203
        %v5303 = vunpack.c.l.b16 %v5204
        %v5304 = vunpack.c.h.b16 %v5204
        %v5305 = vunpack.c.l.b16 %v5205
        %v5306 = vunpack.c.h.b16 %v5205
        %v5307 = vunpack.c.l.b16 %v5206
        %v5308 = vunpack.c.h.b16 %v5206
        %v5309 = vunpack.c.l.b16 %v5207
        %v5310 = vunpack.c.h.b16 %v5207
        %v5311 = vunpack.c.l.b16 %v5208
        %v5312 = vunpack.c.h.b16 %v5208
        %v5313 = vunpack.c.l.b16 %v5209
        %v5314 = vunpack.c.h.b16 %v5209
        %v5315 = vunpack.c.l.b16 %v5210
        %v5316 = vunpack.c.h.b16 %v5210
        %v5317 = vunpack.c.l.b16 %v5211
        %v5318 = vunpack.c.h.b16 %v5211
        %v5319 = vunpack.c.l.b16 %v5212
        %v5320 = vunpack.c.h.b16 %v5212
        %v5321 = vunpack.c.l.b16 %v5213
        %v5322 = vunpack.c.h.b16 %v5213
        %v5323 = vunpack.c.l.b16 %v5214
        %v5324 = vunpack.c.h.b16 %v5214
        %v5325 = vunpack.c.l.b16 %v5215
        %v5326 = vunpack.c.h.b16 %v5215
        %v5327 = vunpack.c.l.b16 %v5216
        %v5328 = vunpack.c.h.b16 %v5216
        %v5329 = vunpack.c.l.b16 %v5217
        %v5330 = vunpack.c.h.b16 %v5217
        %v5331 = vunpack.c.l.b16 %v5218
        %v5332 = vunpack.c.h.b16 %v5218
        %v5333 = vunpack.c.l.b16 %v5219
        %v5334 = vunpack.c.h.b16 %v5219
        %v5335 = vunpack.c.l.b16 %v5220
        %v5336 = vunpack.c.h.b16 %v5220
        %v5337 = vunpack.c.l.b16 %v5221
        %v5338 = vunpack.c.h.b16 %v5221
        %v5339 = vunpack.c.l.b16 %v5222
        %v5340 = vunpack.c.h.b16 %v5222
        %v5341 = vpack.c.b16 %v5281, %v5277
        %v5342 = vpack.c.b16 %v5282, %v5278
        %v5343 = vpack.c.b16 %v5283, %v5279
        %v5344 = vpack.c.b16 %v5284, %v5280
        %v5345 = vpack.c.b16 %v5289, %v5285
        %v5346 = vpack.c.b16 %v5290, %v5286
        %v5347 = vpack.c.b16 %v5291, %v5287
        %v5348 = vpack.c.b16 %v5292, %v5288
        %v5349 = vpack.c.b16 %v5297, %v5293
        %v5350 = vpack.c.b16 %v5298, %v5294
        %v5351 = vpack.c.b16 %v5299, %v5295
        %v5352 = vpack.c.b16 %v5300, %v5296
        %v5353 = vpack.c.b16 %v5305, %v5301
        %v5354 = vpack.c.b16 %v5306, %v5302
        %v5355 = vpack.c.b16 %v5307, %v5303
        %v5356 = vpack.c.b16 %v5308, %v5304
        %v5357 = vpack.c.b16 %v5313, %v5309
        %v5358 = vpack.c.b16 %v5314, %v5310
        %v5359 = vpack.c.b16 %v5315, %v5311
        %v5360 = vpack.c.b16 %v5316, %v5312
        %v5361 = vpack.c.b16 %v5321, %v5317
        %v5362 = vpack.c.b16 %v5322, %v5318
        %v5363 = vpack.c.b16 %v5323, %v5319
        %v5364 = vpack.c.b16 %v5324, %v5320
        %v5365 = vpack.c.b16 %v5329, %v5325
        %v5366 = vpack.c.b16 %v5330, %v5326
        %v5367 = vpack.c.b16 %v5331, %v5327
        %v5368 = vpack.c.b16 %v5332, %v5328
        %v5369 = vpack.c.b16 %v5337, %v5333
        %v5370 = vpack.c.b16 %v5338, %v5334
        %v5371 = vpack.c.b16 %v5339, %v5335
        %v5372 = vpack.c.b16 %v5340, %v5336
        %5405 = vmatprep.subr.bf16.mxu0 %v5342
        %5406 = vmatpush1.bf16.msra.mxu0 %v5341
        %5407 = vmatprep.subr.bf16.mxu0 %v5346
        %5408 = vmatpush1.bf16.msra.mxu0 %v5345
        %5409 = vmatprep.subr.bf16.mxu0 %v5350
        %5410 = vmatpush1.bf16.msra.mxu0 %v5349
        %5411 = vmatprep.subr.bf16.mxu0 %v5354
        %5412 = vmatpush1.bf16.msra.mxu0 %v5353
        %5413 = vmatprep.subr.bf16.mxu0 %v5358
        %5414 = vmatpush1.bf16.msra.mxu0 %v5357
        %5415 = vmatprep.subr.bf16.mxu0 %v5362
        %5416 = vmatpush1.bf16.msra.mxu0 %v5361
        %5417 = vmatprep.subr.bf16.mxu0 %v5366
        %5418 = vmatpush1.bf16.msra.mxu0 %v5365
        %5419 = vmatprep.subr.bf16.mxu0 %v5370
        %5420 = vmatpush1.bf16.msra.mxu0 %v5369
        %5421 = vmatprep.subr.bf16.mxu0 0
        %5422 = vmatpush1.bf16.msra.mxu0 0
        %5423 = vmatprep.subr.bf16.mxu0 0
        %5424 = vmatpush1.bf16.msra.mxu0 0
        %5425 = vmatprep.subr.bf16.mxu0 0
        %5426 = vmatpush1.bf16.msra.mxu0 0
        %5427 = vmatprep.subr.bf16.mxu0 0
        %5428 = vmatpush1.bf16.msra.mxu0 0
        %5429 = vmatprep.subr.bf16.mxu0 0
        %5430 = vmatpush1.bf16.msra.mxu0 0
        %5431 = vmatprep.subr.bf16.mxu0 0
        %5432 = vmatpush1.bf16.msra.mxu0 0
        %5433 = vmatprep.subr.bf16.mxu0 0
        %5434 = vmatpush1.bf16.msra.mxu0 0
        %5435 = vmatprep.subr.bf16.mxu0 0
        %5436 = vmatpush1.bf16.msra.mxu0 0
        %5437 = vmatprep.mubr.bf16.mxu0 0
        %5438 = vmatmul.mubr.bf16.gmra.mrb[0].mxu0 %v5183
        %v5439 = vpop.f32.mrb[0].mxu0
        %v5440 = vadd.f32 %v5228, %v5439
        %v5441 = vpop.f32.mrb[0].mxu0
        %v5442 = vadd.f32 %v5232, %v5441
        %v5443 = vpop.f32.mrb[0].mxu0
        %v5444 = vadd.f32 %v5228, %v5443
        %v5445 = vpop.f32.mrb[0].mxu0
        %v5446 = vadd.f32 %v5232, %v5445
        %5447 = vmatprep.mubr.bf16.mxu0 0
        %5448 = vmatmul.mubr.bf16.gmra.mrb[0].mxu0 %v5184
        %v5449 = vpop.f32.mrb[0].mxu0
        %v5450 = vadd.f32 %v5228, %v5449
        %v5451 = vpop.f32.mrb[0].mxu0
        %v5452 = vadd.f32 %v5232, %v5451
        %v5453 = vpop.f32.mrb[0].mxu0
        %v5454 = vadd.f32 %v5228, %v5453
        %v5455 = vpop.f32.mrb[0].mxu0
        %v5456 = vadd.f32 %v5232, %v5455
        %5457 = vmatprep.mubr.bf16.mxu0 0
        %5458 = vmatmul.mubr.bf16.gmra.mrb[0].mxu0 %v5185
        %v5459 = vpop.f32.mrb[0].mxu0
        %v5460 = vadd.f32 %v5228, %v5459
        %v5461 = vpop.f32.mrb[0].mxu0
        %v5462 = vadd.f32 %v5232, %v5461
        %v5463 = vpop.f32.mrb[0].mxu0
        %v5464 = vadd.f32 %v5228, %v5463
        %v5465 = vpop.f32.mrb[0].mxu0
        %v5466 = vadd.f32 %v5232, %v5465
        %5467 = vmatprep.mubr.bf16.mxu0 0
        %5468 = vmatmul.mubr.bf16.gmra.mrb[0].mxu0 %v5186
        %v5469 = vpop.f32.mrb[0].mxu0
        %v5470 = vadd.f32 %v5228, %v5469
        %v5471 = vpop.f32.mrb[0].mxu0
        %v5472 = vadd.f32 %v5232, %v5471
        %v5473 = vpop.f32.mrb[0].mxu0
        %v5474 = vadd.f32 %v5228, %v5473
        %v5475 = vpop.f32.mrb[0].mxu0
        %v5476 = vadd.f32 %v5232, %v5475
        %5477 = vmatprep.mubr.bf16.mxu0 0
        %5478 = vmatmul.mubr.bf16.gmra.mrb[0].mxu0 %v5187
        %v5479 = vpop.f32.mrb[0].mxu0
        %v5480 = vadd.f32 %v5228, %v5479
        %v5481 = vpop.f32.mrb[0].mxu0
        %v5482 = vadd.f32 %v5232, %v5481
        %v5483 = vpop.f32.mrb[0].mxu0
        %v5484 = vadd.f32 %v5228, %v5483
        %v5485 = vpop.f32.mrb[0].mxu0
        %v5486 = vadd.f32 %v5232, %v5485
        %5487 = vmatprep.mubr.bf16.mxu0 0
        %5488 = vmatmul.mubr.bf16.gmra.mrb[0].mxu0 %v5188
        %v5489 = vpop.f32.mrb[0].mxu0
        %v5490 = vadd.f32 %v5228, %v5489
        %v5491 = vpop.f32.mrb[0].mxu0
        %v5492 = vadd.f32 %v5232, %v5491
        %v5493 = vpop.f32.mrb[0].mxu0
        %v5494 = vadd.f32 %v5228, %v5493
        %v5495 = vpop.f32.mrb[0].mxu0
        %v5496 = vadd.f32 %v5232, %v5495
        %5497 = vmatprep.mubr.bf16.mxu0 0
        %5498 = vmatmul.mubr.bf16.gmra.mrb[0].mxu0 %v5189
        %v5499 = vpop.f32.mrb[0].mxu0
        %v5500 = vadd.f32 %v5228, %v5499
        %v5501 = vpop.f32.mrb[0].mxu0
        %v5502 = vadd.f32 %v5232, %v5501
        %v5503 = vpop.f32.mrb[0].mxu0
        %v5504 = vadd.f32 %v5228, %v5503
        %v5505 = vpop.f32.mrb[0].mxu0
        %v5506 = vadd.f32 %v5232, %v5505
        %5507 = vmatprep.mubr.bf16.mxu0 0
        %5508 = vmatmul.mubr.bf16.gmra.mrb[0].mxu0 %v5190
        %v5509 = vpop.f32.mrb[0].mxu0
        %v5510 = vadd.f32 %v5228, %v5509
        %v5511 = vpop.f32.mrb[0].mxu0
        %v5512 = vadd.f32 %v5232, %v5511
        %v5513 = vpop.f32.mrb[0].mxu0
        %v5514 = vadd.f32 %v5228, %v5513
        %v5515 = vpop.f32.mrb[0].mxu0
        %v5516 = vadd.f32 %v5232, %v5515
        %5517 = vdwg.mxu0
        %5518 = vmatprep.subr.bf16.mxu0 %v5344
        %5519 = vmatpush1.bf16.msra.mxu0 %v5343
        %5520 = vmatprep.subr.bf16.mxu0 %v5348
        %5521 = vmatpush1.bf16.msra.mxu0 %v5347
        %5522 = vmatprep.subr.bf16.mxu0 %v5352
        %5523 = vmatpush1.bf16.msra.mxu0 %v5351
        %5524 = vmatprep.subr.bf16.mxu0 %v5356
        %5525 = vmatpush1.bf16.msra.mxu0 %v5355
        %5526 = vmatprep.subr.bf16.mxu0 %v5360
        %5527 = vmatpush1.bf16.msra.mxu0 %v5359
        %5528 = vmatprep.subr.bf16.mxu0 %v5364
        %5529 = vmatpush1.bf16.msra.mxu0 %v5363
        %5530 = vmatprep.subr.bf16.mxu0 %v5368
        %5531 = vmatpush1.bf16.msra.mxu0 %v5367
        %5532 = vmatprep.subr.bf16.mxu0 %v5372
        %5533 = vmatpush1.bf16.msra.mxu0 %v5371
        %5534 = vmatprep.subr.bf16.mxu0 0
        %5535 = vmatpush1.bf16.msra.mxu0 0
        %5536 = vmatprep.subr.bf16.mxu0 0
        %5537 = vmatpush1.bf16.msra.mxu0 0
        %5538 = vmatprep.subr.bf16.mxu0 0
        %5539 = vmatpush1.bf16.msra.mxu0 0
        %5540 = vmatprep.subr.bf16.mxu0 0
        %5541 = vmatpush1.bf16.msra.mxu0 0
        %5542 = vmatprep.subr.bf16.mxu0 0
        %5543 = vmatpush1.bf16.msra.mxu0 0
        %5544 = vmatprep.subr.bf16.mxu0 0
        %5545 = vmatpush1.bf16.msra.mxu0 0
        %5546 = vmatprep.subr.bf16.mxu0 0
        %5547 = vmatpush1.bf16.msra.mxu0 0
        %5548 = vmatprep.subr.bf16.mxu0 0
        %5549 = vmatpush1.bf16.msra.mxu0 0
        %5550 = vmatprep.mubr.bf16.mxu0 0
        %5551 = vmatmul.mubr.bf16.gmra.mrb[0].mxu0 %v5183
        %v5552 = vpop.f32.mrb[0].mxu0
        %v5553 = vadd.f32 %v5236, %v5552
        %v5554 = vpop.f32.mrb[0].mxu0
        %v5555 = vadd.f32 %v5240, %v5554
        %v5556 = vpop.f32.mrb[0].mxu0
        %v5557 = vadd.f32 %v5236, %v5556
        %v5558 = vpop.f32.mrb[0].mxu0
        %v5559 = vadd.f32 %v5240, %v5558
        %5560 = vmatprep.mubr.bf16.mxu0 0
        %5561 = vmatmul.mubr.bf16.gmra.mrb[0].mxu0 %v5184
        %v5562 = vpop.f32.mrb[0].mxu0
        %v5563 = vadd.f32 %v5236, %v5562
        %v5564 = vpop.f32.mrb[0].mxu0
        %v5565 = vadd.f32 %v5240, %v5564
        %v5566 = vpop.f32.mrb[0].mxu0
        %v5567 = vadd.f32 %v5236, %v5566
        %v5568 = vpop.f32.mrb[0].mxu0
        %v5569 = vadd.f32 %v5240, %v5568
        %5570 = vmatprep.mubr.bf16.mxu0 0
        %5571 = vmatmul.mubr.bf16.gmra.mrb[0].mxu0 %v5185
        %v5572 = vpop.f32.mrb[0].mxu0
        %v5573 = vadd.f32 %v5236, %v5572
        %v5574 = vpop.f32.mrb[0].mxu0
        %v5575 = vadd.f32 %v5240, %v5574
        %v5576 = vpop.f32.mrb[0].mxu0
        %v5577 = vadd.f32 %v5236, %v5576
        %v5578 = vpop.f32.mrb[0].mxu0
        %v5579 = vadd.f32 %v5240, %v5578
        %5580 = vmatprep.mubr.bf16.mxu0 0
        %5581 = vmatmul.mubr.bf16.gmra.mrb[0].mxu0 %v5186
        %v5582 = vpop.f32.mrb[0].mxu0
        %v5583 = vadd.f32 %v5236, %v5582
        %v5584 = vpop.f32.mrb[0].mxu0
        %v5585 = vadd.f32 %v5240, %v5584
        %v5586 = vpop.f32.mrb[0].mxu0
        %v5587 = vadd.f32 %v5236, %v5586
        %v5588 = vpop.f32.mrb[0].mxu0
        %v5589 = vadd.f32 %v5240, %v5588
        %5590 = vmatprep.mubr.bf16.mxu0 0
        %5591 = vmatmul.mubr.bf16.gmra.mrb[0].mxu0 %v5187
        %v5592 = vpop.f32.mrb[0].mxu0
        %v5593 = vadd.f32 %v5236, %v5592
        %v5594 = vpop.f32.mrb[0].mxu0
        %v5595 = vadd.f32 %v5240, %v5594
        %v5596 = vpop.f32.mrb[0].mxu0
        %v5597 = vadd.f32 %v5236, %v5596
        %v5598 = vpop.f32.mrb[0].mxu0
        %v5599 = vadd.f32 %v5240, %v5598
        %5600 = vmatprep.mubr.bf16.mxu0 0
        %5601 = vmatmul.mubr.bf16.gmra.mrb[0].mxu0 %v5188
        %v5602 = vpop.f32.mrb[0].mxu0
        %v5603 = vadd.f32 %v5236, %v5602
        %v5604 = vpop.f32.mrb[0].mxu0
        %v5605 = vadd.f32 %v5240, %v5604
        %v5606 = vpop.f32.mrb[0].mxu0
        %v5607 = vadd.f32 %v5236, %v5606
        %v5608 = vpop.f32.mrb[0].mxu0
        %v5609 = vadd.f32 %v5240, %v5608
        %5610 = vmatprep.mubr.bf16.mxu0 0
        %5611 = vmatmul.mubr.bf16.gmra.mrb[0].mxu0 %v5189
        %v5612 = vpop.f32.mrb[0].mxu0
        %v5613 = vadd.f32 %v5236, %v5612
        %v5614 = vpop.f32.mrb[0].mxu0
        %v5615 = vadd.f32 %v5240, %v5614
        %v5616 = vpop.f32.mrb[0].mxu0
        %v5617 = vadd.f32 %v5236, %v5616
        %v5618 = vpop.f32.mrb[0].mxu0
        %v5619 = vadd.f32 %v5240, %v5618
        %5620 = vmatprep.mubr.bf16.mxu0 0
        %5621 = vmatmul.mubr.bf16.gmra.mrb[0].mxu0 %v5190
        %v5622 = vpop.f32.mrb[0].mxu0
        %v5623 = vadd.f32 %v5236, %v5622
        %v5624 = vpop.f32.mrb[0].mxu0
        %v5625 = vadd.f32 %v5240, %v5624
        %v5626 = vpop.f32.mrb[0].mxu0
        %v5627 = vadd.f32 %v5236, %v5626
        %v5628 = vpop.f32.mrb[0].mxu0
        %v5629 = vadd.f32 %v5240, %v5628
        %5630 = vdwg.mxu0
        %v5631 = vmax.f32 %v5440, 0.0
        %v5632 = vmax.f32 %v5442, 0.0
        %v5633 = vmax.f32 %v5553, 0.0
        %v5634 = vmax.f32 %v5555, 0.0
        %v5635 = vmax.f32 %v5444, 0.0
        %v5636 = vmax.f32 %v5446, 0.0
        %v5637 = vmax.f32 %v5557, 0.0
        %v5638 = vmax.f32 %v5559, 0.0
        %v5639 = vmax.f32 %v5450, 0.0
        %v5640 = vmax.f32 %v5452, 0.0
        %v5641 = vmax.f32 %v5563, 0.0
        %v5642 = vmax.f32 %v5565, 0.0
        %v5643 = vmax.f32 %v5454, 0.0
        %v5644 = vmax.f32 %v5456, 0.0
        %v5645 = vmax.f32 %v5567, 0.0
        %v5646 = vmax.f32 %v5569, 0.0
        %v5647 = vmax.f32 %v5460, 0.0
        %v5648 = vmax.f32 %v5462, 0.0
        %v5649 = vmax.f32 %v5573, 0.0
        %v5650 = vmax.f32 %v5575, 0.0
        %v5651 = vmax.f32 %v5464, 0.0
        %v5652 = vmax.f32 %v5466, 0.0
        %v5653 = vmax.f32 %v5577, 0.0
        %v5654 = vmax.f32 %v5579, 0.0
        %v5655 = vmax.f32 %v5470, 0.0
        %v5656 = vmax.f32 %v5472, 0.0
        %v5657 = vmax.f32 %v5583, 0.0
        %v5658 = vmax.f32 %v5585, 0.0
        %v5659 = vmax.f32 %v5474, 0.0
        %v5660 = vmax.f32 %v5476, 0.0
        %v5661 = vmax.f32 %v5587, 0.0
        %v5662 = vmax.f32 %v5589, 0.0
        %v5663 = vmax.f32 %v5480, 0.0
        %v5664 = vmax.f32 %v5482, 0.0
        %v5665 = vmax.f32 %v5593, 0.0
        %v5666 = vmax.f32 %v5595, 0.0
        %v5667 = vmax.f32 %v5484, 0.0
        %v5668 = vmax.f32 %v5486, 0.0
        %v5669 = vmax.f32 %v5597, 0.0
        %v5670 = vmax.f32 %v5599, 0.0
        %v5671 = vmax.f32 %v5490, 0.0
        %v5672 = vmax.f32 %v5492, 0.0
        %v5673 = vmax.f32 %v5603, 0.0
        %v5674 = vmax.f32 %v5605, 0.0
        %v5675 = vmax.f32 %v5494, 0.0
        %v5676 = vmax.f32 %v5496, 0.0
        %v5677 = vmax.f32 %v5607, 0.0
        %v5678 = vmax.f32 %v5609, 0.0
        %v5679 = vmax.f32 %v5500, 0.0
        %v5680 = vmax.f32 %v5502, 0.0
        %v5681 = vmax.f32 %v5613, 0.0
        %v5682 = vmax.f32 %v5615, 0.0
        %v5683 = vmax.f32 %v5504, 0.0
        %v5684 = vmax.f32 %v5506, 0.0
        %v5685 = vmax.f32 %v5617, 0.0
        %v5686 = vmax.f32 %v5619, 0.0
        %v5687 = vmax.f32 %v5510, 0.0
        %v5688 = vmax.f32 %v5512, 0.0
        %v5689 = vmax.f32 %v5623, 0.0
        %v5690 = vmax.f32 %v5625, 0.0
        %v5691 = vmax.f32 %v5514, 0.0
        %v5692 = vmax.f32 %v5516, 0.0
        %v5693 = vmax.f32 %v5627, 0.0
        %v5694 = vmax.f32 %v5629, 0.0
        %v5695 = vpack.c.bf16 %v5635, %v5631
        %v5696 = vpack.c.bf16 %v5636, %v5632
        %v5697 = vpack.c.bf16 %v5637, %v5633
        %v5698 = vpack.c.bf16 %v5638, %v5634
        %v5699 = vpack.c.bf16 %v5643, %v5639
        %v5700 = vpack.c.bf16 %v5644, %v5640
        %v5701 = vpack.c.bf16 %v5645, %v5641
        %v5702 = vpack.c.bf16 %v5646, %v5642
        %v5703 = vpack.c.bf16 %v5651, %v5647
        %v5704 = vpack.c.bf16 %v5652, %v5648
        %v5705 = vpack.c.bf16 %v5653, %v5649
        %v5706 = vpack.c.bf16 %v5654, %v5650
        %v5707 = vpack.c.bf16 %v5659, %v5655
        %v5708 = vpack.c.bf16 %v5660, %v5656
        %v5709 = vpack.c.bf16 %v5661, %v5657
        %v5710 = vpack.c.bf16 %v5662, %v5658
        %v5711 = vpack.c.bf16 %v5667, %v5663
        %v5712 = vpack.c.bf16 %v5668, %v5664
        %v5713 = vpack.c.bf16 %v5669, %v5665
        %v5714 = vpack.c.bf16 %v5670, %v5666
        %v5715 = vpack.c.bf16 %v5675, %v5671
        %v5716 = vpack.c.bf16 %v5676, %v5672
        %v5717 = vpack.c.bf16 %v5677, %v5673
        %v5718 = vpack.c.bf16 %v5678, %v5674
        %v5719 = vpack.c.bf16 %v5683, %v5679
        %v5720 = vpack.c.bf16 %v5684, %v5680
        %v5721 = vpack.c.bf16 %v5685, %v5681
        %v5722 = vpack.c.bf16 %v5686, %v5682
        %v5723 = vpack.c.bf16 %v5691, %v5687
        %v5724 = vpack.c.bf16 %v5692, %v5688
        %v5725 = vpack.c.bf16 %v5693, %v5689
        %v5726 = vpack.c.bf16 %v5694, %v5690
        %v5727 = vld [vmem:[#allocation13] sm:$0xf]
        %v5728 = vld [vmem:[#allocation13 + $0x4] sm:$0xf]
        %v5729 = vld [vmem:[#allocation13 + $0x8] sm:$0xf]
        %v5730 = vld [vmem:[#allocation13 + $0xc] sm:$0xf]
        %v5731 = vld [vmem:[#allocation13 + $0x10] sm:$0xf]
        %v5732 = vld [vmem:[#allocation13 + $0x14] sm:$0xf]
        %v5733 = vld [vmem:[#allocation13 + $0x18] sm:$0xf]
        %v5734 = vld [vmem:[#allocation13 + $0x1c] sm:$0xf]
        %v5735 = vld [vmem:[#allocation13 + $0x20] sm:$0xf]
        %v5736 = vld [vmem:[#allocation13 + $0x24] sm:$0xf]
        %v5737 = vld [vmem:[#allocation13 + $0x28] sm:$0xf]
        %v5738 = vld [vmem:[#allocation13 + $0x2c] sm:$0xf]
        %v5739 = vld [vmem:[#allocation13 + $0x30] sm:$0xf]
        %v5740 = vld [vmem:[#allocation13 + $0x34] sm:$0xf]
        %v5741 = vld [vmem:[#allocation13 + $0x38] sm:$0xf]
        %v5742 = vld [vmem:[#allocation13 + $0x3c] sm:$0xf]
        %v5743 = vld [vmem:[#allocation13 + $0x40] sm:$0xf]
        %v5744 = vld [vmem:[#allocation13 + $0x44] sm:$0xf]
        %v5745 = vld [vmem:[#allocation13 + $0x48] sm:$0xf]
        %v5746 = vld [vmem:[#allocation13 + $0x4c] sm:$0xf]
        %v5747 = vld [vmem:[#allocation13 + $0x50] sm:$0xf]
        %v5748 = vld [vmem:[#allocation13 + $0x54] sm:$0xf]
        %v5749 = vld [vmem:[#allocation13 + $0x58] sm:$0xf]
        %v5750 = vld [vmem:[#allocation13 + $0x5c] sm:$0xf]
        %v5751 = vld [vmem:[#allocation13 + $0x60] sm:$0xf]
        %v5752 = vld [vmem:[#allocation13 + $0x64] sm:$0xf]
        %v5753 = vld [vmem:[#allocation13 + $0x68] sm:$0xf]
        %v5754 = vld [vmem:[#allocation13 + $0x6c] sm:$0xf]
        %v5755 = vld [vmem:[#allocation13 + $0x70] sm:$0xf]
        %v5756 = vld [vmem:[#allocation13 + $0x74] sm:$0xf]
        %v5757 = vld [vmem:[#allocation13 + $0x78] sm:$0xf]
        %v5758 = vld [vmem:[#allocation13 + $0x7c] sm:$0xf]
        %v5759 = vld [vmem:[#allocation13 + $0x80] sm:$0xf]
        %v5760 = vld [vmem:[#allocation13 + $0x84] sm:$0xf]
        %v5761 = vld [vmem:[#allocation13 + $0x88] sm:$0xf]
        %v5762 = vld [vmem:[#allocation13 + $0x8c] sm:$0xf]
        %v5763 = vld [vmem:[#allocation13 + $0x90] sm:$0xf]
        %v5764 = vld [vmem:[#allocation13 + $0x94] sm:$0xf]
        %v5765 = vld [vmem:[#allocation13 + $0x98] sm:$0xf]
        %v5766 = vld [vmem:[#allocation13 + $0x9c] sm:$0xf]
        %v5767 = vld [vmem:[#allocation13 + $0xa0] sm:$0xf]
        %v5768 = vld [vmem:[#allocation13 + $0xa4] sm:$0xf]
        %v5769 = vld [vmem:[#allocation13 + $0xa8] sm:$0xf]
        %v5770 = vld [vmem:[#allocation13 + $0xac] sm:$0xf]
        %v5771 = vld [vmem:[#allocation13 + $0xb0] sm:$0xf]
        %v5772 = vld [vmem:[#allocation13 + $0xb4] sm:$0xf]
        %v5773 = vld [vmem:[#allocation13 + $0xb8] sm:$0xf]
        %v5774 = vld [vmem:[#allocation13 + $0xbc] sm:$0xf]
        %v5775 = vld [vmem:[#allocation13 + $0xc0] sm:$0xf]
        %v5776 = vld [vmem:[#allocation13 + $0xc4] sm:$0xf]
        %v5777 = vld [vmem:[#allocation13 + $0xc8] sm:$0xf]
        %v5778 = vld [vmem:[#allocation13 + $0xcc] sm:$0xf]
        %v5779 = vld [vmem:[#allocation13 + $0xd0] sm:$0xf]
        %v5780 = vld [vmem:[#allocation13 + $0xd4] sm:$0xf]
        %v5781 = vld [vmem:[#allocation13 + $0xd8] sm:$0xf]
        %v5782 = vld [vmem:[#allocation13 + $0xdc] sm:$0xf]
        %v5783 = vld [vmem:[#allocation13 + $0xe0] sm:$0xf]
        %v5784 = vld [vmem:[#allocation13 + $0xe4] sm:$0xf]
        %v5785 = vld [vmem:[#allocation13 + $0xe8] sm:$0xf]
        %v5786 = vld [vmem:[#allocation13 + $0xec] sm:$0xf]
        %v5787 = vld [vmem:[#allocation13 + $0xf0] sm:$0xf]
        %v5788 = vld [vmem:[#allocation13 + $0xf4] sm:$0xf]
        %v5789 = vld [vmem:[#allocation13 + $0xf8] sm:$0xf]
        %v5790 = vld [vmem:[#allocation13 + $0xfc] sm:$0xf]
        %v5791 = vld [vmem:[%s10] sm:$0x1]
        %v5793 = vlaneseq
        %v5794 = vshrl.u32 %v5793, 7
        %v5795 = vsub.s32 0, %v5794
        %v5796 = vrot.slane %v5791, %v5795
        %v5862 = vunpack.c.l.b16 %v5727
        %v5863 = vunpack.c.l.b16 %v5728
        %v5864 = vunpack.c.l.b16 %v5729
        %v5865 = vunpack.c.l.b16 %v5730
        %v5866 = vunpack.c.l.b16 %v5731
        %v5867 = vunpack.c.l.b16 %v5732
        %v5868 = vunpack.c.l.b16 %v5733
        %v5869 = vunpack.c.l.b16 %v5734
        %v5870 = vunpack.c.l.b16 %v5735
        %v5871 = vunpack.c.l.b16 %v5736
        %v5872 = vunpack.c.l.b16 %v5737
        %v5873 = vunpack.c.l.b16 %v5738
        %v5874 = vunpack.c.l.b16 %v5739
        %v5875 = vunpack.c.l.b16 %v5740
        %v5876 = vunpack.c.l.b16 %v5741
        %v5877 = vunpack.c.l.b16 %v5742
        %v5878 = vunpack.c.l.b16 %v5743
        %v5879 = vunpack.c.l.b16 %v5744
        %v5880 = vunpack.c.l.b16 %v5745
        %v5881 = vunpack.c.l.b16 %v5746
        %v5882 = vunpack.c.l.b16 %v5747
        %v5883 = vunpack.c.l.b16 %v5748
        %v5884 = vunpack.c.l.b16 %v5749
        %v5885 = vunpack.c.l.b16 %v5750
        %v5886 = vunpack.c.l.b16 %v5751
        %v5887 = vunpack.c.l.b16 %v5752
        %v5888 = vunpack.c.l.b16 %v5753
        %v5889 = vunpack.c.l.b16 %v5754
        %v5890 = vunpack.c.l.b16 %v5755
        %v5891 = vunpack.c.l.b16 %v5756
        %v5892 = vunpack.c.l.b16 %v5757
        %v5893 = vunpack.c.l.b16 %v5758
        %v5894 = vunpack.c.l.b16 %v5759
        %v5895 = vunpack.c.l.b16 %v5760
        %v5896 = vunpack.c.l.b16 %v5761
        %v5897 = vunpack.c.l.b16 %v5762
        %v5898 = vunpack.c.l.b16 %v5763
        %v5899 = vunpack.c.l.b16 %v5764
        %v5900 = vunpack.c.l.b16 %v5765
        %v5901 = vunpack.c.l.b16 %v5766
        %v5902 = vunpack.c.l.b16 %v5767
        %v5903 = vunpack.c.l.b16 %v5768
        %v5904 = vunpack.c.l.b16 %v5769
        %v5905 = vunpack.c.l.b16 %v5770
        %v5906 = vunpack.c.l.b16 %v5771
        %v5907 = vunpack.c.l.b16 %v5772
        %v5908 = vunpack.c.l.b16 %v5773
        %v5909 = vunpack.c.l.b16 %v5774
        %v5910 = vunpack.c.l.b16 %v5775
        %v5911 = vunpack.c.l.b16 %v5776
        %v5912 = vunpack.c.l.b16 %v5777
        %v5913 = vunpack.c.l.b16 %v5778
        %v5914 = vunpack.c.l.b16 %v5779
        %v5915 = vunpack.c.l.b16 %v5780
        %v5916 = vunpack.c.l.b16 %v5781
        %v5917 = vunpack.c.l.b16 %v5782
        %v5918 = vunpack.c.l.b16 %v5783
        %v5919 = vunpack.c.l.b16 %v5784
        %v5920 = vunpack.c.l.b16 %v5785
        %v5921 = vunpack.c.l.b16 %v5786
        %v5922 = vunpack.c.l.b16 %v5787
        %v5923 = vunpack.c.l.b16 %v5788
        %v5924 = vunpack.c.l.b16 %v5789
        %v5925 = vunpack.c.l.b16 %v5790
        %v5926 = vpack.c.b16 %v5863, %v5862
        %v5927 = vpack.c.b16 %v5865, %v5864
        %v5928 = vpack.c.b16 %v5867, %v5866
        %v5929 = vpack.c.b16 %v5869, %v5868
        %v5930 = vpack.c.b16 %v5871, %v5870
        %v5931 = vpack.c.b16 %v5873, %v5872
        %v5932 = vpack.c.b16 %v5875, %v5874
        %v5933 = vpack.c.b16 %v5877, %v5876
        %v5934 = vpack.c.b16 %v5879, %v5878
        %v5935 = vpack.c.b16 %v5881, %v5880
        %v5936 = vpack.c.b16 %v5883, %v5882
        %v5937 = vpack.c.b16 %v5885, %v5884
        %v5938 = vpack.c.b16 %v5887, %v5886
        %v5939 = vpack.c.b16 %v5889, %v5888
        %v5940 = vpack.c.b16 %v5891, %v5890
        %v5941 = vpack.c.b16 %v5893, %v5892
        %v5942 = vpack.c.b16 %v5895, %v5894
        %v5943 = vpack.c.b16 %v5897, %v5896
        %v5944 = vpack.c.b16 %v5899, %v5898
        %v5945 = vpack.c.b16 %v5901, %v5900
        %v5946 = vpack.c.b16 %v5903, %v5902
        %v5947 = vpack.c.b16 %v5905, %v5904
        %v5948 = vpack.c.b16 %v5907, %v5906
        %v5949 = vpack.c.b16 %v5909, %v5908
        %v5950 = vpack.c.b16 %v5911, %v5910
        %v5951 = vpack.c.b16 %v5913, %v5912
        %v5952 = vpack.c.b16 %v5915, %v5914
        %v5953 = vpack.c.b16 %v5917, %v5916
        %v5954 = vpack.c.b16 %v5919, %v5918
        %v5955 = vpack.c.b16 %v5921, %v5920
        %v5956 = vpack.c.b16 %v5923, %v5922
        %v5957 = vpack.c.b16 %v5925, %v5924
        %5990 = vmatprep.subr.bf16.mxu0 0
        %5991 = vmatpush1.bf16.msra.mxu0 %v5926
        %5992 = vmatprep.subr.bf16.mxu0 0
        %5993 = vmatpush1.bf16.msra.mxu0 %v5927
        %5994 = vmatprep.subr.bf16.mxu0 0
        %5995 = vmatpush1.bf16.msra.mxu0 %v5928
        %5996 = vmatprep.subr.bf16.mxu0 0
        %5997 = vmatpush1.bf16.msra.mxu0 %v5929
        %5998 = vmatprep.subr.bf16.mxu0 0
        %5999 = vmatpush1.bf16.msra.mxu0 %v5930
        %6000 = vmatprep.subr.bf16.mxu0 0
        %6001 = vmatpush1.bf16.msra.mxu0 %v5931
        %6002 = vmatprep.subr.bf16.mxu0 0
        %6003 = vmatpush1.bf16.msra.mxu0 %v5932
        %6004 = vmatprep.subr.bf16.mxu0 0
        %6005 = vmatpush1.bf16.msra.mxu0 %v5933
        %6006 = vmatprep.subr.bf16.mxu0 0
        %6007 = vmatpush1.bf16.msra.mxu0 %v5934
        %6008 = vmatprep.subr.bf16.mxu0 0
        %6009 = vmatpush1.bf16.msra.mxu0 %v5935
        %6010 = vmatprep.subr.bf16.mxu0 0
        %6011 = vmatpush1.bf16.msra.mxu0 %v5936
        %6012 = vmatprep.subr.bf16.mxu0 0
        %6013 = vmatpush1.bf16.msra.mxu0 %v5937
        %6014 = vmatprep.subr.bf16.mxu0 0
        %6015 = vmatpush1.bf16.msra.mxu0 %v5938
        %6016 = vmatprep.subr.bf16.mxu0 0
        %6017 = vmatpush1.bf16.msra.mxu0 %v5939
        %6018 = vmatprep.subr.bf16.mxu0 0
        %6019 = vmatpush1.bf16.msra.mxu0 %v5940
        %6020 = vmatprep.subr.bf16.mxu0 0
        %6021 = vmatpush1.bf16.msra.mxu0 %v5941
        %6022 = vmatprep.mubr.bf16.mxu0 %v5696
        %6023 = vmatmul.mubr.bf16.gmra.mrb[0].mxu0 %v5695
        %v6024 = vpop.f32.mrb[0].mxu0
        %v6025 = vadd.f32 %v5796, %v6024
        %v6026 = vpop.f32.mrb[0].mxu0
        %v6027 = vpop.f32.mrb[0].mxu0
        %v6028 = vadd.f32 %v5796, %v6027
        %v6029 = vpop.f32.mrb[0].mxu0
        %6030 = vmatprep.mubr.bf16.mxu0 %v5700
        %6031 = vmatmul.mubr.bf16.gmra.mrb[0].mxu0 %v5699
        %v6032 = vpop.f32.mrb[0].mxu0
        %v6033 = vadd.f32 %v5796, %v6032
        %v6034 = vpop.f32.mrb[0].mxu0
        %v6035 = vpop.f32.mrb[0].mxu0
        %v6036 = vadd.f32 %v5796, %v6035
        %v6037 = vpop.f32.mrb[0].mxu0
        %6038 = vmatprep.mubr.bf16.mxu0 %v5704
        %6039 = vmatmul.mubr.bf16.gmra.mrb[0].mxu0 %v5703
        %v6040 = vpop.f32.mrb[0].mxu0
        %v6041 = vadd.f32 %v5796, %v6040
        %v6042 = vpop.f32.mrb[0].mxu0
        %v6043 = vpop.f32.mrb[0].mxu0
        %v6044 = vadd.f32 %v5796, %v6043
        %v6045 = vpop.f32.mrb[0].mxu0
        %6046 = vmatprep.mubr.bf16.mxu0 %v5708
        %6047 = vmatmul.mubr.bf16.gmra.mrb[0].mxu0 %v5707
        %v6048 = vpop.f32.mrb[0].mxu0
        %v6049 = vadd.f32 %v5796, %v6048
        %v6050 = vpop.f32.mrb[0].mxu0
        %v6051 = vpop.f32.mrb[0].mxu0
        %v6052 = vadd.f32 %v5796, %v6051
        %v6053 = vpop.f32.mrb[0].mxu0
        %6054 = vmatprep.mubr.bf16.mxu0 %v5712
        %6055 = vmatmul.mubr.bf16.gmra.mrb[0].mxu0 %v5711
        %v6056 = vpop.f32.mrb[0].mxu0
        %v6057 = vadd.f32 %v5796, %v6056
        %v6058 = vpop.f32.mrb[0].mxu0
        %v6059 = vpop.f32.mrb[0].mxu0
        %v6060 = vadd.f32 %v5796, %v6059
        %v6061 = vpop.f32.mrb[0].mxu0
        %6062 = vmatprep.mubr.bf16.mxu0 %v5716
        %6063 = vmatmul.mubr.bf16.gmra.mrb[0].mxu0 %v5715
        %v6064 = vpop.f32.mrb[0].mxu0
        %v6065 = vadd.f32 %v5796, %v6064
        %v6066 = vpop.f32.mrb[0].mxu0
        %v6067 = vpop.f32.mrb[0].mxu0
        %v6068 = vadd.f32 %v5796, %v6067
        %v6069 = vpop.f32.mrb[0].mxu0
        %6070 = vmatprep.mubr.bf16.mxu0 %v5720
        %6071 = vmatmul.mubr.bf16.gmra.mrb[0].mxu0 %v5719
        %v6072 = vpop.f32.mrb[0].mxu0
        %v6073 = vadd.f32 %v5796, %v6072
        %v6074 = vpop.f32.mrb[0].mxu0
        %v6075 = vpop.f32.mrb[0].mxu0
        %v6076 = vadd.f32 %v5796, %v6075
        %v6077 = vpop.f32.mrb[0].mxu0
        %6078 = vmatprep.mubr.bf16.mxu0 %v5724
        %6079 = vmatmul.mubr.bf16.gmra.mrb[0].mxu0 %v5723
        %v6080 = vpop.f32.mrb[0].mxu0
        %v6081 = vadd.f32 %v5796, %v6080
        %v6082 = vpop.f32.mrb[0].mxu0
        %v6083 = vpop.f32.mrb[0].mxu0
        %v6084 = vadd.f32 %v5796, %v6083
        %v6085 = vpop.f32.mrb[0].mxu0
        %6086 = vdwg.mxu0
        %6087 = vmatprep.subr.bf16.mxu0 0
        %6088 = vmatpush1.bf16.msra.mxu0 %v5942
        %6089 = vmatprep.subr.bf16.mxu0 0
        %6090 = vmatpush1.bf16.msra.mxu0 %v5943
        %6091 = vmatprep.subr.bf16.mxu0 0
        %6092 = vmatpush1.bf16.msra.mxu0 %v5944
        %6093 = vmatprep.subr.bf16.mxu0 0
        %6094 = vmatpush1.bf16.msra.mxu0 %v5945
        %6095 = vmatprep.subr.bf16.mxu0 0
        %6096 = vmatpush1.bf16.msra.mxu0 %v5946
        %6097 = vmatprep.subr.bf16.mxu0 0
        %6098 = vmatpush1.bf16.msra.mxu0 %v5947
        %6099 = vmatprep.subr.bf16.mxu0 0
        %6100 = vmatpush1.bf16.msra.mxu0 %v5948
        %6101 = vmatprep.subr.bf16.mxu0 0
        %6102 = vmatpush1.bf16.msra.mxu0 %v5949
        %6103 = vmatprep.subr.bf16.mxu0 0
        %6104 = vmatpush1.bf16.msra.mxu0 %v5950
        %6105 = vmatprep.subr.bf16.mxu0 0
        %6106 = vmatpush1.bf16.msra.mxu0 %v5951
        %6107 = vmatprep.subr.bf16.mxu0 0
        %6108 = vmatpush1.bf16.msra.mxu0 %v5952
        %6109 = vmatprep.subr.bf16.mxu0 0
        %6110 = vmatpush1.bf16.msra.mxu0 %v5953
        %6111 = vmatprep.subr.bf16.mxu0 0
        %6112 = vmatpush1.bf16.msra.mxu0 %v5954
        %6113 = vmatprep.subr.bf16.mxu0 0
        %6114 = vmatpush1.bf16.msra.mxu0 %v5955
        %6115 = vmatprep.subr.bf16.mxu0 0
        %6116 = vmatpush1.bf16.msra.mxu0 %v5956
        %6117 = vmatprep.subr.bf16.mxu0 0
        %6118 = vmatpush1.bf16.msra.mxu0 %v5957
        %6119 = vmatprep.mubr.bf16.mxu0 %v5698
        %6120 = vmatmul.mubr.bf16.gmra.mrb[0].mxu0 %v5697
        %v6121 = vpop.f32.mrb[0].mxu0
        %v6122 = vadd.f32 %v6025, %v6121
        %v6123 = vpop.f32.mrb[0].mxu0
        %v6124 = vpop.f32.mrb[0].mxu0
        %v6125 = vadd.f32 %v6028, %v6124
        %v6126 = vpop.f32.mrb[0].mxu0
        %6127 = vmatprep.mubr.bf16.mxu0 %v5702
        %6128 = vmatmul.mubr.bf16.gmra.mrb[0].mxu0 %v5701
        %v6129 = vpop.f32.mrb[0].mxu0
        %v6130 = vadd.f32 %v6033, %v6129
        %v6131 = vpop.f32.mrb[0].mxu0
        %v6132 = vpop.f32.mrb[0].mxu0
        %v6133 = vadd.f32 %v6036, %v6132
        %v6134 = vpop.f32.mrb[0].mxu0
        %6135 = vmatprep.mubr.bf16.mxu0 %v5706
        %6136 = vmatmul.mubr.bf16.gmra.mrb[0].mxu0 %v5705
        %v6137 = vpop.f32.mrb[0].mxu0
        %v6138 = vadd.f32 %v6041, %v6137
        %v6139 = vpop.f32.mrb[0].mxu0
        %v6140 = vpop.f32.mrb[0].mxu0
        %v6141 = vadd.f32 %v6044, %v6140
        %v6142 = vpop.f32.mrb[0].mxu0
        %6143 = vmatprep.mubr.bf16.mxu0 %v5710
        %6144 = vmatmul.mubr.bf16.gmra.mrb[0].mxu0 %v5709
        %v6145 = vpop.f32.mrb[0].mxu0
        %v6146 = vadd.f32 %v6049, %v6145
        %v6147 = vpop.f32.mrb[0].mxu0
        %v6148 = vpop.f32.mrb[0].mxu0
        %v6149 = vadd.f32 %v6052, %v6148
        %v6150 = vpop.f32.mrb[0].mxu0
        %6151 = vmatprep.mubr.bf16.mxu0 %v5714
        %6152 = vmatmul.mubr.bf16.gmra.mrb[0].mxu0 %v5713
        %v6153 = vpop.f32.mrb[0].mxu0
        %v6154 = vadd.f32 %v6057, %v6153
        %v6155 = vpop.f32.mrb[0].mxu0
        %v6156 = vpop.f32.mrb[0].mxu0
        %v6157 = vadd.f32 %v6060, %v6156
        %v6158 = vpop.f32.mrb[0].mxu0
        %6159 = vmatprep.mubr.bf16.mxu0 %v5718
        %6160 = vmatmul.mubr.bf16.gmra.mrb[0].mxu0 %v5717
        %v6161 = vpop.f32.mrb[0].mxu0
        %v6162 = vadd.f32 %v6065, %v6161
        %v6163 = vpop.f32.mrb[0].mxu0
        %v6164 = vpop.f32.mrb[0].mxu0
        %v6165 = vadd.f32 %v6068, %v6164
        %v6166 = vpop.f32.mrb[0].mxu0
        %6167 = vmatprep.mubr.bf16.mxu0 %v5722
        %6168 = vmatmul.mubr.bf16.gmra.mrb[0].mxu0 %v5721
        %v6169 = vpop.f32.mrb[0].mxu0
        %v6170 = vadd.f32 %v6073, %v6169
        %v6171 = vpop.f32.mrb[0].mxu0
        %v6172 = vpop.f32.mrb[0].mxu0
        %v6173 = vadd.f32 %v6076, %v6172
        %v6174 = vpop.f32.mrb[0].mxu0
        %6175 = vmatprep.mubr.bf16.mxu0 %v5726
        %6176 = vmatmul.mubr.bf16.gmra.mrb[0].mxu0 %v5725
        %v6177 = vpop.f32.mrb[0].mxu0
        %v6178 = vadd.f32 %v6081, %v6177
        %v6179 = vpop.f32.mrb[0].mxu0
        %v6180 = vpop.f32.mrb[0].mxu0
        %v6181 = vadd.f32 %v6084, %v6180
        %v6182 = vpop.f32.mrb[0].mxu0
        %6183 = vdwg.mxu0
        %v6184 = vadd.f32 %v5167, %v6122
        %v6185 = vadd.f32 %v5168, %v6125
        %v6186 = vadd.f32 %v5169, %v6130
        %v6187 = vadd.f32 %v5170, %v6133
        %v6188 = vadd.f32 %v5171, %v6138
        %v6189 = vadd.f32 %v5172, %v6141
        %v6190 = vadd.f32 %v5173, %v6146
        %v6191 = vadd.f32 %v5174, %v6149
        %v6192 = vadd.f32 %v5175, %v6154
        %v6193 = vadd.f32 %v5176, %v6157
        %v6194 = vadd.f32 %v5177, %v6162
        %v6195 = vadd.f32 %v5178, %v6165
        %v6196 = vadd.f32 %v5179, %v6170
        %v6197 = vadd.f32 %v5180, %v6173
        %v6198 = vadd.f32 %v5181, %v6178
        %v6199 = vadd.f32 %v5182, %v6181
        %v6200 = vld [vmem:[%s11] sm:$0x1]
        %v6201 = vld [vmem:[%s12] sm:$0x1]
        %6202 = vadd.xlane.f32.xlu0 %v6184
        %v6203 = vpop.xlane.xlu0 %6202
        %6204 = vadd.xlane.f32.xlu0 %v6185
        %v6205 = vpop.xlane.xlu0 %6204
        %6206 = vadd.xlane.f32.xlu0 %v6186
        %v6207 = vpop.xlane.xlu0 %6206
        %6208 = vadd.xlane.f32.xlu0 %v6187
        %v6209 = vpop.xlane.xlu0 %6208
        %6210 = vadd.xlane.f32.xlu0 %v6188
        %v6211 = vpop.xlane.xlu0 %6210
        %6212 = vadd.xlane.f32.xlu0 %v6189
        %v6213 = vpop.xlane.xlu0 %6212
        %6214 = vadd.xlane.f32.xlu0 %v6190
        %v6215 = vpop.xlane.xlu0 %6214
        %6216 = vadd.xlane.f32.xlu0 %v6191
        %v6217 = vpop.xlane.xlu0 %6216
        %6218 = vadd.xlane.f32.xlu0 %v6192
        %v6219 = vpop.xlane.xlu0 %6218
        %6220 = vadd.xlane.f32.xlu0 %v6193
        %v6221 = vpop.xlane.xlu0 %6220
        %6222 = vadd.xlane.f32.xlu0 %v6194
        %v6223 = vpop.xlane.xlu0 %6222
        %6224 = vadd.xlane.f32.xlu0 %v6195
        %v6225 = vpop.xlane.xlu0 %6224
        %6226 = vadd.xlane.f32.xlu0 %v6196
        %v6227 = vpop.xlane.xlu0 %6226
        %6228 = vadd.xlane.f32.xlu0 %v6197
        %v6229 = vpop.xlane.xlu0 %6228
        %6230 = vadd.xlane.f32.xlu0 %v6198
        %v6231 = vpop.xlane.xlu0 %6230
        %6232 = vadd.xlane.f32.xlu0 %v6199
        %v6233 = vpop.xlane.xlu0 %6232
        %v6234 = vmul.f32 %v6203, %v4994
        %v6235 = vmul.f32 %v6205, %v4994
        %v6236 = vmul.f32 %v6207, %v4994
        %v6237 = vmul.f32 %v6209, %v4994
        %v6238 = vmul.f32 %v6211, %v4994
        %v6239 = vmul.f32 %v6213, %v4994
        %v6240 = vmul.f32 %v6215, %v4994
        %v6241 = vmul.f32 %v6217, %v4994
        %v6242 = vmul.f32 %v6219, %v4994
        %v6243 = vmul.f32 %v6221, %v4994
        %v6244 = vmul.f32 %v6223, %v4994
        %v6245 = vmul.f32 %v6225, %v4994
        %v6246 = vmul.f32 %v6227, %v4994
        %v6247 = vmul.f32 %v6229, %v4994
        %v6248 = vmul.f32 %v6231, %v4994
        %v6249 = vmul.f32 %v6233, %v4994
        %v6250 = vsub.f32 %v6184, %v6234
        %v6251 = vsub.f32 %v6185, %v6235
        %v6252 = vsub.f32 %v6186, %v6236
        %v6253 = vsub.f32 %v6187, %v6237
        %v6254 = vsub.f32 %v6188, %v6238
        %v6255 = vsub.f32 %v6189, %v6239
        %v6256 = vsub.f32 %v6190, %v6240
        %v6257 = vsub.f32 %v6191, %v6241
        %v6258 = vsub.f32 %v6192, %v6242
        %v6259 = vsub.f32 %v6193, %v6243
        %v6260 = vsub.f32 %v6194, %v6244
        %v6261 = vsub.f32 %v6195, %v6245
        %v6262 = vsub.f32 %v6196, %v6246
        %v6263 = vsub.f32 %v6197, %v6247
        %v6264 = vsub.f32 %v6198, %v6248
        %v6265 = vsub.f32 %v6199, %v6249
        %v6266 = vmul.f32 %v6250, %v6250
        %v6267 = vmul.f32 %v6251, %v6251
        %v6268 = vmul.f32 %v6252, %v6252
        %v6269 = vmul.f32 %v6253, %v6253
        %v6270 = vmul.f32 %v6254, %v6254
        %v6271 = vmul.f32 %v6255, %v6255
        %v6272 = vmul.f32 %v6256, %v6256
        %v6273 = vmul.f32 %v6257, %v6257
        %v6274 = vmul.f32 %v6258, %v6258
        %v6275 = vmul.f32 %v6259, %v6259
        %v6276 = vmul.f32 %v6260, %v6260
        %v6277 = vmul.f32 %v6261, %v6261
        %v6278 = vmul.f32 %v6262, %v6262
        %v6279 = vmul.f32 %v6263, %v6263
        %v6280 = vmul.f32 %v6264, %v6264
        %v6281 = vmul.f32 %v6265, %v6265
        %6282 = vadd.xlane.f32.xlu0 %v6266
        %v6283 = vpop.xlane.xlu0 %6282
        %6284 = vadd.xlane.f32.xlu0 %v6267
        %v6285 = vpop.xlane.xlu0 %6284
        %6286 = vadd.xlane.f32.xlu0 %v6268
        %v6287 = vpop.xlane.xlu0 %6286
        %6288 = vadd.xlane.f32.xlu0 %v6269
        %v6289 = vpop.xlane.xlu0 %6288
        %6290 = vadd.xlane.f32.xlu0 %v6270
        %v6291 = vpop.xlane.xlu0 %6290
        %6292 = vadd.xlane.f32.xlu0 %v6271
        %v6293 = vpop.xlane.xlu0 %6292
        %6294 = vadd.xlane.f32.xlu0 %v6272
        %v6295 = vpop.xlane.xlu0 %6294
        %6296 = vadd.xlane.f32.xlu0 %v6273
        %v6297 = vpop.xlane.xlu0 %6296
        %6298 = vadd.xlane.f32.xlu0 %v6274
        %v6299 = vpop.xlane.xlu0 %6298
        %6300 = vadd.xlane.f32.xlu0 %v6275
        %v6301 = vpop.xlane.xlu0 %6300
        %6302 = vadd.xlane.f32.xlu0 %v6276
        %v6303 = vpop.xlane.xlu0 %6302
        %6304 = vadd.xlane.f32.xlu0 %v6277
        %v6305 = vpop.xlane.xlu0 %6304
        %6306 = vadd.xlane.f32.xlu0 %v6278
        %v6307 = vpop.xlane.xlu0 %6306
        %6308 = vadd.xlane.f32.xlu0 %v6279
        %v6309 = vpop.xlane.xlu0 %6308
        %6310 = vadd.xlane.f32.xlu0 %v6280
        %v6311 = vpop.xlane.xlu0 %6310
        %6312 = vadd.xlane.f32.xlu0 %v6281
        %v6313 = vpop.xlane.xlu0 %6312
        %v6314 = vmul.f32 %v6283, %v4994
        %v6315 = vmul.f32 %v6285, %v4994
        %v6316 = vmul.f32 %v6287, %v4994
        %v6317 = vmul.f32 %v6289, %v4994
        %v6318 = vmul.f32 %v6291, %v4994
        %v6319 = vmul.f32 %v6293, %v4994
        %v6320 = vmul.f32 %v6295, %v4994
        %v6321 = vmul.f32 %v6297, %v4994
        %v6322 = vmul.f32 %v6299, %v4994
        %v6323 = vmul.f32 %v6301, %v4994
        %v6324 = vmul.f32 %v6303, %v4994
        %v6325 = vmul.f32 %v6305, %v4994
        %v6326 = vmul.f32 %v6307, %v4994
        %v6327 = vmul.f32 %v6309, %v4994
        %v6328 = vmul.f32 %v6311, %v4994
        %v6329 = vmul.f32 %v6313, %v4994
        %v6330 = vadd.f32 %v6314, 1e-05
        %v6331 = vadd.f32 %v6315, 1e-05
        %v6332 = vadd.f32 %v6316, 1e-05
        %v6333 = vadd.f32 %v6317, 1e-05
        %v6334 = vadd.f32 %v6318, 1e-05
        %v6335 = vadd.f32 %v6319, 1e-05
        %v6336 = vadd.f32 %v6320, 1e-05
        %v6337 = vadd.f32 %v6321, 1e-05
        %v6338 = vadd.f32 %v6322, 1e-05
        %v6339 = vadd.f32 %v6323, 1e-05
        %v6340 = vadd.f32 %v6324, 1e-05
        %v6341 = vadd.f32 %v6325, 1e-05
        %v6342 = vadd.f32 %v6326, 1e-05
        %v6343 = vadd.f32 %v6327, 1e-05
        %v6344 = vadd.f32 %v6328, 1e-05
        %v6345 = vadd.f32 %v6329, 1e-05
        %v6346 = vrsqrt.pop %v6330
        %v6347 = vrsqrt.pop %v6331
        %v6348 = vrsqrt.pop %v6332
        %v6349 = vrsqrt.pop %v6333
        %v6350 = vrsqrt.pop %v6334
        %v6351 = vrsqrt.pop %v6335
        %v6352 = vrsqrt.pop %v6336
        %v6353 = vrsqrt.pop %v6337
        %v6354 = vrsqrt.pop %v6338
        %v6355 = vrsqrt.pop %v6339
        %v6356 = vrsqrt.pop %v6340
        %v6357 = vrsqrt.pop %v6341
        %v6358 = vrsqrt.pop %v6342
        %v6359 = vrsqrt.pop %v6343
        %v6360 = vrsqrt.pop %v6344
        %v6361 = vrsqrt.pop %v6345
        %v6362 = vmul.f32 %v6250, %v6346
        %v6363 = vmul.f32 %v6251, %v6347
        %v6364 = vmul.f32 %v6252, %v6348
        %v6365 = vmul.f32 %v6253, %v6349
        %v6366 = vmul.f32 %v6254, %v6350
        %v6367 = vmul.f32 %v6255, %v6351
        %v6368 = vmul.f32 %v6256, %v6352
        %v6369 = vmul.f32 %v6257, %v6353
        %v6370 = vmul.f32 %v6258, %v6354
        %v6371 = vmul.f32 %v6259, %v6355
        %v6372 = vmul.f32 %v6260, %v6356
        %v6373 = vmul.f32 %v6261, %v6357
        %v6374 = vmul.f32 %v6262, %v6358
        %v6375 = vmul.f32 %v6263, %v6359
        %v6376 = vmul.f32 %v6264, %v6360
        %v6377 = vmul.f32 %v6265, %v6361
        %v6379 = vlaneseq
        %v6380 = vshrl.u32 %v6379, 7
        %v6381 = vsub.s32 0, %v6380
        %v6382 = vrot.slane %v6200, %v6381
        %v6384 = vmul.f32 %v6362, %v6382
        %v6385 = vmul.f32 %v6363, %v6382
        %v6386 = vmul.f32 %v6364, %v6382
        %v6387 = vmul.f32 %v6365, %v6382
        %v6388 = vmul.f32 %v6366, %v6382
        %v6389 = vmul.f32 %v6367, %v6382
        %v6390 = vmul.f32 %v6368, %v6382
        %v6391 = vmul.f32 %v6369, %v6382
        %v6392 = vmul.f32 %v6370, %v6382
        %v6393 = vmul.f32 %v6371, %v6382
        %v6394 = vmul.f32 %v6372, %v6382
        %v6395 = vmul.f32 %v6373, %v6382
        %v6396 = vmul.f32 %v6374, %v6382
        %v6397 = vmul.f32 %v6375, %v6382
        %v6398 = vmul.f32 %v6376, %v6382
        %v6399 = vmul.f32 %v6377, %v6382
        %v6401 = vlaneseq
        %v6402 = vshrl.u32 %v6401, 7
        %v6403 = vsub.s32 0, %v6402
        %v6404 = vrot.slane %v6201, %v6403
        %v6406 = vadd.f32 %v6384, %v6404
        %v6407 = vadd.f32 %v6385, %v6404
        %v6408 = vadd.f32 %v6386, %v6404
        %v6409 = vadd.f32 %v6387, %v6404
        %v6410 = vadd.f32 %v6388, %v6404
        %v6411 = vadd.f32 %v6389, %v6404
        %v6412 = vadd.f32 %v6390, %v6404
        %v6413 = vadd.f32 %v6391, %v6404
        %v6414 = vadd.f32 %v6392, %v6404
        %v6415 = vadd.f32 %v6393, %v6404
        %v6416 = vadd.f32 %v6394, %v6404
        %v6417 = vadd.f32 %v6395, %v6404
        %v6418 = vadd.f32 %v6396, %v6404
        %v6419 = vadd.f32 %v6397, %v6404
        %v6420 = vadd.f32 %v6398, %v6404
        %v6421 = vadd.f32 %v6399, %v6404
        %6422 = vst [vmem:[%s530] sm:$0xff] %v6406
        %6423 = vst [vmem:[%s530 + $0x8] sm:$0xff] %v6407
        %6424 = vst [vmem:[%s530 + $0x10] sm:$0xff] %v6408
        %6425 = vst [vmem:[%s530 + $0x18] sm:$0xff] %v6409
        %6426 = vst [vmem:[%s530 + $0x20] sm:$0xff] %v6410
        %6427 = vst [vmem:[%s530 + $0x28] sm:$0xff] %v6411
        %6428 = vst [vmem:[%s530 + $0x30] sm:$0xff] %v6412
        %6429 = vst [vmem:[%s530 + $0x38] sm:$0xff] %v6413
        %6430 = vst [vmem:[%s530 + $0x40] sm:$0xff] %v6414
        %6431 = vst [vmem:[%s530 + $0x48] sm:$0xff] %v6415
        %6432 = vst [vmem:[%s530 + $0x50] sm:$0xff] %v6416
        %6433 = vst [vmem:[%s530 + $0x58] sm:$0xff] %v6417
        %6434 = vst [vmem:[%s530 + $0x60] sm:$0xff] %v6418
        %6435 = vst [vmem:[%s530 + $0x68] sm:$0xff] %v6419
        %6436 = vst [vmem:[%s530 + $0x70] sm:$0xff] %v6420
        %6437 = vst [vmem:[%s530 + $0x78] sm:$0xff] %v6421
        %s6438 = sand.u32 %s332, 1
        %s6439 = scalar_lea.sflag [#allocation7], %s6438
        %s6440 = sand.u32 %s332, 1
        %s6441 = smul.addr %s6440, 128
        %s6442 = scalar_lea.vmem [#allocation14], %s6441
        // Predicated region
        $region97: #{tpu_custom_call.1} parent=71 // pred_check
          %p6443 = pneg %p342
        $region98: #{tpu_custom_call.1} parent=71 // pred_check_branch
          %6445 = sbr.rel (%p6443) target = $region100
        $region99: #{tpu_custom_call.1} parent=71 // pred_region
          %s6446 = smul.u32 16, %s37
          %s6448 = ssub.s32 2048, 2048
          %6449 = vsyncadd %s6439, %s6448
          %s6450 = smul.addr %s36, 32
          %s6451 = sadd.s32 %s6446, %s6450
          %s6452 = smul.addr %s6451, 128
          %s6453 = scalar_lea.hbm %s13, %s6452
          %s6454 = sshll.u32 %s6442, 4
          %s6455 = int_to_ptr.vmem [resolvable:$true] %s6454
          %6460 = dma.vmem_to_hbm [thread:$0]  %s6455, 2048, %s6453, %s6439, 128, 128, 8
        $region100: #{tpu_custom_call.1} parent=71 // pred_fallthru
          _
      $region72: #{tpu_custom_call.1} parent=5 // pred_fallthru
        _
      %p6461 = scmp.le.s32.totalorder 2, %s27
      // Predicated region
      $region101: #{tpu_custom_call.1} parent=5 // pred_check
        %p6462 = pneg %p6461
      $region102: #{tpu_custom_call.1} parent=5 // pred_check_branch
        %6464 = sbr.rel (%p6462) target = $region104
      $region103: #{tpu_custom_call.1} parent=5 // pred_region
        %s6465 = ssub.s32 %s27, 2
        // Predicated region
        $region105: #{tpu_custom_call.1} parent=103 // pred_check
          %p6466 = pneg %p348
        $region106: #{tpu_custom_call.1} parent=103 // pred_check_branch
          %6468 = sbr.rel (%p6466) target = $region108
        $region107: #{tpu_custom_call.1} parent=103 // pred_region
          %s6469 = sand.u32 %s333, 1
          %s6470 = scalar_lea.sflag [#allocation7], %s6469
          %s6471 = sand.u32 %s333, 1
          %s6472 = smul.addr %s6471, 128
          %s6473 = scalar_lea.vmem [#allocation14], %s6472
          %6474 = dma.done %s6470, 2048
        $region108: #{tpu_custom_call.1} parent=103 // pred_fallthru
          _
      $region104: #{tpu_custom_call.1} parent=5 // pred_fallthru
        _
    $region6: #{tpu_custom_call.1} parent=1 // loop_footer
      %s31 = sadd.s32 1, %s27
    $region7: #{tpu_custom_call.1} parent=1 // loop_footer_branch
      %26 = sbr.rel target = $region3
    $region8: #{tpu_custom_call.1} parent=1 // loop_exit
      _
    %6475 = vsyncpa [#allocation6], 1
    %s6476 = scalar_lea.sflag [#allocation6], 1
    %6477 = vsyncpa %s6476, 1
    %6478 = vsyncpa [#allocation9], 1
    %6479 = vsyncpa [#allocation12], 1
    %6480 = vsyncpa [#allocation7], 1
    %s6481 = scalar_lea.sflag [#allocation7], 1
    %6482 = vsyncpa %s6481, 1

</llo_original>
